<compile_context>
chip_gen: v6e
topology: v6e:2x2x1
jax: 0.10.0
libtpu: 0.0.40
codegen_flags: <defaults>
</compile_context>

<pallas_src>
from functools import partial

import jax
import jax.numpy as jnp
from jax.experimental import pallas as pl
from jax.experimental.pallas import tpu as pltpu


# ---------------------------------------------------------------------------
# Fused SPPF kernel: cv1 (1x1 conv) -> 3 chained kxk max pools -> cv2 (1x1 conv)
# One grid step = one batch element; everything stays in VMEM in between.
# ---------------------------------------------------------------------------
def _sppf_kernel(x_ref, w1_ref, b1_ref, w2_ref, b2_ref, o_ref,
                 pbuf_ref, cat_ref, *, H, W, k, lpad):
    pad = k // 2
    HW = H * W
    c_ = w1_ref.shape[1]

    # -inf border: fill the whole pool scratch once per step; only the interior
    # window [pad:pad+H, lpad:lpad+W] is ever overwritten, so the border stays
    # -inf for all three pools.  (Cheap: one small bf16 fill.)
    pbuf_ref[...] = jnp.full(pbuf_ref.shape, -jnp.inf, pbuf_ref.dtype)

    # ---- cv1: 1x1 conv + folded BN bias + SiLU (bf16 MXU, f32 accumulate) ----
    x = x_ref[0]                                             # (HW, c1) f32
    z = jnp.dot(x.astype(jnp.bfloat16), w1_ref[...],
                preferred_element_type=jnp.float32) + b1_ref[...]
    z = z * jax.nn.sigmoid(z)                                # SiLU in f32
    # bf16 from here on: pooling (max) is exact in bf16 and cv2 eats bf16 anyway.
    z = z.astype(jnp.bfloat16).reshape(H, W, c_)             # free when W % 8 == 0

    # chunk 0 of the cv2 operand (lane offset 0)
    cat_ref[:, :, 0:c_] = z

    # ---- kxk / stride 1 / pad k//2 max pool via the -inf-bordered scratch ----
    def pool(cur):                                           # (H, W, c_) bf16
        # interior store: lpad is a multiple of 8 -> sublane-aligned store
        pbuf_ref[pl.ds(pad, H), pl.ds(lpad, W), :] = cur
        # W direction: k statically-offset shifted loads (vld slots), k-1 maxes.
        # Loads keep the -inf top/bottom border rows so the H pass needs no mask.
        m = pbuf_ref[:, pl.ds(lpad - pad, W), :]
        for dc in range(1, k):
            m = jnp.maximum(m, pbuf_ref[:, pl.ds(lpad - pad + dc, W), :])
        # H direction: leading-axis slices of a value are free (no relayout).
        if k == 5:
            # 2-level max tree: window-5 = max of two overlapping window-3s.
            t = jnp.maximum(jnp.maximum(m[0:H + 2], m[1:H + 3]), m[2:H + 4])
            return jnp.maximum(t[0:H], t[2:H + 2])
        out = m[0:H]
        for dr in range(1, k):
            out = jnp.maximum(out, m[dr:dr + H])
        return out

    cur = z
    for i in range(1, 4):                                    # y1, y2, y3
        cur = pool(cur)
        cat_ref[:, :, i * c_:(i + 1) * c_] = cur

    # ---- cv2: ONE K=4*c_ matmul over the concatenated chunks ----
    cat = cat_ref[...].reshape(HW, 4 * c_)                   # free when W % 8 == 0
    o = jnp.dot(cat, w2_ref[...], preferred_element_type=jnp.float32) + b2_ref[...]
    o = o * jax.nn.sigmoid(o)                                # SiLU in f32
    o_ref[0] = o.astype(o_ref.dtype)                         # lane-dense (HW, c2)


# ---------------------------------------------------------------------------
# NHWC core (no layout transposes): x (B, H, W, c1) f32 -> (B, H, W, c2) f32
# ---------------------------------------------------------------------------
def sppf_forward_nhwc(x_bhwc, params, k=5):
    assert k % 2 == 1, "SPPF uses an odd pooling kernel"
    B, H, W, c1 = x_bhwc.shape
    w1, b1, w2, b2 = params['w1'], params['b1'], params['w2'], params['b2']
    c_ = w1.shape[1]
    c2 = w2.shape[1]
    pad = k // 2
    HW = H * W

    # Pool-scratch geometry: interior starts at a sublane-aligned column LPAD so
    # the per-pool interior store is unmasked; >= pad columns of -inf on each side.
    LPAD = ((pad + 7) // 8) * 8
    WB = ((LPAD + W + pad + 7) // 8) * 8

    # HBM-side reshape is metadata-only (row-major contiguous).
    x = x_bhwc.reshape(B, HW, c1)

    # Explicit per-step VMEM budget (double-buffered I/O blocks + weights + scratch),
    # with 2x headroom, clamped to stay inside v7x's 64 MiB physical VMEM.
    need = (2 * HW * (c1 + c2) * 4                 # x / out blocks (f32, 2x buffered)
            + 2 * (c1 * c_ + 4 * c_ * c2) * 2      # weights (bf16), conservatively 2x
            + 2 * (c_ + c2) * 4                    # biases (f32)
            + (H + 2 * pad) * WB * c_ * 2          # pool scratch (bf16)
            + HW * 4 * c_ * 2)                     # concat scratch (bf16)
    vmem_limit = int(max(32 << 20, min(2 * need, 48 << 20)))

    out = pl.pallas_call(
        partial(_sppf_kernel, H=H, W=W, k=k, lpad=LPAD),
        out_shape=jax.ShapeDtypeStruct((B, HW, c2), jnp.float32),
        grid=(B,),
        in_specs=[
            pl.BlockSpec((1, HW, c1), lambda b: (b, 0, 0)),      # x rows (f32)
            pl.BlockSpec((c1, c_), lambda b: (0, 0)),            # cv1 weight (bf16)
            pl.BlockSpec((1, c_), lambda b: (0, 0)),             # cv1 folded bias (f32)
            pl.BlockSpec((4 * c_, c2), lambda b: (0, 0)),        # cv2 weight (bf16)
            pl.BlockSpec((1, c2), lambda b: (0, 0)),             # cv2 folded bias (f32)
        ],
        out_specs=pl.BlockSpec((1, HW, c2), lambda b: (b, 0, 0)),
        scratch_shapes=[
            pltpu.VMEM((H + 2 * pad, WB, c_), jnp.bfloat16),     # -inf bordered pool buf
            pltpu.VMEM((H, W, 4 * c_), jnp.bfloat16),            # cv2 concat operand
        ],
        compiler_params=pltpu.CompilerParams(
            dimension_semantics=("parallel",),                   # v7x: 2 TCs split batch
            vmem_limit_bytes=vmem_limit),
    )(x, w1, b1, w2, b2)

    return out.reshape(B, H, W, c2)


def sppf_forward(x_nchw, params, k=5):
    """NCHW interface parity with the PyTorch module.

    Note: the two transposes each cost a full HBM round-trip outside the kernel;
    prefer `sppf_forward_nhwc` when the surrounding graph is NHWC.
    """
    x = jnp.transpose(x_nchw, (0, 2, 3, 1))
    y = sppf_forward_nhwc(x, params, k=k)
    return jnp.transpose(y, (0, 3, 1, 2))


# ---------------------------------------------------------------------------
# Deterministic parameter construction (PyTorch __init__ shapes, eval BN folded)
# ---------------------------------------------------------------------------
def make_params(key, c1, c2, eps=1e-5):
    c_ = c1 // 2
    keys = iter(jax.random.split(key, 16))

    def conv_bn_1x1(cin, cout):
        w = jax.random.normal(next(keys), (cout, cin), jnp.float32) / jnp.sqrt(cin)
        gamma = jax.random.uniform(next(keys), (cout,), jnp.float32, 0.5, 1.5)
        beta = jax.random.normal(next(keys), (cout,), jnp.float32) * 0.1
        mean = jax.random.normal(next(keys), (cout,), jnp.float32) * 0.1
        var = jax.random.uniform(next(keys), (cout,), jnp.float32, 0.5, 1.5)
        s = gamma / jnp.sqrt(var + eps)
        wm = (w * s[:, None]).T          # (cin, cout): BN scale folded into conv
        b = beta - mean * s              # (cout,):     folded BN bias
        return wm, b

    w1, b1 = conv_bn_1x1(c1, c_)             # cv1: c1 -> c_
    w2, b2 = conv_bn_1x1(4 * c_, c2)         # cv2: 4*c_ -> c2
    return {
        'w1': w1.astype(jnp.bfloat16),       # (c1, c_)
        'b1': b1.reshape(1, c_),             # (1, c_)  f32
        # rows [0:c_) -> x, [c_:2c_) -> y1, ... (matches torch.cat order)
        'w2': w2.astype(jnp.bfloat16),       # (4*c_, c2)
        'b2': b2.reshape(1, c2),             # (1, c2)  f32
    }


# ---------------------------------------------------------------------------
# Pure-JAX f32 reference (independent pooling via lax.reduce_window), NHWC
# ---------------------------------------------------------------------------
def ref_forward_nhwc(x, params, k=5):
    B, H, W, c1 = x.shape
    w1 = params['w1'].astype(jnp.float32)
    w2 = params['w2'].astype(jnp.float32)
    b1, b2 = params['b1'], params['b2']
    c_ = w1.shape[1]
    c2 = w2.shape[1]
    pad = k // 2

    z = jnp.dot(x.reshape(-1, c1), w1) + b1
    z = z * jax.nn.sigmoid(z)
    z = z.reshape(B, H, W, c_)

    def pool(v):
        return jax.lax.reduce_window(
            v, -jnp.inf, jax.lax.max,
            window_dimensions=(1, k, k, 1), window_strides=(1, 1, 1, 1),
            padding=((0, 0), (pad, pad), (pad, pad), (0, 0)))

    y1 = pool(z)
    y2 = pool(y1)
    y3 = pool(y2)
    cat = jnp.concatenate([z, y1, y2, y3], axis=-1).reshape(-1, 4 * c_)
    o = jnp.dot(cat, w2) + b2
    o = o * jax.nn.sigmoid(o)
    return o.reshape(B, H, W, c2)


if __name__ == "__main__":
    # Small but TPU-friendly SPPF config: c1=c2=256 (c_=128 -> aligned lane chunks),
    # 16x16 spatial (W multiple of 8 -> tiling-preserving reshapes), k=5.
    B, c1, c2, H, W, k = 2, 256, 256, 16, 16, 5

    key = jax.random.PRNGKey(0)
    kx, kp = jax.random.split(key)
    x = jax.random.normal(kx, (B, H, W, c1), jnp.float32)   # NHWC
    params = make_params(kp, c1, c2)

    out = jax.block_until_ready(sppf_forward_nhwc(x, params, k=k))
    assert out.shape == (B, H, W, c2), out.shape

    ref = jax.block_until_ready(ref_forward_nhwc(x, params, k=k))
    err = float(jnp.max(jnp.abs(out - ref)))
    scale = float(jnp.max(jnp.abs(ref))) + 1e-6
    # bf16 matmul inputs (weights + activations) with f32 accumulation -> ~1e-2 rel.
    assert err / scale < 3e-2, (err, scale)

    print("KERNEL_OK")
</pallas_src>

<mosaic_0001>
module attributes {stable_mosaic.version = 11 : i64} {
  func.func @_sppf_kernel(%arg0: i32, %arg1: memref<1x256x256xf32, #tpu.memory_space<vmem>>, %arg2: memref<256x128xbf16, #tpu.memory_space<vmem>>, %arg3: memref<1x128xf32, #tpu.memory_space<vmem>>, %arg4: memref<512x256xbf16, #tpu.memory_space<vmem>>, %arg5: memref<1x256xf32, #tpu.memory_space<vmem>>, %arg6: memref<1x256x256xf32, #tpu.memory_space<vmem>>, %arg7: memref<20x32x128xbf16, #tpu.memory_space<vmem>>, %arg8: memref<16x16x512xbf16, #tpu.memory_space<vmem>>) attributes {dimension_semantics = [#tpu.dimension_semantics<parallel>], iteration_bounds = array<i64: 2>, scalar_prefetch = 0 : i64, scratch_operands = 2 : i64, tpu.core_type = #tpu.core_type<tc>, window_params = [{transform_indices = @transform_0, window_bounds = array<i64: 1, 256, 256>}, {pipeline_mode = #tpu.pipeline_mode<synchronous>, transform_indices = @transform_1, window_bounds = array<i64: 256, 128>}, {pipeline_mode = #tpu.pipeline_mode<synchronous>, transform_indices = @transform_2, window_bounds = array<i64: 1, 128>}, {pipeline_mode = #tpu.pipeline_mode<synchronous>, transform_indices = @transform_3, window_bounds = array<i64: 512, 256>}, {pipeline_mode = #tpu.pipeline_mode<synchronous>, transform_indices = @transform_4, window_bounds = array<i64: 1, 256>}, {transform_indices = @transform_5, window_bounds = array<i64: 1, 256, 256>}]} {
    %cst = arith.constant 0xFF80 : bf16
    %0 = vector.broadcast %cst : bf16 to vector<20x32x128xbf16>
    %c0 = arith.constant 0 : index
    %c0_0 = arith.constant 0 : index
    %c0_1 = arith.constant 0 : index
    %1 = vector.load %arg7[%c0, %c0_0, %c0_1] : memref<20x32x128xbf16, #tpu.memory_space<vmem>>, vector<20x32x128xbf16>
    tpu.vector_store %arg7[%c0, %c0_0, %c0_1], %0 {strides = array<i32>} : memref<20x32x128xbf16, #tpu.memory_space<vmem>>, vector<20x32x128xbf16>,
    %c0_2 = arith.constant 0 : index
    %c0_3 = arith.constant 0 : index
    %c0_4 = arith.constant 0 : index
    %2 = vector.load %arg1[%c0_2, %c0_3, %c0_4] : memref<1x256x256xf32, #tpu.memory_space<vmem>>, vector<1x256x256xf32>
    %3 = vector.shape_cast %2 : vector<1x256x256xf32> to vector<256x256xf32>
    %4 = arith.truncf %3 : vector<256x256xf32> to vector<256x256xbf16>
    %c0_5 = arith.constant 0 : index
    %c0_6 = arith.constant 0 : index
    %5 = vector.load %arg2[%c0_5, %c0_6] : memref<256x128xbf16, #tpu.memory_space<vmem>>, vector<256x128xbf16>
    %cst_7 = arith.constant dense<0.000000e+00> : vector<256x128xf32>
    %6 = tpu.matmul %4, %5, %cst_7 {dimension_numbers = #tpu.dot_dimension_numbers<[1], [0], [0], [1], [0, 0, 1, 1], [], []>} : vector<256x256xbf16>, vector<256x128xbf16>, vector<256x128xf32> -> vector<256x128xf32>
    %c0_8 = arith.constant 0 : index
    %c0_9 = arith.constant 0 : index
    %7 = vector.load %arg3[%c0_8, %c0_9] : memref<1x128xf32, #tpu.memory_space<vmem>>, vector<1x128xf32>
    %8 = vector.broadcast %7 : vector<1x128xf32> to vector<256x128xf32>
    %9 = arith.addf %6, %8 : vector<256x128xf32>
    %10 = arith.negf %9 : vector<256x128xf32>
    %11 = math.exp %10 : vector<256x128xf32>
    %cst_10 = arith.constant 1.000000e+00 : f32
    %12 = vector.broadcast %cst_10 : f32 to vector<256x128xf32>
    %13 = arith.addf %12, %11 : vector<256x128xf32>
    %14 = arith.divf %12, %13 : vector<256x128xf32>
    %15 = arith.mulf %9, %14 : vector<256x128xf32>
    %16 = arith.truncf %15 : vector<256x128xf32> to vector<256x128xbf16>
    %17 = vector.shape_cast %16 : vector<256x128xbf16> to vector<16x16x128xbf16>
    %c0_11 = arith.constant 0 : index
    %c0_12 = arith.constant 0 : index
    %c0_13 = arith.constant 0 : index
    %18 = vector.load %arg8[%c0_11, %c0_12, %c0_13] : memref<16x16x512xbf16, #tpu.memory_space<vmem>>, vector<16x16x128xbf16>
    tpu.vector_store %arg8[%c0_11, %c0_12, %c0_13], %17 {strides = array<i32>} : memref<16x16x512xbf16, #tpu.memory_space<vmem>>, vector<16x16x128xbf16>,
    %c2 = arith.constant 2 : index
    %c8 = arith.constant 8 : index
    %c0_14 = arith.constant 0 : index
    %19 = vector.load %arg7[%c2, %c8, %c0_14] : memref<20x32x128xbf16, #tpu.memory_space<vmem>>, vector<16x16x128xbf16>
    tpu.vector_store %arg7[%c2, %c8, %c0_14], %17 {strides = array<i32>} : memref<20x32x128xbf16, #tpu.memory_space<vmem>>, vector<16x16x128xbf16>,
    %c0_15 = arith.constant 0 : index
    %c6 = arith.constant 6 : index
    %c0_16 = arith.constant 0 : index
    %20 = vector.load %arg7[%c0_15, %c6, %c0_16] : memref<20x32x128xbf16, #tpu.memory_space<vmem>>, vector<20x16x128xbf16>
    %c0_17 = arith.constant 0 : index
    %c7 = arith.constant 7 : index
    %c0_18 = arith.constant 0 : index
    %21 = vector.load %arg7[%c0_17, %c7, %c0_18] : memref<20x32x128xbf16, #tpu.memory_space<vmem>>, vector<20x16x128xbf16>
    %22 = arith.maximumf %20, %21 : vector<20x16x128xbf16>
    %c0_19 = arith.constant 0 : index
    %c8_20 = arith.constant 8 : index
    %c0_21 = arith.constant 0 : index
    %23 = vector.load %arg7[%c0_19, %c8_20, %c0_21] : memref<20x32x128xbf16, #tpu.memory_space<vmem>>, vector<20x16x128xbf16>
    %24 = arith.maximumf %22, %23 : vector<20x16x128xbf16>
    %c0_22 = arith.constant 0 : index
    %c9 = arith.constant 9 : index
    %c0_23 = arith.constant 0 : index
    %25 = vector.load %arg7[%c0_22, %c9, %c0_23] : memref<20x32x128xbf16, #tpu.memory_space<vmem>>, vector<20x16x128xbf16>
    %26 = arith.maximumf %24, %25 : vector<20x16x128xbf16>
    %c0_24 = arith.constant 0 : index
    %c10 = arith.constant 10 : index
    %c0_25 = arith.constant 0 : index
    %27 = vector.load %arg7[%c0_24, %c10, %c0_25] : memref<20x32x128xbf16, #tpu.memory_space<vmem>>, vector<20x16x128xbf16>
    %28 = arith.maximumf %26, %27 : vector<20x16x128xbf16>
    %29 = vector.extract_strided_slice %28 {offsets = [0, 0, 0], sizes = [18, 16, 128], strides = [1, 1, 1]} : vector<20x16x128xbf16> to vector<18x16x128xbf16>
    %30 = vector.extract_strided_slice %28 {offsets = [1, 0, 0], sizes = [18, 16, 128], strides = [1, 1, 1]} : vector<20x16x128xbf16> to vector<18x16x128xbf16>
    %31 = arith.maximumf %29, %30 : vector<18x16x128xbf16>
    %32 = vector.extract_strided_slice %28 {offsets = [2, 0, 0], sizes = [18, 16, 128], strides = [1, 1, 1]} : vector<20x16x128xbf16> to vector<18x16x128xbf16>
    %33 = arith.maximumf %31, %32 : vector<18x16x128xbf16>
    %34 = vector.extract_strided_slice %33 {offsets = [0, 0, 0], sizes = [16, 16, 128], strides = [1, 1, 1]} : vector<18x16x128xbf16> to vector<16x16x128xbf16>
    %35 = vector.extract_strided_slice %33 {offsets = [2, 0, 0], sizes = [16, 16, 128], strides = [1, 1, 1]} : vector<18x16x128xbf16> to vector<16x16x128xbf16>
    %36 = arith.maximumf %34, %35 : vector<16x16x128xbf16>
    %c0_26 = arith.constant 0 : index
    %c0_27 = arith.constant 0 : index
    %c128 = arith.constant 128 : index
    %37 = vector.load %arg8[%c0_26, %c0_27, %c128] : memref<16x16x512xbf16, #tpu.memory_space<vmem>>, vector<16x16x128xbf16>
    tpu.vector_store %arg8[%c0_26, %c0_27, %c128], %36 {strides = array<i32>} : memref<16x16x512xbf16, #tpu.memory_space<vmem>>, vector<16x16x128xbf16>,
    %c2_28 = arith.constant 2 : index
    %c8_29 = arith.constant 8 : index
    %c0_30 = arith.constant 0 : index
    %38 = vector.load %arg7[%c2_28, %c8_29, %c0_30] : memref<20x32x128xbf16, #tpu.memory_space<vmem>>, vector<16x16x128xbf16>
    tpu.vector_store %arg7[%c2_28, %c8_29, %c0_30], %36 {strides = array<i32>} : memref<20x32x128xbf16, #tpu.memory_space<vmem>>, vector<16x16x128xbf16>,
    %c0_31 = arith.constant 0 : index
    %c6_32 = arith.constant 6 : index
    %c0_33 = arith.constant 0 : index
    %39 = vector.load %arg7[%c0_31, %c6_32, %c0_33] : memref<20x32x128xbf16, #tpu.memory_space<vmem>>, vector<20x16x128xbf16>
    %c0_34 = arith.constant 0 : index
    %c7_35 = arith.constant 7 : index
    %c0_36 = arith.constant 0 : index
    %40 = vector.load %arg7[%c0_34, %c7_35, %c0_36] : memref<20x32x128xbf16, #tpu.memory_space<vmem>>, vector<20x16x128xbf16>
    %41 = arith.maximumf %39, %40 : vector<20x16x128xbf16>
    %c0_37 = arith.constant 0 : index
    %c8_38 = arith.constant 8 : index
    %c0_39 = arith.constant 0 : index
    %42 = vector.load %arg7[%c0_37, %c8_38, %c0_39] : memref<20x32x128xbf16, #tpu.memory_space<vmem>>, vector<20x16x128xbf16>
    %43 = arith.maximumf %41, %42 : vector<20x16x128xbf16>
    %c0_40 = arith.constant 0 : index
    %c9_41 = arith.constant 9 : index
    %c0_42 = arith.constant 0 : index
    %44 = vector.load %arg7[%c0_40, %c9_41, %c0_42] : memref<20x32x128xbf16, #tpu.memory_space<vmem>>, vector<20x16x128xbf16>
    %45 = arith.maximumf %43, %44 : vector<20x16x128xbf16>
    %c0_43 = arith.constant 0 : index
    %c10_44 = arith.constant 10 : index
    %c0_45 = arith.constant 0 : index
    %46 = vector.load %arg7[%c0_43, %c10_44, %c0_45] : memref<20x32x128xbf16, #tpu.memory_space<vmem>>, vector<20x16x128xbf16>
    %47 = arith.maximumf %45, %46 : vector<20x16x128xbf16>
    %48 = vector.extract_strided_slice %47 {offsets = [0, 0, 0], sizes = [18, 16, 128], strides = [1, 1, 1]} : vector<20x16x128xbf16> to vector<18x16x128xbf16>
    %49 = vector.extract_strided_slice %47 {offsets = [1, 0, 0], sizes = [18, 16, 128], strides = [1, 1, 1]} : vector<20x16x128xbf16> to vector<18x16x128xbf16>
    %50 = arith.maximumf %48, %49 : vector<18x16x128xbf16>
    %51 = vector.extract_strided_slice %47 {offsets = [2, 0, 0], sizes = [18, 16, 128], strides = [1, 1, 1]} : vector<20x16x128xbf16> to vector<18x16x128xbf16>
    %52 = arith.maximumf %50, %51 : vector<18x16x128xbf16>
    %53 = vector.extract_strided_slice %52 {offsets = [0, 0, 0], sizes = [16, 16, 128], strides = [1, 1, 1]} : vector<18x16x128xbf16> to vector<16x16x128xbf16>
    %54 = vector.extract_strided_slice %52 {offsets = [2, 0, 0], sizes = [16, 16, 128], strides = [1, 1, 1]} : vector<18x16x128xbf16> to vector<16x16x128xbf16>
    %55 = arith.maximumf %53, %54 : vector<16x16x128xbf16>
    %c0_46 = arith.constant 0 : index
    %c0_47 = arith.constant 0 : index
    %c256 = arith.constant 256 : index
    %56 = vector.load %arg8[%c0_46, %c0_47, %c256] : memref<16x16x512xbf16, #tpu.memory_space<vmem>>, vector<16x16x128xbf16>
    tpu.vector_store %arg8[%c0_46, %c0_47, %c256], %55 {strides = array<i32>} : memref<16x16x512xbf16, #tpu.memory_space<vmem>>, vector<16x16x128xbf16>,
    %c2_48 = arith.constant 2 : index
    %c8_49 = arith.constant 8 : index
    %c0_50 = arith.constant 0 : index
    %57 = vector.load %arg7[%c2_48, %c8_49, %c0_50] : memref<20x32x128xbf16, #tpu.memory_space<vmem>>, vector<16x16x128xbf16>
    tpu.vector_store %arg7[%c2_48, %c8_49, %c0_50], %55 {strides = array<i32>} : memref<20x32x128xbf16, #tpu.memory_space<vmem>>, vector<16x16x128xbf16>,
    %c0_51 = arith.constant 0 : index
    %c6_52 = arith.constant 6 : index
    %c0_53 = arith.constant 0 : index
    %58 = vector.load %arg7[%c0_51, %c6_52, %c0_53] : memref<20x32x128xbf16, #tpu.memory_space<vmem>>, vector<20x16x128xbf16>
    %c0_54 = arith.constant 0 : index
    %c7_55 = arith.constant 7 : index
    %c0_56 = arith.constant 0 : index
    %59 = vector.load %arg7[%c0_54, %c7_55, %c0_56] : memref<20x32x128xbf16, #tpu.memory_space<vmem>>, vector<20x16x128xbf16>
    %60 = arith.maximumf %58, %59 : vector<20x16x128xbf16>
    %c0_57 = arith.constant 0 : index
    %c8_58 = arith.constant 8 : index
    %c0_59 = arith.constant 0 : index
    %61 = vector.load %arg7[%c0_57, %c8_58, %c0_59] : memref<20x32x128xbf16, #tpu.memory_space<vmem>>, vector<20x16x128xbf16>
    %62 = arith.maximumf %60, %61 : vector<20x16x128xbf16>
    %c0_60 = arith.constant 0 : index
    %c9_61 = arith.constant 9 : index
    %c0_62 = arith.constant 0 : index
    %63 = vector.load %arg7[%c0_60, %c9_61, %c0_62] : memref<20x32x128xbf16, #tpu.memory_space<vmem>>, vector<20x16x128xbf16>
    %64 = arith.maximumf %62, %63 : vector<20x16x128xbf16>
    %c0_63 = arith.constant 0 : index
    %c10_64 = arith.constant 10 : index
    %c0_65 = arith.constant 0 : index
    %65 = vector.load %arg7[%c0_63, %c10_64, %c0_65] : memref<20x32x128xbf16, #tpu.memory_space<vmem>>, vector<20x16x128xbf16>
    %66 = arith.maximumf %64, %65 : vector<20x16x128xbf16>
    %67 = vector.extract_strided_slice %66 {offsets = [0, 0, 0], sizes = [18, 16, 128], strides = [1, 1, 1]} : vector<20x16x128xbf16> to vector<18x16x128xbf16>
    %68 = vector.extract_strided_slice %66 {offsets = [1, 0, 0], sizes = [18, 16, 128], strides = [1, 1, 1]} : vector<20x16x128xbf16> to vector<18x16x128xbf16>
    %69 = arith.maximumf %67, %68 : vector<18x16x128xbf16>
    %70 = vector.extract_strided_slice %66 {offsets = [2, 0, 0], sizes = [18, 16, 128], strides = [1, 1, 1]} : vector<20x16x128xbf16> to vector<18x16x128xbf16>
    %71 = arith.maximumf %69, %70 : vector<18x16x128xbf16>
    %72 = vector.extract_strided_slice %71 {offsets = [0, 0, 0], sizes = [16, 16, 128], strides = [1, 1, 1]} : vector<18x16x128xbf16> to vector<16x16x128xbf16>
    %73 = vector.extract_strided_slice %71 {offsets = [2, 0, 0], sizes = [16, 16, 128], strides = [1, 1, 1]} : vector<18x16x128xbf16> to vector<16x16x128xbf16>
    %74 = arith.maximumf %72, %73 : vector<16x16x128xbf16>
    %c0_66 = arith.constant 0 : index
    %c0_67 = arith.constant 0 : index
    %c384 = arith.constant 384 : index
    %75 = vector.load %arg8[%c0_66, %c0_67, %c384] : memref<16x16x512xbf16, #tpu.memory_space<vmem>>, vector<16x16x128xbf16>
    tpu.vector_store %arg8[%c0_66, %c0_67, %c384], %74 {strides = array<i32>} : memref<16x16x512xbf16, #tpu.memory_space<vmem>>, vector<16x16x128xbf16>,
    %c0_68 = arith.constant 0 : index
    %c0_69 = arith.constant 0 : index
    %c0_70 = arith.constant 0 : index
    %76 = vector.load %arg8[%c0_68, %c0_69, %c0_70] : memref<16x16x512xbf16, #tpu.memory_space<vmem>>, vector<16x16x512xbf16>
    %77 = vector.shape_cast %76 : vector<16x16x512xbf16> to vector<256x512xbf16>
    %c0_71 = arith.constant 0 : index
    %c0_72 = arith.constant 0 : index
    %78 = vector.load %arg4[%c0_71, %c0_72] : memref<512x256xbf16, #tpu.memory_space<vmem>>, vector<512x256xbf16>
    %cst_73 = arith.constant dense<0.000000e+00> : vector<256x256xf32>
    %79 = tpu.matmul %77, %78, %cst_73 {dimension_numbers = #tpu.dot_dimension_numbers<[1], [0], [0], [1], [0, 0, 1, 1], [], []>} : vector<256x512xbf16>, vector<512x256xbf16>, vector<256x256xf32> -> vector<256x256xf32>
    %c0_74 = arith.constant 0 : index
    %c0_75 = arith.constant 0 : index
    %80 = vector.load %arg5[%c0_74, %c0_75] : memref<1x256xf32, #tpu.memory_space<vmem>>, vector<1x256xf32>
    %81 = vector.broadcast %80 : vector<1x256xf32> to vector<256x256xf32>
    %82 = arith.addf %79, %81 : vector<256x256xf32>
    %83 = arith.negf %82 : vector<256x256xf32>
    %84 = math.exp %83 : vector<256x256xf32>
    %cst_76 = arith.constant 1.000000e+00 : f32
    %85 = vector.broadcast %cst_76 : f32 to vector<256x256xf32>
    %86 = arith.addf %85, %84 : vector<256x256xf32>
    %87 = arith.divf %85, %86 : vector<256x256xf32>
    %88 = arith.mulf %82, %87 : vector<256x256xf32>
    %c0_77 = arith.constant 0 : index
    %c0_78 = arith.constant 0 : index
    %c0_79 = arith.constant 0 : index
    %89 = vector.load %arg6[%c0_77, %c0_78, %c0_79] : memref<1x256x256xf32, #tpu.memory_space<vmem>>, vector<1x256x256xf32>
    %90 = vector.shape_cast %89 : vector<1x256x256xf32> to vector<256x256xf32>
    %91 = vector.shape_cast %88 : vector<256x256xf32> to vector<1x256x256xf32>
    tpu.vector_store %arg6[%c0_77, %c0_78, %c0_79], %91 {strides = array<i32>} : memref<1x256x256xf32, #tpu.memory_space<vmem>>, vector<1x256x256xf32>,
    return
  }
  func.func @transform_0(%arg0: i32) -> (i32, i32, i32) {
    %c0_i32 = arith.constant 0 : i32
    %c0_i32_0 = arith.constant 0 : i32
    %c0_i32_1 = arith.constant 0 : i32
    return %arg0, %c0_i32, %c0_i32_0 : i32, i32, i32
  }
  func.func @transform_1(%arg0: i32) -> (i32, i32) {
    %c0_i32 = arith.constant 0 : i32
    %c0_i32_0 = arith.constant 0 : i32
    %c0_i32_1 = arith.constant 0 : i32
    return %c0_i32, %c0_i32_0 : i32, i32
  }
  func.func @transform_2(%arg0: i32) -> (i32, i32) {
    %c0_i32 = arith.constant 0 : i32
    %c0_i32_0 = arith.constant 0 : i32
    %c0_i32_1 = arith.constant 0 : i32
    return %c0_i32, %c0_i32_0 : i32, i32
  }
  func.func @transform_3(%arg0: i32) -> (i32, i32) {
    %c0_i32 = arith.constant 0 : i32
    %c0_i32_0 = arith.constant 0 : i32
    %c0_i32_1 = arith.constant 0 : i32
    return %c0_i32, %c0_i32_0 : i32, i32
  }
  func.func @transform_4(%arg0: i32) -> (i32, i32) {
    %c0_i32 = arith.constant 0 : i32
    %c0_i32_0 = arith.constant 0 : i32
    %c0_i32_1 = arith.constant 0 : i32
    return %c0_i32, %c0_i32_0 : i32, i32
  }
  func.func @transform_5(%arg0: i32) -> (i32, i32, i32) {
    %c0_i32 = arith.constant 0 : i32
    %c0_i32_0 = arith.constant 0 : i32
    %c0_i32_1 = arith.constant 0 : i32
    return %arg0, %c0_i32, %c0_i32_0 : i32, i32, i32
  }
}

</mosaic_0001>

<llo_original>
// kernel: tpu_custom_call.1
$region0: #{tpu_custom_call.1}
  #allocation0 [shape = 'u32[]', space=smem, size = 0x4, offset = 0x4, fixed_abs, tag = 'smem constant byte address 0x4 - core index']
  #allocation1 [shape = 'u32[144,128]{1,0:T(1,128)}', space=vmem, size = 0x12000, scoped, tag = 'internal scratch']
  #allocation2 [shape = 'bf16[20,32,128]{2,1,0:T(8,128)(2,1)}', space=vmem, size = 0x28000, scoped, tag = 'scratch operand']
  #allocation3 [shape = 'bf16[16,16,512]{2,1,0:T(8,128)(2,1)}', space=vmem, size = 0x40000, scoped, tag = 'scratch operand']
  %s0 = inlined_call_operand.hbm [shape: f32[2,256,256], index: 0, kind: input, shape index: {}]
  %s1 = inlined_call_operand.hbm [shape: bf16[256,128], index: 1, kind: input, shape index: {}]
  %s2 = inlined_call_operand.vmem [shape: f32[1,128], index: 2, kind: input, shape index: {}]
  %s3 = inlined_call_operand.hbm [shape: bf16[512,256], index: 3, kind: input, shape index: {}]
  %s4 = inlined_call_operand.vmem [shape: f32[1,256], index: 4, kind: input, shape index: {}]
  %s5 = inlined_call_operand.hbm [shape: f32[2,256,256], index: 5, kind: output, shape index: {}]
  %s6 = sld [smem:[#allocation0]]
  $region65: #{tpu_custom_call.1} parent=0
    _
  %s8 = ssub.s32 1, %s6
  %s9 = scalar_select 0, %s8, %s6
  $region1: #{tpu_custom_call.1} parent=0
    #allocation4 [shape = 'u8[524288]{0}', space=vmem, size = 0x80000, scoped, tag = 'input window, operand 0']
    #allocation5 [shape = 's32[2]{0}', space=sflag, size = 0x8, scoped, tag = 'scoped memory for tpu_custom_call.1']
    #allocation6 [shape = 's32[2]{0}', space=sflag, size = 0x8, scoped, tag = 'scoped memory for tpu_custom_call.1']
    #allocation7 [shape = 'u8[65536]{0}', space=vmem, size = 0x10000, scoped, tag = 'input window, operand 1, single buffered']
    #allocation8 [shape = 's32[1]{0}', space=sflag, size = 0x4, scoped, tag = 'scoped memory for tpu_custom_call.1']
    #allocation9 [shape = 'u8[262144]{0}', space=vmem, size = 0x40000, scoped, tag = 'input window, operand 3, single buffered']
    #allocation10 [shape = 'u8[524288]{0}', space=vmem, size = 0x80000, scoped, tag = 'output window, operand 0']
    %10 = vsyncpa [#allocation5], 0
    %s11 = scalar_lea.sflag [#allocation5], 1
    %12 = vsyncpa %s11, 0
    %13 = vsyncpa [#allocation8], 0
    %14 = vsyncpa [#allocation6], 0
    %s15 = scalar_lea.sflag [#allocation6], 1
    %16 = vsyncpa %s15, 0
    loop: start=0, step=1, limit=4
    $region2: #{tpu_custom_call.1} parent=1 // loop_pre_header
      _
    $region3: #{tpu_custom_call.1} parent=1 // loop_header
      %s18 = sphi 0, %s22
      %p19 = scmp.ge.s32.totalorder %s18, 4
      %s28 = sphi 0, %s30
      %s31 = sphi 0, %s28
      %s32 = sphi 0, %s31
      %s48 = sphi 0, %s32
      %s52 = sphi 0, %s52
      %s54 = sphi 0, %s52
      %s55 = sphi 0, %s54
      %s69 = sphi 0, %s55
      %s73 = sphi 0, %s73
      %s75 = sphi 0, %s73
      %s76 = sphi 0, %s75
      %s90 = sphi 0, %s76
      %s94 = sphi 0, %s94
      %s96 = sphi 0, %s94
      %s97 = sphi 0, %s96
      %s111 = sphi 0, %s97
      %s115 = sphi 0, %s115
      %s117 = sphi 0, %s115
      %s118 = sphi 0, %s117
      %s132 = sphi 0, %s118
      %s138 = sphi 0, %s140
      %s141 = sphi 0, %s138
      %s142 = sphi 0, %s141
      %s158 = sphi 0, %s142
    $region4: #{tpu_custom_call.1} parent=1 // loop_header_branch
      %21 = sbr.rel (%p19) target = $region8
    $region5: #{tpu_custom_call.1} parent=1 // loop_body
      %s23 = ssub.s32 %s18, 1
      %s24 = ssub.s32 %s18, 2
      %s25 = sadd.s32 %s18, 1
      %s26 = ssub.s32 %s18, %s25
      %p27 = scmp.eq.s32.totalorder %s26, 0
      %s29 = sadd.s32 %s28, 1
      %s30 = scalar_select %p27, %s28, %s29
      %p33 = pneg %p27
      %p34 = scmp.eq.s32.totalorder %s18, 1
      %p35 = por %p33, %p34
      %p36 = scmp.ne.s32.totalorder %s28, %s31
      %p37 = scmp.eq.s32.totalorder %s18, 0
      %p38 = por %p36, %p37
      %p39 = scmp.ne.s32.totalorder %s28, %s31
      %p40 = scmp.eq.s32.totalorder %s23, 1
      %p41 = por %p39, %p40
      %p42 = scmp.ne.s32.totalorder %s31, %s32
      %p43 = scmp.eq.s32.totalorder %s23, 0
      %p44 = por %p42, %p43
      %p45 = scmp.ne.s32.totalorder %s31, %s32
      %p46 = scmp.eq.s32.totalorder %s24, 1
      %p47 = por %p45, %p46
      %p49 = scmp.ne.s32.totalorder %s32, %s48
      %p50 = scmp.eq.s32.totalorder %s24, 0
      %p51 = por %p49, %p50
      %s53 = sadd.s32 %s52, 1
      %p56 = scmp.eq.s32.totalorder %s18, 1
      %p57 = scmp.ne.s32.totalorder %s52, %s54
      %p58 = scmp.eq.s32.totalorder %s18, 0
      %p59 = por %p57, %p58
      %p60 = scmp.ne.s32.totalorder %s52, %s54
      %p61 = scmp.eq.s32.totalorder %s23, 1
      %p62 = por %p60, %p61
      %p63 = scmp.ne.s32.totalorder %s54, %s55
      %p64 = scmp.eq.s32.totalorder %s23, 0
      %p65 = por %p63, %p64
      %p66 = scmp.ne.s32.totalorder %s54, %s55
      %p67 = scmp.eq.s32.totalorder %s24, 1
      %p68 = por %p66, %p67
      %p70 = scmp.ne.s32.totalorder %s55, %s69
      %p71 = scmp.eq.s32.totalorder %s24, 0
      %p72 = por %p70, %p71
      %s74 = sadd.s32 %s73, 1
      %p77 = scmp.eq.s32.totalorder %s18, 1
      %p78 = scmp.ne.s32.totalorder %s73, %s75
      %p79 = scmp.eq.s32.totalorder %s18, 0
      %p80 = por %p78, %p79
      %p81 = scmp.ne.s32.totalorder %s73, %s75
      %p82 = scmp.eq.s32.totalorder %s23, 1
      %p83 = por %p81, %p82
      %p84 = scmp.ne.s32.totalorder %s75, %s76
      %p85 = scmp.eq.s32.totalorder %s23, 0
      %p86 = por %p84, %p85
      %p87 = scmp.ne.s32.totalorder %s75, %s76
      %p88 = scmp.eq.s32.totalorder %s24, 1
      %p89 = por %p87, %p88
      %p91 = scmp.ne.s32.totalorder %s76, %s90
      %p92 = scmp.eq.s32.totalorder %s24, 0
      %p93 = por %p91, %p92
      %s95 = sadd.s32 %s94, 1
      %p98 = scmp.eq.s32.totalorder %s18, 1
      %p99 = scmp.ne.s32.totalorder %s94, %s96
      %p100 = scmp.eq.s32.totalorder %s18, 0
      %p101 = por %p99, %p100
      %p102 = scmp.ne.s32.totalorder %s94, %s96
      %p103 = scmp.eq.s32.totalorder %s23, 1
      %p104 = por %p102, %p103
      %p105 = scmp.ne.s32.totalorder %s96, %s97
      %p106 = scmp.eq.s32.totalorder %s23, 0
      %p107 = por %p105, %p106
      %p108 = scmp.ne.s32.totalorder %s96, %s97
      %p109 = scmp.eq.s32.totalorder %s24, 1
      %p110 = por %p108, %p109
      %p112 = scmp.ne.s32.totalorder %s97, %s111
      %p113 = scmp.eq.s32.totalorder %s24, 0
      %p114 = por %p112, %p113
      %s116 = sadd.s32 %s115, 1
      %p119 = scmp.eq.s32.totalorder %s18, 1
      %p120 = scmp.ne.s32.totalorder %s115, %s117
      %p121 = scmp.eq.s32.totalorder %s18, 0
      %p122 = por %p120, %p121
      %p123 = scmp.ne.s32.totalorder %s115, %s117
      %p124 = scmp.eq.s32.totalorder %s23, 1
      %p125 = por %p123, %p124
      %p126 = scmp.ne.s32.totalorder %s117, %s118
      %p127 = scmp.eq.s32.totalorder %s23, 0
      %p128 = por %p126, %p127
      %p129 = scmp.ne.s32.totalorder %s117, %s118
      %p130 = scmp.eq.s32.totalorder %s24, 1
      %p131 = por %p129, %p130
      %p133 = scmp.ne.s32.totalorder %s118, %s132
      %p134 = scmp.eq.s32.totalorder %s24, 0
      %p135 = por %p133, %p134
      %s136 = ssub.s32 %s18, %s25
      %p137 = scmp.eq.s32.totalorder %s136, 0
      %s139 = sadd.s32 %s138, 1
      %s140 = scalar_select %p137, %s138, %s139
      %p143 = pneg %p137
      %p144 = scmp.eq.s32.totalorder %s18, 1
      %p145 = por %p143, %p144
      %p146 = scmp.ne.s32.totalorder %s138, %s141
      %p147 = scmp.eq.s32.totalorder %s18, 0
      %p148 = por %p146, %p147
      %p149 = scmp.ne.s32.totalorder %s138, %s141
      %p150 = scmp.eq.s32.totalorder %s23, 1
      %p151 = por %p149, %p150
      %p152 = scmp.ne.s32.totalorder %s141, %s142
      %p153 = scmp.eq.s32.totalorder %s23, 0
      %p154 = por %p152, %p153
      %p155 = scmp.ne.s32.totalorder %s141, %s142
      %p156 = scmp.eq.s32.totalorder %s24, 1
      %p157 = por %p155, %p156
      %p159 = scmp.ne.s32.totalorder %s142, %s158
      %p160 = scmp.eq.s32.totalorder %s24, 0
      %p161 = por %p159, %p160
      %p162 = scmp.le.s32.totalorder 1, %s18
      %p163 = scmp.lt.s32.totalorder %s18, 3
      %p164 = pnand %p162, %p163
      %p165 = pneg %p164
      // Predicated region
      $region9: #{tpu_custom_call.1} parent=5 // pred_check
        _
      $region10: #{tpu_custom_call.1} parent=5 // pred_check_branch
        %167 = sbr.rel (%p164) target = $region12
      $region11: #{tpu_custom_call.1} parent=5 // pred_region
        %s168 = ssub.s32 %s18, 1
        // Predicated region
        $region13: #{tpu_custom_call.1} parent=11 // pred_check
          %p169 = pneg %p65
        $region14: #{tpu_custom_call.1} parent=11 // pred_check_branch
          %171 = sbr.rel (%p169) target = $region16
        $region15: #{tpu_custom_call.1} parent=11 // pred_region
          %s173 = ssub.s32 2048, 2048
          %174 = vsyncadd [#allocation8], %s173
          %s175 = sshll.u32 [#allocation7], 4
          %s176 = int_to_ptr.vmem [resolvable:$true] %s175
          %181 = dma.hbm_to_vmem [thread:$0]  %s1, 2048, %s176, [#allocation8], 64, 64, 4
        $region16: #{tpu_custom_call.1} parent=11 // pred_fallthru
          _
        // Predicated region
        $region17: #{tpu_custom_call.1} parent=11 // pred_check
          %p182 = pneg %p86
        $region18: #{tpu_custom_call.1} parent=11 // pred_check_branch
          %184 = sbr.rel (%p182) target = $region20
        $region19: #{tpu_custom_call.1} parent=11 // pred_region
          _
        $region20: #{tpu_custom_call.1} parent=11 // pred_fallthru
          _
        // Predicated region
        $region21: #{tpu_custom_call.1} parent=11 // pred_check
          %p185 = pneg %p107
        $region22: #{tpu_custom_call.1} parent=11 // pred_check_branch
          %187 = sbr.rel (%p185) target = $region24
        $region23: #{tpu_custom_call.1} parent=11 // pred_region
          %s189 = ssub.s32 8192, 8192
          %190 = vsyncadd [#allocation8], %s189
          %s191 = sshll.u32 [#allocation9], 4
          %s192 = int_to_ptr.vmem [resolvable:$true] %s191
          %197 = dma.hbm_to_vmem [thread:$0]  %s3, 8192, %s192, [#allocation8], 128, 128, 8
        $region24: #{tpu_custom_call.1} parent=11 // pred_fallthru
          _
        // Predicated region
        $region25: #{tpu_custom_call.1} parent=11 // pred_check
          %p198 = pneg %p128
        $region26: #{tpu_custom_call.1} parent=11 // pred_check_branch
          %200 = sbr.rel (%p198) target = $region28
        $region27: #{tpu_custom_call.1} parent=11 // pred_region
          _
        $region28: #{tpu_custom_call.1} parent=11 // pred_fallthru
          _
      $region12: #{tpu_custom_call.1} parent=5 // pred_fallthru
        _
      %p201 = scmp.lt.s32.totalorder %s18, 2
      // Predicated region
      $region29: #{tpu_custom_call.1} parent=5 // pred_check
        %p202 = pneg %p201
      $region30: #{tpu_custom_call.1} parent=5 // pred_check_branch
        %204 = sbr.rel (%p202) target = $region32
      $region31: #{tpu_custom_call.1} parent=5 // pred_region
        // Predicated region
        $region33: #{tpu_custom_call.1} parent=31 // pred_check
          %p205 = pneg %p38
        $region34: #{tpu_custom_call.1} parent=31 // pred_check_branch
          %207 = sbr.rel (%p205) target = $region36
        $region35: #{tpu_custom_call.1} parent=31 // pred_region
          %s208 = sand.u32 %s28, 1
          %s209 = scalar_lea.sflag [#allocation5], %s208
          %s210 = sand.u32 %s28, 1
          %s211 = smul.addr %s210, 512
          %s212 = scalar_lea.vmem [#allocation4], %s211
          %s214 = ssub.s32 8192, 8192
          %215 = vsyncadd %s209, %s214
          %s216 = smul.addr %s18, 64
          %s217 = smul.addr %s216, 128
          %s218 = scalar_lea.hbm %s0, %s217
          %s219 = sshll.u32 %s212, 4
          %s220 = int_to_ptr.vmem [resolvable:$true] %s219
          %225 = dma.hbm_to_vmem [thread:$0]  %s218, 8192, %s220, %s209, 256, 256, 16
        $region36: #{tpu_custom_call.1} parent=31 // pred_fallthru
          _
      $region32: #{tpu_custom_call.1} parent=5 // pred_fallthru
        _
      %p226 = scmp.le.s32.totalorder 1, %s18
      %p227 = scmp.lt.s32.totalorder %s18, 3
      %p228 = pnand %p226, %p227
      %p229 = pneg %p228
      // Predicated region
      $region37: #{tpu_custom_call.1} parent=5 // pred_check
        _
      $region38: #{tpu_custom_call.1} parent=5 // pred_check_branch
        %231 = sbr.rel (%p228) target = $region40
      $region39: #{tpu_custom_call.1} parent=5 // pred_region
        %s232 = ssub.s32 %s18, 1
        %s233 = sand.u32 %s31, 1
        %s234 = scalar_lea.sflag [#allocation5], %s233
        %s235 = sand.u32 %s31, 1
        %s236 = smul.addr %s235, 512
        %s237 = scalar_lea.vmem [#allocation4], %s236
        // Predicated region
        $region41: #{tpu_custom_call.1} parent=39 // pred_check
          %p238 = pneg %p44
        $region42: #{tpu_custom_call.1} parent=39 // pred_check_branch
          %240 = sbr.rel (%p238) target = $region44
        $region43: #{tpu_custom_call.1} parent=39 // pred_region
          %241 = dma.done %s234, 8192
        $region44: #{tpu_custom_call.1} parent=39 // pred_fallthru
          _
        // Predicated region
        $region45: #{tpu_custom_call.1} parent=39 // pred_check
          %p242 = pneg %p65
        $region46: #{tpu_custom_call.1} parent=39 // pred_check_branch
          %244 = sbr.rel (%p242) target = $region48
        $region47: #{tpu_custom_call.1} parent=39 // pred_region
          %245 = dma.done [#allocation8], 2048
        $region48: #{tpu_custom_call.1} parent=39 // pred_fallthru
          _
        // Predicated region
        $region49: #{tpu_custom_call.1} parent=39 // pred_check
          %p246 = pneg %p107
        $region50: #{tpu_custom_call.1} parent=39 // pred_check_branch
          %248 = sbr.rel (%p246) target = $region52
        $region51: #{tpu_custom_call.1} parent=39 // pred_region
          %249 = dma.done [#allocation8], 8192
        $region52: #{tpu_custom_call.1} parent=39 // pred_fallthru
          _
        %s250 = sand.u32 %s31, 1
        %s251 = scalar_lea.sflag [#allocation5], %s250
        %s252 = sand.u32 %s31, 1
        %s253 = smul.addr %s252, 512
        %s254 = scalar_lea.vmem [#allocation4], %s253
        %p255 = pneg %p44
        %p256 = pneg %p41
        %p257 = pneg %p65
        %p258 = pneg %p62
        %p259 = pneg %p86
        %p260 = pneg %p83
        %p261 = pneg %p107
        %p262 = pneg %p104
        %p263 = pneg %p128
        %p264 = pneg %p125
        %p265 = pneg %p154
        %p266 = pneg %p151
        %s267 = sand.u32 %s141, 1
        %s268 = scalar_lea.sflag [#allocation6], %s267
        %s269 = sand.u32 %s141, 1
        %s270 = smul.addr %s269, 512
        %s271 = scalar_lea.vmem [#allocation10], %s270
        %274 = vst [vmem:[#allocation2] sm:$0xf] 4286644096
        %275 = vst [vmem:[#allocation2 + $0x4] sm:$0xf] 4286644096
        %276 = vst [vmem:[#allocation2 + $0x8] sm:$0xf] 4286644096
        %277 = vst [vmem:[#allocation2 + $0xc] sm:$0xf] 4286644096
        %278 = vst [vmem:[#allocation2 + $0x10] sm:$0xf] 4286644096
        %279 = vst [vmem:[#allocation2 + $0x14] sm:$0xf] 4286644096
        %280 = vst [vmem:[#allocation2 + $0x18] sm:$0xf] 4286644096
        %281 = vst [vmem:[#allocation2 + $0x1c] sm:$0xf] 4286644096
        %282 = vst [vmem:[#allocation2 + $0x20] sm:$0xf] 4286644096
        %283 = vst [vmem:[#allocation2 + $0x24] sm:$0xf] 4286644096
        %284 = vst [vmem:[#allocation2 + $0x28] sm:$0xf] 4286644096
        %285 = vst [vmem:[#allocation2 + $0x2c] sm:$0xf] 4286644096
        %286 = vst [vmem:[#allocation2 + $0x30] sm:$0xf] 4286644096
        %287 = vst [vmem:[#allocation2 + $0x34] sm:$0xf] 4286644096
        %288 = vst [vmem:[#allocation2 + $0x38] sm:$0xf] 4286644096
        %289 = vst [vmem:[#allocation2 + $0x3c] sm:$0xf] 4286644096
        %290 = vst [vmem:[#allocation2 + $0x40] sm:$0xf] 4286644096
        %291 = vst [vmem:[#allocation2 + $0x44] sm:$0xf] 4286644096
        %292 = vst [vmem:[#allocation2 + $0x48] sm:$0xf] 4286644096
        %293 = vst [vmem:[#allocation2 + $0x4c] sm:$0xf] 4286644096
        %294 = vst [vmem:[#allocation2 + $0x50] sm:$0xf] 4286644096
        %295 = vst [vmem:[#allocation2 + $0x54] sm:$0xf] 4286644096
        %296 = vst [vmem:[#allocation2 + $0x58] sm:$0xf] 4286644096
        %297 = vst [vmem:[#allocation2 + $0x5c] sm:$0xf] 4286644096
        %298 = vst [vmem:[#allocation2 + $0x60] sm:$0xf] 4286644096
        %299 = vst [vmem:[#allocation2 + $0x64] sm:$0xf] 4286644096
        %300 = vst [vmem:[#allocation2 + $0x68] sm:$0xf] 4286644096
        %301 = vst [vmem:[#allocation2 + $0x6c] sm:$0xf] 4286644096
        %302 = vst [vmem:[#allocation2 + $0x70] sm:$0xf] 4286644096
        %303 = vst [vmem:[#allocation2 + $0x74] sm:$0xf] 4286644096
        %304 = vst [vmem:[#allocation2 + $0x78] sm:$0xf] 4286644096
        %305 = vst [vmem:[#allocation2 + $0x7c] sm:$0xf] 4286644096
        %306 = vst [vmem:[#allocation2 + $0x80] sm:$0xf] 4286644096
        %307 = vst [vmem:[#allocation2 + $0x84] sm:$0xf] 4286644096
        %308 = vst [vmem:[#allocation2 + $0x88] sm:$0xf] 4286644096
        %309 = vst [vmem:[#allocation2 + $0x8c] sm:$0xf] 4286644096
        %310 = vst [vmem:[#allocation2 + $0x90] sm:$0xf] 4286644096
        %311 = vst [vmem:[#allocation2 + $0x94] sm:$0xf] 4286644096
        %312 = vst [vmem:[#allocation2 + $0x98] sm:$0xf] 4286644096
        %313 = vst [vmem:[#allocation2 + $0x9c] sm:$0xf] 4286644096
        %314 = vst [vmem:[#allocation2 + $0xa0] sm:$0xf] 4286644096
        %315 = vst [vmem:[#allocation2 + $0xa4] sm:$0xf] 4286644096
        %316 = vst [vmem:[#allocation2 + $0xa8] sm:$0xf] 4286644096
        %317 = vst [vmem:[#allocation2 + $0xac] sm:$0xf] 4286644096
        %318 = vst [vmem:[#allocation2 + $0xb0] sm:$0xf] 4286644096
        %319 = vst [vmem:[#allocation2 + $0xb4] sm:$0xf] 4286644096
        %320 = vst [vmem:[#allocation2 + $0xb8] sm:$0xf] 4286644096
        %321 = vst [vmem:[#allocation2 + $0xbc] sm:$0xf] 4286644096
        %322 = vst [vmem:[#allocation2 + $0xc0] sm:$0xf] 4286644096
        %323 = vst [vmem:[#allocation2 + $0xc4] sm:$0xf] 4286644096
        %324 = vst [vmem:[#allocation2 + $0xc8] sm:$0xf] 4286644096
        %325 = vst [vmem:[#allocation2 + $0xcc] sm:$0xf] 4286644096
        %326 = vst [vmem:[#allocation2 + $0xd0] sm:$0xf] 4286644096
        %327 = vst [vmem:[#allocation2 + $0xd4] sm:$0xf] 4286644096
        %328 = vst [vmem:[#allocation2 + $0xd8] sm:$0xf] 4286644096
        %329 = vst [vmem:[#allocation2 + $0xdc] sm:$0xf] 4286644096
        %330 = vst [vmem:[#allocation2 + $0xe0] sm:$0xf] 4286644096
        %331 = vst [vmem:[#allocation2 + $0xe4] sm:$0xf] 4286644096
        %332 = vst [vmem:[#allocation2 + $0xe8] sm:$0xf] 4286644096
        %333 = vst [vmem:[#allocation2 + $0xec] sm:$0xf] 4286644096
        %334 = vst [vmem:[#allocation2 + $0xf0] sm:$0xf] 4286644096
        %335 = vst [vmem:[#allocation2 + $0xf4] sm:$0xf] 4286644096
        %336 = vst [vmem:[#allocation2 + $0xf8] sm:$0xf] 4286644096
        %337 = vst [vmem:[#allocation2 + $0xfc] sm:$0xf] 4286644096
        %338 = vst [vmem:[#allocation2 + $0x100] sm:$0xf] 4286644096
        %339 = vst [vmem:[#allocation2 + $0x104] sm:$0xf] 4286644096
        %340 = vst [vmem:[#allocation2 + $0x108] sm:$0xf] 4286644096
        %341 = vst [vmem:[#allocation2 + $0x10c] sm:$0xf] 4286644096
        %342 = vst [vmem:[#allocation2 + $0x110] sm:$0xf] 4286644096
        %343 = vst [vmem:[#allocation2 + $0x114] sm:$0xf] 4286644096
        %344 = vst [vmem:[#allocation2 + $0x118] sm:$0xf] 4286644096
        %345 = vst [vmem:[#allocation2 + $0x11c] sm:$0xf] 4286644096
        %346 = vst [vmem:[#allocation2 + $0x120] sm:$0xf] 4286644096
        %347 = vst [vmem:[#allocation2 + $0x124] sm:$0xf] 4286644096
        %348 = vst [vmem:[#allocation2 + $0x128] sm:$0xf] 4286644096
        %349 = vst [vmem:[#allocation2 + $0x12c] sm:$0xf] 4286644096
        %350 = vst [vmem:[#allocation2 + $0x130] sm:$0xf] 4286644096
        %351 = vst [vmem:[#allocation2 + $0x134] sm:$0xf] 4286644096
        %352 = vst [vmem:[#allocation2 + $0x138] sm:$0xf] 4286644096
        %353 = vst [vmem:[#allocation2 + $0x13c] sm:$0xf] 4286644096
        %v354 = vld [vmem:[%s237] sm:$0xff]
        %v355 = vld [vmem:[%s237 + $0x8] sm:$0xff]
        %v356 = vld [vmem:[%s237 + $0x10] sm:$0xff]
        %v357 = vld [vmem:[%s237 + $0x18] sm:$0xff]
        %v358 = vld [vmem:[%s237 + $0x20] sm:$0xff]
        %v359 = vld [vmem:[%s237 + $0x28] sm:$0xff]
        %v360 = vld [vmem:[%s237 + $0x30] sm:$0xff]
        %v361 = vld [vmem:[%s237 + $0x38] sm:$0xff]
        %v362 = vld [vmem:[%s237 + $0x40] sm:$0xff]
        %v363 = vld [vmem:[%s237 + $0x48] sm:$0xff]
        %v364 = vld [vmem:[%s237 + $0x50] sm:$0xff]
        %v365 = vld [vmem:[%s237 + $0x58] sm:$0xff]
        %v366 = vld [vmem:[%s237 + $0x60] sm:$0xff]
        %v367 = vld [vmem:[%s237 + $0x68] sm:$0xff]
        %v368 = vld [vmem:[%s237 + $0x70] sm:$0xff]
        %v369 = vld [vmem:[%s237 + $0x78] sm:$0xff]
        %v370 = vld [vmem:[%s237 + $0x80] sm:$0xff]
        %v371 = vld [vmem:[%s237 + $0x88] sm:$0xff]
        %v372 = vld [vmem:[%s237 + $0x90] sm:$0xff]
        %v373 = vld [vmem:[%s237 + $0x98] sm:$0xff]
        %v374 = vld [vmem:[%s237 + $0xa0] sm:$0xff]
        %v375 = vld [vmem:[%s237 + $0xa8] sm:$0xff]
        %v376 = vld [vmem:[%s237 + $0xb0] sm:$0xff]
        %v377 = vld [vmem:[%s237 + $0xb8] sm:$0xff]
        %v378 = vld [vmem:[%s237 + $0xc0] sm:$0xff]
        %v379 = vld [vmem:[%s237 + $0xc8] sm:$0xff]
        %v380 = vld [vmem:[%s237 + $0xd0] sm:$0xff]
        %v381 = vld [vmem:[%s237 + $0xd8] sm:$0xff]
        %v382 = vld [vmem:[%s237 + $0xe0] sm:$0xff]
        %v383 = vld [vmem:[%s237 + $0xe8] sm:$0xff]
        %v384 = vld [vmem:[%s237 + $0xf0] sm:$0xff]
        %v385 = vld [vmem:[%s237 + $0xf8] sm:$0xff]
        %v386 = vld [vmem:[%s237 + $0x100] sm:$0xff]
        %v387 = vld [vmem:[%s237 + $0x108] sm:$0xff]
        %v388 = vld [vmem:[%s237 + $0x110] sm:$0xff]
        %v389 = vld [vmem:[%s237 + $0x118] sm:$0xff]
        %v390 = vld [vmem:[%s237 + $0x120] sm:$0xff]
        %v391 = vld [vmem:[%s237 + $0x128] sm:$0xff]
        %v392 = vld [vmem:[%s237 + $0x130] sm:$0xff]
        %v393 = vld [vmem:[%s237 + $0x138] sm:$0xff]
        %v394 = vld [vmem:[%s237 + $0x140] sm:$0xff]
        %v395 = vld [vmem:[%s237 + $0x148] sm:$0xff]
        %v396 = vld [vmem:[%s237 + $0x150] sm:$0xff]
        %v397 = vld [vmem:[%s237 + $0x158] sm:$0xff]
        %v398 = vld [vmem:[%s237 + $0x160] sm:$0xff]
        %v399 = vld [vmem:[%s237 + $0x168] sm:$0xff]
        %v400 = vld [vmem:[%s237 + $0x170] sm:$0xff]
        %v401 = vld [vmem:[%s237 + $0x178] sm:$0xff]
        %v402 = vld [vmem:[%s237 + $0x180] sm:$0xff]
        %v403 = vld [vmem:[%s237 + $0x188] sm:$0xff]
        %v404 = vld [vmem:[%s237 + $0x190] sm:$0xff]
        %v405 = vld [vmem:[%s237 + $0x198] sm:$0xff]
        %v406 = vld [vmem:[%s237 + $0x1a0] sm:$0xff]
        %v407 = vld [vmem:[%s237 + $0x1a8] sm:$0xff]
        %v408 = vld [vmem:[%s237 + $0x1b0] sm:$0xff]
        %v409 = vld [vmem:[%s237 + $0x1b8] sm:$0xff]
        %v410 = vld [vmem:[%s237 + $0x1c0] sm:$0xff]
        %v411 = vld [vmem:[%s237 + $0x1c8] sm:$0xff]
        %v412 = vld [vmem:[%s237 + $0x1d0] sm:$0xff]
        %v413 = vld [vmem:[%s237 + $0x1d8] sm:$0xff]
        %v414 = vld [vmem:[%s237 + $0x1e0] sm:$0xff]
        %v415 = vld [vmem:[%s237 + $0x1e8] sm:$0xff]
        %v416 = vld [vmem:[%s237 + $0x1f0] sm:$0xff]
        %v417 = vld [vmem:[%s237 + $0x1f8] sm:$0xff]
        %v418 = vpack.c.bf16 %v356, %v354
        %v419 = vpack.c.bf16 %v357, %v355
        %v420 = vpack.c.bf16 %v360, %v358
        %v421 = vpack.c.bf16 %v361, %v359
        %v422 = vpack.c.bf16 %v364, %v362
        %v423 = vpack.c.bf16 %v365, %v363
        %v424 = vpack.c.bf16 %v368, %v366
        %v425 = vpack.c.bf16 %v369, %v367
        %v426 = vpack.c.bf16 %v372, %v370
        %v427 = vpack.c.bf16 %v373, %v371
        %v428 = vpack.c.bf16 %v376, %v374
        %v429 = vpack.c.bf16 %v377, %v375
        %v430 = vpack.c.bf16 %v380, %v378
        %v431 = vpack.c.bf16 %v381, %v379
        %v432 = vpack.c.bf16 %v384, %v382
        %v433 = vpack.c.bf16 %v385, %v383
        %v434 = vpack.c.bf16 %v388, %v386
        %v435 = vpack.c.bf16 %v389, %v387
        %v436 = vpack.c.bf16 %v392, %v390
        %v437 = vpack.c.bf16 %v393, %v391
        %v438 = vpack.c.bf16 %v396, %v394
        %v439 = vpack.c.bf16 %v397, %v395
        %v440 = vpack.c.bf16 %v400, %v398
        %v441 = vpack.c.bf16 %v401, %v399
        %v442 = vpack.c.bf16 %v404, %v402
        %v443 = vpack.c.bf16 %v405, %v403
        %v444 = vpack.c.bf16 %v408, %v406
        %v445 = vpack.c.bf16 %v409, %v407
        %v446 = vpack.c.bf16 %v412, %v410
        %v447 = vpack.c.bf16 %v413, %v411
        %v448 = vpack.c.bf16 %v416, %v414
        %v449 = vpack.c.bf16 %v417, %v415
        %v450 = vld [vmem:[#allocation7] sm:$0xf]
        %v451 = vld [vmem:[#allocation7 + $0x4] sm:$0xf]
        %v452 = vld [vmem:[#allocation7 + $0x8] sm:$0xf]
        %v453 = vld [vmem:[#allocation7 + $0xc] sm:$0xf]
        %v454 = vld [vmem:[#allocation7 + $0x10] sm:$0xf]
        %v455 = vld [vmem:[#allocation7 + $0x14] sm:$0xf]
        %v456 = vld [vmem:[#allocation7 + $0x18] sm:$0xf]
        %v457 = vld [vmem:[#allocation7 + $0x1c] sm:$0xf]
        %v458 = vld [vmem:[#allocation7 + $0x20] sm:$0xf]
        %v459 = vld [vmem:[#allocation7 + $0x24] sm:$0xf]
        %v460 = vld [vmem:[#allocation7 + $0x28] sm:$0xf]
        %v461 = vld [vmem:[#allocation7 + $0x2c] sm:$0xf]
        %v462 = vld [vmem:[#allocation7 + $0x30] sm:$0xf]
        %v463 = vld [vmem:[#allocation7 + $0x34] sm:$0xf]
        %v464 = vld [vmem:[#allocation7 + $0x38] sm:$0xf]
        %v465 = vld [vmem:[#allocation7 + $0x3c] sm:$0xf]
        %v466 = vld [vmem:[#allocation7 + $0x40] sm:$0xf]
        %v467 = vld [vmem:[#allocation7 + $0x44] sm:$0xf]
        %v468 = vld [vmem:[#allocation7 + $0x48] sm:$0xf]
        %v469 = vld [vmem:[#allocation7 + $0x4c] sm:$0xf]
        %v470 = vld [vmem:[#allocation7 + $0x50] sm:$0xf]
        %v471 = vld [vmem:[#allocation7 + $0x54] sm:$0xf]
        %v472 = vld [vmem:[#allocation7 + $0x58] sm:$0xf]
        %v473 = vld [vmem:[#allocation7 + $0x5c] sm:$0xf]
        %v474 = vld [vmem:[#allocation7 + $0x60] sm:$0xf]
        %v475 = vld [vmem:[#allocation7 + $0x64] sm:$0xf]
        %v476 = vld [vmem:[#allocation7 + $0x68] sm:$0xf]
        %v477 = vld [vmem:[#allocation7 + $0x6c] sm:$0xf]
        %v478 = vld [vmem:[#allocation7 + $0x70] sm:$0xf]
        %v479 = vld [vmem:[#allocation7 + $0x74] sm:$0xf]
        %v480 = vld [vmem:[#allocation7 + $0x78] sm:$0xf]
        %v481 = vld [vmem:[#allocation7 + $0x7c] sm:$0xf]
        %v482 = vld [vmem:[%s2] sm:$0x1]
        %v484 = vlaneseq
        %v485 = vshrl.u32 %v484, 7
        %v486 = vsub.s32 0, %v485
        %v487 = vrot.slane %v482, %v486
        %v521 = vunpack.c.l.b16 %v450
        %v522 = vunpack.c.l.b16 %v451
        %v523 = vunpack.c.l.b16 %v452
        %v524 = vunpack.c.l.b16 %v453
        %v525 = vunpack.c.l.b16 %v454
        %v526 = vunpack.c.l.b16 %v455
        %v527 = vunpack.c.l.b16 %v456
        %v528 = vunpack.c.l.b16 %v457
        %v529 = vunpack.c.l.b16 %v458
        %v530 = vunpack.c.l.b16 %v459
        %v531 = vunpack.c.l.b16 %v460
        %v532 = vunpack.c.l.b16 %v461
        %v533 = vunpack.c.l.b16 %v462
        %v534 = vunpack.c.l.b16 %v463
        %v535 = vunpack.c.l.b16 %v464
        %v536 = vunpack.c.l.b16 %v465
        %v537 = vunpack.c.l.b16 %v466
        %v538 = vunpack.c.l.b16 %v467
        %v539 = vunpack.c.l.b16 %v468
        %v540 = vunpack.c.l.b16 %v469
        %v541 = vunpack.c.l.b16 %v470
        %v542 = vunpack.c.l.b16 %v471
        %v543 = vunpack.c.l.b16 %v472
        %v544 = vunpack.c.l.b16 %v473
        %v545 = vunpack.c.l.b16 %v474
        %v546 = vunpack.c.l.b16 %v475
        %v547 = vunpack.c.l.b16 %v476
        %v548 = vunpack.c.l.b16 %v477
        %v549 = vunpack.c.l.b16 %v478
        %v550 = vunpack.c.l.b16 %v479
        %v551 = vunpack.c.l.b16 %v480
        %v552 = vunpack.c.l.b16 %v481
        %v553 = vpack.c.b16 %v522, %v521
        %v554 = vpack.c.b16 %v524, %v523
        %v555 = vpack.c.b16 %v526, %v525
        %v556 = vpack.c.b16 %v528, %v527
        %v557 = vpack.c.b16 %v530, %v529
        %v558 = vpack.c.b16 %v532, %v531
        %v559 = vpack.c.b16 %v534, %v533
        %v560 = vpack.c.b16 %v536, %v535
        %v561 = vpack.c.b16 %v538, %v537
        %v562 = vpack.c.b16 %v540, %v539
        %v563 = vpack.c.b16 %v542, %v541
        %v564 = vpack.c.b16 %v544, %v543
        %v565 = vpack.c.b16 %v546, %v545
        %v566 = vpack.c.b16 %v548, %v547
        %v567 = vpack.c.b16 %v550, %v549
        %v568 = vpack.c.b16 %v552, %v551
        %585 = vmatprep.subr.bf16.mxu0 0
        %586 = vmatpush1.bf16.msra.mxu0 %v560
        %587 = vmatprep.subr.bf16.mxu0 0
        %588 = vmatpush1.bf16.msra.mxu0 %v559
        %589 = vmatprep.subr.bf16.mxu0 0
        %590 = vmatpush1.bf16.msra.mxu0 %v558
        %591 = vmatprep.subr.bf16.mxu0 0
        %592 = vmatpush1.bf16.msra.mxu0 %v557
        %593 = vmatprep.subr.bf16.mxu0 0
        %594 = vmatpush1.bf16.msra.mxu0 %v556
        %595 = vmatprep.subr.bf16.mxu0 0
        %596 = vmatpush1.bf16.msra.mxu0 %v555
        %597 = vmatprep.subr.bf16.mxu0 0
        %598 = vmatpush1.bf16.msra.mxu0 %v554
        %599 = vmatprep.subr.bf16.mxu0 0
        %600 = vmatpush1.bf16.msra.mxu0 %v553
        %601 = vmatprep.subr.bf16.mxu0 0
        %602 = vmatpush2.bf16.msra.mxu0 %v568
        %603 = vmatprep.subr.bf16.mxu0 0
        %604 = vmatpush2.bf16.msra.mxu0 %v567
        %605 = vmatprep.subr.bf16.mxu0 0
        %606 = vmatpush2.bf16.msra.mxu0 %v566
        %607 = vmatprep.subr.bf16.mxu0 0
        %608 = vmatpush2.bf16.msra.mxu0 %v565
        %609 = vmatprep.subr.bf16.mxu0 0
        %610 = vmatpush2.bf16.msra.mxu0 %v564
        %611 = vmatprep.subr.bf16.mxu0 0
        %612 = vmatpush2.bf16.msra.mxu0 %v563
        %613 = vmatprep.subr.bf16.mxu0 0
        %614 = vmatpush2.bf16.msra.mxu0 %v562
        %615 = vmatprep.subr.bf16.mxu0 0
        %616 = vmatpush2.bf16.msra.mxu0 %v561
        %617 = vmatprep.mubr.bf16.mxu0 %v419
        %618 = vmatmul.mubr.bf16.gmra.mxu0 %v418
        %v619 = vpop.f32.mrf.mxu0
        %v620 = vadd.f32 %v487, %v619
        %v621 = vpop.f32.mrf.mxu0
        %v622 = vpop.f32.mrf.mxu0
        %v623 = vadd.f32 %v487, %v622
        %v624 = vpop.f32.mrf.mxu0
        %625 = vmatprep.mubr.bf16.mxu0 %v421
        %626 = vmatmul.mubr.bf16.gmra.mxu0 %v420
        %v627 = vpop.f32.mrf.mxu0
        %v628 = vadd.f32 %v487, %v627
        %v629 = vpop.f32.mrf.mxu0
        %v630 = vpop.f32.mrf.mxu0
        %v631 = vadd.f32 %v487, %v630
        %v632 = vpop.f32.mrf.mxu0
        %633 = vmatprep.mubr.bf16.mxu0 %v423
        %634 = vmatmul.mubr.bf16.gmra.mxu0 %v422
        %v635 = vpop.f32.mrf.mxu0
        %v636 = vadd.f32 %v487, %v635
        %v637 = vpop.f32.mrf.mxu0
        %v638 = vpop.f32.mrf.mxu0
        %v639 = vadd.f32 %v487, %v638
        %v640 = vpop.f32.mrf.mxu0
        %641 = vmatprep.mubr.bf16.mxu0 %v425
        %642 = vmatmul.mubr.bf16.gmra.mxu0 %v424
        %v643 = vpop.f32.mrf.mxu0
        %v644 = vadd.f32 %v487, %v643
        %v645 = vpop.f32.mrf.mxu0
        %v646 = vpop.f32.mrf.mxu0
        %v647 = vadd.f32 %v487, %v646
        %v648 = vpop.f32.mrf.mxu0
        %649 = vmatprep.mubr.bf16.mxu0 %v427
        %650 = vmatmul.mubr.bf16.gmra.mxu0 %v426
        %v651 = vpop.f32.mrf.mxu0
        %v652 = vadd.f32 %v487, %v651
        %v653 = vpop.f32.mrf.mxu0
        %v654 = vpop.f32.mrf.mxu0
        %v655 = vadd.f32 %v487, %v654
        %v656 = vpop.f32.mrf.mxu0
        %657 = vmatprep.mubr.bf16.mxu0 %v429
        %658 = vmatmul.mubr.bf16.gmra.mxu0 %v428
        %v659 = vpop.f32.mrf.mxu0
        %v660 = vadd.f32 %v487, %v659
        %v661 = vpop.f32.mrf.mxu0
        %v662 = vpop.f32.mrf.mxu0
        %v663 = vadd.f32 %v487, %v662
        %v664 = vpop.f32.mrf.mxu0
        %665 = vmatprep.mubr.bf16.mxu0 %v431
        %666 = vmatmul.mubr.bf16.gmra.mxu0 %v430
        %v667 = vpop.f32.mrf.mxu0
        %v668 = vadd.f32 %v487, %v667
        %v669 = vpop.f32.mrf.mxu0
        %v670 = vpop.f32.mrf.mxu0
        %v671 = vadd.f32 %v487, %v670
        %v672 = vpop.f32.mrf.mxu0
        %673 = vmatprep.mubr.bf16.mxu0 %v433
        %674 = vmatmul.mubr.bf16.gmra.mxu0 %v432
        %v675 = vpop.f32.mrf.mxu0
        %v676 = vadd.f32 %v487, %v675
        %v677 = vpop.f32.mrf.mxu0
        %v678 = vpop.f32.mrf.mxu0
        %v679 = vadd.f32 %v487, %v678
        %v680 = vpop.f32.mrf.mxu0
        %681 = vmatprep.mubr.bf16.mxu0 %v435
        %682 = vmatmul.mubr.bf16.gmra.mxu0 %v434
        %v683 = vpop.f32.mrf.mxu0
        %v684 = vadd.f32 %v487, %v683
        %v685 = vpop.f32.mrf.mxu0
        %v686 = vpop.f32.mrf.mxu0
        %v687 = vadd.f32 %v487, %v686
        %v688 = vpop.f32.mrf.mxu0
        %689 = vmatprep.mubr.bf16.mxu0 %v437
        %690 = vmatmul.mubr.bf16.gmra.mxu0 %v436
        %v691 = vpop.f32.mrf.mxu0
        %v692 = vadd.f32 %v487, %v691
        %v693 = vpop.f32.mrf.mxu0
        %v694 = vpop.f32.mrf.mxu0
        %v695 = vadd.f32 %v487, %v694
        %v696 = vpop.f32.mrf.mxu0
        %697 = vmatprep.mubr.bf16.mxu0 %v439
        %698 = vmatmul.mubr.bf16.gmra.mxu0 %v438
        %v699 = vpop.f32.mrf.mxu0
        %v700 = vadd.f32 %v487, %v699
        %v701 = vpop.f32.mrf.mxu0
        %v702 = vpop.f32.mrf.mxu0
        %v703 = vadd.f32 %v487, %v702
        %v704 = vpop.f32.mrf.mxu0
        %705 = vmatprep.mubr.bf16.mxu0 %v441
        %706 = vmatmul.mubr.bf16.gmra.mxu0 %v440
        %v707 = vpop.f32.mrf.mxu0
        %v708 = vadd.f32 %v487, %v707
        %v709 = vpop.f32.mrf.mxu0
        %v710 = vpop.f32.mrf.mxu0
        %v711 = vadd.f32 %v487, %v710
        %v712 = vpop.f32.mrf.mxu0
        %713 = vmatprep.mubr.bf16.mxu0 %v443
        %714 = vmatmul.mubr.bf16.gmra.mxu0 %v442
        %v715 = vpop.f32.mrf.mxu0
        %v716 = vadd.f32 %v487, %v715
        %v717 = vpop.f32.mrf.mxu0
        %v718 = vpop.f32.mrf.mxu0
        %v719 = vadd.f32 %v487, %v718
        %v720 = vpop.f32.mrf.mxu0
        %721 = vmatprep.mubr.bf16.mxu0 %v445
        %722 = vmatmul.mubr.bf16.gmra.mxu0 %v444
        %v723 = vpop.f32.mrf.mxu0
        %v724 = vadd.f32 %v487, %v723
        %v725 = vpop.f32.mrf.mxu0
        %v726 = vpop.f32.mrf.mxu0
        %v727 = vadd.f32 %v487, %v726
        %v728 = vpop.f32.mrf.mxu0
        %729 = vmatprep.mubr.bf16.mxu0 %v447
        %730 = vmatmul.mubr.bf16.gmra.mxu0 %v446
        %v731 = vpop.f32.mrf.mxu0
        %v732 = vadd.f32 %v487, %v731
        %v733 = vpop.f32.mrf.mxu0
        %v734 = vpop.f32.mrf.mxu0
        %v735 = vadd.f32 %v487, %v734
        %v736 = vpop.f32.mrf.mxu0
        %737 = vmatprep.mubr.bf16.mxu0 %v449
        %738 = vmatmul.mubr.bf16.gmra.mxu0 %v448
        %v739 = vpop.f32.mrf.mxu0
        %v740 = vadd.f32 %v487, %v739
        %v741 = vpop.f32.mrf.mxu0
        %v742 = vpop.f32.mrf.mxu0
        %v743 = vadd.f32 %v487, %v742
        %v744 = vpop.f32.mrf.mxu0
        %745 = vdwg.mxu0
        %v746 = vxor.u32 %v620, 2147483648
        %v747 = vxor.u32 %v623, 2147483648
        %v748 = vxor.u32 %v628, 2147483648
        %v749 = vxor.u32 %v631, 2147483648
        %v750 = vxor.u32 %v636, 2147483648
        %v751 = vxor.u32 %v639, 2147483648
        %v752 = vxor.u32 %v644, 2147483648
        %v753 = vxor.u32 %v647, 2147483648
        %v754 = vxor.u32 %v652, 2147483648
        %v755 = vxor.u32 %v655, 2147483648
        %v756 = vxor.u32 %v660, 2147483648
        %v757 = vxor.u32 %v663, 2147483648
        %v758 = vxor.u32 %v668, 2147483648
        %v759 = vxor.u32 %v671, 2147483648
        %v760 = vxor.u32 %v676, 2147483648
        %v761 = vxor.u32 %v679, 2147483648
        %v762 = vxor.u32 %v684, 2147483648
        %v763 = vxor.u32 %v687, 2147483648
        %v764 = vxor.u32 %v692, 2147483648
        %v765 = vxor.u32 %v695, 2147483648
        %v766 = vxor.u32 %v700, 2147483648
        %v767 = vxor.u32 %v703, 2147483648
        %v768 = vxor.u32 %v708, 2147483648
        %v769 = vxor.u32 %v711, 2147483648
        %v770 = vxor.u32 %v716, 2147483648
        %v771 = vxor.u32 %v719, 2147483648
        %v772 = vxor.u32 %v724, 2147483648
        %v773 = vxor.u32 %v727, 2147483648
        %v774 = vxor.u32 %v732, 2147483648
        %v775 = vxor.u32 %v735, 2147483648
        %v776 = vxor.u32 %v740, 2147483648
        %v777 = vxor.u32 %v743, 2147483648
        %v778 = vmul.f32 %v746, 1.442695
        %v779 = vpow.pop %v778
        %v780 = vmul.f32 %v747, 1.442695
        %v781 = vpow.pop %v780
        %v782 = vmul.f32 %v748, 1.442695
        %v783 = vpow.pop %v782
        %v784 = vmul.f32 %v749, 1.442695
        %v785 = vpow.pop %v784
        %v786 = vmul.f32 %v750, 1.442695
        %v787 = vpow.pop %v786
        %v788 = vmul.f32 %v751, 1.442695
        %v789 = vpow.pop %v788
        %v790 = vmul.f32 %v752, 1.442695
        %v791 = vpow.pop %v790
        %v792 = vmul.f32 %v753, 1.442695
        %v793 = vpow.pop %v792
        %v794 = vmul.f32 %v754, 1.442695
        %v795 = vpow.pop %v794
        %v796 = vmul.f32 %v755, 1.442695
        %v797 = vpow.pop %v796
        %v798 = vmul.f32 %v756, 1.442695
        %v799 = vpow.pop %v798
        %v800 = vmul.f32 %v757, 1.442695
        %v801 = vpow.pop %v800
        %v802 = vmul.f32 %v758, 1.442695
        %v803 = vpow.pop %v802
        %v804 = vmul.f32 %v759, 1.442695
        %v805 = vpow.pop %v804
        %v806 = vmul.f32 %v760, 1.442695
        %v807 = vpow.pop %v806
        %v808 = vmul.f32 %v761, 1.442695
        %v809 = vpow.pop %v808
        %v810 = vmul.f32 %v762, 1.442695
        %v811 = vpow.pop %v810
        %v812 = vmul.f32 %v763, 1.442695
        %v813 = vpow.pop %v812
        %v814 = vmul.f32 %v764, 1.442695
        %v815 = vpow.pop %v814
        %v816 = vmul.f32 %v765, 1.442695
        %v817 = vpow.pop %v816
        %v818 = vmul.f32 %v766, 1.442695
        %v819 = vpow.pop %v818
        %v820 = vmul.f32 %v767, 1.442695
        %v821 = vpow.pop %v820
        %v822 = vmul.f32 %v768, 1.442695
        %v823 = vpow.pop %v822
        %v824 = vmul.f32 %v769, 1.442695
        %v825 = vpow.pop %v824
        %v826 = vmul.f32 %v770, 1.442695
        %v827 = vpow.pop %v826
        %v828 = vmul.f32 %v771, 1.442695
        %v829 = vpow.pop %v828
        %v830 = vmul.f32 %v772, 1.442695
        %v831 = vpow.pop %v830
        %v832 = vmul.f32 %v773, 1.442695
        %v833 = vpow.pop %v832
        %v834 = vmul.f32 %v774, 1.442695
        %v835 = vpow.pop %v834
        %v836 = vmul.f32 %v775, 1.442695
        %v837 = vpow.pop %v836
        %v838 = vmul.f32 %v776, 1.442695
        %v839 = vpow.pop %v838
        %v840 = vmul.f32 %v777, 1.442695
        %v841 = vpow.pop %v840
        %v842 = vadd.f32 %v779, 1.0
        %v843 = vadd.f32 %v781, 1.0
        %v844 = vadd.f32 %v783, 1.0
        %v845 = vadd.f32 %v785, 1.0
        %v846 = vadd.f32 %v787, 1.0
        %v847 = vadd.f32 %v789, 1.0
        %v848 = vadd.f32 %v791, 1.0
        %v849 = vadd.f32 %v793, 1.0
        %v850 = vadd.f32 %v795, 1.0
        %v851 = vadd.f32 %v797, 1.0
        %v852 = vadd.f32 %v799, 1.0
        %v853 = vadd.f32 %v801, 1.0
        %v854 = vadd.f32 %v803, 1.0
        %v855 = vadd.f32 %v805, 1.0
        %v856 = vadd.f32 %v807, 1.0
        %v857 = vadd.f32 %v809, 1.0
        %v858 = vadd.f32 %v811, 1.0
        %v859 = vadd.f32 %v813, 1.0
        %v860 = vadd.f32 %v815, 1.0
        %v861 = vadd.f32 %v817, 1.0
        %v862 = vadd.f32 %v819, 1.0
        %v863 = vadd.f32 %v821, 1.0
        %v864 = vadd.f32 %v823, 1.0
        %v865 = vadd.f32 %v825, 1.0
        %v866 = vadd.f32 %v827, 1.0
        %v867 = vadd.f32 %v829, 1.0
        %v868 = vadd.f32 %v831, 1.0
        %v869 = vadd.f32 %v833, 1.0
        %v870 = vadd.f32 %v835, 1.0
        %v871 = vadd.f32 %v837, 1.0
        %v872 = vadd.f32 %v839, 1.0
        %v873 = vadd.f32 %v841, 1.0
        %v874 = vrcp.pop %v842
        %v875 = vmul.f32 1.0, %v874
        %v876 = vrcp.pop %v843
        %v877 = vmul.f32 1.0, %v876
        %v878 = vrcp.pop %v844
        %v879 = vmul.f32 1.0, %v878
        %v880 = vrcp.pop %v845
        %v881 = vmul.f32 1.0, %v880
        %v882 = vrcp.pop %v846
        %v883 = vmul.f32 1.0, %v882
        %v884 = vrcp.pop %v847
        %v885 = vmul.f32 1.0, %v884
        %v886 = vrcp.pop %v848
        %v887 = vmul.f32 1.0, %v886
        %v888 = vrcp.pop %v849
        %v889 = vmul.f32 1.0, %v888
        %v890 = vrcp.pop %v850
        %v891 = vmul.f32 1.0, %v890
        %v892 = vrcp.pop %v851
        %v893 = vmul.f32 1.0, %v892
        %v894 = vrcp.pop %v852
        %v895 = vmul.f32 1.0, %v894
        %v896 = vrcp.pop %v853
        %v897 = vmul.f32 1.0, %v896
        %v898 = vrcp.pop %v854
        %v899 = vmul.f32 1.0, %v898
        %v900 = vrcp.pop %v855
        %v901 = vmul.f32 1.0, %v900
        %v902 = vrcp.pop %v856
        %v903 = vmul.f32 1.0, %v902
        %v904 = vrcp.pop %v857
        %v905 = vmul.f32 1.0, %v904
        %v906 = vrcp.pop %v858
        %v907 = vmul.f32 1.0, %v906
        %v908 = vrcp.pop %v859
        %v909 = vmul.f32 1.0, %v908
        %v910 = vrcp.pop %v860
        %v911 = vmul.f32 1.0, %v910
        %v912 = vrcp.pop %v861
        %v913 = vmul.f32 1.0, %v912
        %v914 = vrcp.pop %v862
        %v915 = vmul.f32 1.0, %v914
        %v916 = vrcp.pop %v863
        %v917 = vmul.f32 1.0, %v916
        %v918 = vrcp.pop %v864
        %v919 = vmul.f32 1.0, %v918
        %v920 = vrcp.pop %v865
        %v921 = vmul.f32 1.0, %v920
        %v922 = vrcp.pop %v866
        %v923 = vmul.f32 1.0, %v922
        %v924 = vrcp.pop %v867
        %v925 = vmul.f32 1.0, %v924
        %v926 = vrcp.pop %v868
        %v927 = vmul.f32 1.0, %v926
        %v928 = vrcp.pop %v869
        %v929 = vmul.f32 1.0, %v928
        %v930 = vrcp.pop %v870
        %v931 = vmul.f32 1.0, %v930
        %v932 = vrcp.pop %v871
        %v933 = vmul.f32 1.0, %v932
        %v934 = vrcp.pop %v872
        %v935 = vmul.f32 1.0, %v934
        %v936 = vrcp.pop %v873
        %v937 = vmul.f32 1.0, %v936
        %v938 = vmul.f32 %v620, %v875
        %v939 = vmul.f32 %v623, %v877
        %v940 = vmul.f32 %v628, %v879
        %v941 = vmul.f32 %v631, %v881
        %v942 = vmul.f32 %v636, %v883
        %v943 = vmul.f32 %v639, %v885
        %v944 = vmul.f32 %v644, %v887
        %v945 = vmul.f32 %v647, %v889
        %v946 = vmul.f32 %v652, %v891
        %v947 = vmul.f32 %v655, %v893
        %v948 = vmul.f32 %v660, %v895
        %v949 = vmul.f32 %v663, %v897
        %v950 = vmul.f32 %v668, %v899
        %v951 = vmul.f32 %v671, %v901
        %v952 = vmul.f32 %v676, %v903
        %v953 = vmul.f32 %v679, %v905
        %v954 = vmul.f32 %v684, %v907
        %v955 = vmul.f32 %v687, %v909
        %v956 = vmul.f32 %v692, %v911
        %v957 = vmul.f32 %v695, %v913
        %v958 = vmul.f32 %v700, %v915
        %v959 = vmul.f32 %v703, %v917
        %v960 = vmul.f32 %v708, %v919
        %v961 = vmul.f32 %v711, %v921
        %v962 = vmul.f32 %v716, %v923
        %v963 = vmul.f32 %v719, %v925
        %v964 = vmul.f32 %v724, %v927
        %v965 = vmul.f32 %v727, %v929
        %v966 = vmul.f32 %v732, %v931
        %v967 = vmul.f32 %v735, %v933
        %v968 = vmul.f32 %v740, %v935
        %v969 = vmul.f32 %v743, %v937
        %v970 = vpack.c.bf16 %v939, %v938
        %v971 = vpack.c.bf16 %v941, %v940
        %v972 = vpack.c.bf16 %v943, %v942
        %v973 = vpack.c.bf16 %v945, %v944
        %v974 = vpack.c.bf16 %v947, %v946
        %v975 = vpack.c.bf16 %v949, %v948
        %v976 = vpack.c.bf16 %v951, %v950
        %v977 = vpack.c.bf16 %v953, %v952
        %v978 = vpack.c.bf16 %v955, %v954
        %v979 = vpack.c.bf16 %v957, %v956
        %v980 = vpack.c.bf16 %v959, %v958
        %v981 = vpack.c.bf16 %v961, %v960
        %v982 = vpack.c.bf16 %v963, %v962
        %v983 = vpack.c.bf16 %v965, %v964
        %v984 = vpack.c.bf16 %v967, %v966
        %v985 = vpack.c.bf16 %v969, %v968
        %v1002 = vunpack.c.l.b16 %v970
        %v1003 = vunpack.c.h.b16 %v970
        %v1004 = vunpack.c.l.b16 %v971
        %v1005 = vunpack.c.h.b16 %v971
        %v1006 = vunpack.c.l.b16 %v972
        %v1007 = vunpack.c.h.b16 %v972
        %v1008 = vunpack.c.l.b16 %v973
        %v1009 = vunpack.c.h.b16 %v973
        %v1010 = vunpack.c.l.b16 %v974
        %v1011 = vunpack.c.h.b16 %v974
        %v1012 = vunpack.c.l.b16 %v975
        %v1013 = vunpack.c.h.b16 %v975
        %v1014 = vunpack.c.l.b16 %v976
        %v1015 = vunpack.c.h.b16 %v976
        %v1016 = vunpack.c.l.b16 %v977
        %v1017 = vunpack.c.h.b16 %v977
        %v1018 = vunpack.c.l.b16 %v978
        %v1019 = vunpack.c.h.b16 %v978
        %v1020 = vunpack.c.l.b16 %v979
        %v1021 = vunpack.c.h.b16 %v979
        %v1022 = vunpack.c.l.b16 %v980
        %v1023 = vunpack.c.h.b16 %v980
        %v1024 = vunpack.c.l.b16 %v981
        %v1025 = vunpack.c.h.b16 %v981
        %v1026 = vunpack.c.l.b16 %v982
        %v1027 = vunpack.c.h.b16 %v982
        %v1028 = vunpack.c.l.b16 %v983
        %v1029 = vunpack.c.h.b16 %v983
        %v1030 = vunpack.c.l.b16 %v984
        %v1031 = vunpack.c.h.b16 %v984
        %v1032 = vunpack.c.l.b16 %v985
        %v1033 = vunpack.c.h.b16 %v985
        %v1034 = vpack.c.b16 %v1002, %v1002
        %v1035 = vpack.c.b16 %v1003, %v1003
        %v1036 = vpack.c.b16 %v1004, %v1004
        %v1037 = vpack.c.b16 %v1005, %v1005
        %v1038 = vpack.c.b16 %v1006, %v1006
        %v1039 = vpack.c.b16 %v1007, %v1007
        %v1040 = vpack.c.b16 %v1008, %v1008
        %v1041 = vpack.c.b16 %v1009, %v1009
        %v1042 = vpack.c.b16 %v1010, %v1010
        %v1043 = vpack.c.b16 %v1011, %v1011
        %v1044 = vpack.c.b16 %v1012, %v1012
        %v1045 = vpack.c.b16 %v1013, %v1013
        %v1046 = vpack.c.b16 %v1014, %v1014
        %v1047 = vpack.c.b16 %v1015, %v1015
        %v1048 = vpack.c.b16 %v1016, %v1016
        %v1049 = vpack.c.b16 %v1017, %v1017
        %v1050 = vpack.c.b16 %v1018, %v1018
        %v1051 = vpack.c.b16 %v1019, %v1019
        %v1052 = vpack.c.b16 %v1020, %v1020
        %v1053 = vpack.c.b16 %v1021, %v1021
        %v1054 = vpack.c.b16 %v1022, %v1022
        %v1055 = vpack.c.b16 %v1023, %v1023
        %v1056 = vpack.c.b16 %v1024, %v1024
        %v1057 = vpack.c.b16 %v1025, %v1025
        %v1058 = vpack.c.b16 %v1026, %v1026
        %v1059 = vpack.c.b16 %v1027, %v1027
        %v1060 = vpack.c.b16 %v1028, %v1028
        %v1061 = vpack.c.b16 %v1029, %v1029
        %v1062 = vpack.c.b16 %v1030, %v1030
        %v1063 = vpack.c.b16 %v1031, %v1031
        %v1064 = vpack.c.b16 %v1032, %v1032
        %v1065 = vpack.c.b16 %v1033, %v1033
        %1098 = vst [vmem:[#allocation3] sm:$0xf] %v1034
        %1099 = vst [vmem:[#allocation3 + $0x10] sm:$0xf] %v1035
        %1100 = vst [vmem:[#allocation3 + $0x20] sm:$0xf] %v1036
        %1101 = vst [vmem:[#allocation3 + $0x30] sm:$0xf] %v1037
        %1102 = vst [vmem:[#allocation3 + $0x40] sm:$0xf] %v1038
        %1103 = vst [vmem:[#allocation3 + $0x50] sm:$0xf] %v1039
        %1104 = vst [vmem:[#allocation3 + $0x60] sm:$0xf] %v1040
        %1105 = vst [vmem:[#allocation3 + $0x70] sm:$0xf] %v1041
        %1106 = vst [vmem:[#allocation3 + $0x80] sm:$0xf] %v1042
        %1107 = vst [vmem:[#allocation3 + $0x90] sm:$0xf] %v1043
        %1108 = vst [vmem:[#allocation3 + $0xa0] sm:$0xf] %v1044
        %1109 = vst [vmem:[#allocation3 + $0xb0] sm:$0xf] %v1045
        %1110 = vst [vmem:[#allocation3 + $0xc0] sm:$0xf] %v1046
        %1111 = vst [vmem:[#allocation3 + $0xd0] sm:$0xf] %v1047
        %1112 = vst [vmem:[#allocation3 + $0xe0] sm:$0xf] %v1048
        %1113 = vst [vmem:[#allocation3 + $0xf0] sm:$0xf] %v1049
        %1114 = vst [vmem:[#allocation3 + $0x100] sm:$0xf] %v1050
        %1115 = vst [vmem:[#allocation3 + $0x110] sm:$0xf] %v1051
        %1116 = vst [vmem:[#allocation3 + $0x120] sm:$0xf] %v1052
        %1117 = vst [vmem:[#allocation3 + $0x130] sm:$0xf] %v1053
        %1118 = vst [vmem:[#allocation3 + $0x140] sm:$0xf] %v1054
        %1119 = vst [vmem:[#allocation3 + $0x150] sm:$0xf] %v1055
        %1120 = vst [vmem:[#allocation3 + $0x160] sm:$0xf] %v1056
        %1121 = vst [vmem:[#allocation3 + $0x170] sm:$0xf] %v1057
        %1122 = vst [vmem:[#allocation3 + $0x180] sm:$0xf] %v1058
        %1123 = vst [vmem:[#allocation3 + $0x190] sm:$0xf] %v1059
        %1124 = vst [vmem:[#allocation3 + $0x1a0] sm:$0xf] %v1060
        %1125 = vst [vmem:[#allocation3 + $0x1b0] sm:$0xf] %v1061
        %1126 = vst [vmem:[#allocation3 + $0x1c0] sm:$0xf] %v1062
        %1127 = vst [vmem:[#allocation3 + $0x1d0] sm:$0xf] %v1063
        %1128 = vst [vmem:[#allocation3 + $0x1e0] sm:$0xf] %v1064
        %1129 = vst [vmem:[#allocation3 + $0x1f0] sm:$0xf] %v1065
        %s1130 = scalar_lea.vmem [#allocation2], 32
        %1131 = vst [vmem:[%s1130 + $0x4] sm:$0xf] %v1034
        %1132 = vst [vmem:[%s1130 + $0x8] sm:$0xf] %v1035
        %1133 = vst [vmem:[%s1130 + $0x14] sm:$0xf] %v1036
        %1134 = vst [vmem:[%s1130 + $0x18] sm:$0xf] %v1037
        %1135 = vst [vmem:[%s1130 + $0x24] sm:$0xf] %v1038
        %1136 = vst [vmem:[%s1130 + $0x28] sm:$0xf] %v1039
        %1137 = vst [vmem:[%s1130 + $0x34] sm:$0xf] %v1040
        %1138 = vst [vmem:[%s1130 + $0x38] sm:$0xf] %v1041
        %1139 = vst [vmem:[%s1130 + $0x44] sm:$0xf] %v1042
        %1140 = vst [vmem:[%s1130 + $0x48] sm:$0xf] %v1043
        %1141 = vst [vmem:[%s1130 + $0x54] sm:$0xf] %v1044
        %1142 = vst [vmem:[%s1130 + $0x58] sm:$0xf] %v1045
        %1143 = vst [vmem:[%s1130 + $0x64] sm:$0xf] %v1046
        %1144 = vst [vmem:[%s1130 + $0x68] sm:$0xf] %v1047
        %1145 = vst [vmem:[%s1130 + $0x74] sm:$0xf] %v1048
        %1146 = vst [vmem:[%s1130 + $0x78] sm:$0xf] %v1049
        %1147 = vst [vmem:[%s1130 + $0x84] sm:$0xf] %v1050
        %1148 = vst [vmem:[%s1130 + $0x88] sm:$0xf] %v1051
        %1149 = vst [vmem:[%s1130 + $0x94] sm:$0xf] %v1052
        %1150 = vst [vmem:[%s1130 + $0x98] sm:$0xf] %v1053
        %1151 = vst [vmem:[%s1130 + $0xa4] sm:$0xf] %v1054
        %1152 = vst [vmem:[%s1130 + $0xa8] sm:$0xf] %v1055
        %1153 = vst [vmem:[%s1130 + $0xb4] sm:$0xf] %v1056
        %1154 = vst [vmem:[%s1130 + $0xb8] sm:$0xf] %v1057
        %1155 = vst [vmem:[%s1130 + $0xc4] sm:$0xf] %v1058
        %1156 = vst [vmem:[%s1130 + $0xc8] sm:$0xf] %v1059
        %1157 = vst [vmem:[%s1130 + $0xd4] sm:$0xf] %v1060
        %1158 = vst [vmem:[%s1130 + $0xd8] sm:$0xf] %v1061
        %1159 = vst [vmem:[%s1130 + $0xe4] sm:$0xf] %v1062
        %1160 = vst [vmem:[%s1130 + $0xe8] sm:$0xf] %v1063
        %1161 = vst [vmem:[%s1130 + $0xf4] sm:$0xf] %v1064
        %1162 = vst [vmem:[%s1130 + $0xf8] sm:$0xf] %v1065
        %v1163 = vld [vmem:[#allocation2] sm:$0x8]
        %v1164 = vld [vmem:[#allocation2 + $0x4] sm:$0xf]
        %v1165 = vld [vmem:[#allocation2 + $0x8] sm:$0x7]
        %v1166 = vld [vmem:[#allocation2 + $0x10] sm:$0x8]
        %v1167 = vld [vmem:[#allocation2 + $0x14] sm:$0xf]
        %v1168 = vld [vmem:[#allocation2 + $0x18] sm:$0x7]
        %v1169 = vld [vmem:[#allocation2 + $0x20] sm:$0x8]
        %v1170 = vld [vmem:[#allocation2 + $0x24] sm:$0xf]
        %v1171 = vld [vmem:[#allocation2 + $0x28] sm:$0x7]
        %v1172 = vld [vmem:[#allocation2 + $0x30] sm:$0x8]
        %v1173 = vld [vmem:[#allocation2 + $0x34] sm:$0xf]
        %v1174 = vld [vmem:[#allocation2 + $0x38] sm:$0x7]
        %v1175 = vld [vmem:[#allocation2 + $0x40] sm:$0x8]
        %v1176 = vld [vmem:[#allocation2 + $0x44] sm:$0xf]
        %v1177 = vld [vmem:[#allocation2 + $0x48] sm:$0x7]
        %v1178 = vld [vmem:[#allocation2 + $0x50] sm:$0x8]
        %v1179 = vld [vmem:[#allocation2 + $0x54] sm:$0xf]
        %v1180 = vld [vmem:[#allocation2 + $0x58] sm:$0x7]
        %v1181 = vld [vmem:[#allocation2 + $0x60] sm:$0x8]
        %v1182 = vld [vmem:[#allocation2 + $0x64] sm:$0xf]
        %v1183 = vld [vmem:[#allocation2 + $0x68] sm:$0x7]
        %v1184 = vld [vmem:[#allocation2 + $0x70] sm:$0x8]
        %v1185 = vld [vmem:[#allocation2 + $0x74] sm:$0xf]
        %v1186 = vld [vmem:[#allocation2 + $0x78] sm:$0x7]
        %v1187 = vld [vmem:[#allocation2 + $0x80] sm:$0x8]
        %v1188 = vld [vmem:[#allocation2 + $0x84] sm:$0xf]
        %v1189 = vld [vmem:[#allocation2 + $0x88] sm:$0x7]
        %v1190 = vld [vmem:[#allocation2 + $0x90] sm:$0x8]
        %v1191 = vld [vmem:[#allocation2 + $0x94] sm:$0xf]
        %v1192 = vld [vmem:[#allocation2 + $0x98] sm:$0x7]
        %v1193 = vld [vmem:[#allocation2 + $0xa0] sm:$0x8]
        %v1194 = vld [vmem:[#allocation2 + $0xa4] sm:$0xf]
        %v1195 = vld [vmem:[#allocation2 + $0xa8] sm:$0x7]
        %v1196 = vld [vmem:[#allocation2 + $0xb0] sm:$0x8]
        %v1197 = vld [vmem:[#allocation2 + $0xb4] sm:$0xf]
        %v1198 = vld [vmem:[#allocation2 + $0xb8] sm:$0x7]
        %v1199 = vld [vmem:[#allocation2 + $0xc0] sm:$0x8]
        %v1200 = vld [vmem:[#allocation2 + $0xc4] sm:$0xf]
        %v1201 = vld [vmem:[#allocation2 + $0xc8] sm:$0x7]
        %v1202 = vld [vmem:[#allocation2 + $0xd0] sm:$0x8]
        %v1203 = vld [vmem:[#allocation2 + $0xd4] sm:$0xf]
        %v1204 = vld [vmem:[#allocation2 + $0xd8] sm:$0x7]
        %v1205 = vld [vmem:[#allocation2 + $0xe0] sm:$0x8]
        %v1206 = vld [vmem:[#allocation2 + $0xe4] sm:$0xf]
        %v1207 = vld [vmem:[#allocation2 + $0xe8] sm:$0x7]
        %v1208 = vld [vmem:[#allocation2 + $0xf0] sm:$0x8]
        %v1209 = vld [vmem:[#allocation2 + $0xf4] sm:$0xf]
        %v1210 = vld [vmem:[#allocation2 + $0xf8] sm:$0x7]
        %v1211 = vld [vmem:[#allocation2 + $0x100] sm:$0x8]
        %v1212 = vld [vmem:[#allocation2 + $0x104] sm:$0xf]
        %v1213 = vld [vmem:[#allocation2 + $0x108] sm:$0x7]
        %v1214 = vld [vmem:[#allocation2 + $0x110] sm:$0x8]
        %v1215 = vld [vmem:[#allocation2 + $0x114] sm:$0xf]
        %v1216 = vld [vmem:[#allocation2 + $0x118] sm:$0x7]
        %v1217 = vld [vmem:[#allocation2 + $0x120] sm:$0x8]
        %v1218 = vld [vmem:[#allocation2 + $0x124] sm:$0xf]
        %v1219 = vld [vmem:[#allocation2 + $0x128] sm:$0x7]
        %v1220 = vld [vmem:[#allocation2 + $0x130] sm:$0x8]
        %v1221 = vld [vmem:[#allocation2 + $0x134] sm:$0xf]
        %v1222 = vld [vmem:[#allocation2 + $0x138] sm:$0x7]
        %v1223 = vld [vmem:[#allocation2 + $0x8] sm:$0xf]
        %v1224 = vld [vmem:[#allocation2 + $0x18] sm:$0xf]
        %v1225 = vld [vmem:[#allocation2 + $0x28] sm:$0xf]
        %v1226 = vld [vmem:[#allocation2 + $0x38] sm:$0xf]
        %v1227 = vld [vmem:[#allocation2 + $0x48] sm:$0xf]
        %v1228 = vld [vmem:[#allocation2 + $0x58] sm:$0xf]
        %v1229 = vld [vmem:[#allocation2 + $0x68] sm:$0xf]
        %v1230 = vld [vmem:[#allocation2 + $0x78] sm:$0xf]
        %v1231 = vld [vmem:[#allocation2 + $0x88] sm:$0xf]
        %v1232 = vld [vmem:[#allocation2 + $0x98] sm:$0xf]
        %v1233 = vld [vmem:[#allocation2 + $0xa8] sm:$0xf]
        %v1234 = vld [vmem:[#allocation2 + $0xb8] sm:$0xf]
        %v1235 = vld [vmem:[#allocation2 + $0xc8] sm:$0xf]
        %v1236 = vld [vmem:[#allocation2 + $0xd8] sm:$0xf]
        %v1237 = vld [vmem:[#allocation2 + $0xe8] sm:$0xf]
        %v1238 = vld [vmem:[#allocation2 + $0xf8] sm:$0xf]
        %v1239 = vld [vmem:[#allocation2 + $0x108] sm:$0xf]
        %v1240 = vld [vmem:[#allocation2 + $0x118] sm:$0xf]
        %v1241 = vld [vmem:[#allocation2 + $0x128] sm:$0xf]
        %v1242 = vld [vmem:[#allocation2 + $0x138] sm:$0xf]
        %vm1243 = vsmask.f32 3328
        %vm1244 = vsmask.f32 7440
        %vm1245 = vmor %vm1243, %vm1244
        %v1247 = vshrl.u32 %v1163, 16
        %v1249 = vrot.slane %v1247, 4
        %v1250 = vrot.slane %v1249, 4
        %v1252 = vshll.u32 %v1164, 16
        %v1254 = vrot.slane %v1252, 5
        %v1255 = vsel %vm1245, %v1250, %v1254
        %v1256 = vshrl.u32 %v1164, 16
        %v1258 = vrot.slane %v1256, 4
        %v1259 = vor.u32 %v1258, %v1254
        %v1260 = vrot.slane %v1259, 4
        %v1262 = vshll.u32 %v1223, 16
        %v1264 = vrot.slane %v1262, 5
        %v1265 = vsel %vm1245, %v1260, %v1264
        %v1266 = vshrl.u32 %v1223, 16
        %v1268 = vrot.slane %v1266, 4
        %v1269 = vor.u32 %v1268, %v1264
        %v1270 = vrot.slane %v1269, 4
        %v1272 = vshrl.u32 %v1166, 16
        %v1274 = vrot.slane %v1272, 4
        %v1275 = vrot.slane %v1274, 4
        %v1277 = vshll.u32 %v1167, 16
        %v1279 = vrot.slane %v1277, 5
        %v1280 = vsel %vm1245, %v1275, %v1279
        %v1281 = vshrl.u32 %v1167, 16
        %v1283 = vrot.slane %v1281, 4
        %v1284 = vor.u32 %v1283, %v1279
        %v1285 = vrot.slane %v1284, 4
        %v1287 = vshll.u32 %v1224, 16
        %v1289 = vrot.slane %v1287, 5
        %v1290 = vsel %vm1245, %v1285, %v1289
        %v1291 = vshrl.u32 %v1224, 16
        %v1293 = vrot.slane %v1291, 4
        %v1294 = vor.u32 %v1293, %v1289
        %v1295 = vrot.slane %v1294, 4
        %v1297 = vshrl.u32 %v1169, 16
        %v1299 = vrot.slane %v1297, 4
        %v1300 = vrot.slane %v1299, 4
        %v1302 = vshll.u32 %v1170, 16
        %v1304 = vrot.slane %v1302, 5
        %v1305 = vsel %vm1245, %v1300, %v1304
        %v1306 = vshrl.u32 %v1170, 16
        %v1308 = vrot.slane %v1306, 4
        %v1309 = vor.u32 %v1308, %v1304
        %v1310 = vrot.slane %v1309, 4
        %v1312 = vshll.u32 %v1225, 16
        %v1314 = vrot.slane %v1312, 5
        %v1315 = vsel %vm1245, %v1310, %v1314
        %v1316 = vshrl.u32 %v1225, 16
        %v1318 = vrot.slane %v1316, 4
        %v1319 = vor.u32 %v1318, %v1314
        %v1320 = vrot.slane %v1319, 4
        %v1322 = vshrl.u32 %v1172, 16
        %v1324 = vrot.slane %v1322, 4
        %v1325 = vrot.slane %v1324, 4
        %v1327 = vshll.u32 %v1173, 16
        %v1329 = vrot.slane %v1327, 5
        %v1330 = vsel %vm1245, %v1325, %v1329
        %v1331 = vshrl.u32 %v1173, 16
        %v1333 = vrot.slane %v1331, 4
        %v1334 = vor.u32 %v1333, %v1329
        %v1335 = vrot.slane %v1334, 4
        %v1337 = vshll.u32 %v1226, 16
        %v1339 = vrot.slane %v1337, 5
        %v1340 = vsel %vm1245, %v1335, %v1339
        %v1341 = vshrl.u32 %v1226, 16
        %v1343 = vrot.slane %v1341, 4
        %v1344 = vor.u32 %v1343, %v1339
        %v1345 = vrot.slane %v1344, 4
        %v1347 = vshrl.u32 %v1175, 16
        %v1349 = vrot.slane %v1347, 4
        %v1350 = vrot.slane %v1349, 4
        %v1352 = vshll.u32 %v1176, 16
        %v1354 = vrot.slane %v1352, 5
        %v1355 = vsel %vm1245, %v1350, %v1354
        %v1356 = vshrl.u32 %v1176, 16
        %v1358 = vrot.slane %v1356, 4
        %v1359 = vor.u32 %v1358, %v1354
        %v1360 = vrot.slane %v1359, 4
        %v1362 = vshll.u32 %v1227, 16
        %v1364 = vrot.slane %v1362, 5
        %v1365 = vsel %vm1245, %v1360, %v1364
        %v1366 = vshrl.u32 %v1227, 16
        %v1368 = vrot.slane %v1366, 4
        %v1369 = vor.u32 %v1368, %v1364
        %v1370 = vrot.slane %v1369, 4
        %v1372 = vshrl.u32 %v1178, 16
        %v1374 = vrot.slane %v1372, 4
        %v1375 = vrot.slane %v1374, 4
        %v1377 = vshll.u32 %v1179, 16
        %v1379 = vrot.slane %v1377, 5
        %v1380 = vsel %vm1245, %v1375, %v1379
        %v1381 = vshrl.u32 %v1179, 16
        %v1383 = vrot.slane %v1381, 4
        %v1384 = vor.u32 %v1383, %v1379
        %v1385 = vrot.slane %v1384, 4
        %v1387 = vshll.u32 %v1228, 16
        %v1389 = vrot.slane %v1387, 5
        %v1390 = vsel %vm1245, %v1385, %v1389
        %v1391 = vshrl.u32 %v1228, 16
        %v1393 = vrot.slane %v1391, 4
        %v1394 = vor.u32 %v1393, %v1389
        %v1395 = vrot.slane %v1394, 4
        %v1397 = vshrl.u32 %v1181, 16
        %v1399 = vrot.slane %v1397, 4
        %v1400 = vrot.slane %v1399, 4
        %v1402 = vshll.u32 %v1182, 16
        %v1404 = vrot.slane %v1402, 5
        %v1405 = vsel %vm1245, %v1400, %v1404
        %v1406 = vshrl.u32 %v1182, 16
        %v1408 = vrot.slane %v1406, 4
        %v1409 = vor.u32 %v1408, %v1404
        %v1410 = vrot.slane %v1409, 4
        %v1412 = vshll.u32 %v1229, 16
        %v1414 = vrot.slane %v1412, 5
        %v1415 = vsel %vm1245, %v1410, %v1414
        %v1416 = vshrl.u32 %v1229, 16
        %v1418 = vrot.slane %v1416, 4
        %v1419 = vor.u32 %v1418, %v1414
        %v1420 = vrot.slane %v1419, 4
        %v1422 = vshrl.u32 %v1184, 16
        %v1424 = vrot.slane %v1422, 4
        %v1425 = vrot.slane %v1424, 4
        %v1427 = vshll.u32 %v1185, 16
        %v1429 = vrot.slane %v1427, 5
        %v1430 = vsel %vm1245, %v1425, %v1429
        %v1431 = vshrl.u32 %v1185, 16
        %v1433 = vrot.slane %v1431, 4
        %v1434 = vor.u32 %v1433, %v1429
        %v1435 = vrot.slane %v1434, 4
        %v1437 = vshll.u32 %v1230, 16
        %v1439 = vrot.slane %v1437, 5
        %v1440 = vsel %vm1245, %v1435, %v1439
        %v1441 = vshrl.u32 %v1230, 16
        %v1443 = vrot.slane %v1441, 4
        %v1444 = vor.u32 %v1443, %v1439
        %v1445 = vrot.slane %v1444, 4
        %v1447 = vshrl.u32 %v1187, 16
        %v1449 = vrot.slane %v1447, 4
        %v1450 = vrot.slane %v1449, 4
        %v1452 = vshll.u32 %v1188, 16
        %v1454 = vrot.slane %v1452, 5
        %v1455 = vsel %vm1245, %v1450, %v1454
        %v1456 = vshrl.u32 %v1188, 16
        %v1458 = vrot.slane %v1456, 4
        %v1459 = vor.u32 %v1458, %v1454
        %v1460 = vrot.slane %v1459, 4
        %v1462 = vshll.u32 %v1231, 16
        %v1464 = vrot.slane %v1462, 5
        %v1465 = vsel %vm1245, %v1460, %v1464
        %v1466 = vshrl.u32 %v1231, 16
        %v1468 = vrot.slane %v1466, 4
        %v1469 = vor.u32 %v1468, %v1464
        %v1470 = vrot.slane %v1469, 4
        %v1472 = vshrl.u32 %v1190, 16
        %v1474 = vrot.slane %v1472, 4
        %v1475 = vrot.slane %v1474, 4
        %v1477 = vshll.u32 %v1191, 16
        %v1479 = vrot.slane %v1477, 5
        %v1480 = vsel %vm1245, %v1475, %v1479
        %v1481 = vshrl.u32 %v1191, 16
        %v1483 = vrot.slane %v1481, 4
        %v1484 = vor.u32 %v1483, %v1479
        %v1485 = vrot.slane %v1484, 4
        %v1487 = vshll.u32 %v1232, 16
        %v1489 = vrot.slane %v1487, 5
        %v1490 = vsel %vm1245, %v1485, %v1489
        %v1491 = vshrl.u32 %v1232, 16
        %v1493 = vrot.slane %v1491, 4
        %v1494 = vor.u32 %v1493, %v1489
        %v1495 = vrot.slane %v1494, 4
        %v1497 = vshrl.u32 %v1193, 16
        %v1499 = vrot.slane %v1497, 4
        %v1500 = vrot.slane %v1499, 4
        %v1502 = vshll.u32 %v1194, 16
        %v1504 = vrot.slane %v1502, 5
        %v1505 = vsel %vm1245, %v1500, %v1504
        %v1506 = vshrl.u32 %v1194, 16
        %v1508 = vrot.slane %v1506, 4
        %v1509 = vor.u32 %v1508, %v1504
        %v1510 = vrot.slane %v1509, 4
        %v1512 = vshll.u32 %v1233, 16
        %v1514 = vrot.slane %v1512, 5
        %v1515 = vsel %vm1245, %v1510, %v1514
        %v1516 = vshrl.u32 %v1233, 16
        %v1518 = vrot.slane %v1516, 4
        %v1519 = vor.u32 %v1518, %v1514
        %v1520 = vrot.slane %v1519, 4
        %v1522 = vshrl.u32 %v1196, 16
        %v1524 = vrot.slane %v1522, 4
        %v1525 = vrot.slane %v1524, 4
        %v1527 = vshll.u32 %v1197, 16
        %v1529 = vrot.slane %v1527, 5
        %v1530 = vsel %vm1245, %v1525, %v1529
        %v1531 = vshrl.u32 %v1197, 16
        %v1533 = vrot.slane %v1531, 4
        %v1534 = vor.u32 %v1533, %v1529
        %v1535 = vrot.slane %v1534, 4
        %v1537 = vshll.u32 %v1234, 16
        %v1539 = vrot.slane %v1537, 5
        %v1540 = vsel %vm1245, %v1535, %v1539
        %v1541 = vshrl.u32 %v1234, 16
        %v1543 = vrot.slane %v1541, 4
        %v1544 = vor.u32 %v1543, %v1539
        %v1545 = vrot.slane %v1544, 4
        %v1547 = vshrl.u32 %v1199, 16
        %v1549 = vrot.slane %v1547, 4
        %v1550 = vrot.slane %v1549, 4
        %v1552 = vshll.u32 %v1200, 16
        %v1554 = vrot.slane %v1552, 5
        %v1555 = vsel %vm1245, %v1550, %v1554
        %v1556 = vshrl.u32 %v1200, 16
        %v1558 = vrot.slane %v1556, 4
        %v1559 = vor.u32 %v1558, %v1554
        %v1560 = vrot.slane %v1559, 4
        %v1562 = vshll.u32 %v1235, 16
        %v1564 = vrot.slane %v1562, 5
        %v1565 = vsel %vm1245, %v1560, %v1564
        %v1566 = vshrl.u32 %v1235, 16
        %v1568 = vrot.slane %v1566, 4
        %v1569 = vor.u32 %v1568, %v1564
        %v1570 = vrot.slane %v1569, 4
        %v1572 = vshrl.u32 %v1202, 16
        %v1574 = vrot.slane %v1572, 4
        %v1575 = vrot.slane %v1574, 4
        %v1577 = vshll.u32 %v1203, 16
        %v1579 = vrot.slane %v1577, 5
        %v1580 = vsel %vm1245, %v1575, %v1579
        %v1581 = vshrl.u32 %v1203, 16
        %v1583 = vrot.slane %v1581, 4
        %v1584 = vor.u32 %v1583, %v1579
        %v1585 = vrot.slane %v1584, 4
        %v1587 = vshll.u32 %v1236, 16
        %v1589 = vrot.slane %v1587, 5
        %v1590 = vsel %vm1245, %v1585, %v1589
        %v1591 = vshrl.u32 %v1236, 16
        %v1593 = vrot.slane %v1591, 4
        %v1594 = vor.u32 %v1593, %v1589
        %v1595 = vrot.slane %v1594, 4
        %v1597 = vshrl.u32 %v1205, 16
        %v1599 = vrot.slane %v1597, 4
        %v1600 = vrot.slane %v1599, 4
        %v1602 = vshll.u32 %v1206, 16
        %v1604 = vrot.slane %v1602, 5
        %v1605 = vsel %vm1245, %v1600, %v1604
        %v1606 = vshrl.u32 %v1206, 16
        %v1608 = vrot.slane %v1606, 4
        %v1609 = vor.u32 %v1608, %v1604
        %v1610 = vrot.slane %v1609, 4
        %v1612 = vshll.u32 %v1237, 16
        %v1614 = vrot.slane %v1612, 5
        %v1615 = vsel %vm1245, %v1610, %v1614
        %v1616 = vshrl.u32 %v1237, 16
        %v1618 = vrot.slane %v1616, 4
        %v1619 = vor.u32 %v1618, %v1614
        %v1620 = vrot.slane %v1619, 4
        %v1622 = vshrl.u32 %v1208, 16
        %v1624 = vrot.slane %v1622, 4
        %v1625 = vrot.slane %v1624, 4
        %v1627 = vshll.u32 %v1209, 16
        %v1629 = vrot.slane %v1627, 5
        %v1630 = vsel %vm1245, %v1625, %v1629
        %v1631 = vshrl.u32 %v1209, 16
        %v1633 = vrot.slane %v1631, 4
        %v1634 = vor.u32 %v1633, %v1629
        %v1635 = vrot.slane %v1634, 4
        %v1637 = vshll.u32 %v1238, 16
        %v1639 = vrot.slane %v1637, 5
        %v1640 = vsel %vm1245, %v1635, %v1639
        %v1641 = vshrl.u32 %v1238, 16
        %v1643 = vrot.slane %v1641, 4
        %v1644 = vor.u32 %v1643, %v1639
        %v1645 = vrot.slane %v1644, 4
        %v1647 = vshrl.u32 %v1211, 16
        %v1649 = vrot.slane %v1647, 4
        %v1650 = vrot.slane %v1649, 4
        %v1652 = vshll.u32 %v1212, 16
        %v1654 = vrot.slane %v1652, 5
        %v1655 = vsel %vm1245, %v1650, %v1654
        %v1656 = vshrl.u32 %v1212, 16
        %v1658 = vrot.slane %v1656, 4
        %v1659 = vor.u32 %v1658, %v1654
        %v1660 = vrot.slane %v1659, 4
        %v1662 = vshll.u32 %v1239, 16
        %v1664 = vrot.slane %v1662, 5
        %v1665 = vsel %vm1245, %v1660, %v1664
        %v1666 = vshrl.u32 %v1239, 16
        %v1668 = vrot.slane %v1666, 4
        %v1669 = vor.u32 %v1668, %v1664
        %v1670 = vrot.slane %v1669, 4
        %v1672 = vshrl.u32 %v1214, 16
        %v1674 = vrot.slane %v1672, 4
        %v1675 = vrot.slane %v1674, 4
        %v1677 = vshll.u32 %v1215, 16
        %v1679 = vrot.slane %v1677, 5
        %v1680 = vsel %vm1245, %v1675, %v1679
        %v1681 = vshrl.u32 %v1215, 16
        %v1683 = vrot.slane %v1681, 4
        %v1684 = vor.u32 %v1683, %v1679
        %v1685 = vrot.slane %v1684, 4
        %v1687 = vshll.u32 %v1240, 16
        %v1689 = vrot.slane %v1687, 5
        %v1690 = vsel %vm1245, %v1685, %v1689
        %v1691 = vshrl.u32 %v1240, 16
        %v1693 = vrot.slane %v1691, 4
        %v1694 = vor.u32 %v1693, %v1689
        %v1695 = vrot.slane %v1694, 4
        %v1697 = vshrl.u32 %v1217, 16
        %v1699 = vrot.slane %v1697, 4
        %v1700 = vrot.slane %v1699, 4
        %v1702 = vshll.u32 %v1218, 16
        %v1704 = vrot.slane %v1702, 5
        %v1705 = vsel %vm1245, %v1700, %v1704
        %v1706 = vshrl.u32 %v1218, 16
        %v1708 = vrot.slane %v1706, 4
        %v1709 = vor.u32 %v1708, %v1704
        %v1710 = vrot.slane %v1709, 4
        %v1712 = vshll.u32 %v1241, 16
        %v1714 = vrot.slane %v1712, 5
        %v1715 = vsel %vm1245, %v1710, %v1714
        %v1716 = vshrl.u32 %v1241, 16
        %v1718 = vrot.slane %v1716, 4
        %v1719 = vor.u32 %v1718, %v1714
        %v1720 = vrot.slane %v1719, 4
        %v1722 = vshrl.u32 %v1220, 16
        %v1724 = vrot.slane %v1722, 4
        %v1725 = vrot.slane %v1724, 4
        %v1727 = vshll.u32 %v1221, 16
        %v1729 = vrot.slane %v1727, 5
        %v1730 = vsel %vm1245, %v1725, %v1729
        %v1731 = vshrl.u32 %v1221, 16
        %v1733 = vrot.slane %v1731, 4
        %v1734 = vor.u32 %v1733, %v1729
        %v1735 = vrot.slane %v1734, 4
        %v1737 = vshll.u32 %v1242, 16
        %v1739 = vrot.slane %v1737, 5
        %v1740 = vsel %vm1245, %v1735, %v1739
        %v1741 = vshrl.u32 %v1242, 16
        %v1743 = vrot.slane %v1741, 4
        %v1744 = vor.u32 %v1743, %v1739
        %v1745 = vrot.slane %v1744, 4
        %v1806 = vmax.bf16 %v1163, %v1255
        %v1807 = vmax.bf16 %v1164, %v1265
        %v1808 = vmax.bf16 %v1165, %v1270
        %v1809 = vmax.bf16 %v1166, %v1280
        %v1810 = vmax.bf16 %v1167, %v1290
        %v1811 = vmax.bf16 %v1168, %v1295
        %v1812 = vmax.bf16 %v1169, %v1305
        %v1813 = vmax.bf16 %v1170, %v1315
        %v1814 = vmax.bf16 %v1171, %v1320
        %v1815 = vmax.bf16 %v1172, %v1330
        %v1816 = vmax.bf16 %v1173, %v1340
        %v1817 = vmax.bf16 %v1174, %v1345
        %v1818 = vmax.bf16 %v1175, %v1355
        %v1819 = vmax.bf16 %v1176, %v1365
        %v1820 = vmax.bf16 %v1177, %v1370
        %v1821 = vmax.bf16 %v1178, %v1380
        %v1822 = vmax.bf16 %v1179, %v1390
        %v1823 = vmax.bf16 %v1180, %v1395
        %v1824 = vmax.bf16 %v1181, %v1405
        %v1825 = vmax.bf16 %v1182, %v1415
        %v1826 = vmax.bf16 %v1183, %v1420
        %v1827 = vmax.bf16 %v1184, %v1430
        %v1828 = vmax.bf16 %v1185, %v1440
        %v1829 = vmax.bf16 %v1186, %v1445
        %v1830 = vmax.bf16 %v1187, %v1455
        %v1831 = vmax.bf16 %v1188, %v1465
        %v1832 = vmax.bf16 %v1189, %v1470
        %v1833 = vmax.bf16 %v1190, %v1480
        %v1834 = vmax.bf16 %v1191, %v1490
        %v1835 = vmax.bf16 %v1192, %v1495
        %v1836 = vmax.bf16 %v1193, %v1505
        %v1837 = vmax.bf16 %v1194, %v1515
        %v1838 = vmax.bf16 %v1195, %v1520
        %v1839 = vmax.bf16 %v1196, %v1530
        %v1840 = vmax.bf16 %v1197, %v1540
        %v1841 = vmax.bf16 %v1198, %v1545
        %v1842 = vmax.bf16 %v1199, %v1555
        %v1843 = vmax.bf16 %v1200, %v1565
        %v1844 = vmax.bf16 %v1201, %v1570
        %v1845 = vmax.bf16 %v1202, %v1580
        %v1846 = vmax.bf16 %v1203, %v1590
        %v1847 = vmax.bf16 %v1204, %v1595
        %v1848 = vmax.bf16 %v1205, %v1605
        %v1849 = vmax.bf16 %v1206, %v1615
        %v1850 = vmax.bf16 %v1207, %v1620
        %v1851 = vmax.bf16 %v1208, %v1630
        %v1852 = vmax.bf16 %v1209, %v1640
        %v1853 = vmax.bf16 %v1210, %v1645
        %v1854 = vmax.bf16 %v1211, %v1655
        %v1855 = vmax.bf16 %v1212, %v1665
        %v1856 = vmax.bf16 %v1213, %v1670
        %v1857 = vmax.bf16 %v1214, %v1680
        %v1858 = vmax.bf16 %v1215, %v1690
        %v1859 = vmax.bf16 %v1216, %v1695
        %v1860 = vmax.bf16 %v1217, %v1705
        %v1861 = vmax.bf16 %v1218, %v1715
        %v1862 = vmax.bf16 %v1219, %v1720
        %v1863 = vmax.bf16 %v1220, %v1730
        %v1864 = vmax.bf16 %v1221, %v1740
        %v1865 = vmax.bf16 %v1222, %v1745
        %vm1906 = vcmask 1042432
        %vm1907 = vcmask 1046532
        %vm1908 = vmor %vm1906, %vm1907
        %v1909 = vrot.slane %v1164, 5
        %v1910 = vrot.slane %v1909, 4
        %v1911 = vrot.slane %v1223, 5
        %v1912 = vsel %vm1908, %v1910, %v1911
        %v1913 = vrot.slane %v1911, 4
        %v1914 = vrot.slane %v1167, 5
        %v1915 = vrot.slane %v1914, 4
        %v1916 = vrot.slane %v1224, 5
        %v1917 = vsel %vm1908, %v1915, %v1916
        %v1918 = vrot.slane %v1916, 4
        %v1919 = vrot.slane %v1170, 5
        %v1920 = vrot.slane %v1919, 4
        %v1921 = vrot.slane %v1225, 5
        %v1922 = vsel %vm1908, %v1920, %v1921
        %v1923 = vrot.slane %v1921, 4
        %v1924 = vrot.slane %v1173, 5
        %v1925 = vrot.slane %v1924, 4
        %v1926 = vrot.slane %v1226, 5
        %v1927 = vsel %vm1908, %v1925, %v1926
        %v1928 = vrot.slane %v1926, 4
        %v1929 = vrot.slane %v1176, 5
        %v1930 = vrot.slane %v1929, 4
        %v1931 = vrot.slane %v1227, 5
        %v1932 = vsel %vm1908, %v1930, %v1931
        %v1933 = vrot.slane %v1931, 4
        %v1934 = vrot.slane %v1179, 5
        %v1935 = vrot.slane %v1934, 4
        %v1936 = vrot.slane %v1228, 5
        %v1937 = vsel %vm1908, %v1935, %v1936
        %v1938 = vrot.slane %v1936, 4
        %v1939 = vrot.slane %v1182, 5
        %v1940 = vrot.slane %v1939, 4
        %v1941 = vrot.slane %v1229, 5
        %v1942 = vsel %vm1908, %v1940, %v1941
        %v1943 = vrot.slane %v1941, 4
        %v1944 = vrot.slane %v1185, 5
        %v1945 = vrot.slane %v1944, 4
        %v1946 = vrot.slane %v1230, 5
        %v1947 = vsel %vm1908, %v1945, %v1946
        %v1948 = vrot.slane %v1946, 4
        %v1949 = vrot.slane %v1188, 5
        %v1950 = vrot.slane %v1949, 4
        %v1951 = vrot.slane %v1231, 5
        %v1952 = vsel %vm1908, %v1950, %v1951
        %v1953 = vrot.slane %v1951, 4
        %v1954 = vrot.slane %v1191, 5
        %v1955 = vrot.slane %v1954, 4
        %v1956 = vrot.slane %v1232, 5
        %v1957 = vsel %vm1908, %v1955, %v1956
        %v1958 = vrot.slane %v1956, 4
        %v1959 = vrot.slane %v1194, 5
        %v1960 = vrot.slane %v1959, 4
        %v1961 = vrot.slane %v1233, 5
        %v1962 = vsel %vm1908, %v1960, %v1961
        %v1963 = vrot.slane %v1961, 4
        %v1964 = vrot.slane %v1197, 5
        %v1965 = vrot.slane %v1964, 4
        %v1966 = vrot.slane %v1234, 5
        %v1967 = vsel %vm1908, %v1965, %v1966
        %v1968 = vrot.slane %v1966, 4
        %v1969 = vrot.slane %v1200, 5
        %v1970 = vrot.slane %v1969, 4
        %v1971 = vrot.slane %v1235, 5
        %v1972 = vsel %vm1908, %v1970, %v1971
        %v1973 = vrot.slane %v1971, 4
        %v1974 = vrot.slane %v1203, 5
        %v1975 = vrot.slane %v1974, 4
        %v1976 = vrot.slane %v1236, 5
        %v1977 = vsel %vm1908, %v1975, %v1976
        %v1978 = vrot.slane %v1976, 4
        %v1979 = vrot.slane %v1206, 5
        %v1980 = vrot.slane %v1979, 4
        %v1981 = vrot.slane %v1237, 5
        %v1982 = vsel %vm1908, %v1980, %v1981
        %v1983 = vrot.slane %v1981, 4
        %v1984 = vrot.slane %v1209, 5
        %v1985 = vrot.slane %v1984, 4
        %v1986 = vrot.slane %v1238, 5
        %v1987 = vsel %vm1908, %v1985, %v1986
        %v1988 = vrot.slane %v1986, 4
        %v1989 = vrot.slane %v1212, 5
        %v1990 = vrot.slane %v1989, 4
        %v1991 = vrot.slane %v1239, 5
        %v1992 = vsel %vm1908, %v1990, %v1991
        %v1993 = vrot.slane %v1991, 4
        %v1994 = vrot.slane %v1215, 5
        %v1995 = vrot.slane %v1994, 4
        %v1996 = vrot.slane %v1240, 5
        %v1997 = vsel %vm1908, %v1995, %v1996
        %v1998 = vrot.slane %v1996, 4
        %v1999 = vrot.slane %v1218, 5
        %v2000 = vrot.slane %v1999, 4
        %v2001 = vrot.slane %v1241, 5
        %v2002 = vsel %vm1908, %v2000, %v2001
        %v2003 = vrot.slane %v2001, 4
        %v2004 = vrot.slane %v1221, 5
        %v2005 = vrot.slane %v2004, 4
        %v2006 = vrot.slane %v1242, 5
        %v2007 = vsel %vm1908, %v2005, %v2006
        %v2008 = vrot.slane %v2006, 4
        %v2069 = vmax.bf16 %v1806, %v1909
        %v2070 = vmax.bf16 %v1807, %v1912
        %v2071 = vmax.bf16 %v1808, %v1913
        %v2072 = vmax.bf16 %v1809, %v1914
        %v2073 = vmax.bf16 %v1810, %v1917
        %v2074 = vmax.bf16 %v1811, %v1918
        %v2075 = vmax.bf16 %v1812, %v1919
        %v2076 = vmax.bf16 %v1813, %v1922
        %v2077 = vmax.bf16 %v1814, %v1923
        %v2078 = vmax.bf16 %v1815, %v1924
        %v2079 = vmax.bf16 %v1816, %v1927
        %v2080 = vmax.bf16 %v1817, %v1928
        %v2081 = vmax.bf16 %v1818, %v1929
        %v2082 = vmax.bf16 %v1819, %v1932
        %v2083 = vmax.bf16 %v1820, %v1933
        %v2084 = vmax.bf16 %v1821, %v1934
        %v2085 = vmax.bf16 %v1822, %v1937
        %v2086 = vmax.bf16 %v1823, %v1938
        %v2087 = vmax.bf16 %v1824, %v1939
        %v2088 = vmax.bf16 %v1825, %v1942
        %v2089 = vmax.bf16 %v1826, %v1943
        %v2090 = vmax.bf16 %v1827, %v1944
        %v2091 = vmax.bf16 %v1828, %v1947
        %v2092 = vmax.bf16 %v1829, %v1948
        %v2093 = vmax.bf16 %v1830, %v1949
        %v2094 = vmax.bf16 %v1831, %v1952
        %v2095 = vmax.bf16 %v1832, %v1953
        %v2096 = vmax.bf16 %v1833, %v1954
        %v2097 = vmax.bf16 %v1834, %v1957
        %v2098 = vmax.bf16 %v1835, %v1958
        %v2099 = vmax.bf16 %v1836, %v1959
        %v2100 = vmax.bf16 %v1837, %v1962
        %v2101 = vmax.bf16 %v1838, %v1963
        %v2102 = vmax.bf16 %v1839, %v1964
        %v2103 = vmax.bf16 %v1840, %v1967
        %v2104 = vmax.bf16 %v1841, %v1968
        %v2105 = vmax.bf16 %v1842, %v1969
        %v2106 = vmax.bf16 %v1843, %v1972
        %v2107 = vmax.bf16 %v1844, %v1973
        %v2108 = vmax.bf16 %v1845, %v1974
        %v2109 = vmax.bf16 %v1846, %v1977
        %v2110 = vmax.bf16 %v1847, %v1978
        %v2111 = vmax.bf16 %v1848, %v1979
        %v2112 = vmax.bf16 %v1849, %v1982
        %v2113 = vmax.bf16 %v1850, %v1983
        %v2114 = vmax.bf16 %v1851, %v1984
        %v2115 = vmax.bf16 %v1852, %v1987
        %v2116 = vmax.bf16 %v1853, %v1988
        %v2117 = vmax.bf16 %v1854, %v1989
        %v2118 = vmax.bf16 %v1855, %v1992
        %v2119 = vmax.bf16 %v1856, %v1993
        %v2120 = vmax.bf16 %v1857, %v1994
        %v2121 = vmax.bf16 %v1858, %v1997
        %v2122 = vmax.bf16 %v1859, %v1998
        %v2123 = vmax.bf16 %v1860, %v1999
        %v2124 = vmax.bf16 %v1861, %v2002
        %v2125 = vmax.bf16 %v1862, %v2003
        %v2126 = vmax.bf16 %v1863, %v2004
        %v2127 = vmax.bf16 %v1864, %v2007
        %v2128 = vmax.bf16 %v1865, %v2008
        %v2129 = vld [vmem:[#allocation2 + $0x4] sm:$0xf]
        %v2130 = vld [vmem:[#allocation2 + $0x8] sm:$0xf]
        %v2131 = vld [vmem:[#allocation2 + $0xc] sm:$0x1]
        %v2132 = vld [vmem:[#allocation2 + $0x14] sm:$0xf]
        %v2133 = vld [vmem:[#allocation2 + $0x18] sm:$0xf]
        %v2134 = vld [vmem:[#allocation2 + $0x1c] sm:$0x1]
        %v2135 = vld [vmem:[#allocation2 + $0x24] sm:$0xf]
        %v2136 = vld [vmem:[#allocation2 + $0x28] sm:$0xf]
        %v2137 = vld [vmem:[#allocation2 + $0x2c] sm:$0x1]
        %v2138 = vld [vmem:[#allocation2 + $0x34] sm:$0xf]
        %v2139 = vld [vmem:[#allocation2 + $0x38] sm:$0xf]
        %v2140 = vld [vmem:[#allocation2 + $0x3c] sm:$0x1]
        %v2141 = vld [vmem:[#allocation2 + $0x44] sm:$0xf]
        %v2142 = vld [vmem:[#allocation2 + $0x48] sm:$0xf]
        %v2143 = vld [vmem:[#allocation2 + $0x4c] sm:$0x1]
        %v2144 = vld [vmem:[#allocation2 + $0x54] sm:$0xf]
        %v2145 = vld [vmem:[#allocation2 + $0x58] sm:$0xf]
        %v2146 = vld [vmem:[#allocation2 + $0x5c] sm:$0x1]
        %v2147 = vld [vmem:[#allocation2 + $0x64] sm:$0xf]
        %v2148 = vld [vmem:[#allocation2 + $0x68] sm:$0xf]
        %v2149 = vld [vmem:[#allocation2 + $0x6c] sm:$0x1]
        %v2150 = vld [vmem:[#allocation2 + $0x74] sm:$0xf]
        %v2151 = vld [vmem:[#allocation2 + $0x78] sm:$0xf]
        %v2152 = vld [vmem:[#allocation2 + $0x7c] sm:$0x1]
        %v2153 = vld [vmem:[#allocation2 + $0x84] sm:$0xf]
        %v2154 = vld [vmem:[#allocation2 + $0x88] sm:$0xf]
        %v2155 = vld [vmem:[#allocation2 + $0x8c] sm:$0x1]
        %v2156 = vld [vmem:[#allocation2 + $0x94] sm:$0xf]
        %v2157 = vld [vmem:[#allocation2 + $0x98] sm:$0xf]
        %v2158 = vld [vmem:[#allocation2 + $0x9c] sm:$0x1]
        %v2159 = vld [vmem:[#allocation2 + $0xa4] sm:$0xf]
        %v2160 = vld [vmem:[#allocation2 + $0xa8] sm:$0xf]
        %v2161 = vld [vmem:[#allocation2 + $0xac] sm:$0x1]
        %v2162 = vld [vmem:[#allocation2 + $0xb4] sm:$0xf]
        %v2163 = vld [vmem:[#allocation2 + $0xb8] sm:$0xf]
        %v2164 = vld [vmem:[#allocation2 + $0xbc] sm:$0x1]
        %v2165 = vld [vmem:[#allocation2 + $0xc4] sm:$0xf]
        %v2166 = vld [vmem:[#allocation2 + $0xc8] sm:$0xf]
        %v2167 = vld [vmem:[#allocation2 + $0xcc] sm:$0x1]
        %v2168 = vld [vmem:[#allocation2 + $0xd4] sm:$0xf]
        %v2169 = vld [vmem:[#allocation2 + $0xd8] sm:$0xf]
        %v2170 = vld [vmem:[#allocation2 + $0xdc] sm:$0x1]
        %v2171 = vld [vmem:[#allocation2 + $0xe4] sm:$0xf]
        %v2172 = vld [vmem:[#allocation2 + $0xe8] sm:$0xf]
        %v2173 = vld [vmem:[#allocation2 + $0xec] sm:$0x1]
        %v2174 = vld [vmem:[#allocation2 + $0xf4] sm:$0xf]
        %v2175 = vld [vmem:[#allocation2 + $0xf8] sm:$0xf]
        %v2176 = vld [vmem:[#allocation2 + $0xfc] sm:$0x1]
        %v2177 = vld [vmem:[#allocation2 + $0x104] sm:$0xf]
        %v2178 = vld [vmem:[#allocation2 + $0x108] sm:$0xf]
        %v2179 = vld [vmem:[#allocation2 + $0x10c] sm:$0x1]
        %v2180 = vld [vmem:[#allocation2 + $0x114] sm:$0xf]
        %v2181 = vld [vmem:[#allocation2 + $0x118] sm:$0xf]
        %v2182 = vld [vmem:[#allocation2 + $0x11c] sm:$0x1]
        %v2183 = vld [vmem:[#allocation2 + $0x124] sm:$0xf]
        %v2184 = vld [vmem:[#allocation2 + $0x128] sm:$0xf]
        %v2185 = vld [vmem:[#allocation2 + $0x12c] sm:$0x1]
        %v2186 = vld [vmem:[#allocation2 + $0x134] sm:$0xf]
        %v2187 = vld [vmem:[#allocation2 + $0x138] sm:$0xf]
        %v2188 = vld [vmem:[#allocation2 + $0x13c] sm:$0x1]
        %vm2189 = vsmask.f32 2304
        %vm2190 = vsmask.f32 6416
        %vm2191 = vmor %vm2189, %vm2190
        %v2193 = vshrl.u32 %v2129, 16
        %v2195 = vrot.slane %v2193, 5
        %v2196 = vshll.u32 %v2129, 16
        %v2198 = vrot.slane %v2196, 6
        %v2199 = vor.u32 %v2195, %v2198
        %v2200 = vrot.slane %v2199, 4
        %v2202 = vshrl.u32 %v2130, 16
        %v2204 = vrot.slane %v2202, 5
        %v2205 = vshll.u32 %v2130, 16
        %v2207 = vrot.slane %v2205, 6
        %v2208 = vor.u32 %v2204, %v2207
        %v2209 = vsel %vm2191, %v2200, %v2208
        %v2210 = vrot.slane %v2208, 4
        %v2212 = vshll.u32 %v2131, 16
        %v2214 = vrot.slane %v2212, 6
        %v2215 = vsel %vm2191, %v2210, %v2214
        %v2217 = vshrl.u32 %v2132, 16
        %v2219 = vrot.slane %v2217, 5
        %v2220 = vshll.u32 %v2132, 16
        %v2222 = vrot.slane %v2220, 6
        %v2223 = vor.u32 %v2219, %v2222
        %v2224 = vrot.slane %v2223, 4
        %v2226 = vshrl.u32 %v2133, 16
        %v2228 = vrot.slane %v2226, 5
        %v2229 = vshll.u32 %v2133, 16
        %v2231 = vrot.slane %v2229, 6
        %v2232 = vor.u32 %v2228, %v2231
        %v2233 = vsel %vm2191, %v2224, %v2232
        %v2234 = vrot.slane %v2232, 4
        %v2236 = vshll.u32 %v2134, 16
        %v2238 = vrot.slane %v2236, 6
        %v2239 = vsel %vm2191, %v2234, %v2238
        %v2241 = vshrl.u32 %v2135, 16
        %v2243 = vrot.slane %v2241, 5
        %v2244 = vshll.u32 %v2135, 16
        %v2246 = vrot.slane %v2244, 6
        %v2247 = vor.u32 %v2243, %v2246
        %v2248 = vrot.slane %v2247, 4
        %v2250 = vshrl.u32 %v2136, 16
        %v2252 = vrot.slane %v2250, 5
        %v2253 = vshll.u32 %v2136, 16
        %v2255 = vrot.slane %v2253, 6
        %v2256 = vor.u32 %v2252, %v2255
        %v2257 = vsel %vm2191, %v2248, %v2256
        %v2258 = vrot.slane %v2256, 4
        %v2260 = vshll.u32 %v2137, 16
        %v2262 = vrot.slane %v2260, 6
        %v2263 = vsel %vm2191, %v2258, %v2262
        %v2265 = vshrl.u32 %v2138, 16
        %v2267 = vrot.slane %v2265, 5
        %v2268 = vshll.u32 %v2138, 16
        %v2270 = vrot.slane %v2268, 6
        %v2271 = vor.u32 %v2267, %v2270
        %v2272 = vrot.slane %v2271, 4
        %v2274 = vshrl.u32 %v2139, 16
        %v2276 = vrot.slane %v2274, 5
        %v2277 = vshll.u32 %v2139, 16
        %v2279 = vrot.slane %v2277, 6
        %v2280 = vor.u32 %v2276, %v2279
        %v2281 = vsel %vm2191, %v2272, %v2280
        %v2282 = vrot.slane %v2280, 4
        %v2284 = vshll.u32 %v2140, 16
        %v2286 = vrot.slane %v2284, 6
        %v2287 = vsel %vm2191, %v2282, %v2286
        %v2289 = vshrl.u32 %v2141, 16
        %v2291 = vrot.slane %v2289, 5
        %v2292 = vshll.u32 %v2141, 16
        %v2294 = vrot.slane %v2292, 6
        %v2295 = vor.u32 %v2291, %v2294
        %v2296 = vrot.slane %v2295, 4
        %v2298 = vshrl.u32 %v2142, 16
        %v2300 = vrot.slane %v2298, 5
        %v2301 = vshll.u32 %v2142, 16
        %v2303 = vrot.slane %v2301, 6
        %v2304 = vor.u32 %v2300, %v2303
        %v2305 = vsel %vm2191, %v2296, %v2304
        %v2306 = vrot.slane %v2304, 4
        %v2308 = vshll.u32 %v2143, 16
        %v2310 = vrot.slane %v2308, 6
        %v2311 = vsel %vm2191, %v2306, %v2310
        %v2313 = vshrl.u32 %v2144, 16
        %v2315 = vrot.slane %v2313, 5
        %v2316 = vshll.u32 %v2144, 16
        %v2318 = vrot.slane %v2316, 6
        %v2319 = vor.u32 %v2315, %v2318
        %v2320 = vrot.slane %v2319, 4
        %v2322 = vshrl.u32 %v2145, 16
        %v2324 = vrot.slane %v2322, 5
        %v2325 = vshll.u32 %v2145, 16
        %v2327 = vrot.slane %v2325, 6
        %v2328 = vor.u32 %v2324, %v2327
        %v2329 = vsel %vm2191, %v2320, %v2328
        %v2330 = vrot.slane %v2328, 4
        %v2332 = vshll.u32 %v2146, 16
        %v2334 = vrot.slane %v2332, 6
        %v2335 = vsel %vm2191, %v2330, %v2334
        %v2337 = vshrl.u32 %v2147, 16
        %v2339 = vrot.slane %v2337, 5
        %v2340 = vshll.u32 %v2147, 16
        %v2342 = vrot.slane %v2340, 6
        %v2343 = vor.u32 %v2339, %v2342
        %v2344 = vrot.slane %v2343, 4
        %v2346 = vshrl.u32 %v2148, 16
        %v2348 = vrot.slane %v2346, 5
        %v2349 = vshll.u32 %v2148, 16
        %v2351 = vrot.slane %v2349, 6
        %v2352 = vor.u32 %v2348, %v2351
        %v2353 = vsel %vm2191, %v2344, %v2352
        %v2354 = vrot.slane %v2352, 4
        %v2356 = vshll.u32 %v2149, 16
        %v2358 = vrot.slane %v2356, 6
        %v2359 = vsel %vm2191, %v2354, %v2358
        %v2361 = vshrl.u32 %v2150, 16
        %v2363 = vrot.slane %v2361, 5
        %v2364 = vshll.u32 %v2150, 16
        %v2366 = vrot.slane %v2364, 6
        %v2367 = vor.u32 %v2363, %v2366
        %v2368 = vrot.slane %v2367, 4
        %v2370 = vshrl.u32 %v2151, 16
        %v2372 = vrot.slane %v2370, 5
        %v2373 = vshll.u32 %v2151, 16
        %v2375 = vrot.slane %v2373, 6
        %v2376 = vor.u32 %v2372, %v2375
        %v2377 = vsel %vm2191, %v2368, %v2376
        %v2378 = vrot.slane %v2376, 4
        %v2380 = vshll.u32 %v2152, 16
        %v2382 = vrot.slane %v2380, 6
        %v2383 = vsel %vm2191, %v2378, %v2382
        %v2385 = vshrl.u32 %v2153, 16
        %v2387 = vrot.slane %v2385, 5
        %v2388 = vshll.u32 %v2153, 16
        %v2390 = vrot.slane %v2388, 6
        %v2391 = vor.u32 %v2387, %v2390
        %v2392 = vrot.slane %v2391, 4
        %v2394 = vshrl.u32 %v2154, 16
        %v2396 = vrot.slane %v2394, 5
        %v2397 = vshll.u32 %v2154, 16
        %v2399 = vrot.slane %v2397, 6
        %v2400 = vor.u32 %v2396, %v2399
        %v2401 = vsel %vm2191, %v2392, %v2400
        %v2402 = vrot.slane %v2400, 4
        %v2404 = vshll.u32 %v2155, 16
        %v2406 = vrot.slane %v2404, 6
        %v2407 = vsel %vm2191, %v2402, %v2406
        %v2409 = vshrl.u32 %v2156, 16
        %v2411 = vrot.slane %v2409, 5
        %v2412 = vshll.u32 %v2156, 16
        %v2414 = vrot.slane %v2412, 6
        %v2415 = vor.u32 %v2411, %v2414
        %v2416 = vrot.slane %v2415, 4
        %v2418 = vshrl.u32 %v2157, 16
        %v2420 = vrot.slane %v2418, 5
        %v2421 = vshll.u32 %v2157, 16
        %v2423 = vrot.slane %v2421, 6
        %v2424 = vor.u32 %v2420, %v2423
        %v2425 = vsel %vm2191, %v2416, %v2424
        %v2426 = vrot.slane %v2424, 4
        %v2428 = vshll.u32 %v2158, 16
        %v2430 = vrot.slane %v2428, 6
        %v2431 = vsel %vm2191, %v2426, %v2430
        %v2433 = vshrl.u32 %v2159, 16
        %v2435 = vrot.slane %v2433, 5
        %v2436 = vshll.u32 %v2159, 16
        %v2438 = vrot.slane %v2436, 6
        %v2439 = vor.u32 %v2435, %v2438
        %v2440 = vrot.slane %v2439, 4
        %v2442 = vshrl.u32 %v2160, 16
        %v2444 = vrot.slane %v2442, 5
        %v2445 = vshll.u32 %v2160, 16
        %v2447 = vrot.slane %v2445, 6
        %v2448 = vor.u32 %v2444, %v2447
        %v2449 = vsel %vm2191, %v2440, %v2448
        %v2450 = vrot.slane %v2448, 4
        %v2452 = vshll.u32 %v2161, 16
        %v2454 = vrot.slane %v2452, 6
        %v2455 = vsel %vm2191, %v2450, %v2454
        %v2457 = vshrl.u32 %v2162, 16
        %v2459 = vrot.slane %v2457, 5
        %v2460 = vshll.u32 %v2162, 16
        %v2462 = vrot.slane %v2460, 6
        %v2463 = vor.u32 %v2459, %v2462
        %v2464 = vrot.slane %v2463, 4
        %v2466 = vshrl.u32 %v2163, 16
        %v2468 = vrot.slane %v2466, 5
        %v2469 = vshll.u32 %v2163, 16
        %v2471 = vrot.slane %v2469, 6
        %v2472 = vor.u32 %v2468, %v2471
        %v2473 = vsel %vm2191, %v2464, %v2472
        %v2474 = vrot.slane %v2472, 4
        %v2476 = vshll.u32 %v2164, 16
        %v2478 = vrot.slane %v2476, 6
        %v2479 = vsel %vm2191, %v2474, %v2478
        %v2481 = vshrl.u32 %v2165, 16
        %v2483 = vrot.slane %v2481, 5
        %v2484 = vshll.u32 %v2165, 16
        %v2486 = vrot.slane %v2484, 6
        %v2487 = vor.u32 %v2483, %v2486
        %v2488 = vrot.slane %v2487, 4
        %v2490 = vshrl.u32 %v2166, 16
        %v2492 = vrot.slane %v2490, 5
        %v2493 = vshll.u32 %v2166, 16
        %v2495 = vrot.slane %v2493, 6
        %v2496 = vor.u32 %v2492, %v2495
        %v2497 = vsel %vm2191, %v2488, %v2496
        %v2498 = vrot.slane %v2496, 4
        %v2500 = vshll.u32 %v2167, 16
        %v2502 = vrot.slane %v2500, 6
        %v2503 = vsel %vm2191, %v2498, %v2502
        %v2505 = vshrl.u32 %v2168, 16
        %v2507 = vrot.slane %v2505, 5
        %v2508 = vshll.u32 %v2168, 16
        %v2510 = vrot.slane %v2508, 6
        %v2511 = vor.u32 %v2507, %v2510
        %v2512 = vrot.slane %v2511, 4
        %v2514 = vshrl.u32 %v2169, 16
        %v2516 = vrot.slane %v2514, 5
        %v2517 = vshll.u32 %v2169, 16
        %v2519 = vrot.slane %v2517, 6
        %v2520 = vor.u32 %v2516, %v2519
        %v2521 = vsel %vm2191, %v2512, %v2520
        %v2522 = vrot.slane %v2520, 4
        %v2524 = vshll.u32 %v2170, 16
        %v2526 = vrot.slane %v2524, 6
        %v2527 = vsel %vm2191, %v2522, %v2526
        %v2529 = vshrl.u32 %v2171, 16
        %v2531 = vrot.slane %v2529, 5
        %v2532 = vshll.u32 %v2171, 16
        %v2534 = vrot.slane %v2532, 6
        %v2535 = vor.u32 %v2531, %v2534
        %v2536 = vrot.slane %v2535, 4
        %v2538 = vshrl.u32 %v2172, 16
        %v2540 = vrot.slane %v2538, 5
        %v2541 = vshll.u32 %v2172, 16
        %v2543 = vrot.slane %v2541, 6
        %v2544 = vor.u32 %v2540, %v2543
        %v2545 = vsel %vm2191, %v2536, %v2544
        %v2546 = vrot.slane %v2544, 4
        %v2548 = vshll.u32 %v2173, 16
        %v2550 = vrot.slane %v2548, 6
        %v2551 = vsel %vm2191, %v2546, %v2550
        %v2553 = vshrl.u32 %v2174, 16
        %v2555 = vrot.slane %v2553, 5
        %v2556 = vshll.u32 %v2174, 16
        %v2558 = vrot.slane %v2556, 6
        %v2559 = vor.u32 %v2555, %v2558
        %v2560 = vrot.slane %v2559, 4
        %v2562 = vshrl.u32 %v2175, 16
        %v2564 = vrot.slane %v2562, 5
        %v2565 = vshll.u32 %v2175, 16
        %v2567 = vrot.slane %v2565, 6
        %v2568 = vor.u32 %v2564, %v2567
        %v2569 = vsel %vm2191, %v2560, %v2568
        %v2570 = vrot.slane %v2568, 4
        %v2572 = vshll.u32 %v2176, 16
        %v2574 = vrot.slane %v2572, 6
        %v2575 = vsel %vm2191, %v2570, %v2574
        %v2577 = vshrl.u32 %v2177, 16
        %v2579 = vrot.slane %v2577, 5
        %v2580 = vshll.u32 %v2177, 16
        %v2582 = vrot.slane %v2580, 6
        %v2583 = vor.u32 %v2579, %v2582
        %v2584 = vrot.slane %v2583, 4
        %v2586 = vshrl.u32 %v2178, 16
        %v2588 = vrot.slane %v2586, 5
        %v2589 = vshll.u32 %v2178, 16
        %v2591 = vrot.slane %v2589, 6
        %v2592 = vor.u32 %v2588, %v2591
        %v2593 = vsel %vm2191, %v2584, %v2592
        %v2594 = vrot.slane %v2592, 4
        %v2596 = vshll.u32 %v2179, 16
        %v2598 = vrot.slane %v2596, 6
        %v2599 = vsel %vm2191, %v2594, %v2598
        %v2601 = vshrl.u32 %v2180, 16
        %v2603 = vrot.slane %v2601, 5
        %v2604 = vshll.u32 %v2180, 16
        %v2606 = vrot.slane %v2604, 6
        %v2607 = vor.u32 %v2603, %v2606
        %v2608 = vrot.slane %v2607, 4
        %v2610 = vshrl.u32 %v2181, 16
        %v2612 = vrot.slane %v2610, 5
        %v2613 = vshll.u32 %v2181, 16
        %v2615 = vrot.slane %v2613, 6
        %v2616 = vor.u32 %v2612, %v2615
        %v2617 = vsel %vm2191, %v2608, %v2616
        %v2618 = vrot.slane %v2616, 4
        %v2620 = vshll.u32 %v2182, 16
        %v2622 = vrot.slane %v2620, 6
        %v2623 = vsel %vm2191, %v2618, %v2622
        %v2625 = vshrl.u32 %v2183, 16
        %v2627 = vrot.slane %v2625, 5
        %v2628 = vshll.u32 %v2183, 16
        %v2630 = vrot.slane %v2628, 6
        %v2631 = vor.u32 %v2627, %v2630
        %v2632 = vrot.slane %v2631, 4
        %v2634 = vshrl.u32 %v2184, 16
        %v2636 = vrot.slane %v2634, 5
        %v2637 = vshll.u32 %v2184, 16
        %v2639 = vrot.slane %v2637, 6
        %v2640 = vor.u32 %v2636, %v2639
        %v2641 = vsel %vm2191, %v2632, %v2640
        %v2642 = vrot.slane %v2640, 4
        %v2644 = vshll.u32 %v2185, 16
        %v2646 = vrot.slane %v2644, 6
        %v2647 = vsel %vm2191, %v2642, %v2646
        %v2649 = vshrl.u32 %v2186, 16
        %v2651 = vrot.slane %v2649, 5
        %v2652 = vshll.u32 %v2186, 16
        %v2654 = vrot.slane %v2652, 6
        %v2655 = vor.u32 %v2651, %v2654
        %v2656 = vrot.slane %v2655, 4
        %v2658 = vshrl.u32 %v2187, 16
        %v2660 = vrot.slane %v2658, 5
        %v2661 = vshll.u32 %v2187, 16
        %v2663 = vrot.slane %v2661, 6
        %v2664 = vor.u32 %v2660, %v2663
        %v2665 = vsel %vm2191, %v2656, %v2664
        %v2666 = vrot.slane %v2664, 4
        %v2668 = vshll.u32 %v2188, 16
        %v2670 = vrot.slane %v2668, 6
        %v2671 = vsel %vm2191, %v2666, %v2670
        %v2732 = vmax.bf16 %v2069, %v2199
        %v2733 = vmax.bf16 %v2070, %v2209
        %v2734 = vmax.bf16 %v2071, %v2215
        %v2735 = vmax.bf16 %v2072, %v2223
        %v2736 = vmax.bf16 %v2073, %v2233
        %v2737 = vmax.bf16 %v2074, %v2239
        %v2738 = vmax.bf16 %v2075, %v2247
        %v2739 = vmax.bf16 %v2076, %v2257
        %v2740 = vmax.bf16 %v2077, %v2263
        %v2741 = vmax.bf16 %v2078, %v2271
        %v2742 = vmax.bf16 %v2079, %v2281
        %v2743 = vmax.bf16 %v2080, %v2287
        %v2744 = vmax.bf16 %v2081, %v2295
        %v2745 = vmax.bf16 %v2082, %v2305
        %v2746 = vmax.bf16 %v2083, %v2311
        %v2747 = vmax.bf16 %v2084, %v2319
        %v2748 = vmax.bf16 %v2085, %v2329
        %v2749 = vmax.bf16 %v2086, %v2335
        %v2750 = vmax.bf16 %v2087, %v2343
        %v2751 = vmax.bf16 %v2088, %v2353
        %v2752 = vmax.bf16 %v2089, %v2359
        %v2753 = vmax.bf16 %v2090, %v2367
        %v2754 = vmax.bf16 %v2091, %v2377
        %v2755 = vmax.bf16 %v2092, %v2383
        %v2756 = vmax.bf16 %v2093, %v2391
        %v2757 = vmax.bf16 %v2094, %v2401
        %v2758 = vmax.bf16 %v2095, %v2407
        %v2759 = vmax.bf16 %v2096, %v2415
        %v2760 = vmax.bf16 %v2097, %v2425
        %v2761 = vmax.bf16 %v2098, %v2431
        %v2762 = vmax.bf16 %v2099, %v2439
        %v2763 = vmax.bf16 %v2100, %v2449
        %v2764 = vmax.bf16 %v2101, %v2455
        %v2765 = vmax.bf16 %v2102, %v2463
        %v2766 = vmax.bf16 %v2103, %v2473
        %v2767 = vmax.bf16 %v2104, %v2479
        %v2768 = vmax.bf16 %v2105, %v2487
        %v2769 = vmax.bf16 %v2106, %v2497
        %v2770 = vmax.bf16 %v2107, %v2503
        %v2771 = vmax.bf16 %v2108, %v2511
        %v2772 = vmax.bf16 %v2109, %v2521
        %v2773 = vmax.bf16 %v2110, %v2527
        %v2774 = vmax.bf16 %v2111, %v2535
        %v2775 = vmax.bf16 %v2112, %v2545
        %v2776 = vmax.bf16 %v2113, %v2551
        %v2777 = vmax.bf16 %v2114, %v2559
        %v2778 = vmax.bf16 %v2115, %v2569
        %v2779 = vmax.bf16 %v2116, %v2575
        %v2780 = vmax.bf16 %v2117, %v2583
        %v2781 = vmax.bf16 %v2118, %v2593
        %v2782 = vmax.bf16 %v2119, %v2599
        %v2783 = vmax.bf16 %v2120, %v2607
        %v2784 = vmax.bf16 %v2121, %v2617
        %v2785 = vmax.bf16 %v2122, %v2623
        %v2786 = vmax.bf16 %v2123, %v2631
        %v2787 = vmax.bf16 %v2124, %v2641
        %v2788 = vmax.bf16 %v2125, %v2647
        %v2789 = vmax.bf16 %v2126, %v2655
        %v2790 = vmax.bf16 %v2127, %v2665
        %v2791 = vmax.bf16 %v2128, %v2671
        %v2792 = vld [vmem:[#allocation2 + $0x4] sm:$0xe]
        %v2793 = vld [vmem:[#allocation2 + $0x14] sm:$0xe]
        %v2794 = vld [vmem:[#allocation2 + $0x24] sm:$0xe]
        %v2795 = vld [vmem:[#allocation2 + $0x34] sm:$0xe]
        %v2796 = vld [vmem:[#allocation2 + $0x44] sm:$0xe]
        %v2797 = vld [vmem:[#allocation2 + $0x54] sm:$0xe]
        %v2798 = vld [vmem:[#allocation2 + $0x64] sm:$0xe]
        %v2799 = vld [vmem:[#allocation2 + $0x74] sm:$0xe]
        %v2800 = vld [vmem:[#allocation2 + $0x84] sm:$0xe]
        %v2801 = vld [vmem:[#allocation2 + $0x94] sm:$0xe]
        %v2802 = vld [vmem:[#allocation2 + $0xa4] sm:$0xe]
        %v2803 = vld [vmem:[#allocation2 + $0xb4] sm:$0xe]
        %v2804 = vld [vmem:[#allocation2 + $0xc4] sm:$0xe]
        %v2805 = vld [vmem:[#allocation2 + $0xd4] sm:$0xe]
        %v2806 = vld [vmem:[#allocation2 + $0xe4] sm:$0xe]
        %v2807 = vld [vmem:[#allocation2 + $0xf4] sm:$0xe]
        %v2808 = vld [vmem:[#allocation2 + $0x104] sm:$0xe]
        %v2809 = vld [vmem:[#allocation2 + $0x114] sm:$0xe]
        %v2810 = vld [vmem:[#allocation2 + $0x124] sm:$0xe]
        %v2811 = vld [vmem:[#allocation2 + $0x134] sm:$0xe]
        %vm2872 = vcmask 1041408
        %vm2873 = vcmask 1045508
        %vm2874 = vmor %vm2872, %vm2873
        %v2875 = vrot.slane %v2792, 6
        %v2876 = vrot.slane %v2875, 4
        %v2877 = vrot.slane %v2130, 6
        %v2878 = vsel %vm2874, %v2876, %v2877
        %v2879 = vrot.slane %v2877, 4
        %v2880 = vrot.slane %v2131, 6
        %v2881 = vsel %vm2874, %v2879, %v2880
        %v2882 = vrot.slane %v2793, 6
        %v2883 = vrot.slane %v2882, 4
        %v2884 = vrot.slane %v2133, 6
        %v2885 = vsel %vm2874, %v2883, %v2884
        %v2886 = vrot.slane %v2884, 4
        %v2887 = vrot.slane %v2134, 6
        %v2888 = vsel %vm2874, %v2886, %v2887
        %v2889 = vrot.slane %v2794, 6
        %v2890 = vrot.slane %v2889, 4
        %v2891 = vrot.slane %v2136, 6
        %v2892 = vsel %vm2874, %v2890, %v2891
        %v2893 = vrot.slane %v2891, 4
        %v2894 = vrot.slane %v2137, 6
        %v2895 = vsel %vm2874, %v2893, %v2894
        %v2896 = vrot.slane %v2795, 6
        %v2897 = vrot.slane %v2896, 4
        %v2898 = vrot.slane %v2139, 6
        %v2899 = vsel %vm2874, %v2897, %v2898
        %v2900 = vrot.slane %v2898, 4
        %v2901 = vrot.slane %v2140, 6
        %v2902 = vsel %vm2874, %v2900, %v2901
        %v2903 = vrot.slane %v2796, 6
        %v2904 = vrot.slane %v2903, 4
        %v2905 = vrot.slane %v2142, 6
        %v2906 = vsel %vm2874, %v2904, %v2905
        %v2907 = vrot.slane %v2905, 4
        %v2908 = vrot.slane %v2143, 6
        %v2909 = vsel %vm2874, %v2907, %v2908
        %v2910 = vrot.slane %v2797, 6
        %v2911 = vrot.slane %v2910, 4
        %v2912 = vrot.slane %v2145, 6
        %v2913 = vsel %vm2874, %v2911, %v2912
        %v2914 = vrot.slane %v2912, 4
        %v2915 = vrot.slane %v2146, 6
        %v2916 = vsel %vm2874, %v2914, %v2915
        %v2917 = vrot.slane %v2798, 6
        %v2918 = vrot.slane %v2917, 4
        %v2919 = vrot.slane %v2148, 6
        %v2920 = vsel %vm2874, %v2918, %v2919
        %v2921 = vrot.slane %v2919, 4
        %v2922 = vrot.slane %v2149, 6
        %v2923 = vsel %vm2874, %v2921, %v2922
        %v2924 = vrot.slane %v2799, 6
        %v2925 = vrot.slane %v2924, 4
        %v2926 = vrot.slane %v2151, 6
        %v2927 = vsel %vm2874, %v2925, %v2926
        %v2928 = vrot.slane %v2926, 4
        %v2929 = vrot.slane %v2152, 6
        %v2930 = vsel %vm2874, %v2928, %v2929
        %v2931 = vrot.slane %v2800, 6
        %v2932 = vrot.slane %v2931, 4
        %v2933 = vrot.slane %v2154, 6
        %v2934 = vsel %vm2874, %v2932, %v2933
        %v2935 = vrot.slane %v2933, 4
        %v2936 = vrot.slane %v2155, 6
        %v2937 = vsel %vm2874, %v2935, %v2936
        %v2938 = vrot.slane %v2801, 6
        %v2939 = vrot.slane %v2938, 4
        %v2940 = vrot.slane %v2157, 6
        %v2941 = vsel %vm2874, %v2939, %v2940
        %v2942 = vrot.slane %v2940, 4
        %v2943 = vrot.slane %v2158, 6
        %v2944 = vsel %vm2874, %v2942, %v2943
        %v2945 = vrot.slane %v2802, 6
        %v2946 = vrot.slane %v2945, 4
        %v2947 = vrot.slane %v2160, 6
        %v2948 = vsel %vm2874, %v2946, %v2947
        %v2949 = vrot.slane %v2947, 4
        %v2950 = vrot.slane %v2161, 6
        %v2951 = vsel %vm2874, %v2949, %v2950
        %v2952 = vrot.slane %v2803, 6
        %v2953 = vrot.slane %v2952, 4
        %v2954 = vrot.slane %v2163, 6
        %v2955 = vsel %vm2874, %v2953, %v2954
        %v2956 = vrot.slane %v2954, 4
        %v2957 = vrot.slane %v2164, 6
        %v2958 = vsel %vm2874, %v2956, %v2957
        %v2959 = vrot.slane %v2804, 6
        %v2960 = vrot.slane %v2959, 4
        %v2961 = vrot.slane %v2166, 6
        %v2962 = vsel %vm2874, %v2960, %v2961
        %v2963 = vrot.slane %v2961, 4
        %v2964 = vrot.slane %v2167, 6
        %v2965 = vsel %vm2874, %v2963, %v2964
        %v2966 = vrot.slane %v2805, 6
        %v2967 = vrot.slane %v2966, 4
        %v2968 = vrot.slane %v2169, 6
        %v2969 = vsel %vm2874, %v2967, %v2968
        %v2970 = vrot.slane %v2968, 4
        %v2971 = vrot.slane %v2170, 6
        %v2972 = vsel %vm2874, %v2970, %v2971
        %v2973 = vrot.slane %v2806, 6
        %v2974 = vrot.slane %v2973, 4
        %v2975 = vrot.slane %v2172, 6
        %v2976 = vsel %vm2874, %v2974, %v2975
        %v2977 = vrot.slane %v2975, 4
        %v2978 = vrot.slane %v2173, 6
        %v2979 = vsel %vm2874, %v2977, %v2978
        %v2980 = vrot.slane %v2807, 6
        %v2981 = vrot.slane %v2980, 4
        %v2982 = vrot.slane %v2175, 6
        %v2983 = vsel %vm2874, %v2981, %v2982
        %v2984 = vrot.slane %v2982, 4
        %v2985 = vrot.slane %v2176, 6
        %v2986 = vsel %vm2874, %v2984, %v2985
        %v2987 = vrot.slane %v2808, 6
        %v2988 = vrot.slane %v2987, 4
        %v2989 = vrot.slane %v2178, 6
        %v2990 = vsel %vm2874, %v2988, %v2989
        %v2991 = vrot.slane %v2989, 4
        %v2992 = vrot.slane %v2179, 6
        %v2993 = vsel %vm2874, %v2991, %v2992
        %v2994 = vrot.slane %v2809, 6
        %v2995 = vrot.slane %v2994, 4
        %v2996 = vrot.slane %v2181, 6
        %v2997 = vsel %vm2874, %v2995, %v2996
        %v2998 = vrot.slane %v2996, 4
        %v2999 = vrot.slane %v2182, 6
        %v3000 = vsel %vm2874, %v2998, %v2999
        %v3001 = vrot.slane %v2810, 6
        %v3002 = vrot.slane %v3001, 4
        %v3003 = vrot.slane %v2184, 6
        %v3004 = vsel %vm2874, %v3002, %v3003
        %v3005 = vrot.slane %v3003, 4
        %v3006 = vrot.slane %v2185, 6
        %v3007 = vsel %vm2874, %v3005, %v3006
        %v3008 = vrot.slane %v2811, 6
        %v3009 = vrot.slane %v3008, 4
        %v3010 = vrot.slane %v2187, 6
        %v3011 = vsel %vm2874, %v3009, %v3010
        %v3012 = vrot.slane %v3010, 4
        %v3013 = vrot.slane %v2188, 6
        %v3014 = vsel %vm2874, %v3012, %v3013
        %v3075 = vmax.bf16 %v2732, %v2875
        %v3076 = vmax.bf16 %v2733, %v2878
        %v3077 = vmax.bf16 %v2734, %v2881
        %v3078 = vmax.bf16 %v2735, %v2882
        %v3079 = vmax.bf16 %v2736, %v2885
        %v3080 = vmax.bf16 %v2737, %v2888
        %v3081 = vmax.bf16 %v2738, %v2889
        %v3082 = vmax.bf16 %v2739, %v2892
        %v3083 = vmax.bf16 %v2740, %v2895
        %v3084 = vmax.bf16 %v2741, %v2896
        %v3085 = vmax.bf16 %v2742, %v2899
        %v3086 = vmax.bf16 %v2743, %v2902
        %v3087 = vmax.bf16 %v2744, %v2903
        %v3088 = vmax.bf16 %v2745, %v2906
        %v3089 = vmax.bf16 %v2746, %v2909
        %v3090 = vmax.bf16 %v2747, %v2910
        %v3091 = vmax.bf16 %v2748, %v2913
        %v3092 = vmax.bf16 %v2749, %v2916
        %v3093 = vmax.bf16 %v2750, %v2917
        %v3094 = vmax.bf16 %v2751, %v2920
        %v3095 = vmax.bf16 %v2752, %v2923
        %v3096 = vmax.bf16 %v2753, %v2924
        %v3097 = vmax.bf16 %v2754, %v2927
        %v3098 = vmax.bf16 %v2755, %v2930
        %v3099 = vmax.bf16 %v2756, %v2931
        %v3100 = vmax.bf16 %v2757, %v2934
        %v3101 = vmax.bf16 %v2758, %v2937
        %v3102 = vmax.bf16 %v2759, %v2938
        %v3103 = vmax.bf16 %v2760, %v2941
        %v3104 = vmax.bf16 %v2761, %v2944
        %v3105 = vmax.bf16 %v2762, %v2945
        %v3106 = vmax.bf16 %v2763, %v2948
        %v3107 = vmax.bf16 %v2764, %v2951
        %v3108 = vmax.bf16 %v2765, %v2952
        %v3109 = vmax.bf16 %v2766, %v2955
        %v3110 = vmax.bf16 %v2767, %v2958
        %v3111 = vmax.bf16 %v2768, %v2959
        %v3112 = vmax.bf16 %v2769, %v2962
        %v3113 = vmax.bf16 %v2770, %v2965
        %v3114 = vmax.bf16 %v2771, %v2966
        %v3115 = vmax.bf16 %v2772, %v2969
        %v3116 = vmax.bf16 %v2773, %v2972
        %v3117 = vmax.bf16 %v2774, %v2973
        %v3118 = vmax.bf16 %v2775, %v2976
        %v3119 = vmax.bf16 %v2776, %v2979
        %v3120 = vmax.bf16 %v2777, %v2980
        %v3121 = vmax.bf16 %v2778, %v2983
        %v3122 = vmax.bf16 %v2779, %v2986
        %v3123 = vmax.bf16 %v2780, %v2987
        %v3124 = vmax.bf16 %v2781, %v2990
        %v3125 = vmax.bf16 %v2782, %v2993
        %v3126 = vmax.bf16 %v2783, %v2994
        %v3127 = vmax.bf16 %v2784, %v2997
        %v3128 = vmax.bf16 %v2785, %v3000
        %v3129 = vmax.bf16 %v2786, %v3001
        %v3130 = vmax.bf16 %v2787, %v3004
        %v3131 = vmax.bf16 %v2788, %v3007
        %v3132 = vmax.bf16 %v2789, %v3008
        %v3133 = vmax.bf16 %v2790, %v3011
        %v3134 = vmax.bf16 %v2791, %v3014
        %v3135 = vmax.bf16 %v3075, %v3078
        %v3136 = vmax.bf16 %v3076, %v3079
        %v3137 = vmax.bf16 %v3077, %v3080
        %v3138 = vmax.bf16 %v3078, %v3081
        %v3139 = vmax.bf16 %v3079, %v3082
        %v3140 = vmax.bf16 %v3080, %v3083
        %v3141 = vmax.bf16 %v3081, %v3084
        %v3142 = vmax.bf16 %v3082, %v3085
        %v3143 = vmax.bf16 %v3083, %v3086
        %v3144 = vmax.bf16 %v3084, %v3087
        %v3145 = vmax.bf16 %v3085, %v3088
        %v3146 = vmax.bf16 %v3086, %v3089
        %v3147 = vmax.bf16 %v3087, %v3090
        %v3148 = vmax.bf16 %v3088, %v3091
        %v3149 = vmax.bf16 %v3089, %v3092
        %v3150 = vmax.bf16 %v3090, %v3093
        %v3151 = vmax.bf16 %v3091, %v3094
        %v3152 = vmax.bf16 %v3092, %v3095
        %v3153 = vmax.bf16 %v3093, %v3096
        %v3154 = vmax.bf16 %v3094, %v3097
        %v3155 = vmax.bf16 %v3095, %v3098
        %v3156 = vmax.bf16 %v3096, %v3099
        %v3157 = vmax.bf16 %v3097, %v3100
        %v3158 = vmax.bf16 %v3098, %v3101
        %v3159 = vmax.bf16 %v3099, %v3102
        %v3160 = vmax.bf16 %v3100, %v3103
        %v3161 = vmax.bf16 %v3101, %v3104
        %v3162 = vmax.bf16 %v3102, %v3105
        %v3163 = vmax.bf16 %v3103, %v3106
        %v3164 = vmax.bf16 %v3104, %v3107
        %v3165 = vmax.bf16 %v3105, %v3108
        %v3166 = vmax.bf16 %v3106, %v3109
        %v3167 = vmax.bf16 %v3107, %v3110
        %v3168 = vmax.bf16 %v3108, %v3111
        %v3169 = vmax.bf16 %v3109, %v3112
        %v3170 = vmax.bf16 %v3110, %v3113
        %v3171 = vmax.bf16 %v3111, %v3114
        %v3172 = vmax.bf16 %v3112, %v3115
        %v3173 = vmax.bf16 %v3113, %v3116
        %v3174 = vmax.bf16 %v3114, %v3117
        %v3175 = vmax.bf16 %v3115, %v3118
        %v3176 = vmax.bf16 %v3116, %v3119
        %v3177 = vmax.bf16 %v3117, %v3120
        %v3178 = vmax.bf16 %v3118, %v3121
        %v3179 = vmax.bf16 %v3119, %v3122
        %v3180 = vmax.bf16 %v3120, %v3123
        %v3181 = vmax.bf16 %v3121, %v3124
        %v3182 = vmax.bf16 %v3122, %v3125
        %v3183 = vmax.bf16 %v3123, %v3126
        %v3184 = vmax.bf16 %v3124, %v3127
        %v3185 = vmax.bf16 %v3125, %v3128
        %v3186 = vmax.bf16 %v3126, %v3129
        %v3187 = vmax.bf16 %v3127, %v3130
        %v3188 = vmax.bf16 %v3128, %v3131
        %v3189 = vmax.bf16 %v3135, %v3081
        %v3190 = vmax.bf16 %v3136, %v3082
        %v3191 = vmax.bf16 %v3137, %v3083
        %v3192 = vmax.bf16 %v3138, %v3084
        %v3193 = vmax.bf16 %v3139, %v3085
        %v3194 = vmax.bf16 %v3140, %v3086
        %v3195 = vmax.bf16 %v3141, %v3087
        %v3196 = vmax.bf16 %v3142, %v3088
        %v3197 = vmax.bf16 %v3143, %v3089
        %v3198 = vmax.bf16 %v3144, %v3090
        %v3199 = vmax.bf16 %v3145, %v3091
        %v3200 = vmax.bf16 %v3146, %v3092
        %v3201 = vmax.bf16 %v3147, %v3093
        %v3202 = vmax.bf16 %v3148, %v3094
        %v3203 = vmax.bf16 %v3149, %v3095
        %v3204 = vmax.bf16 %v3150, %v3096
        %v3205 = vmax.bf16 %v3151, %v3097
        %v3206 = vmax.bf16 %v3152, %v3098
        %v3207 = vmax.bf16 %v3153, %v3099
        %v3208 = vmax.bf16 %v3154, %v3100
        %v3209 = vmax.bf16 %v3155, %v3101
        %v3210 = vmax.bf16 %v3156, %v3102
        %v3211 = vmax.bf16 %v3157, %v3103
        %v3212 = vmax.bf16 %v3158, %v3104
        %v3213 = vmax.bf16 %v3159, %v3105
        %v3214 = vmax.bf16 %v3160, %v3106
        %v3215 = vmax.bf16 %v3161, %v3107
        %v3216 = vmax.bf16 %v3162, %v3108
        %v3217 = vmax.bf16 %v3163, %v3109
        %v3218 = vmax.bf16 %v3164, %v3110
        %v3219 = vmax.bf16 %v3165, %v3111
        %v3220 = vmax.bf16 %v3166, %v3112
        %v3221 = vmax.bf16 %v3167, %v3113
        %v3222 = vmax.bf16 %v3168, %v3114
        %v3223 = vmax.bf16 %v3169, %v3115
        %v3224 = vmax.bf16 %v3170, %v3116
        %v3225 = vmax.bf16 %v3171, %v3117
        %v3226 = vmax.bf16 %v3172, %v3118
        %v3227 = vmax.bf16 %v3173, %v3119
        %v3228 = vmax.bf16 %v3174, %v3120
        %v3229 = vmax.bf16 %v3175, %v3121
        %v3230 = vmax.bf16 %v3176, %v3122
        %v3231 = vmax.bf16 %v3177, %v3123
        %v3232 = vmax.bf16 %v3178, %v3124
        %v3233 = vmax.bf16 %v3179, %v3125
        %v3234 = vmax.bf16 %v3180, %v3126
        %v3235 = vmax.bf16 %v3181, %v3127
        %v3236 = vmax.bf16 %v3182, %v3128
        %v3237 = vmax.bf16 %v3183, %v3129
        %v3238 = vmax.bf16 %v3184, %v3130
        %v3239 = vmax.bf16 %v3185, %v3131
        %v3240 = vmax.bf16 %v3186, %v3132
        %v3241 = vmax.bf16 %v3187, %v3133
        %v3242 = vmax.bf16 %v3188, %v3134
        %v3243 = vmax.bf16 %v3189, %v3195
        %v3244 = vmax.bf16 %v3190, %v3196
        %v3245 = vmax.bf16 %v3191, %v3197
        %v3246 = vmax.bf16 %v3192, %v3198
        %v3247 = vmax.bf16 %v3193, %v3199
        %v3248 = vmax.bf16 %v3194, %v3200
        %v3249 = vmax.bf16 %v3195, %v3201
        %v3250 = vmax.bf16 %v3196, %v3202
        %v3251 = vmax.bf16 %v3197, %v3203
        %v3252 = vmax.bf16 %v3198, %v3204
        %v3253 = vmax.bf16 %v3199, %v3205
        %v3254 = vmax.bf16 %v3200, %v3206
        %v3255 = vmax.bf16 %v3201, %v3207
        %v3256 = vmax.bf16 %v3202, %v3208
        %v3257 = vmax.bf16 %v3203, %v3209
        %v3258 = vmax.bf16 %v3204, %v3210
        %v3259 = vmax.bf16 %v3205, %v3211
        %v3260 = vmax.bf16 %v3206, %v3212
        %v3261 = vmax.bf16 %v3207, %v3213
        %v3262 = vmax.bf16 %v3208, %v3214
        %v3263 = vmax.bf16 %v3209, %v3215
        %v3264 = vmax.bf16 %v3210, %v3216
        %v3265 = vmax.bf16 %v3211, %v3217
        %v3266 = vmax.bf16 %v3212, %v3218
        %v3267 = vmax.bf16 %v3213, %v3219
        %v3268 = vmax.bf16 %v3214, %v3220
        %v3269 = vmax.bf16 %v3215, %v3221
        %v3270 = vmax.bf16 %v3216, %v3222
        %v3271 = vmax.bf16 %v3217, %v3223
        %v3272 = vmax.bf16 %v3218, %v3224
        %v3273 = vmax.bf16 %v3219, %v3225
        %v3274 = vmax.bf16 %v3220, %v3226
        %v3275 = vmax.bf16 %v3221, %v3227
        %v3276 = vmax.bf16 %v3222, %v3228
        %v3277 = vmax.bf16 %v3223, %v3229
        %v3278 = vmax.bf16 %v3224, %v3230
        %v3279 = vmax.bf16 %v3225, %v3231
        %v3280 = vmax.bf16 %v3226, %v3232
        %v3281 = vmax.bf16 %v3227, %v3233
        %v3282 = vmax.bf16 %v3228, %v3234
        %v3283 = vmax.bf16 %v3229, %v3235
        %v3284 = vmax.bf16 %v3230, %v3236
        %v3285 = vmax.bf16 %v3231, %v3237
        %v3286 = vmax.bf16 %v3232, %v3238
        %v3287 = vmax.bf16 %v3233, %v3239
        %v3288 = vmax.bf16 %v3234, %v3240
        %v3289 = vmax.bf16 %v3235, %v3241
        %v3290 = vmax.bf16 %v3236, %v3242
        %vm3339 = vcmask 1040384
        %vm3340 = vcmask 1044484
        %vm3341 = vmor %vm3339, %vm3340
        %v3342 = vrot.slane %v3243, 7
        %v3343 = vrot.slane %v3342, 4
        %v3344 = vrot.slane %v3244, 7
        %v3345 = vsel %vm3341, %v3343, %v3344
        %v3346 = vrot.slane %v3344, 4
        %v3347 = vrot.slane %v3245, 7
        %v3348 = vsel %vm3341, %v3346, %v3347
        %v3349 = vrot.slane %v3246, 7
        %v3350 = vrot.slane %v3349, 4
        %v3351 = vrot.slane %v3247, 7
        %v3352 = vsel %vm3341, %v3350, %v3351
        %v3353 = vrot.slane %v3351, 4
        %v3354 = vrot.slane %v3248, 7
        %v3355 = vsel %vm3341, %v3353, %v3354
        %v3356 = vrot.slane %v3249, 7
        %v3357 = vrot.slane %v3356, 4
        %v3358 = vrot.slane %v3250, 7
        %v3359 = vsel %vm3341, %v3357, %v3358
        %v3360 = vrot.slane %v3358, 4
        %v3361 = vrot.slane %v3251, 7
        %v3362 = vsel %vm3341, %v3360, %v3361
        %v3363 = vrot.slane %v3252, 7
        %v3364 = vrot.slane %v3363, 4
        %v3365 = vrot.slane %v3253, 7
        %v3366 = vsel %vm3341, %v3364, %v3365
        %v3367 = vrot.slane %v3365, 4
        %v3368 = vrot.slane %v3254, 7
        %v3369 = vsel %vm3341, %v3367, %v3368
        %v3370 = vrot.slane %v3255, 7
        %v3371 = vrot.slane %v3370, 4
        %v3372 = vrot.slane %v3256, 7
        %v3373 = vsel %vm3341, %v3371, %v3372
        %v3374 = vrot.slane %v3372, 4
        %v3375 = vrot.slane %v3257, 7
        %v3376 = vsel %vm3341, %v3374, %v3375
        %v3377 = vrot.slane %v3258, 7
        %v3378 = vrot.slane %v3377, 4
        %v3379 = vrot.slane %v3259, 7
        %v3380 = vsel %vm3341, %v3378, %v3379
        %v3381 = vrot.slane %v3379, 4
        %v3382 = vrot.slane %v3260, 7
        %v3383 = vsel %vm3341, %v3381, %v3382
        %v3384 = vrot.slane %v3261, 7
        %v3385 = vrot.slane %v3384, 4
        %v3386 = vrot.slane %v3262, 7
        %v3387 = vsel %vm3341, %v3385, %v3386
        %v3388 = vrot.slane %v3386, 4
        %v3389 = vrot.slane %v3263, 7
        %v3390 = vsel %vm3341, %v3388, %v3389
        %v3391 = vrot.slane %v3264, 7
        %v3392 = vrot.slane %v3391, 4
        %v3393 = vrot.slane %v3265, 7
        %v3394 = vsel %vm3341, %v3392, %v3393
        %v3395 = vrot.slane %v3393, 4
        %v3396 = vrot.slane %v3266, 7
        %v3397 = vsel %vm3341, %v3395, %v3396
        %v3398 = vrot.slane %v3267, 7
        %v3399 = vrot.slane %v3398, 4
        %v3400 = vrot.slane %v3268, 7
        %v3401 = vsel %vm3341, %v3399, %v3400
        %v3402 = vrot.slane %v3400, 4
        %v3403 = vrot.slane %v3269, 7
        %v3404 = vsel %vm3341, %v3402, %v3403
        %v3405 = vrot.slane %v3270, 7
        %v3406 = vrot.slane %v3405, 4
        %v3407 = vrot.slane %v3271, 7
        %v3408 = vsel %vm3341, %v3406, %v3407
        %v3409 = vrot.slane %v3407, 4
        %v3410 = vrot.slane %v3272, 7
        %v3411 = vsel %vm3341, %v3409, %v3410
        %v3412 = vrot.slane %v3273, 7
        %v3413 = vrot.slane %v3412, 4
        %v3414 = vrot.slane %v3274, 7
        %v3415 = vsel %vm3341, %v3413, %v3414
        %v3416 = vrot.slane %v3414, 4
        %v3417 = vrot.slane %v3275, 7
        %v3418 = vsel %vm3341, %v3416, %v3417
        %v3419 = vrot.slane %v3276, 7
        %v3420 = vrot.slane %v3419, 4
        %v3421 = vrot.slane %v3277, 7
        %v3422 = vsel %vm3341, %v3420, %v3421
        %v3423 = vrot.slane %v3421, 4
        %v3424 = vrot.slane %v3278, 7
        %v3425 = vsel %vm3341, %v3423, %v3424
        %v3426 = vrot.slane %v3279, 7
        %v3427 = vrot.slane %v3426, 4
        %v3428 = vrot.slane %v3280, 7
        %v3429 = vsel %vm3341, %v3427, %v3428
        %v3430 = vrot.slane %v3428, 4
        %v3431 = vrot.slane %v3281, 7
        %v3432 = vsel %vm3341, %v3430, %v3431
        %v3433 = vrot.slane %v3282, 7
        %v3434 = vrot.slane %v3433, 4
        %v3435 = vrot.slane %v3283, 7
        %v3436 = vsel %vm3341, %v3434, %v3435
        %v3437 = vrot.slane %v3435, 4
        %v3438 = vrot.slane %v3284, 7
        %v3439 = vsel %vm3341, %v3437, %v3438
        %v3440 = vrot.slane %v3285, 7
        %v3441 = vrot.slane %v3440, 4
        %v3442 = vrot.slane %v3286, 7
        %v3443 = vsel %vm3341, %v3441, %v3442
        %v3444 = vrot.slane %v3442, 4
        %v3445 = vrot.slane %v3287, 7
        %v3446 = vsel %vm3341, %v3444, %v3445
        %v3447 = vrot.slane %v3288, 7
        %v3448 = vrot.slane %v3447, 4
        %v3449 = vrot.slane %v3289, 7
        %v3450 = vsel %vm3341, %v3448, %v3449
        %v3451 = vrot.slane %v3449, 4
        %v3452 = vrot.slane %v3290, 7
        %v3453 = vsel %vm3341, %v3451, %v3452
        %3486 = vst [vmem:[#allocation3 + $0x4] sm:$0xf] %v3345
        %3487 = vst [vmem:[#allocation3 + $0x14] sm:$0xf] %v3348
        %3488 = vst [vmem:[#allocation3 + $0x24] sm:$0xf] %v3352
        %3489 = vst [vmem:[#allocation3 + $0x34] sm:$0xf] %v3355
        %3490 = vst [vmem:[#allocation3 + $0x44] sm:$0xf] %v3359
        %3491 = vst [vmem:[#allocation3 + $0x54] sm:$0xf] %v3362
        %3492 = vst [vmem:[#allocation3 + $0x64] sm:$0xf] %v3366
        %3493 = vst [vmem:[#allocation3 + $0x74] sm:$0xf] %v3369
        %3494 = vst [vmem:[#allocation3 + $0x84] sm:$0xf] %v3373
        %3495 = vst [vmem:[#allocation3 + $0x94] sm:$0xf] %v3376
        %3496 = vst [vmem:[#allocation3 + $0xa4] sm:$0xf] %v3380
        %3497 = vst [vmem:[#allocation3 + $0xb4] sm:$0xf] %v3383
        %3498 = vst [vmem:[#allocation3 + $0xc4] sm:$0xf] %v3387
        %3499 = vst [vmem:[#allocation3 + $0xd4] sm:$0xf] %v3390
        %3500 = vst [vmem:[#allocation3 + $0xe4] sm:$0xf] %v3394
        %3501 = vst [vmem:[#allocation3 + $0xf4] sm:$0xf] %v3397
        %3502 = vst [vmem:[#allocation3 + $0x104] sm:$0xf] %v3401
        %3503 = vst [vmem:[#allocation3 + $0x114] sm:$0xf] %v3404
        %3504 = vst [vmem:[#allocation3 + $0x124] sm:$0xf] %v3408
        %3505 = vst [vmem:[#allocation3 + $0x134] sm:$0xf] %v3411
        %3506 = vst [vmem:[#allocation3 + $0x144] sm:$0xf] %v3415
        %3507 = vst [vmem:[#allocation3 + $0x154] sm:$0xf] %v3418
        %3508 = vst [vmem:[#allocation3 + $0x164] sm:$0xf] %v3422
        %3509 = vst [vmem:[#allocation3 + $0x174] sm:$0xf] %v3425
        %3510 = vst [vmem:[#allocation3 + $0x184] sm:$0xf] %v3429
        %3511 = vst [vmem:[#allocation3 + $0x194] sm:$0xf] %v3432
        %3512 = vst [vmem:[#allocation3 + $0x1a4] sm:$0xf] %v3436
        %3513 = vst [vmem:[#allocation3 + $0x1b4] sm:$0xf] %v3439
        %3514 = vst [vmem:[#allocation3 + $0x1c4] sm:$0xf] %v3443
        %3515 = vst [vmem:[#allocation3 + $0x1d4] sm:$0xf] %v3446
        %3516 = vst [vmem:[#allocation3 + $0x1e4] sm:$0xf] %v3450
        %3517 = vst [vmem:[#allocation3 + $0x1f4] sm:$0xf] %v3453
        %3518 = vst [vmem:[%s1130 + $0x4] sm:$0xf] %v3345
        %3519 = vst [vmem:[%s1130 + $0x8] sm:$0xf] %v3348
        %3520 = vst [vmem:[%s1130 + $0x14] sm:$0xf] %v3352
        %3521 = vst [vmem:[%s1130 + $0x18] sm:$0xf] %v3355
        %3522 = vst [vmem:[%s1130 + $0x24] sm:$0xf] %v3359
        %3523 = vst [vmem:[%s1130 + $0x28] sm:$0xf] %v3362
        %3524 = vst [vmem:[%s1130 + $0x34] sm:$0xf] %v3366
        %3525 = vst [vmem:[%s1130 + $0x38] sm:$0xf] %v3369
        %3526 = vst [vmem:[%s1130 + $0x44] sm:$0xf] %v3373
        %3527 = vst [vmem:[%s1130 + $0x48] sm:$0xf] %v3376
        %3528 = vst [vmem:[%s1130 + $0x54] sm:$0xf] %v3380
        %3529 = vst [vmem:[%s1130 + $0x58] sm:$0xf] %v3383
        %3530 = vst [vmem:[%s1130 + $0x64] sm:$0xf] %v3387
        %3531 = vst [vmem:[%s1130 + $0x68] sm:$0xf] %v3390
        %3532 = vst [vmem:[%s1130 + $0x74] sm:$0xf] %v3394
        %3533 = vst [vmem:[%s1130 + $0x78] sm:$0xf] %v3397
        %3534 = vst [vmem:[%s1130 + $0x84] sm:$0xf] %v3401
        %3535 = vst [vmem:[%s1130 + $0x88] sm:$0xf] %v3404
        %3536 = vst [vmem:[%s1130 + $0x94] sm:$0xf] %v3408
        %3537 = vst [vmem:[%s1130 + $0x98] sm:$0xf] %v3411
        %3538 = vst [vmem:[%s1130 + $0xa4] sm:$0xf] %v3415
        %3539 = vst [vmem:[%s1130 + $0xa8] sm:$0xf] %v3418
        %3540 = vst [vmem:[%s1130 + $0xb4] sm:$0xf] %v3422
        %3541 = vst [vmem:[%s1130 + $0xb8] sm:$0xf] %v3425
        %3542 = vst [vmem:[%s1130 + $0xc4] sm:$0xf] %v3429
        %3543 = vst [vmem:[%s1130 + $0xc8] sm:$0xf] %v3432
        %3544 = vst [vmem:[%s1130 + $0xd4] sm:$0xf] %v3436
        %3545 = vst [vmem:[%s1130 + $0xd8] sm:$0xf] %v3439
        %3546 = vst [vmem:[%s1130 + $0xe4] sm:$0xf] %v3443
        %3547 = vst [vmem:[%s1130 + $0xe8] sm:$0xf] %v3446
        %3548 = vst [vmem:[%s1130 + $0xf4] sm:$0xf] %v3450
        %3549 = vst [vmem:[%s1130 + $0xf8] sm:$0xf] %v3453
        %v3550 = vld [vmem:[#allocation2] sm:$0x8]
        %v3551 = vld [vmem:[#allocation2 + $0x4] sm:$0xf]
        %v3552 = vld [vmem:[#allocation2 + $0x8] sm:$0x7]
        %v3553 = vld [vmem:[#allocation2 + $0x10] sm:$0x8]
        %v3554 = vld [vmem:[#allocation2 + $0x14] sm:$0xf]
        %v3555 = vld [vmem:[#allocation2 + $0x18] sm:$0x7]
        %v3556 = vld [vmem:[#allocation2 + $0x20] sm:$0x8]
        %v3557 = vld [vmem:[#allocation2 + $0x24] sm:$0xf]
        %v3558 = vld [vmem:[#allocation2 + $0x28] sm:$0x7]
        %v3559 = vld [vmem:[#allocation2 + $0x30] sm:$0x8]
        %v3560 = vld [vmem:[#allocation2 + $0x34] sm:$0xf]
        %v3561 = vld [vmem:[#allocation2 + $0x38] sm:$0x7]
        %v3562 = vld [vmem:[#allocation2 + $0x40] sm:$0x8]
        %v3563 = vld [vmem:[#allocation2 + $0x44] sm:$0xf]
        %v3564 = vld [vmem:[#allocation2 + $0x48] sm:$0x7]
        %v3565 = vld [vmem:[#allocation2 + $0x50] sm:$0x8]
        %v3566 = vld [vmem:[#allocation2 + $0x54] sm:$0xf]
        %v3567 = vld [vmem:[#allocation2 + $0x58] sm:$0x7]
        %v3568 = vld [vmem:[#allocation2 + $0x60] sm:$0x8]
        %v3569 = vld [vmem:[#allocation2 + $0x64] sm:$0xf]
        %v3570 = vld [vmem:[#allocation2 + $0x68] sm:$0x7]
        %v3571 = vld [vmem:[#allocation2 + $0x70] sm:$0x8]
        %v3572 = vld [vmem:[#allocation2 + $0x74] sm:$0xf]
        %v3573 = vld [vmem:[#allocation2 + $0x78] sm:$0x7]
        %v3574 = vld [vmem:[#allocation2 + $0x80] sm:$0x8]
        %v3575 = vld [vmem:[#allocation2 + $0x84] sm:$0xf]
        %v3576 = vld [vmem:[#allocation2 + $0x88] sm:$0x7]
        %v3577 = vld [vmem:[#allocation2 + $0x90] sm:$0x8]
        %v3578 = vld [vmem:[#allocation2 + $0x94] sm:$0xf]
        %v3579 = vld [vmem:[#allocation2 + $0x98] sm:$0x7]
        %v3580 = vld [vmem:[#allocation2 + $0xa0] sm:$0x8]
        %v3581 = vld [vmem:[#allocation2 + $0xa4] sm:$0xf]
        %v3582 = vld [vmem:[#allocation2 + $0xa8] sm:$0x7]
        %v3583 = vld [vmem:[#allocation2 + $0xb0] sm:$0x8]
        %v3584 = vld [vmem:[#allocation2 + $0xb4] sm:$0xf]
        %v3585 = vld [vmem:[#allocation2 + $0xb8] sm:$0x7]
        %v3586 = vld [vmem:[#allocation2 + $0xc0] sm:$0x8]
        %v3587 = vld [vmem:[#allocation2 + $0xc4] sm:$0xf]
        %v3588 = vld [vmem:[#allocation2 + $0xc8] sm:$0x7]
        %v3589 = vld [vmem:[#allocation2 + $0xd0] sm:$0x8]
        %v3590 = vld [vmem:[#allocation2 + $0xd4] sm:$0xf]
        %v3591 = vld [vmem:[#allocation2 + $0xd8] sm:$0x7]
        %v3592 = vld [vmem:[#allocation2 + $0xe0] sm:$0x8]
        %v3593 = vld [vmem:[#allocation2 + $0xe4] sm:$0xf]
        %v3594 = vld [vmem:[#allocation2 + $0xe8] sm:$0x7]
        %v3595 = vld [vmem:[#allocation2 + $0xf0] sm:$0x8]
        %v3596 = vld [vmem:[#allocation2 + $0xf4] sm:$0xf]
        %v3597 = vld [vmem:[#allocation2 + $0xf8] sm:$0x7]
        %v3598 = vld [vmem:[#allocation2 + $0x100] sm:$0x8]
        %v3599 = vld [vmem:[#allocation2 + $0x104] sm:$0xf]
        %v3600 = vld [vmem:[#allocation2 + $0x108] sm:$0x7]
        %v3601 = vld [vmem:[#allocation2 + $0x110] sm:$0x8]
        %v3602 = vld [vmem:[#allocation2 + $0x114] sm:$0xf]
        %v3603 = vld [vmem:[#allocation2 + $0x118] sm:$0x7]
        %v3604 = vld [vmem:[#allocation2 + $0x120] sm:$0x8]
        %v3605 = vld [vmem:[#allocation2 + $0x124] sm:$0xf]
        %v3606 = vld [vmem:[#allocation2 + $0x128] sm:$0x7]
        %v3607 = vld [vmem:[#allocation2 + $0x130] sm:$0x8]
        %v3608 = vld [vmem:[#allocation2 + $0x134] sm:$0xf]
        %v3609 = vld [vmem:[#allocation2 + $0x138] sm:$0x7]
        %v3610 = vld [vmem:[#allocation2 + $0x8] sm:$0xf]
        %v3611 = vld [vmem:[#allocation2 + $0x18] sm:$0xf]
        %v3612 = vld [vmem:[#allocation2 + $0x28] sm:$0xf]
        %v3613 = vld [vmem:[#allocation2 + $0x38] sm:$0xf]
        %v3614 = vld [vmem:[#allocation2 + $0x48] sm:$0xf]
        %v3615 = vld [vmem:[#allocation2 + $0x58] sm:$0xf]
        %v3616 = vld [vmem:[#allocation2 + $0x68] sm:$0xf]
        %v3617 = vld [vmem:[#allocation2 + $0x78] sm:$0xf]
        %v3618 = vld [vmem:[#allocation2 + $0x88] sm:$0xf]
        %v3619 = vld [vmem:[#allocation2 + $0x98] sm:$0xf]
        %v3620 = vld [vmem:[#allocation2 + $0xa8] sm:$0xf]
        %v3621 = vld [vmem:[#allocation2 + $0xb8] sm:$0xf]
        %v3622 = vld [vmem:[#allocation2 + $0xc8] sm:$0xf]
        %v3623 = vld [vmem:[#allocation2 + $0xd8] sm:$0xf]
        %v3624 = vld [vmem:[#allocation2 + $0xe8] sm:$0xf]
        %v3625 = vld [vmem:[#allocation2 + $0xf8] sm:$0xf]
        %v3626 = vld [vmem:[#allocation2 + $0x108] sm:$0xf]
        %v3627 = vld [vmem:[#allocation2 + $0x118] sm:$0xf]
        %v3628 = vld [vmem:[#allocation2 + $0x128] sm:$0xf]
        %v3629 = vld [vmem:[#allocation2 + $0x138] sm:$0xf]
        %v3631 = vshrl.u32 %v3550, 16
        %v3633 = vrot.slane %v3631, 4
        %v3634 = vrot.slane %v3633, 4
        %v3636 = vshll.u32 %v3551, 16
        %v3638 = vrot.slane %v3636, 5
        %v3639 = vsel %vm1245, %v3634, %v3638
        %v3640 = vshrl.u32 %v3551, 16
        %v3642 = vrot.slane %v3640, 4
        %v3643 = vor.u32 %v3642, %v3638
        %v3644 = vrot.slane %v3643, 4
        %v3646 = vshll.u32 %v3610, 16
        %v3648 = vrot.slane %v3646, 5
        %v3649 = vsel %vm1245, %v3644, %v3648
        %v3650 = vshrl.u32 %v3610, 16
        %v3652 = vrot.slane %v3650, 4
        %v3653 = vor.u32 %v3652, %v3648
        %v3654 = vrot.slane %v3653, 4
        %v3656 = vshrl.u32 %v3553, 16
        %v3658 = vrot.slane %v3656, 4
        %v3659 = vrot.slane %v3658, 4
        %v3661 = vshll.u32 %v3554, 16
        %v3663 = vrot.slane %v3661, 5
        %v3664 = vsel %vm1245, %v3659, %v3663
        %v3665 = vshrl.u32 %v3554, 16
        %v3667 = vrot.slane %v3665, 4
        %v3668 = vor.u32 %v3667, %v3663
        %v3669 = vrot.slane %v3668, 4
        %v3671 = vshll.u32 %v3611, 16
        %v3673 = vrot.slane %v3671, 5
        %v3674 = vsel %vm1245, %v3669, %v3673
        %v3675 = vshrl.u32 %v3611, 16
        %v3677 = vrot.slane %v3675, 4
        %v3678 = vor.u32 %v3677, %v3673
        %v3679 = vrot.slane %v3678, 4
        %v3681 = vshrl.u32 %v3556, 16
        %v3683 = vrot.slane %v3681, 4
        %v3684 = vrot.slane %v3683, 4
        %v3686 = vshll.u32 %v3557, 16
        %v3688 = vrot.slane %v3686, 5
        %v3689 = vsel %vm1245, %v3684, %v3688
        %v3690 = vshrl.u32 %v3557, 16
        %v3692 = vrot.slane %v3690, 4
        %v3693 = vor.u32 %v3692, %v3688
        %v3694 = vrot.slane %v3693, 4
        %v3696 = vshll.u32 %v3612, 16
        %v3698 = vrot.slane %v3696, 5
        %v3699 = vsel %vm1245, %v3694, %v3698
        %v3700 = vshrl.u32 %v3612, 16
        %v3702 = vrot.slane %v3700, 4
        %v3703 = vor.u32 %v3702, %v3698
        %v3704 = vrot.slane %v3703, 4
        %v3706 = vshrl.u32 %v3559, 16
        %v3708 = vrot.slane %v3706, 4
        %v3709 = vrot.slane %v3708, 4
        %v3711 = vshll.u32 %v3560, 16
        %v3713 = vrot.slane %v3711, 5
        %v3714 = vsel %vm1245, %v3709, %v3713
        %v3715 = vshrl.u32 %v3560, 16
        %v3717 = vrot.slane %v3715, 4
        %v3718 = vor.u32 %v3717, %v3713
        %v3719 = vrot.slane %v3718, 4
        %v3721 = vshll.u32 %v3613, 16
        %v3723 = vrot.slane %v3721, 5
        %v3724 = vsel %vm1245, %v3719, %v3723
        %v3725 = vshrl.u32 %v3613, 16
        %v3727 = vrot.slane %v3725, 4
        %v3728 = vor.u32 %v3727, %v3723
        %v3729 = vrot.slane %v3728, 4
        %v3731 = vshrl.u32 %v3562, 16
        %v3733 = vrot.slane %v3731, 4
        %v3734 = vrot.slane %v3733, 4
        %v3736 = vshll.u32 %v3563, 16
        %v3738 = vrot.slane %v3736, 5
        %v3739 = vsel %vm1245, %v3734, %v3738
        %v3740 = vshrl.u32 %v3563, 16
        %v3742 = vrot.slane %v3740, 4
        %v3743 = vor.u32 %v3742, %v3738
        %v3744 = vrot.slane %v3743, 4
        %v3746 = vshll.u32 %v3614, 16
        %v3748 = vrot.slane %v3746, 5
        %v3749 = vsel %vm1245, %v3744, %v3748
        %v3750 = vshrl.u32 %v3614, 16
        %v3752 = vrot.slane %v3750, 4
        %v3753 = vor.u32 %v3752, %v3748
        %v3754 = vrot.slane %v3753, 4
        %v3756 = vshrl.u32 %v3565, 16
        %v3758 = vrot.slane %v3756, 4
        %v3759 = vrot.slane %v3758, 4
        %v3761 = vshll.u32 %v3566, 16
        %v3763 = vrot.slane %v3761, 5
        %v3764 = vsel %vm1245, %v3759, %v3763
        %v3765 = vshrl.u32 %v3566, 16
        %v3767 = vrot.slane %v3765, 4
        %v3768 = vor.u32 %v3767, %v3763
        %v3769 = vrot.slane %v3768, 4
        %v3771 = vshll.u32 %v3615, 16
        %v3773 = vrot.slane %v3771, 5
        %v3774 = vsel %vm1245, %v3769, %v3773
        %v3775 = vshrl.u32 %v3615, 16
        %v3777 = vrot.slane %v3775, 4
        %v3778 = vor.u32 %v3777, %v3773
        %v3779 = vrot.slane %v3778, 4
        %v3781 = vshrl.u32 %v3568, 16
        %v3783 = vrot.slane %v3781, 4
        %v3784 = vrot.slane %v3783, 4
        %v3786 = vshll.u32 %v3569, 16
        %v3788 = vrot.slane %v3786, 5
        %v3789 = vsel %vm1245, %v3784, %v3788
        %v3790 = vshrl.u32 %v3569, 16
        %v3792 = vrot.slane %v3790, 4
        %v3793 = vor.u32 %v3792, %v3788
        %v3794 = vrot.slane %v3793, 4
        %v3796 = vshll.u32 %v3616, 16
        %v3798 = vrot.slane %v3796, 5
        %v3799 = vsel %vm1245, %v3794, %v3798
        %v3800 = vshrl.u32 %v3616, 16
        %v3802 = vrot.slane %v3800, 4
        %v3803 = vor.u32 %v3802, %v3798
        %v3804 = vrot.slane %v3803, 4
        %v3806 = vshrl.u32 %v3571, 16
        %v3808 = vrot.slane %v3806, 4
        %v3809 = vrot.slane %v3808, 4
        %v3811 = vshll.u32 %v3572, 16
        %v3813 = vrot.slane %v3811, 5
        %v3814 = vsel %vm1245, %v3809, %v3813
        %v3815 = vshrl.u32 %v3572, 16
        %v3817 = vrot.slane %v3815, 4
        %v3818 = vor.u32 %v3817, %v3813
        %v3819 = vrot.slane %v3818, 4
        %v3821 = vshll.u32 %v3617, 16
        %v3823 = vrot.slane %v3821, 5
        %v3824 = vsel %vm1245, %v3819, %v3823
        %v3825 = vshrl.u32 %v3617, 16
        %v3827 = vrot.slane %v3825, 4
        %v3828 = vor.u32 %v3827, %v3823
        %v3829 = vrot.slane %v3828, 4
        %v3831 = vshrl.u32 %v3574, 16
        %v3833 = vrot.slane %v3831, 4
        %v3834 = vrot.slane %v3833, 4
        %v3836 = vshll.u32 %v3575, 16
        %v3838 = vrot.slane %v3836, 5
        %v3839 = vsel %vm1245, %v3834, %v3838
        %v3840 = vshrl.u32 %v3575, 16
        %v3842 = vrot.slane %v3840, 4
        %v3843 = vor.u32 %v3842, %v3838
        %v3844 = vrot.slane %v3843, 4
        %v3846 = vshll.u32 %v3618, 16
        %v3848 = vrot.slane %v3846, 5
        %v3849 = vsel %vm1245, %v3844, %v3848
        %v3850 = vshrl.u32 %v3618, 16
        %v3852 = vrot.slane %v3850, 4
        %v3853 = vor.u32 %v3852, %v3848
        %v3854 = vrot.slane %v3853, 4
        %v3856 = vshrl.u32 %v3577, 16
        %v3858 = vrot.slane %v3856, 4
        %v3859 = vrot.slane %v3858, 4
        %v3861 = vshll.u32 %v3578, 16
        %v3863 = vrot.slane %v3861, 5
        %v3864 = vsel %vm1245, %v3859, %v3863
        %v3865 = vshrl.u32 %v3578, 16
        %v3867 = vrot.slane %v3865, 4
        %v3868 = vor.u32 %v3867, %v3863
        %v3869 = vrot.slane %v3868, 4
        %v3871 = vshll.u32 %v3619, 16
        %v3873 = vrot.slane %v3871, 5
        %v3874 = vsel %vm1245, %v3869, %v3873
        %v3875 = vshrl.u32 %v3619, 16
        %v3877 = vrot.slane %v3875, 4
        %v3878 = vor.u32 %v3877, %v3873
        %v3879 = vrot.slane %v3878, 4
        %v3881 = vshrl.u32 %v3580, 16
        %v3883 = vrot.slane %v3881, 4
        %v3884 = vrot.slane %v3883, 4
        %v3886 = vshll.u32 %v3581, 16
        %v3888 = vrot.slane %v3886, 5
        %v3889 = vsel %vm1245, %v3884, %v3888
        %v3890 = vshrl.u32 %v3581, 16
        %v3892 = vrot.slane %v3890, 4
        %v3893 = vor.u32 %v3892, %v3888
        %v3894 = vrot.slane %v3893, 4
        %v3896 = vshll.u32 %v3620, 16
        %v3898 = vrot.slane %v3896, 5
        %v3899 = vsel %vm1245, %v3894, %v3898
        %v3900 = vshrl.u32 %v3620, 16
        %v3902 = vrot.slane %v3900, 4
        %v3903 = vor.u32 %v3902, %v3898
        %v3904 = vrot.slane %v3903, 4
        %v3906 = vshrl.u32 %v3583, 16
        %v3908 = vrot.slane %v3906, 4
        %v3909 = vrot.slane %v3908, 4
        %v3911 = vshll.u32 %v3584, 16
        %v3913 = vrot.slane %v3911, 5
        %v3914 = vsel %vm1245, %v3909, %v3913
        %v3915 = vshrl.u32 %v3584, 16
        %v3917 = vrot.slane %v3915, 4
        %v3918 = vor.u32 %v3917, %v3913
        %v3919 = vrot.slane %v3918, 4
        %v3921 = vshll.u32 %v3621, 16
        %v3923 = vrot.slane %v3921, 5
        %v3924 = vsel %vm1245, %v3919, %v3923
        %v3925 = vshrl.u32 %v3621, 16
        %v3927 = vrot.slane %v3925, 4
        %v3928 = vor.u32 %v3927, %v3923
        %v3929 = vrot.slane %v3928, 4
        %v3931 = vshrl.u32 %v3586, 16
        %v3933 = vrot.slane %v3931, 4
        %v3934 = vrot.slane %v3933, 4
        %v3936 = vshll.u32 %v3587, 16
        %v3938 = vrot.slane %v3936, 5
        %v3939 = vsel %vm1245, %v3934, %v3938
        %v3940 = vshrl.u32 %v3587, 16
        %v3942 = vrot.slane %v3940, 4
        %v3943 = vor.u32 %v3942, %v3938
        %v3944 = vrot.slane %v3943, 4
        %v3946 = vshll.u32 %v3622, 16
        %v3948 = vrot.slane %v3946, 5
        %v3949 = vsel %vm1245, %v3944, %v3948
        %v3950 = vshrl.u32 %v3622, 16
        %v3952 = vrot.slane %v3950, 4
        %v3953 = vor.u32 %v3952, %v3948
        %v3954 = vrot.slane %v3953, 4
        %v3956 = vshrl.u32 %v3589, 16
        %v3958 = vrot.slane %v3956, 4
        %v3959 = vrot.slane %v3958, 4
        %v3961 = vshll.u32 %v3590, 16
        %v3963 = vrot.slane %v3961, 5
        %v3964 = vsel %vm1245, %v3959, %v3963
        %v3965 = vshrl.u32 %v3590, 16
        %v3967 = vrot.slane %v3965, 4
        %v3968 = vor.u32 %v3967, %v3963
        %v3969 = vrot.slane %v3968, 4
        %v3971 = vshll.u32 %v3623, 16
        %v3973 = vrot.slane %v3971, 5
        %v3974 = vsel %vm1245, %v3969, %v3973
        %v3975 = vshrl.u32 %v3623, 16
        %v3977 = vrot.slane %v3975, 4
        %v3978 = vor.u32 %v3977, %v3973
        %v3979 = vrot.slane %v3978, 4
        %v3981 = vshrl.u32 %v3592, 16
        %v3983 = vrot.slane %v3981, 4
        %v3984 = vrot.slane %v3983, 4
        %v3986 = vshll.u32 %v3593, 16
        %v3988 = vrot.slane %v3986, 5
        %v3989 = vsel %vm1245, %v3984, %v3988
        %v3990 = vshrl.u32 %v3593, 16
        %v3992 = vrot.slane %v3990, 4
        %v3993 = vor.u32 %v3992, %v3988
        %v3994 = vrot.slane %v3993, 4
        %v3996 = vshll.u32 %v3624, 16
        %v3998 = vrot.slane %v3996, 5
        %v3999 = vsel %vm1245, %v3994, %v3998
        %v4000 = vshrl.u32 %v3624, 16
        %v4002 = vrot.slane %v4000, 4
        %v4003 = vor.u32 %v4002, %v3998
        %v4004 = vrot.slane %v4003, 4
        %v4006 = vshrl.u32 %v3595, 16
        %v4008 = vrot.slane %v4006, 4
        %v4009 = vrot.slane %v4008, 4
        %v4011 = vshll.u32 %v3596, 16
        %v4013 = vrot.slane %v4011, 5
        %v4014 = vsel %vm1245, %v4009, %v4013
        %v4015 = vshrl.u32 %v3596, 16
        %v4017 = vrot.slane %v4015, 4
        %v4018 = vor.u32 %v4017, %v4013
        %v4019 = vrot.slane %v4018, 4
        %v4021 = vshll.u32 %v3625, 16
        %v4023 = vrot.slane %v4021, 5
        %v4024 = vsel %vm1245, %v4019, %v4023
        %v4025 = vshrl.u32 %v3625, 16
        %v4027 = vrot.slane %v4025, 4
        %v4028 = vor.u32 %v4027, %v4023
        %v4029 = vrot.slane %v4028, 4
        %v4031 = vshrl.u32 %v3598, 16
        %v4033 = vrot.slane %v4031, 4
        %v4034 = vrot.slane %v4033, 4
        %v4036 = vshll.u32 %v3599, 16
        %v4038 = vrot.slane %v4036, 5
        %v4039 = vsel %vm1245, %v4034, %v4038
        %v4040 = vshrl.u32 %v3599, 16
        %v4042 = vrot.slane %v4040, 4
        %v4043 = vor.u32 %v4042, %v4038
        %v4044 = vrot.slane %v4043, 4
        %v4046 = vshll.u32 %v3626, 16
        %v4048 = vrot.slane %v4046, 5
        %v4049 = vsel %vm1245, %v4044, %v4048
        %v4050 = vshrl.u32 %v3626, 16
        %v4052 = vrot.slane %v4050, 4
        %v4053 = vor.u32 %v4052, %v4048
        %v4054 = vrot.slane %v4053, 4
        %v4056 = vshrl.u32 %v3601, 16
        %v4058 = vrot.slane %v4056, 4
        %v4059 = vrot.slane %v4058, 4
        %v4061 = vshll.u32 %v3602, 16
        %v4063 = vrot.slane %v4061, 5
        %v4064 = vsel %vm1245, %v4059, %v4063
        %v4065 = vshrl.u32 %v3602, 16
        %v4067 = vrot.slane %v4065, 4
        %v4068 = vor.u32 %v4067, %v4063
        %v4069 = vrot.slane %v4068, 4
        %v4071 = vshll.u32 %v3627, 16
        %v4073 = vrot.slane %v4071, 5
        %v4074 = vsel %vm1245, %v4069, %v4073
        %v4075 = vshrl.u32 %v3627, 16
        %v4077 = vrot.slane %v4075, 4
        %v4078 = vor.u32 %v4077, %v4073
        %v4079 = vrot.slane %v4078, 4
        %v4081 = vshrl.u32 %v3604, 16
        %v4083 = vrot.slane %v4081, 4
        %v4084 = vrot.slane %v4083, 4
        %v4086 = vshll.u32 %v3605, 16
        %v4088 = vrot.slane %v4086, 5
        %v4089 = vsel %vm1245, %v4084, %v4088
        %v4090 = vshrl.u32 %v3605, 16
        %v4092 = vrot.slane %v4090, 4
        %v4093 = vor.u32 %v4092, %v4088
        %v4094 = vrot.slane %v4093, 4
        %v4096 = vshll.u32 %v3628, 16
        %v4098 = vrot.slane %v4096, 5
        %v4099 = vsel %vm1245, %v4094, %v4098
        %v4100 = vshrl.u32 %v3628, 16
        %v4102 = vrot.slane %v4100, 4
        %v4103 = vor.u32 %v4102, %v4098
        %v4104 = vrot.slane %v4103, 4
        %v4106 = vshrl.u32 %v3607, 16
        %v4108 = vrot.slane %v4106, 4
        %v4109 = vrot.slane %v4108, 4
        %v4111 = vshll.u32 %v3608, 16
        %v4113 = vrot.slane %v4111, 5
        %v4114 = vsel %vm1245, %v4109, %v4113
        %v4115 = vshrl.u32 %v3608, 16
        %v4117 = vrot.slane %v4115, 4
        %v4118 = vor.u32 %v4117, %v4113
        %v4119 = vrot.slane %v4118, 4
        %v4121 = vshll.u32 %v3629, 16
        %v4123 = vrot.slane %v4121, 5
        %v4124 = vsel %vm1245, %v4119, %v4123
        %v4125 = vshrl.u32 %v3629, 16
        %v4127 = vrot.slane %v4125, 4
        %v4128 = vor.u32 %v4127, %v4123
        %v4129 = vrot.slane %v4128, 4
        %v4190 = vmax.bf16 %v3550, %v3639
        %v4191 = vmax.bf16 %v3551, %v3649
        %v4192 = vmax.bf16 %v3552, %v3654
        %v4193 = vmax.bf16 %v3553, %v3664
        %v4194 = vmax.bf16 %v3554, %v3674
        %v4195 = vmax.bf16 %v3555, %v3679
        %v4196 = vmax.bf16 %v3556, %v3689
        %v4197 = vmax.bf16 %v3557, %v3699
        %v4198 = vmax.bf16 %v3558, %v3704
        %v4199 = vmax.bf16 %v3559, %v3714
        %v4200 = vmax.bf16 %v3560, %v3724
        %v4201 = vmax.bf16 %v3561, %v3729
        %v4202 = vmax.bf16 %v3562, %v3739
        %v4203 = vmax.bf16 %v3563, %v3749
        %v4204 = vmax.bf16 %v3564, %v3754
        %v4205 = vmax.bf16 %v3565, %v3764
        %v4206 = vmax.bf16 %v3566, %v3774
        %v4207 = vmax.bf16 %v3567, %v3779
        %v4208 = vmax.bf16 %v3568, %v3789
        %v4209 = vmax.bf16 %v3569, %v3799
        %v4210 = vmax.bf16 %v3570, %v3804
        %v4211 = vmax.bf16 %v3571, %v3814
        %v4212 = vmax.bf16 %v3572, %v3824
        %v4213 = vmax.bf16 %v3573, %v3829
        %v4214 = vmax.bf16 %v3574, %v3839
        %v4215 = vmax.bf16 %v3575, %v3849
        %v4216 = vmax.bf16 %v3576, %v3854
        %v4217 = vmax.bf16 %v3577, %v3864
        %v4218 = vmax.bf16 %v3578, %v3874
        %v4219 = vmax.bf16 %v3579, %v3879
        %v4220 = vmax.bf16 %v3580, %v3889
        %v4221 = vmax.bf16 %v3581, %v3899
        %v4222 = vmax.bf16 %v3582, %v3904
        %v4223 = vmax.bf16 %v3583, %v3914
        %v4224 = vmax.bf16 %v3584, %v3924
        %v4225 = vmax.bf16 %v3585, %v3929
        %v4226 = vmax.bf16 %v3586, %v3939
        %v4227 = vmax.bf16 %v3587, %v3949
        %v4228 = vmax.bf16 %v3588, %v3954
        %v4229 = vmax.bf16 %v3589, %v3964
        %v4230 = vmax.bf16 %v3590, %v3974
        %v4231 = vmax.bf16 %v3591, %v3979
        %v4232 = vmax.bf16 %v3592, %v3989
        %v4233 = vmax.bf16 %v3593, %v3999
        %v4234 = vmax.bf16 %v3594, %v4004
        %v4235 = vmax.bf16 %v3595, %v4014
        %v4236 = vmax.bf16 %v3596, %v4024
        %v4237 = vmax.bf16 %v3597, %v4029
        %v4238 = vmax.bf16 %v3598, %v4039
        %v4239 = vmax.bf16 %v3599, %v4049
        %v4240 = vmax.bf16 %v3600, %v4054
        %v4241 = vmax.bf16 %v3601, %v4064
        %v4242 = vmax.bf16 %v3602, %v4074
        %v4243 = vmax.bf16 %v3603, %v4079
        %v4244 = vmax.bf16 %v3604, %v4089
        %v4245 = vmax.bf16 %v3605, %v4099
        %v4246 = vmax.bf16 %v3606, %v4104
        %v4247 = vmax.bf16 %v3607, %v4114
        %v4248 = vmax.bf16 %v3608, %v4124
        %v4249 = vmax.bf16 %v3609, %v4129
        %v4290 = vrot.slane %v3551, 5
        %v4291 = vrot.slane %v4290, 4
        %v4292 = vrot.slane %v3610, 5
        %v4293 = vsel %vm1908, %v4291, %v4292
        %v4294 = vrot.slane %v4292, 4
        %v4295 = vrot.slane %v3554, 5
        %v4296 = vrot.slane %v4295, 4
        %v4297 = vrot.slane %v3611, 5
        %v4298 = vsel %vm1908, %v4296, %v4297
        %v4299 = vrot.slane %v4297, 4
        %v4300 = vrot.slane %v3557, 5
        %v4301 = vrot.slane %v4300, 4
        %v4302 = vrot.slane %v3612, 5
        %v4303 = vsel %vm1908, %v4301, %v4302
        %v4304 = vrot.slane %v4302, 4
        %v4305 = vrot.slane %v3560, 5
        %v4306 = vrot.slane %v4305, 4
        %v4307 = vrot.slane %v3613, 5
        %v4308 = vsel %vm1908, %v4306, %v4307
        %v4309 = vrot.slane %v4307, 4
        %v4310 = vrot.slane %v3563, 5
        %v4311 = vrot.slane %v4310, 4
        %v4312 = vrot.slane %v3614, 5
        %v4313 = vsel %vm1908, %v4311, %v4312
        %v4314 = vrot.slane %v4312, 4
        %v4315 = vrot.slane %v3566, 5
        %v4316 = vrot.slane %v4315, 4
        %v4317 = vrot.slane %v3615, 5
        %v4318 = vsel %vm1908, %v4316, %v4317
        %v4319 = vrot.slane %v4317, 4
        %v4320 = vrot.slane %v3569, 5
        %v4321 = vrot.slane %v4320, 4
        %v4322 = vrot.slane %v3616, 5
        %v4323 = vsel %vm1908, %v4321, %v4322
        %v4324 = vrot.slane %v4322, 4
        %v4325 = vrot.slane %v3572, 5
        %v4326 = vrot.slane %v4325, 4
        %v4327 = vrot.slane %v3617, 5
        %v4328 = vsel %vm1908, %v4326, %v4327
        %v4329 = vrot.slane %v4327, 4
        %v4330 = vrot.slane %v3575, 5
        %v4331 = vrot.slane %v4330, 4
        %v4332 = vrot.slane %v3618, 5
        %v4333 = vsel %vm1908, %v4331, %v4332
        %v4334 = vrot.slane %v4332, 4
        %v4335 = vrot.slane %v3578, 5
        %v4336 = vrot.slane %v4335, 4
        %v4337 = vrot.slane %v3619, 5
        %v4338 = vsel %vm1908, %v4336, %v4337
        %v4339 = vrot.slane %v4337, 4
        %v4340 = vrot.slane %v3581, 5
        %v4341 = vrot.slane %v4340, 4
        %v4342 = vrot.slane %v3620, 5
        %v4343 = vsel %vm1908, %v4341, %v4342
        %v4344 = vrot.slane %v4342, 4
        %v4345 = vrot.slane %v3584, 5
        %v4346 = vrot.slane %v4345, 4
        %v4347 = vrot.slane %v3621, 5
        %v4348 = vsel %vm1908, %v4346, %v4347
        %v4349 = vrot.slane %v4347, 4
        %v4350 = vrot.slane %v3587, 5
        %v4351 = vrot.slane %v4350, 4
        %v4352 = vrot.slane %v3622, 5
        %v4353 = vsel %vm1908, %v4351, %v4352
        %v4354 = vrot.slane %v4352, 4
        %v4355 = vrot.slane %v3590, 5
        %v4356 = vrot.slane %v4355, 4
        %v4357 = vrot.slane %v3623, 5
        %v4358 = vsel %vm1908, %v4356, %v4357
        %v4359 = vrot.slane %v4357, 4
        %v4360 = vrot.slane %v3593, 5
        %v4361 = vrot.slane %v4360, 4
        %v4362 = vrot.slane %v3624, 5
        %v4363 = vsel %vm1908, %v4361, %v4362
        %v4364 = vrot.slane %v4362, 4
        %v4365 = vrot.slane %v3596, 5
        %v4366 = vrot.slane %v4365, 4
        %v4367 = vrot.slane %v3625, 5
        %v4368 = vsel %vm1908, %v4366, %v4367
        %v4369 = vrot.slane %v4367, 4
        %v4370 = vrot.slane %v3599, 5
        %v4371 = vrot.slane %v4370, 4
        %v4372 = vrot.slane %v3626, 5
        %v4373 = vsel %vm1908, %v4371, %v4372
        %v4374 = vrot.slane %v4372, 4
        %v4375 = vrot.slane %v3602, 5
        %v4376 = vrot.slane %v4375, 4
        %v4377 = vrot.slane %v3627, 5
        %v4378 = vsel %vm1908, %v4376, %v4377
        %v4379 = vrot.slane %v4377, 4
        %v4380 = vrot.slane %v3605, 5
        %v4381 = vrot.slane %v4380, 4
        %v4382 = vrot.slane %v3628, 5
        %v4383 = vsel %vm1908, %v4381, %v4382
        %v4384 = vrot.slane %v4382, 4
        %v4385 = vrot.slane %v3608, 5
        %v4386 = vrot.slane %v4385, 4
        %v4387 = vrot.slane %v3629, 5
        %v4388 = vsel %vm1908, %v4386, %v4387
        %v4389 = vrot.slane %v4387, 4
        %v4450 = vmax.bf16 %v4190, %v4290
        %v4451 = vmax.bf16 %v4191, %v4293
        %v4452 = vmax.bf16 %v4192, %v4294
        %v4453 = vmax.bf16 %v4193, %v4295
        %v4454 = vmax.bf16 %v4194, %v4298
        %v4455 = vmax.bf16 %v4195, %v4299
        %v4456 = vmax.bf16 %v4196, %v4300
        %v4457 = vmax.bf16 %v4197, %v4303
        %v4458 = vmax.bf16 %v4198, %v4304
        %v4459 = vmax.bf16 %v4199, %v4305
        %v4460 = vmax.bf16 %v4200, %v4308
        %v4461 = vmax.bf16 %v4201, %v4309
        %v4462 = vmax.bf16 %v4202, %v4310
        %v4463 = vmax.bf16 %v4203, %v4313
        %v4464 = vmax.bf16 %v4204, %v4314
        %v4465 = vmax.bf16 %v4205, %v4315
        %v4466 = vmax.bf16 %v4206, %v4318
        %v4467 = vmax.bf16 %v4207, %v4319
        %v4468 = vmax.bf16 %v4208, %v4320
        %v4469 = vmax.bf16 %v4209, %v4323
        %v4470 = vmax.bf16 %v4210, %v4324
        %v4471 = vmax.bf16 %v4211, %v4325
        %v4472 = vmax.bf16 %v4212, %v4328
        %v4473 = vmax.bf16 %v4213, %v4329
        %v4474 = vmax.bf16 %v4214, %v4330
        %v4475 = vmax.bf16 %v4215, %v4333
        %v4476 = vmax.bf16 %v4216, %v4334
        %v4477 = vmax.bf16 %v4217, %v4335
        %v4478 = vmax.bf16 %v4218, %v4338
        %v4479 = vmax.bf16 %v4219, %v4339
        %v4480 = vmax.bf16 %v4220, %v4340
        %v4481 = vmax.bf16 %v4221, %v4343
        %v4482 = vmax.bf16 %v4222, %v4344
        %v4483 = vmax.bf16 %v4223, %v4345
        %v4484 = vmax.bf16 %v4224, %v4348
        %v4485 = vmax.bf16 %v4225, %v4349
        %v4486 = vmax.bf16 %v4226, %v4350
        %v4487 = vmax.bf16 %v4227, %v4353
        %v4488 = vmax.bf16 %v4228, %v4354
        %v4489 = vmax.bf16 %v4229, %v4355
        %v4490 = vmax.bf16 %v4230, %v4358
        %v4491 = vmax.bf16 %v4231, %v4359
        %v4492 = vmax.bf16 %v4232, %v4360
        %v4493 = vmax.bf16 %v4233, %v4363
        %v4494 = vmax.bf16 %v4234, %v4364
        %v4495 = vmax.bf16 %v4235, %v4365
        %v4496 = vmax.bf16 %v4236, %v4368
        %v4497 = vmax.bf16 %v4237, %v4369
        %v4498 = vmax.bf16 %v4238, %v4370
        %v4499 = vmax.bf16 %v4239, %v4373
        %v4500 = vmax.bf16 %v4240, %v4374
        %v4501 = vmax.bf16 %v4241, %v4375
        %v4502 = vmax.bf16 %v4242, %v4378
        %v4503 = vmax.bf16 %v4243, %v4379
        %v4504 = vmax.bf16 %v4244, %v4380
        %v4505 = vmax.bf16 %v4245, %v4383
        %v4506 = vmax.bf16 %v4246, %v4384
        %v4507 = vmax.bf16 %v4247, %v4385
        %v4508 = vmax.bf16 %v4248, %v4388
        %v4509 = vmax.bf16 %v4249, %v4389
        %v4510 = vld [vmem:[#allocation2 + $0x4] sm:$0xf]
        %v4511 = vld [vmem:[#allocation2 + $0x8] sm:$0xf]
        %v4512 = vld [vmem:[#allocation2 + $0xc] sm:$0x1]
        %v4513 = vld [vmem:[#allocation2 + $0x14] sm:$0xf]
        %v4514 = vld [vmem:[#allocation2 + $0x18] sm:$0xf]
        %v4515 = vld [vmem:[#allocation2 + $0x1c] sm:$0x1]
        %v4516 = vld [vmem:[#allocation2 + $0x24] sm:$0xf]
        %v4517 = vld [vmem:[#allocation2 + $0x28] sm:$0xf]
        %v4518 = vld [vmem:[#allocation2 + $0x2c] sm:$0x1]
        %v4519 = vld [vmem:[#allocation2 + $0x34] sm:$0xf]
        %v4520 = vld [vmem:[#allocation2 + $0x38] sm:$0xf]
        %v4521 = vld [vmem:[#allocation2 + $0x3c] sm:$0x1]
        %v4522 = vld [vmem:[#allocation2 + $0x44] sm:$0xf]
        %v4523 = vld [vmem:[#allocation2 + $0x48] sm:$0xf]
        %v4524 = vld [vmem:[#allocation2 + $0x4c] sm:$0x1]
        %v4525 = vld [vmem:[#allocation2 + $0x54] sm:$0xf]
        %v4526 = vld [vmem:[#allocation2 + $0x58] sm:$0xf]
        %v4527 = vld [vmem:[#allocation2 + $0x5c] sm:$0x1]
        %v4528 = vld [vmem:[#allocation2 + $0x64] sm:$0xf]
        %v4529 = vld [vmem:[#allocation2 + $0x68] sm:$0xf]
        %v4530 = vld [vmem:[#allocation2 + $0x6c] sm:$0x1]
        %v4531 = vld [vmem:[#allocation2 + $0x74] sm:$0xf]
        %v4532 = vld [vmem:[#allocation2 + $0x78] sm:$0xf]
        %v4533 = vld [vmem:[#allocation2 + $0x7c] sm:$0x1]
        %v4534 = vld [vmem:[#allocation2 + $0x84] sm:$0xf]
        %v4535 = vld [vmem:[#allocation2 + $0x88] sm:$0xf]
        %v4536 = vld [vmem:[#allocation2 + $0x8c] sm:$0x1]
        %v4537 = vld [vmem:[#allocation2 + $0x94] sm:$0xf]
        %v4538 = vld [vmem:[#allocation2 + $0x98] sm:$0xf]
        %v4539 = vld [vmem:[#allocation2 + $0x9c] sm:$0x1]
        %v4540 = vld [vmem:[#allocation2 + $0xa4] sm:$0xf]
        %v4541 = vld [vmem:[#allocation2 + $0xa8] sm:$0xf]
        %v4542 = vld [vmem:[#allocation2 + $0xac] sm:$0x1]
        %v4543 = vld [vmem:[#allocation2 + $0xb4] sm:$0xf]
        %v4544 = vld [vmem:[#allocation2 + $0xb8] sm:$0xf]
        %v4545 = vld [vmem:[#allocation2 + $0xbc] sm:$0x1]
        %v4546 = vld [vmem:[#allocation2 + $0xc4] sm:$0xf]
        %v4547 = vld [vmem:[#allocation2 + $0xc8] sm:$0xf]
        %v4548 = vld [vmem:[#allocation2 + $0xcc] sm:$0x1]
        %v4549 = vld [vmem:[#allocation2 + $0xd4] sm:$0xf]
        %v4550 = vld [vmem:[#allocation2 + $0xd8] sm:$0xf]
        %v4551 = vld [vmem:[#allocation2 + $0xdc] sm:$0x1]
        %v4552 = vld [vmem:[#allocation2 + $0xe4] sm:$0xf]
        %v4553 = vld [vmem:[#allocation2 + $0xe8] sm:$0xf]
        %v4554 = vld [vmem:[#allocation2 + $0xec] sm:$0x1]
        %v4555 = vld [vmem:[#allocation2 + $0xf4] sm:$0xf]
        %v4556 = vld [vmem:[#allocation2 + $0xf8] sm:$0xf]
        %v4557 = vld [vmem:[#allocation2 + $0xfc] sm:$0x1]
        %v4558 = vld [vmem:[#allocation2 + $0x104] sm:$0xf]
        %v4559 = vld [vmem:[#allocation2 + $0x108] sm:$0xf]
        %v4560 = vld [vmem:[#allocation2 + $0x10c] sm:$0x1]
        %v4561 = vld [vmem:[#allocation2 + $0x114] sm:$0xf]
        %v4562 = vld [vmem:[#allocation2 + $0x118] sm:$0xf]
        %v4563 = vld [vmem:[#allocation2 + $0x11c] sm:$0x1]
        %v4564 = vld [vmem:[#allocation2 + $0x124] sm:$0xf]
        %v4565 = vld [vmem:[#allocation2 + $0x128] sm:$0xf]
        %v4566 = vld [vmem:[#allocation2 + $0x12c] sm:$0x1]
        %v4567 = vld [vmem:[#allocation2 + $0x134] sm:$0xf]
        %v4568 = vld [vmem:[#allocation2 + $0x138] sm:$0xf]
        %v4569 = vld [vmem:[#allocation2 + $0x13c] sm:$0x1]
        %v4571 = vshrl.u32 %v4510, 16
        %v4573 = vrot.slane %v4571, 5
        %v4574 = vshll.u32 %v4510, 16
        %v4576 = vrot.slane %v4574, 6
        %v4577 = vor.u32 %v4573, %v4576
        %v4578 = vrot.slane %v4577, 4
        %v4580 = vshrl.u32 %v4511, 16
        %v4582 = vrot.slane %v4580, 5
        %v4583 = vshll.u32 %v4511, 16
        %v4585 = vrot.slane %v4583, 6
        %v4586 = vor.u32 %v4582, %v4585
        %v4587 = vsel %vm2191, %v4578, %v4586
        %v4588 = vrot.slane %v4586, 4
        %v4590 = vshll.u32 %v4512, 16
        %v4592 = vrot.slane %v4590, 6
        %v4593 = vsel %vm2191, %v4588, %v4592
        %v4595 = vshrl.u32 %v4513, 16
        %v4597 = vrot.slane %v4595, 5
        %v4598 = vshll.u32 %v4513, 16
        %v4600 = vrot.slane %v4598, 6
        %v4601 = vor.u32 %v4597, %v4600
        %v4602 = vrot.slane %v4601, 4
        %v4604 = vshrl.u32 %v4514, 16
        %v4606 = vrot.slane %v4604, 5
        %v4607 = vshll.u32 %v4514, 16
        %v4609 = vrot.slane %v4607, 6
        %v4610 = vor.u32 %v4606, %v4609
        %v4611 = vsel %vm2191, %v4602, %v4610
        %v4612 = vrot.slane %v4610, 4
        %v4614 = vshll.u32 %v4515, 16
        %v4616 = vrot.slane %v4614, 6
        %v4617 = vsel %vm2191, %v4612, %v4616
        %v4619 = vshrl.u32 %v4516, 16
        %v4621 = vrot.slane %v4619, 5
        %v4622 = vshll.u32 %v4516, 16
        %v4624 = vrot.slane %v4622, 6
        %v4625 = vor.u32 %v4621, %v4624
        %v4626 = vrot.slane %v4625, 4
        %v4628 = vshrl.u32 %v4517, 16
        %v4630 = vrot.slane %v4628, 5
        %v4631 = vshll.u32 %v4517, 16
        %v4633 = vrot.slane %v4631, 6
        %v4634 = vor.u32 %v4630, %v4633
        %v4635 = vsel %vm2191, %v4626, %v4634
        %v4636 = vrot.slane %v4634, 4
        %v4638 = vshll.u32 %v4518, 16
        %v4640 = vrot.slane %v4638, 6
        %v4641 = vsel %vm2191, %v4636, %v4640
        %v4643 = vshrl.u32 %v4519, 16
        %v4645 = vrot.slane %v4643, 5
        %v4646 = vshll.u32 %v4519, 16
        %v4648 = vrot.slane %v4646, 6
        %v4649 = vor.u32 %v4645, %v4648
        %v4650 = vrot.slane %v4649, 4
        %v4652 = vshrl.u32 %v4520, 16
        %v4654 = vrot.slane %v4652, 5
        %v4655 = vshll.u32 %v4520, 16
        %v4657 = vrot.slane %v4655, 6
        %v4658 = vor.u32 %v4654, %v4657
        %v4659 = vsel %vm2191, %v4650, %v4658
        %v4660 = vrot.slane %v4658, 4
        %v4662 = vshll.u32 %v4521, 16
        %v4664 = vrot.slane %v4662, 6
        %v4665 = vsel %vm2191, %v4660, %v4664
        %v4667 = vshrl.u32 %v4522, 16
        %v4669 = vrot.slane %v4667, 5
        %v4670 = vshll.u32 %v4522, 16
        %v4672 = vrot.slane %v4670, 6
        %v4673 = vor.u32 %v4669, %v4672
        %v4674 = vrot.slane %v4673, 4
        %v4676 = vshrl.u32 %v4523, 16
        %v4678 = vrot.slane %v4676, 5
        %v4679 = vshll.u32 %v4523, 16
        %v4681 = vrot.slane %v4679, 6
        %v4682 = vor.u32 %v4678, %v4681
        %v4683 = vsel %vm2191, %v4674, %v4682
        %v4684 = vrot.slane %v4682, 4
        %v4686 = vshll.u32 %v4524, 16
        %v4688 = vrot.slane %v4686, 6
        %v4689 = vsel %vm2191, %v4684, %v4688
        %v4691 = vshrl.u32 %v4525, 16
        %v4693 = vrot.slane %v4691, 5
        %v4694 = vshll.u32 %v4525, 16
        %v4696 = vrot.slane %v4694, 6
        %v4697 = vor.u32 %v4693, %v4696
        %v4698 = vrot.slane %v4697, 4
        %v4700 = vshrl.u32 %v4526, 16
        %v4702 = vrot.slane %v4700, 5
        %v4703 = vshll.u32 %v4526, 16
        %v4705 = vrot.slane %v4703, 6
        %v4706 = vor.u32 %v4702, %v4705
        %v4707 = vsel %vm2191, %v4698, %v4706
        %v4708 = vrot.slane %v4706, 4
        %v4710 = vshll.u32 %v4527, 16
        %v4712 = vrot.slane %v4710, 6
        %v4713 = vsel %vm2191, %v4708, %v4712
        %v4715 = vshrl.u32 %v4528, 16
        %v4717 = vrot.slane %v4715, 5
        %v4718 = vshll.u32 %v4528, 16
        %v4720 = vrot.slane %v4718, 6
        %v4721 = vor.u32 %v4717, %v4720
        %v4722 = vrot.slane %v4721, 4
        %v4724 = vshrl.u32 %v4529, 16
        %v4726 = vrot.slane %v4724, 5
        %v4727 = vshll.u32 %v4529, 16
        %v4729 = vrot.slane %v4727, 6
        %v4730 = vor.u32 %v4726, %v4729
        %v4731 = vsel %vm2191, %v4722, %v4730
        %v4732 = vrot.slane %v4730, 4
        %v4734 = vshll.u32 %v4530, 16
        %v4736 = vrot.slane %v4734, 6
        %v4737 = vsel %vm2191, %v4732, %v4736
        %v4739 = vshrl.u32 %v4531, 16
        %v4741 = vrot.slane %v4739, 5
        %v4742 = vshll.u32 %v4531, 16
        %v4744 = vrot.slane %v4742, 6
        %v4745 = vor.u32 %v4741, %v4744
        %v4746 = vrot.slane %v4745, 4
        %v4748 = vshrl.u32 %v4532, 16
        %v4750 = vrot.slane %v4748, 5
        %v4751 = vshll.u32 %v4532, 16
        %v4753 = vrot.slane %v4751, 6
        %v4754 = vor.u32 %v4750, %v4753
        %v4755 = vsel %vm2191, %v4746, %v4754
        %v4756 = vrot.slane %v4754, 4
        %v4758 = vshll.u32 %v4533, 16
        %v4760 = vrot.slane %v4758, 6
        %v4761 = vsel %vm2191, %v4756, %v4760
        %v4763 = vshrl.u32 %v4534, 16
        %v4765 = vrot.slane %v4763, 5
        %v4766 = vshll.u32 %v4534, 16
        %v4768 = vrot.slane %v4766, 6
        %v4769 = vor.u32 %v4765, %v4768
        %v4770 = vrot.slane %v4769, 4
        %v4772 = vshrl.u32 %v4535, 16
        %v4774 = vrot.slane %v4772, 5
        %v4775 = vshll.u32 %v4535, 16
        %v4777 = vrot.slane %v4775, 6
        %v4778 = vor.u32 %v4774, %v4777
        %v4779 = vsel %vm2191, %v4770, %v4778
        %v4780 = vrot.slane %v4778, 4
        %v4782 = vshll.u32 %v4536, 16
        %v4784 = vrot.slane %v4782, 6
        %v4785 = vsel %vm2191, %v4780, %v4784
        %v4787 = vshrl.u32 %v4537, 16
        %v4789 = vrot.slane %v4787, 5
        %v4790 = vshll.u32 %v4537, 16
        %v4792 = vrot.slane %v4790, 6
        %v4793 = vor.u32 %v4789, %v4792
        %v4794 = vrot.slane %v4793, 4
        %v4796 = vshrl.u32 %v4538, 16
        %v4798 = vrot.slane %v4796, 5
        %v4799 = vshll.u32 %v4538, 16
        %v4801 = vrot.slane %v4799, 6
        %v4802 = vor.u32 %v4798, %v4801
        %v4803 = vsel %vm2191, %v4794, %v4802
        %v4804 = vrot.slane %v4802, 4
        %v4806 = vshll.u32 %v4539, 16
        %v4808 = vrot.slane %v4806, 6
        %v4809 = vsel %vm2191, %v4804, %v4808
        %v4811 = vshrl.u32 %v4540, 16
        %v4813 = vrot.slane %v4811, 5
        %v4814 = vshll.u32 %v4540, 16
        %v4816 = vrot.slane %v4814, 6
        %v4817 = vor.u32 %v4813, %v4816
        %v4818 = vrot.slane %v4817, 4
        %v4820 = vshrl.u32 %v4541, 16
        %v4822 = vrot.slane %v4820, 5
        %v4823 = vshll.u32 %v4541, 16
        %v4825 = vrot.slane %v4823, 6
        %v4826 = vor.u32 %v4822, %v4825
        %v4827 = vsel %vm2191, %v4818, %v4826
        %v4828 = vrot.slane %v4826, 4
        %v4830 = vshll.u32 %v4542, 16
        %v4832 = vrot.slane %v4830, 6
        %v4833 = vsel %vm2191, %v4828, %v4832
        %v4835 = vshrl.u32 %v4543, 16
        %v4837 = vrot.slane %v4835, 5
        %v4838 = vshll.u32 %v4543, 16
        %v4840 = vrot.slane %v4838, 6
        %v4841 = vor.u32 %v4837, %v4840
        %v4842 = vrot.slane %v4841, 4
        %v4844 = vshrl.u32 %v4544, 16
        %v4846 = vrot.slane %v4844, 5
        %v4847 = vshll.u32 %v4544, 16
        %v4849 = vrot.slane %v4847, 6
        %v4850 = vor.u32 %v4846, %v4849
        %v4851 = vsel %vm2191, %v4842, %v4850
        %v4852 = vrot.slane %v4850, 4
        %v4854 = vshll.u32 %v4545, 16
        %v4856 = vrot.slane %v4854, 6
        %v4857 = vsel %vm2191, %v4852, %v4856
        %v4859 = vshrl.u32 %v4546, 16
        %v4861 = vrot.slane %v4859, 5
        %v4862 = vshll.u32 %v4546, 16
        %v4864 = vrot.slane %v4862, 6
        %v4865 = vor.u32 %v4861, %v4864
        %v4866 = vrot.slane %v4865, 4
        %v4868 = vshrl.u32 %v4547, 16
        %v4870 = vrot.slane %v4868, 5
        %v4871 = vshll.u32 %v4547, 16
        %v4873 = vrot.slane %v4871, 6
        %v4874 = vor.u32 %v4870, %v4873
        %v4875 = vsel %vm2191, %v4866, %v4874
        %v4876 = vrot.slane %v4874, 4
        %v4878 = vshll.u32 %v4548, 16
        %v4880 = vrot.slane %v4878, 6
        %v4881 = vsel %vm2191, %v4876, %v4880
        %v4883 = vshrl.u32 %v4549, 16
        %v4885 = vrot.slane %v4883, 5
        %v4886 = vshll.u32 %v4549, 16
        %v4888 = vrot.slane %v4886, 6
        %v4889 = vor.u32 %v4885, %v4888
        %v4890 = vrot.slane %v4889, 4
        %v4892 = vshrl.u32 %v4550, 16
        %v4894 = vrot.slane %v4892, 5
        %v4895 = vshll.u32 %v4550, 16
        %v4897 = vrot.slane %v4895, 6
        %v4898 = vor.u32 %v4894, %v4897
        %v4899 = vsel %vm2191, %v4890, %v4898
        %v4900 = vrot.slane %v4898, 4
        %v4902 = vshll.u32 %v4551, 16
        %v4904 = vrot.slane %v4902, 6
        %v4905 = vsel %vm2191, %v4900, %v4904
        %v4907 = vshrl.u32 %v4552, 16
        %v4909 = vrot.slane %v4907, 5
        %v4910 = vshll.u32 %v4552, 16
        %v4912 = vrot.slane %v4910, 6
        %v4913 = vor.u32 %v4909, %v4912
        %v4914 = vrot.slane %v4913, 4
        %v4916 = vshrl.u32 %v4553, 16
        %v4918 = vrot.slane %v4916, 5
        %v4919 = vshll.u32 %v4553, 16
        %v4921 = vrot.slane %v4919, 6
        %v4922 = vor.u32 %v4918, %v4921
        %v4923 = vsel %vm2191, %v4914, %v4922
        %v4924 = vrot.slane %v4922, 4
        %v4926 = vshll.u32 %v4554, 16
        %v4928 = vrot.slane %v4926, 6
        %v4929 = vsel %vm2191, %v4924, %v4928
        %v4931 = vshrl.u32 %v4555, 16
        %v4933 = vrot.slane %v4931, 5
        %v4934 = vshll.u32 %v4555, 16
        %v4936 = vrot.slane %v4934, 6
        %v4937 = vor.u32 %v4933, %v4936
        %v4938 = vrot.slane %v4937, 4
        %v4940 = vshrl.u32 %v4556, 16
        %v4942 = vrot.slane %v4940, 5
        %v4943 = vshll.u32 %v4556, 16
        %v4945 = vrot.slane %v4943, 6
        %v4946 = vor.u32 %v4942, %v4945
        %v4947 = vsel %vm2191, %v4938, %v4946
        %v4948 = vrot.slane %v4946, 4
        %v4950 = vshll.u32 %v4557, 16
        %v4952 = vrot.slane %v4950, 6
        %v4953 = vsel %vm2191, %v4948, %v4952
        %v4955 = vshrl.u32 %v4558, 16
        %v4957 = vrot.slane %v4955, 5
        %v4958 = vshll.u32 %v4558, 16
        %v4960 = vrot.slane %v4958, 6
        %v4961 = vor.u32 %v4957, %v4960
        %v4962 = vrot.slane %v4961, 4
        %v4964 = vshrl.u32 %v4559, 16
        %v4966 = vrot.slane %v4964, 5
        %v4967 = vshll.u32 %v4559, 16
        %v4969 = vrot.slane %v4967, 6
        %v4970 = vor.u32 %v4966, %v4969
        %v4971 = vsel %vm2191, %v4962, %v4970
        %v4972 = vrot.slane %v4970, 4
        %v4974 = vshll.u32 %v4560, 16
        %v4976 = vrot.slane %v4974, 6
        %v4977 = vsel %vm2191, %v4972, %v4976
        %v4979 = vshrl.u32 %v4561, 16
        %v4981 = vrot.slane %v4979, 5
        %v4982 = vshll.u32 %v4561, 16
        %v4984 = vrot.slane %v4982, 6
        %v4985 = vor.u32 %v4981, %v4984
        %v4986 = vrot.slane %v4985, 4
        %v4988 = vshrl.u32 %v4562, 16
        %v4990 = vrot.slane %v4988, 5
        %v4991 = vshll.u32 %v4562, 16
        %v4993 = vrot.slane %v4991, 6
        %v4994 = vor.u32 %v4990, %v4993
        %v4995 = vsel %vm2191, %v4986, %v4994
        %v4996 = vrot.slane %v4994, 4
        %v4998 = vshll.u32 %v4563, 16
        %v5000 = vrot.slane %v4998, 6
        %v5001 = vsel %vm2191, %v4996, %v5000
        %v5003 = vshrl.u32 %v4564, 16
        %v5005 = vrot.slane %v5003, 5
        %v5006 = vshll.u32 %v4564, 16
        %v5008 = vrot.slane %v5006, 6
        %v5009 = vor.u32 %v5005, %v5008
        %v5010 = vrot.slane %v5009, 4
        %v5012 = vshrl.u32 %v4565, 16
        %v5014 = vrot.slane %v5012, 5
        %v5015 = vshll.u32 %v4565, 16
        %v5017 = vrot.slane %v5015, 6
        %v5018 = vor.u32 %v5014, %v5017
        %v5019 = vsel %vm2191, %v5010, %v5018
        %v5020 = vrot.slane %v5018, 4
        %v5022 = vshll.u32 %v4566, 16
        %v5024 = vrot.slane %v5022, 6
        %v5025 = vsel %vm2191, %v5020, %v5024
        %v5027 = vshrl.u32 %v4567, 16
        %v5029 = vrot.slane %v5027, 5
        %v5030 = vshll.u32 %v4567, 16
        %v5032 = vrot.slane %v5030, 6
        %v5033 = vor.u32 %v5029, %v5032
        %v5034 = vrot.slane %v5033, 4
        %v5036 = vshrl.u32 %v4568, 16
        %v5038 = vrot.slane %v5036, 5
        %v5039 = vshll.u32 %v4568, 16
        %v5041 = vrot.slane %v5039, 6
        %v5042 = vor.u32 %v5038, %v5041
        %v5043 = vsel %vm2191, %v5034, %v5042
        %v5044 = vrot.slane %v5042, 4
        %v5046 = vshll.u32 %v4569, 16
        %v5048 = vrot.slane %v5046, 6
        %v5049 = vsel %vm2191, %v5044, %v5048
        %v5110 = vmax.bf16 %v4450, %v4577
        %v5111 = vmax.bf16 %v4451, %v4587
        %v5112 = vmax.bf16 %v4452, %v4593
        %v5113 = vmax.bf16 %v4453, %v4601
        %v5114 = vmax.bf16 %v4454, %v4611
        %v5115 = vmax.bf16 %v4455, %v4617
        %v5116 = vmax.bf16 %v4456, %v4625
        %v5117 = vmax.bf16 %v4457, %v4635
        %v5118 = vmax.bf16 %v4458, %v4641
        %v5119 = vmax.bf16 %v4459, %v4649
        %v5120 = vmax.bf16 %v4460, %v4659
        %v5121 = vmax.bf16 %v4461, %v4665
        %v5122 = vmax.bf16 %v4462, %v4673
        %v5123 = vmax.bf16 %v4463, %v4683
        %v5124 = vmax.bf16 %v4464, %v4689
        %v5125 = vmax.bf16 %v4465, %v4697
        %v5126 = vmax.bf16 %v4466, %v4707
        %v5127 = vmax.bf16 %v4467, %v4713
        %v5128 = vmax.bf16 %v4468, %v4721
        %v5129 = vmax.bf16 %v4469, %v4731
        %v5130 = vmax.bf16 %v4470, %v4737
        %v5131 = vmax.bf16 %v4471, %v4745
        %v5132 = vmax.bf16 %v4472, %v4755
        %v5133 = vmax.bf16 %v4473, %v4761
        %v5134 = vmax.bf16 %v4474, %v4769
        %v5135 = vmax.bf16 %v4475, %v4779
        %v5136 = vmax.bf16 %v4476, %v4785
        %v5137 = vmax.bf16 %v4477, %v4793
        %v5138 = vmax.bf16 %v4478, %v4803
        %v5139 = vmax.bf16 %v4479, %v4809
        %v5140 = vmax.bf16 %v4480, %v4817
        %v5141 = vmax.bf16 %v4481, %v4827
        %v5142 = vmax.bf16 %v4482, %v4833
        %v5143 = vmax.bf16 %v4483, %v4841
        %v5144 = vmax.bf16 %v4484, %v4851
        %v5145 = vmax.bf16 %v4485, %v4857
        %v5146 = vmax.bf16 %v4486, %v4865
        %v5147 = vmax.bf16 %v4487, %v4875
        %v5148 = vmax.bf16 %v4488, %v4881
        %v5149 = vmax.bf16 %v4489, %v4889
        %v5150 = vmax.bf16 %v4490, %v4899
        %v5151 = vmax.bf16 %v4491, %v4905
        %v5152 = vmax.bf16 %v4492, %v4913
        %v5153 = vmax.bf16 %v4493, %v4923
        %v5154 = vmax.bf16 %v4494, %v4929
        %v5155 = vmax.bf16 %v4495, %v4937
        %v5156 = vmax.bf16 %v4496, %v4947
        %v5157 = vmax.bf16 %v4497, %v4953
        %v5158 = vmax.bf16 %v4498, %v4961
        %v5159 = vmax.bf16 %v4499, %v4971
        %v5160 = vmax.bf16 %v4500, %v4977
        %v5161 = vmax.bf16 %v4501, %v4985
        %v5162 = vmax.bf16 %v4502, %v4995
        %v5163 = vmax.bf16 %v4503, %v5001
        %v5164 = vmax.bf16 %v4504, %v5009
        %v5165 = vmax.bf16 %v4505, %v5019
        %v5166 = vmax.bf16 %v4506, %v5025
        %v5167 = vmax.bf16 %v4507, %v5033
        %v5168 = vmax.bf16 %v4508, %v5043
        %v5169 = vmax.bf16 %v4509, %v5049
        %v5170 = vld [vmem:[#allocation2 + $0x4] sm:$0xe]
        %v5171 = vld [vmem:[#allocation2 + $0x14] sm:$0xe]
        %v5172 = vld [vmem:[#allocation2 + $0x24] sm:$0xe]
        %v5173 = vld [vmem:[#allocation2 + $0x34] sm:$0xe]
        %v5174 = vld [vmem:[#allocation2 + $0x44] sm:$0xe]
        %v5175 = vld [vmem:[#allocation2 + $0x54] sm:$0xe]
        %v5176 = vld [vmem:[#allocation2 + $0x64] sm:$0xe]
        %v5177 = vld [vmem:[#allocation2 + $0x74] sm:$0xe]
        %v5178 = vld [vmem:[#allocation2 + $0x84] sm:$0xe]
        %v5179 = vld [vmem:[#allocation2 + $0x94] sm:$0xe]
        %v5180 = vld [vmem:[#allocation2 + $0xa4] sm:$0xe]
        %v5181 = vld [vmem:[#allocation2 + $0xb4] sm:$0xe]
        %v5182 = vld [vmem:[#allocation2 + $0xc4] sm:$0xe]
        %v5183 = vld [vmem:[#allocation2 + $0xd4] sm:$0xe]
        %v5184 = vld [vmem:[#allocation2 + $0xe4] sm:$0xe]
        %v5185 = vld [vmem:[#allocation2 + $0xf4] sm:$0xe]
        %v5186 = vld [vmem:[#allocation2 + $0x104] sm:$0xe]
        %v5187 = vld [vmem:[#allocation2 + $0x114] sm:$0xe]
        %v5188 = vld [vmem:[#allocation2 + $0x124] sm:$0xe]
        %v5189 = vld [vmem:[#allocation2 + $0x134] sm:$0xe]
        %v5250 = vrot.slane %v5170, 6
        %v5251 = vrot.slane %v5250, 4
        %v5252 = vrot.slane %v4511, 6
        %v5253 = vsel %vm2874, %v5251, %v5252
        %v5254 = vrot.slane %v5252, 4
        %v5255 = vrot.slane %v4512, 6
        %v5256 = vsel %vm2874, %v5254, %v5255
        %v5257 = vrot.slane %v5171, 6
        %v5258 = vrot.slane %v5257, 4
        %v5259 = vrot.slane %v4514, 6
        %v5260 = vsel %vm2874, %v5258, %v5259
        %v5261 = vrot.slane %v5259, 4
        %v5262 = vrot.slane %v4515, 6
        %v5263 = vsel %vm2874, %v5261, %v5262
        %v5264 = vrot.slane %v5172, 6
        %v5265 = vrot.slane %v5264, 4
        %v5266 = vrot.slane %v4517, 6
        %v5267 = vsel %vm2874, %v5265, %v5266
        %v5268 = vrot.slane %v5266, 4
        %v5269 = vrot.slane %v4518, 6
        %v5270 = vsel %vm2874, %v5268, %v5269
        %v5271 = vrot.slane %v5173, 6
        %v5272 = vrot.slane %v5271, 4
        %v5273 = vrot.slane %v4520, 6
        %v5274 = vsel %vm2874, %v5272, %v5273
        %v5275 = vrot.slane %v5273, 4
        %v5276 = vrot.slane %v4521, 6
        %v5277 = vsel %vm2874, %v5275, %v5276
        %v5278 = vrot.slane %v5174, 6
        %v5279 = vrot.slane %v5278, 4
        %v5280 = vrot.slane %v4523, 6
        %v5281 = vsel %vm2874, %v5279, %v5280
        %v5282 = vrot.slane %v5280, 4
        %v5283 = vrot.slane %v4524, 6
        %v5284 = vsel %vm2874, %v5282, %v5283
        %v5285 = vrot.slane %v5175, 6
        %v5286 = vrot.slane %v5285, 4
        %v5287 = vrot.slane %v4526, 6
        %v5288 = vsel %vm2874, %v5286, %v5287
        %v5289 = vrot.slane %v5287, 4
        %v5290 = vrot.slane %v4527, 6
        %v5291 = vsel %vm2874, %v5289, %v5290
        %v5292 = vrot.slane %v5176, 6
        %v5293 = vrot.slane %v5292, 4
        %v5294 = vrot.slane %v4529, 6
        %v5295 = vsel %vm2874, %v5293, %v5294
        %v5296 = vrot.slane %v5294, 4
        %v5297 = vrot.slane %v4530, 6
        %v5298 = vsel %vm2874, %v5296, %v5297
        %v5299 = vrot.slane %v5177, 6
        %v5300 = vrot.slane %v5299, 4
        %v5301 = vrot.slane %v4532, 6
        %v5302 = vsel %vm2874, %v5300, %v5301
        %v5303 = vrot.slane %v5301, 4
        %v5304 = vrot.slane %v4533, 6
        %v5305 = vsel %vm2874, %v5303, %v5304
        %v5306 = vrot.slane %v5178, 6
        %v5307 = vrot.slane %v5306, 4
        %v5308 = vrot.slane %v4535, 6
        %v5309 = vsel %vm2874, %v5307, %v5308
        %v5310 = vrot.slane %v5308, 4
        %v5311 = vrot.slane %v4536, 6
        %v5312 = vsel %vm2874, %v5310, %v5311
        %v5313 = vrot.slane %v5179, 6
        %v5314 = vrot.slane %v5313, 4
        %v5315 = vrot.slane %v4538, 6
        %v5316 = vsel %vm2874, %v5314, %v5315
        %v5317 = vrot.slane %v5315, 4
        %v5318 = vrot.slane %v4539, 6
        %v5319 = vsel %vm2874, %v5317, %v5318
        %v5320 = vrot.slane %v5180, 6
        %v5321 = vrot.slane %v5320, 4
        %v5322 = vrot.slane %v4541, 6
        %v5323 = vsel %vm2874, %v5321, %v5322
        %v5324 = vrot.slane %v5322, 4
        %v5325 = vrot.slane %v4542, 6
        %v5326 = vsel %vm2874, %v5324, %v5325
        %v5327 = vrot.slane %v5181, 6
        %v5328 = vrot.slane %v5327, 4
        %v5329 = vrot.slane %v4544, 6
        %v5330 = vsel %vm2874, %v5328, %v5329
        %v5331 = vrot.slane %v5329, 4
        %v5332 = vrot.slane %v4545, 6
        %v5333 = vsel %vm2874, %v5331, %v5332
        %v5334 = vrot.slane %v5182, 6
        %v5335 = vrot.slane %v5334, 4
        %v5336 = vrot.slane %v4547, 6
        %v5337 = vsel %vm2874, %v5335, %v5336
        %v5338 = vrot.slane %v5336, 4
        %v5339 = vrot.slane %v4548, 6
        %v5340 = vsel %vm2874, %v5338, %v5339
        %v5341 = vrot.slane %v5183, 6
        %v5342 = vrot.slane %v5341, 4
        %v5343 = vrot.slane %v4550, 6
        %v5344 = vsel %vm2874, %v5342, %v5343
        %v5345 = vrot.slane %v5343, 4
        %v5346 = vrot.slane %v4551, 6
        %v5347 = vsel %vm2874, %v5345, %v5346
        %v5348 = vrot.slane %v5184, 6
        %v5349 = vrot.slane %v5348, 4
        %v5350 = vrot.slane %v4553, 6
        %v5351 = vsel %vm2874, %v5349, %v5350
        %v5352 = vrot.slane %v5350, 4
        %v5353 = vrot.slane %v4554, 6
        %v5354 = vsel %vm2874, %v5352, %v5353
        %v5355 = vrot.slane %v5185, 6
        %v5356 = vrot.slane %v5355, 4
        %v5357 = vrot.slane %v4556, 6
        %v5358 = vsel %vm2874, %v5356, %v5357
        %v5359 = vrot.slane %v5357, 4
        %v5360 = vrot.slane %v4557, 6
        %v5361 = vsel %vm2874, %v5359, %v5360
        %v5362 = vrot.slane %v5186, 6
        %v5363 = vrot.slane %v5362, 4
        %v5364 = vrot.slane %v4559, 6
        %v5365 = vsel %vm2874, %v5363, %v5364
        %v5366 = vrot.slane %v5364, 4
        %v5367 = vrot.slane %v4560, 6
        %v5368 = vsel %vm2874, %v5366, %v5367
        %v5369 = vrot.slane %v5187, 6
        %v5370 = vrot.slane %v5369, 4
        %v5371 = vrot.slane %v4562, 6
        %v5372 = vsel %vm2874, %v5370, %v5371
        %v5373 = vrot.slane %v5371, 4
        %v5374 = vrot.slane %v4563, 6
        %v5375 = vsel %vm2874, %v5373, %v5374
        %v5376 = vrot.slane %v5188, 6
        %v5377 = vrot.slane %v5376, 4
        %v5378 = vrot.slane %v4565, 6
        %v5379 = vsel %vm2874, %v5377, %v5378
        %v5380 = vrot.slane %v5378, 4
        %v5381 = vrot.slane %v4566, 6
        %v5382 = vsel %vm2874, %v5380, %v5381
        %v5383 = vrot.slane %v5189, 6
        %v5384 = vrot.slane %v5383, 4
        %v5385 = vrot.slane %v4568, 6
        %v5386 = vsel %vm2874, %v5384, %v5385
        %v5387 = vrot.slane %v5385, 4
        %v5388 = vrot.slane %v4569, 6
        %v5389 = vsel %vm2874, %v5387, %v5388
        %v5450 = vmax.bf16 %v5110, %v5250
        %v5451 = vmax.bf16 %v5111, %v5253
        %v5452 = vmax.bf16 %v5112, %v5256
        %v5453 = vmax.bf16 %v5113, %v5257
        %v5454 = vmax.bf16 %v5114, %v5260
        %v5455 = vmax.bf16 %v5115, %v5263
        %v5456 = vmax.bf16 %v5116, %v5264
        %v5457 = vmax.bf16 %v5117, %v5267
        %v5458 = vmax.bf16 %v5118, %v5270
        %v5459 = vmax.bf16 %v5119, %v5271
        %v5460 = vmax.bf16 %v5120, %v5274
        %v5461 = vmax.bf16 %v5121, %v5277
        %v5462 = vmax.bf16 %v5122, %v5278
        %v5463 = vmax.bf16 %v5123, %v5281
        %v5464 = vmax.bf16 %v5124, %v5284
        %v5465 = vmax.bf16 %v5125, %v5285
        %v5466 = vmax.bf16 %v5126, %v5288
        %v5467 = vmax.bf16 %v5127, %v5291
        %v5468 = vmax.bf16 %v5128, %v5292
        %v5469 = vmax.bf16 %v5129, %v5295
        %v5470 = vmax.bf16 %v5130, %v5298
        %v5471 = vmax.bf16 %v5131, %v5299
        %v5472 = vmax.bf16 %v5132, %v5302
        %v5473 = vmax.bf16 %v5133, %v5305
        %v5474 = vmax.bf16 %v5134, %v5306
        %v5475 = vmax.bf16 %v5135, %v5309
        %v5476 = vmax.bf16 %v5136, %v5312
        %v5477 = vmax.bf16 %v5137, %v5313
        %v5478 = vmax.bf16 %v5138, %v5316
        %v5479 = vmax.bf16 %v5139, %v5319
        %v5480 = vmax.bf16 %v5140, %v5320
        %v5481 = vmax.bf16 %v5141, %v5323
        %v5482 = vmax.bf16 %v5142, %v5326
        %v5483 = vmax.bf16 %v5143, %v5327
        %v5484 = vmax.bf16 %v5144, %v5330
        %v5485 = vmax.bf16 %v5145, %v5333
        %v5486 = vmax.bf16 %v5146, %v5334
        %v5487 = vmax.bf16 %v5147, %v5337
        %v5488 = vmax.bf16 %v5148, %v5340
        %v5489 = vmax.bf16 %v5149, %v5341
        %v5490 = vmax.bf16 %v5150, %v5344
        %v5491 = vmax.bf16 %v5151, %v5347
        %v5492 = vmax.bf16 %v5152, %v5348
        %v5493 = vmax.bf16 %v5153, %v5351
        %v5494 = vmax.bf16 %v5154, %v5354
        %v5495 = vmax.bf16 %v5155, %v5355
        %v5496 = vmax.bf16 %v5156, %v5358
        %v5497 = vmax.bf16 %v5157, %v5361
        %v5498 = vmax.bf16 %v5158, %v5362
        %v5499 = vmax.bf16 %v5159, %v5365
        %v5500 = vmax.bf16 %v5160, %v5368
        %v5501 = vmax.bf16 %v5161, %v5369
        %v5502 = vmax.bf16 %v5162, %v5372
        %v5503 = vmax.bf16 %v5163, %v5375
        %v5504 = vmax.bf16 %v5164, %v5376
        %v5505 = vmax.bf16 %v5165, %v5379
        %v5506 = vmax.bf16 %v5166, %v5382
        %v5507 = vmax.bf16 %v5167, %v5383
        %v5508 = vmax.bf16 %v5168, %v5386
        %v5509 = vmax.bf16 %v5169, %v5389
        %v5510 = vmax.bf16 %v5450, %v5453
        %v5511 = vmax.bf16 %v5451, %v5454
        %v5512 = vmax.bf16 %v5452, %v5455
        %v5513 = vmax.bf16 %v5453, %v5456
        %v5514 = vmax.bf16 %v5454, %v5457
        %v5515 = vmax.bf16 %v5455, %v5458
        %v5516 = vmax.bf16 %v5456, %v5459
        %v5517 = vmax.bf16 %v5457, %v5460
        %v5518 = vmax.bf16 %v5458, %v5461
        %v5519 = vmax.bf16 %v5459, %v5462
        %v5520 = vmax.bf16 %v5460, %v5463
        %v5521 = vmax.bf16 %v5461, %v5464
        %v5522 = vmax.bf16 %v5462, %v5465
        %v5523 = vmax.bf16 %v5463, %v5466
        %v5524 = vmax.bf16 %v5464, %v5467
        %v5525 = vmax.bf16 %v5465, %v5468
        %v5526 = vmax.bf16 %v5466, %v5469
        %v5527 = vmax.bf16 %v5467, %v5470
        %v5528 = vmax.bf16 %v5468, %v5471
        %v5529 = vmax.bf16 %v5469, %v5472
        %v5530 = vmax.bf16 %v5470, %v5473
        %v5531 = vmax.bf16 %v5471, %v5474
        %v5532 = vmax.bf16 %v5472, %v5475
        %v5533 = vmax.bf16 %v5473, %v5476
        %v5534 = vmax.bf16 %v5474, %v5477
        %v5535 = vmax.bf16 %v5475, %v5478
        %v5536 = vmax.bf16 %v5476, %v5479
        %v5537 = vmax.bf16 %v5477, %v5480
        %v5538 = vmax.bf16 %v5478, %v5481
        %v5539 = vmax.bf16 %v5479, %v5482
        %v5540 = vmax.bf16 %v5480, %v5483
        %v5541 = vmax.bf16 %v5481, %v5484
        %v5542 = vmax.bf16 %v5482, %v5485
        %v5543 = vmax.bf16 %v5483, %v5486
        %v5544 = vmax.bf16 %v5484, %v5487
        %v5545 = vmax.bf16 %v5485, %v5488
        %v5546 = vmax.bf16 %v5486, %v5489
        %v5547 = vmax.bf16 %v5487, %v5490
        %v5548 = vmax.bf16 %v5488, %v5491
        %v5549 = vmax.bf16 %v5489, %v5492
        %v5550 = vmax.bf16 %v5490, %v5493
        %v5551 = vmax.bf16 %v5491, %v5494
        %v5552 = vmax.bf16 %v5492, %v5495
        %v5553 = vmax.bf16 %v5493, %v5496
        %v5554 = vmax.bf16 %v5494, %v5497
        %v5555 = vmax.bf16 %v5495, %v5498
        %v5556 = vmax.bf16 %v5496, %v5499
        %v5557 = vmax.bf16 %v5497, %v5500
        %v5558 = vmax.bf16 %v5498, %v5501
        %v5559 = vmax.bf16 %v5499, %v5502
        %v5560 = vmax.bf16 %v5500, %v5503
        %v5561 = vmax.bf16 %v5501, %v5504
        %v5562 = vmax.bf16 %v5502, %v5505
        %v5563 = vmax.bf16 %v5503, %v5506
        %v5564 = vmax.bf16 %v5510, %v5456
        %v5565 = vmax.bf16 %v5511, %v5457
        %v5566 = vmax.bf16 %v5512, %v5458
        %v5567 = vmax.bf16 %v5513, %v5459
        %v5568 = vmax.bf16 %v5514, %v5460
        %v5569 = vmax.bf16 %v5515, %v5461
        %v5570 = vmax.bf16 %v5516, %v5462
        %v5571 = vmax.bf16 %v5517, %v5463
        %v5572 = vmax.bf16 %v5518, %v5464
        %v5573 = vmax.bf16 %v5519, %v5465
        %v5574 = vmax.bf16 %v5520, %v5466
        %v5575 = vmax.bf16 %v5521, %v5467
        %v5576 = vmax.bf16 %v5522, %v5468
        %v5577 = vmax.bf16 %v5523, %v5469
        %v5578 = vmax.bf16 %v5524, %v5470
        %v5579 = vmax.bf16 %v5525, %v5471
        %v5580 = vmax.bf16 %v5526, %v5472
        %v5581 = vmax.bf16 %v5527, %v5473
        %v5582 = vmax.bf16 %v5528, %v5474
        %v5583 = vmax.bf16 %v5529, %v5475
        %v5584 = vmax.bf16 %v5530, %v5476
        %v5585 = vmax.bf16 %v5531, %v5477
        %v5586 = vmax.bf16 %v5532, %v5478
        %v5587 = vmax.bf16 %v5533, %v5479
        %v5588 = vmax.bf16 %v5534, %v5480
        %v5589 = vmax.bf16 %v5535, %v5481
        %v5590 = vmax.bf16 %v5536, %v5482
        %v5591 = vmax.bf16 %v5537, %v5483
        %v5592 = vmax.bf16 %v5538, %v5484
        %v5593 = vmax.bf16 %v5539, %v5485
        %v5594 = vmax.bf16 %v5540, %v5486
        %v5595 = vmax.bf16 %v5541, %v5487
        %v5596 = vmax.bf16 %v5542, %v5488
        %v5597 = vmax.bf16 %v5543, %v5489
        %v5598 = vmax.bf16 %v5544, %v5490
        %v5599 = vmax.bf16 %v5545, %v5491
        %v5600 = vmax.bf16 %v5546, %v5492
        %v5601 = vmax.bf16 %v5547, %v5493
        %v5602 = vmax.bf16 %v5548, %v5494
        %v5603 = vmax.bf16 %v5549, %v5495
        %v5604 = vmax.bf16 %v5550, %v5496
        %v5605 = vmax.bf16 %v5551, %v5497
        %v5606 = vmax.bf16 %v5552, %v5498
        %v5607 = vmax.bf16 %v5553, %v5499
        %v5608 = vmax.bf16 %v5554, %v5500
        %v5609 = vmax.bf16 %v5555, %v5501
        %v5610 = vmax.bf16 %v5556, %v5502
        %v5611 = vmax.bf16 %v5557, %v5503
        %v5612 = vmax.bf16 %v5558, %v5504
        %v5613 = vmax.bf16 %v5559, %v5505
        %v5614 = vmax.bf16 %v5560, %v5506
        %v5615 = vmax.bf16 %v5561, %v5507
        %v5616 = vmax.bf16 %v5562, %v5508
        %v5617 = vmax.bf16 %v5563, %v5509
        %v5618 = vmax.bf16 %v5564, %v5570
        %v5619 = vmax.bf16 %v5565, %v5571
        %v5620 = vmax.bf16 %v5566, %v5572
        %v5621 = vmax.bf16 %v5567, %v5573
        %v5622 = vmax.bf16 %v5568, %v5574
        %v5623 = vmax.bf16 %v5569, %v5575
        %v5624 = vmax.bf16 %v5570, %v5576
        %v5625 = vmax.bf16 %v5571, %v5577
        %v5626 = vmax.bf16 %v5572, %v5578
        %v5627 = vmax.bf16 %v5573, %v5579
        %v5628 = vmax.bf16 %v5574, %v5580
        %v5629 = vmax.bf16 %v5575, %v5581
        %v5630 = vmax.bf16 %v5576, %v5582
        %v5631 = vmax.bf16 %v5577, %v5583
        %v5632 = vmax.bf16 %v5578, %v5584
        %v5633 = vmax.bf16 %v5579, %v5585
        %v5634 = vmax.bf16 %v5580, %v5586
        %v5635 = vmax.bf16 %v5581, %v5587
        %v5636 = vmax.bf16 %v5582, %v5588
        %v5637 = vmax.bf16 %v5583, %v5589
        %v5638 = vmax.bf16 %v5584, %v5590
        %v5639 = vmax.bf16 %v5585, %v5591
        %v5640 = vmax.bf16 %v5586, %v5592
        %v5641 = vmax.bf16 %v5587, %v5593
        %v5642 = vmax.bf16 %v5588, %v5594
        %v5643 = vmax.bf16 %v5589, %v5595
        %v5644 = vmax.bf16 %v5590, %v5596
        %v5645 = vmax.bf16 %v5591, %v5597
        %v5646 = vmax.bf16 %v5592, %v5598
        %v5647 = vmax.bf16 %v5593, %v5599
        %v5648 = vmax.bf16 %v5594, %v5600
        %v5649 = vmax.bf16 %v5595, %v5601
        %v5650 = vmax.bf16 %v5596, %v5602
        %v5651 = vmax.bf16 %v5597, %v5603
        %v5652 = vmax.bf16 %v5598, %v5604
        %v5653 = vmax.bf16 %v5599, %v5605
        %v5654 = vmax.bf16 %v5600, %v5606
        %v5655 = vmax.bf16 %v5601, %v5607
        %v5656 = vmax.bf16 %v5602, %v5608
        %v5657 = vmax.bf16 %v5603, %v5609
        %v5658 = vmax.bf16 %v5604, %v5610
        %v5659 = vmax.bf16 %v5605, %v5611
        %v5660 = vmax.bf16 %v5606, %v5612
        %v5661 = vmax.bf16 %v5607, %v5613
        %v5662 = vmax.bf16 %v5608, %v5614
        %v5663 = vmax.bf16 %v5609, %v5615
        %v5664 = vmax.bf16 %v5610, %v5616
        %v5665 = vmax.bf16 %v5611, %v5617
        %v5714 = vrot.slane %v5618, 7
        %v5715 = vrot.slane %v5714, 4
        %v5716 = vrot.slane %v5619, 7
        %v5717 = vsel %vm3341, %v5715, %v5716
        %v5718 = vrot.slane %v5716, 4
        %v5719 = vrot.slane %v5620, 7
        %v5720 = vsel %vm3341, %v5718, %v5719
        %v5721 = vrot.slane %v5621, 7
        %v5722 = vrot.slane %v5721, 4
        %v5723 = vrot.slane %v5622, 7
        %v5724 = vsel %vm3341, %v5722, %v5723
        %v5725 = vrot.slane %v5723, 4
        %v5726 = vrot.slane %v5623, 7
        %v5727 = vsel %vm3341, %v5725, %v5726
        %v5728 = vrot.slane %v5624, 7
        %v5729 = vrot.slane %v5728, 4
        %v5730 = vrot.slane %v5625, 7
        %v5731 = vsel %vm3341, %v5729, %v5730
        %v5732 = vrot.slane %v5730, 4
        %v5733 = vrot.slane %v5626, 7
        %v5734 = vsel %vm3341, %v5732, %v5733
        %v5735 = vrot.slane %v5627, 7
        %v5736 = vrot.slane %v5735, 4
        %v5737 = vrot.slane %v5628, 7
        %v5738 = vsel %vm3341, %v5736, %v5737
        %v5739 = vrot.slane %v5737, 4
        %v5740 = vrot.slane %v5629, 7
        %v5741 = vsel %vm3341, %v5739, %v5740
        %v5742 = vrot.slane %v5630, 7
        %v5743 = vrot.slane %v5742, 4
        %v5744 = vrot.slane %v5631, 7
        %v5745 = vsel %vm3341, %v5743, %v5744
        %v5746 = vrot.slane %v5744, 4
        %v5747 = vrot.slane %v5632, 7
        %v5748 = vsel %vm3341, %v5746, %v5747
        %v5749 = vrot.slane %v5633, 7
        %v5750 = vrot.slane %v5749, 4
        %v5751 = vrot.slane %v5634, 7
        %v5752 = vsel %vm3341, %v5750, %v5751
        %v5753 = vrot.slane %v5751, 4
        %v5754 = vrot.slane %v5635, 7
        %v5755 = vsel %vm3341, %v5753, %v5754
        %v5756 = vrot.slane %v5636, 7
        %v5757 = vrot.slane %v5756, 4
        %v5758 = vrot.slane %v5637, 7
        %v5759 = vsel %vm3341, %v5757, %v5758
        %v5760 = vrot.slane %v5758, 4
        %v5761 = vrot.slane %v5638, 7
        %v5762 = vsel %vm3341, %v5760, %v5761
        %v5763 = vrot.slane %v5639, 7
        %v5764 = vrot.slane %v5763, 4
        %v5765 = vrot.slane %v5640, 7
        %v5766 = vsel %vm3341, %v5764, %v5765
        %v5767 = vrot.slane %v5765, 4
        %v5768 = vrot.slane %v5641, 7
        %v5769 = vsel %vm3341, %v5767, %v5768
        %v5770 = vrot.slane %v5642, 7
        %v5771 = vrot.slane %v5770, 4
        %v5772 = vrot.slane %v5643, 7
        %v5773 = vsel %vm3341, %v5771, %v5772
        %v5774 = vrot.slane %v5772, 4
        %v5775 = vrot.slane %v5644, 7
        %v5776 = vsel %vm3341, %v5774, %v5775
        %v5777 = vrot.slane %v5645, 7
        %v5778 = vrot.slane %v5777, 4
        %v5779 = vrot.slane %v5646, 7
        %v5780 = vsel %vm3341, %v5778, %v5779
        %v5781 = vrot.slane %v5779, 4
        %v5782 = vrot.slane %v5647, 7
        %v5783 = vsel %vm3341, %v5781, %v5782
        %v5784 = vrot.slane %v5648, 7
        %v5785 = vrot.slane %v5784, 4
        %v5786 = vrot.slane %v5649, 7
        %v5787 = vsel %vm3341, %v5785, %v5786
        %v5788 = vrot.slane %v5786, 4
        %v5789 = vrot.slane %v5650, 7
        %v5790 = vsel %vm3341, %v5788, %v5789
        %v5791 = vrot.slane %v5651, 7
        %v5792 = vrot.slane %v5791, 4
        %v5793 = vrot.slane %v5652, 7
        %v5794 = vsel %vm3341, %v5792, %v5793
        %v5795 = vrot.slane %v5793, 4
        %v5796 = vrot.slane %v5653, 7
        %v5797 = vsel %vm3341, %v5795, %v5796
        %v5798 = vrot.slane %v5654, 7
        %v5799 = vrot.slane %v5798, 4
        %v5800 = vrot.slane %v5655, 7
        %v5801 = vsel %vm3341, %v5799, %v5800
        %v5802 = vrot.slane %v5800, 4
        %v5803 = vrot.slane %v5656, 7
        %v5804 = vsel %vm3341, %v5802, %v5803
        %v5805 = vrot.slane %v5657, 7
        %v5806 = vrot.slane %v5805, 4
        %v5807 = vrot.slane %v5658, 7
        %v5808 = vsel %vm3341, %v5806, %v5807
        %v5809 = vrot.slane %v5807, 4
        %v5810 = vrot.slane %v5659, 7
        %v5811 = vsel %vm3341, %v5809, %v5810
        %v5812 = vrot.slane %v5660, 7
        %v5813 = vrot.slane %v5812, 4
        %v5814 = vrot.slane %v5661, 7
        %v5815 = vsel %vm3341, %v5813, %v5814
        %v5816 = vrot.slane %v5814, 4
        %v5817 = vrot.slane %v5662, 7
        %v5818 = vsel %vm3341, %v5816, %v5817
        %v5819 = vrot.slane %v5663, 7
        %v5820 = vrot.slane %v5819, 4
        %v5821 = vrot.slane %v5664, 7
        %v5822 = vsel %vm3341, %v5820, %v5821
        %v5823 = vrot.slane %v5821, 4
        %v5824 = vrot.slane %v5665, 7
        %v5825 = vsel %vm3341, %v5823, %v5824
        %5858 = vst [vmem:[#allocation3 + $0x8] sm:$0xf] %v5717
        %5859 = vst [vmem:[#allocation3 + $0x18] sm:$0xf] %v5720
        %5860 = vst [vmem:[#allocation3 + $0x28] sm:$0xf] %v5724
        %5861 = vst [vmem:[#allocation3 + $0x38] sm:$0xf] %v5727
        %5862 = vst [vmem:[#allocation3 + $0x48] sm:$0xf] %v5731
        %5863 = vst [vmem:[#allocation3 + $0x58] sm:$0xf] %v5734
        %5864 = vst [vmem:[#allocation3 + $0x68] sm:$0xf] %v5738
        %5865 = vst [vmem:[#allocation3 + $0x78] sm:$0xf] %v5741
        %5866 = vst [vmem:[#allocation3 + $0x88] sm:$0xf] %v5745
        %5867 = vst [vmem:[#allocation3 + $0x98] sm:$0xf] %v5748
        %5868 = vst [vmem:[#allocation3 + $0xa8] sm:$0xf] %v5752
        %5869 = vst [vmem:[#allocation3 + $0xb8] sm:$0xf] %v5755
        %5870 = vst [vmem:[#allocation3 + $0xc8] sm:$0xf] %v5759
        %5871 = vst [vmem:[#allocation3 + $0xd8] sm:$0xf] %v5762
        %5872 = vst [vmem:[#allocation3 + $0xe8] sm:$0xf] %v5766
        %5873 = vst [vmem:[#allocation3 + $0xf8] sm:$0xf] %v5769
        %5874 = vst [vmem:[#allocation3 + $0x108] sm:$0xf] %v5773
        %5875 = vst [vmem:[#allocation3 + $0x118] sm:$0xf] %v5776
        %5876 = vst [vmem:[#allocation3 + $0x128] sm:$0xf] %v5780
        %5877 = vst [vmem:[#allocation3 + $0x138] sm:$0xf] %v5783
        %5878 = vst [vmem:[#allocation3 + $0x148] sm:$0xf] %v5787
        %5879 = vst [vmem:[#allocation3 + $0x158] sm:$0xf] %v5790
        %5880 = vst [vmem:[#allocation3 + $0x168] sm:$0xf] %v5794
        %5881 = vst [vmem:[#allocation3 + $0x178] sm:$0xf] %v5797
        %5882 = vst [vmem:[#allocation3 + $0x188] sm:$0xf] %v5801
        %5883 = vst [vmem:[#allocation3 + $0x198] sm:$0xf] %v5804
        %5884 = vst [vmem:[#allocation3 + $0x1a8] sm:$0xf] %v5808
        %5885 = vst [vmem:[#allocation3 + $0x1b8] sm:$0xf] %v5811
        %5886 = vst [vmem:[#allocation3 + $0x1c8] sm:$0xf] %v5815
        %5887 = vst [vmem:[#allocation3 + $0x1d8] sm:$0xf] %v5818
        %5888 = vst [vmem:[#allocation3 + $0x1e8] sm:$0xf] %v5822
        %5889 = vst [vmem:[#allocation3 + $0x1f8] sm:$0xf] %v5825
        %5890 = vst [vmem:[%s1130 + $0x4] sm:$0xf] %v5717
        %5891 = vst [vmem:[%s1130 + $0x8] sm:$0xf] %v5720
        %5892 = vst [vmem:[%s1130 + $0x14] sm:$0xf] %v5724
        %5893 = vst [vmem:[%s1130 + $0x18] sm:$0xf] %v5727
        %5894 = vst [vmem:[%s1130 + $0x24] sm:$0xf] %v5731
        %5895 = vst [vmem:[%s1130 + $0x28] sm:$0xf] %v5734
        %5896 = vst [vmem:[%s1130 + $0x34] sm:$0xf] %v5738
        %5897 = vst [vmem:[%s1130 + $0x38] sm:$0xf] %v5741
        %5898 = vst [vmem:[%s1130 + $0x44] sm:$0xf] %v5745
        %5899 = vst [vmem:[%s1130 + $0x48] sm:$0xf] %v5748
        %5900 = vst [vmem:[%s1130 + $0x54] sm:$0xf] %v5752
        %5901 = vst [vmem:[%s1130 + $0x58] sm:$0xf] %v5755
        %5902 = vst [vmem:[%s1130 + $0x64] sm:$0xf] %v5759
        %5903 = vst [vmem:[%s1130 + $0x68] sm:$0xf] %v5762
        %5904 = vst [vmem:[%s1130 + $0x74] sm:$0xf] %v5766
        %5905 = vst [vmem:[%s1130 + $0x78] sm:$0xf] %v5769
        %5906 = vst [vmem:[%s1130 + $0x84] sm:$0xf] %v5773
        %5907 = vst [vmem:[%s1130 + $0x88] sm:$0xf] %v5776
        %5908 = vst [vmem:[%s1130 + $0x94] sm:$0xf] %v5780
        %5909 = vst [vmem:[%s1130 + $0x98] sm:$0xf] %v5783
        %5910 = vst [vmem:[%s1130 + $0xa4] sm:$0xf] %v5787
        %5911 = vst [vmem:[%s1130 + $0xa8] sm:$0xf] %v5790
        %5912 = vst [vmem:[%s1130 + $0xb4] sm:$0xf] %v5794
        %5913 = vst [vmem:[%s1130 + $0xb8] sm:$0xf] %v5797
        %5914 = vst [vmem:[%s1130 + $0xc4] sm:$0xf] %v5801
        %5915 = vst [vmem:[%s1130 + $0xc8] sm:$0xf] %v5804
        %5916 = vst [vmem:[%s1130 + $0xd4] sm:$0xf] %v5808
        %5917 = vst [vmem:[%s1130 + $0xd8] sm:$0xf] %v5811
        %5918 = vst [vmem:[%s1130 + $0xe4] sm:$0xf] %v5815
        %5919 = vst [vmem:[%s1130 + $0xe8] sm:$0xf] %v5818
        %5920 = vst [vmem:[%s1130 + $0xf4] sm:$0xf] %v5822
        %5921 = vst [vmem:[%s1130 + $0xf8] sm:$0xf] %v5825
        %v5922 = vld [vmem:[#allocation2] sm:$0x8]
        %v5923 = vld [vmem:[#allocation2 + $0x4] sm:$0xf]
        %v5924 = vld [vmem:[#allocation2 + $0x8] sm:$0x7]
        %v5925 = vld [vmem:[#allocation2 + $0x10] sm:$0x8]
        %v5926 = vld [vmem:[#allocation2 + $0x14] sm:$0xf]
        %v5927 = vld [vmem:[#allocation2 + $0x18] sm:$0x7]
        %v5928 = vld [vmem:[#allocation2 + $0x20] sm:$0x8]
        %v5929 = vld [vmem:[#allocation2 + $0x24] sm:$0xf]
        %v5930 = vld [vmem:[#allocation2 + $0x28] sm:$0x7]
        %v5931 = vld [vmem:[#allocation2 + $0x30] sm:$0x8]
        %v5932 = vld [vmem:[#allocation2 + $0x34] sm:$0xf]
        %v5933 = vld [vmem:[#allocation2 + $0x38] sm:$0x7]
        %v5934 = vld [vmem:[#allocation2 + $0x40] sm:$0x8]
        %v5935 = vld [vmem:[#allocation2 + $0x44] sm:$0xf]
        %v5936 = vld [vmem:[#allocation2 + $0x48] sm:$0x7]
        %v5937 = vld [vmem:[#allocation2 + $0x50] sm:$0x8]
        %v5938 = vld [vmem:[#allocation2 + $0x54] sm:$0xf]
        %v5939 = vld [vmem:[#allocation2 + $0x58] sm:$0x7]
        %v5940 = vld [vmem:[#allocation2 + $0x60] sm:$0x8]
        %v5941 = vld [vmem:[#allocation2 + $0x64] sm:$0xf]
        %v5942 = vld [vmem:[#allocation2 + $0x68] sm:$0x7]
        %v5943 = vld [vmem:[#allocation2 + $0x70] sm:$0x8]
        %v5944 = vld [vmem:[#allocation2 + $0x74] sm:$0xf]
        %v5945 = vld [vmem:[#allocation2 + $0x78] sm:$0x7]
        %v5946 = vld [vmem:[#allocation2 + $0x80] sm:$0x8]
        %v5947 = vld [vmem:[#allocation2 + $0x84] sm:$0xf]
        %v5948 = vld [vmem:[#allocation2 + $0x88] sm:$0x7]
        %v5949 = vld [vmem:[#allocation2 + $0x90] sm:$0x8]
        %v5950 = vld [vmem:[#allocation2 + $0x94] sm:$0xf]
        %v5951 = vld [vmem:[#allocation2 + $0x98] sm:$0x7]
        %v5952 = vld [vmem:[#allocation2 + $0xa0] sm:$0x8]
        %v5953 = vld [vmem:[#allocation2 + $0xa4] sm:$0xf]
        %v5954 = vld [vmem:[#allocation2 + $0xa8] sm:$0x7]
        %v5955 = vld [vmem:[#allocation2 + $0xb0] sm:$0x8]
        %v5956 = vld [vmem:[#allocation2 + $0xb4] sm:$0xf]
        %v5957 = vld [vmem:[#allocation2 + $0xb8] sm:$0x7]
        %v5958 = vld [vmem:[#allocation2 + $0xc0] sm:$0x8]
        %v5959 = vld [vmem:[#allocation2 + $0xc4] sm:$0xf]
        %v5960 = vld [vmem:[#allocation2 + $0xc8] sm:$0x7]
        %v5961 = vld [vmem:[#allocation2 + $0xd0] sm:$0x8]
        %v5962 = vld [vmem:[#allocation2 + $0xd4] sm:$0xf]
        %v5963 = vld [vmem:[#allocation2 + $0xd8] sm:$0x7]
        %v5964 = vld [vmem:[#allocation2 + $0xe0] sm:$0x8]
        %v5965 = vld [vmem:[#allocation2 + $0xe4] sm:$0xf]
        %v5966 = vld [vmem:[#allocation2 + $0xe8] sm:$0x7]
        %v5967 = vld [vmem:[#allocation2 + $0xf0] sm:$0x8]
        %v5968 = vld [vmem:[#allocation2 + $0xf4] sm:$0xf]
        %v5969 = vld [vmem:[#allocation2 + $0xf8] sm:$0x7]
        %v5970 = vld [vmem:[#allocation2 + $0x100] sm:$0x8]
        %v5971 = vld [vmem:[#allocation2 + $0x104] sm:$0xf]
        %v5972 = vld [vmem:[#allocation2 + $0x108] sm:$0x7]
        %v5973 = vld [vmem:[#allocation2 + $0x110] sm:$0x8]
        %v5974 = vld [vmem:[#allocation2 + $0x114] sm:$0xf]
        %v5975 = vld [vmem:[#allocation2 + $0x118] sm:$0x7]
        %v5976 = vld [vmem:[#allocation2 + $0x120] sm:$0x8]
        %v5977 = vld [vmem:[#allocation2 + $0x124] sm:$0xf]
        %v5978 = vld [vmem:[#allocation2 + $0x128] sm:$0x7]
        %v5979 = vld [vmem:[#allocation2 + $0x130] sm:$0x8]
        %v5980 = vld [vmem:[#allocation2 + $0x134] sm:$0xf]
        %v5981 = vld [vmem:[#allocation2 + $0x138] sm:$0x7]
        %v5982 = vld [vmem:[#allocation2 + $0x8] sm:$0xf]
        %v5983 = vld [vmem:[#allocation2 + $0x18] sm:$0xf]
        %v5984 = vld [vmem:[#allocation2 + $0x28] sm:$0xf]
        %v5985 = vld [vmem:[#allocation2 + $0x38] sm:$0xf]
        %v5986 = vld [vmem:[#allocation2 + $0x48] sm:$0xf]
        %v5987 = vld [vmem:[#allocation2 + $0x58] sm:$0xf]
        %v5988 = vld [vmem:[#allocation2 + $0x68] sm:$0xf]
        %v5989 = vld [vmem:[#allocation2 + $0x78] sm:$0xf]
        %v5990 = vld [vmem:[#allocation2 + $0x88] sm:$0xf]
        %v5991 = vld [vmem:[#allocation2 + $0x98] sm:$0xf]
        %v5992 = vld [vmem:[#allocation2 + $0xa8] sm:$0xf]
        %v5993 = vld [vmem:[#allocation2 + $0xb8] sm:$0xf]
        %v5994 = vld [vmem:[#allocation2 + $0xc8] sm:$0xf]
        %v5995 = vld [vmem:[#allocation2 + $0xd8] sm:$0xf]
        %v5996 = vld [vmem:[#allocation2 + $0xe8] sm:$0xf]
        %v5997 = vld [vmem:[#allocation2 + $0xf8] sm:$0xf]
        %v5998 = vld [vmem:[#allocation2 + $0x108] sm:$0xf]
        %v5999 = vld [vmem:[#allocation2 + $0x118] sm:$0xf]
        %v6000 = vld [vmem:[#allocation2 + $0x128] sm:$0xf]
        %v6001 = vld [vmem:[#allocation2 + $0x138] sm:$0xf]
        %v6003 = vshrl.u32 %v5922, 16
        %v6005 = vrot.slane %v6003, 4
        %v6006 = vrot.slane %v6005, 4
        %v6008 = vshll.u32 %v5923, 16
        %v6010 = vrot.slane %v6008, 5
        %v6011 = vsel %vm1245, %v6006, %v6010
        %v6012 = vshrl.u32 %v5923, 16
        %v6014 = vrot.slane %v6012, 4
        %v6015 = vor.u32 %v6014, %v6010
        %v6016 = vrot.slane %v6015, 4
        %v6018 = vshll.u32 %v5982, 16
        %v6020 = vrot.slane %v6018, 5
        %v6021 = vsel %vm1245, %v6016, %v6020
        %v6022 = vshrl.u32 %v5982, 16
        %v6024 = vrot.slane %v6022, 4
        %v6025 = vor.u32 %v6024, %v6020
        %v6026 = vrot.slane %v6025, 4
        %v6028 = vshrl.u32 %v5925, 16
        %v6030 = vrot.slane %v6028, 4
        %v6031 = vrot.slane %v6030, 4
        %v6033 = vshll.u32 %v5926, 16
        %v6035 = vrot.slane %v6033, 5
        %v6036 = vsel %vm1245, %v6031, %v6035
        %v6037 = vshrl.u32 %v5926, 16
        %v6039 = vrot.slane %v6037, 4
        %v6040 = vor.u32 %v6039, %v6035
        %v6041 = vrot.slane %v6040, 4
        %v6043 = vshll.u32 %v5983, 16
        %v6045 = vrot.slane %v6043, 5
        %v6046 = vsel %vm1245, %v6041, %v6045
        %v6047 = vshrl.u32 %v5983, 16
        %v6049 = vrot.slane %v6047, 4
        %v6050 = vor.u32 %v6049, %v6045
        %v6051 = vrot.slane %v6050, 4
        %v6053 = vshrl.u32 %v5928, 16
        %v6055 = vrot.slane %v6053, 4
        %v6056 = vrot.slane %v6055, 4
        %v6058 = vshll.u32 %v5929, 16
        %v6060 = vrot.slane %v6058, 5
        %v6061 = vsel %vm1245, %v6056, %v6060
        %v6062 = vshrl.u32 %v5929, 16
        %v6064 = vrot.slane %v6062, 4
        %v6065 = vor.u32 %v6064, %v6060
        %v6066 = vrot.slane %v6065, 4
        %v6068 = vshll.u32 %v5984, 16
        %v6070 = vrot.slane %v6068, 5
        %v6071 = vsel %vm1245, %v6066, %v6070
        %v6072 = vshrl.u32 %v5984, 16
        %v6074 = vrot.slane %v6072, 4
        %v6075 = vor.u32 %v6074, %v6070
        %v6076 = vrot.slane %v6075, 4
        %v6078 = vshrl.u32 %v5931, 16
        %v6080 = vrot.slane %v6078, 4
        %v6081 = vrot.slane %v6080, 4
        %v6083 = vshll.u32 %v5932, 16
        %v6085 = vrot.slane %v6083, 5
        %v6086 = vsel %vm1245, %v6081, %v6085
        %v6087 = vshrl.u32 %v5932, 16
        %v6089 = vrot.slane %v6087, 4
        %v6090 = vor.u32 %v6089, %v6085
        %v6091 = vrot.slane %v6090, 4
        %v6093 = vshll.u32 %v5985, 16
        %v6095 = vrot.slane %v6093, 5
        %v6096 = vsel %vm1245, %v6091, %v6095
        %v6097 = vshrl.u32 %v5985, 16
        %v6099 = vrot.slane %v6097, 4
        %v6100 = vor.u32 %v6099, %v6095
        %v6101 = vrot.slane %v6100, 4
        %v6103 = vshrl.u32 %v5934, 16
        %v6105 = vrot.slane %v6103, 4
        %v6106 = vrot.slane %v6105, 4
        %v6108 = vshll.u32 %v5935, 16
        %v6110 = vrot.slane %v6108, 5
        %v6111 = vsel %vm1245, %v6106, %v6110
        %v6112 = vshrl.u32 %v5935, 16
        %v6114 = vrot.slane %v6112, 4
        %v6115 = vor.u32 %v6114, %v6110
        %v6116 = vrot.slane %v6115, 4
        %v6118 = vshll.u32 %v5986, 16
        %v6120 = vrot.slane %v6118, 5
        %v6121 = vsel %vm1245, %v6116, %v6120
        %v6122 = vshrl.u32 %v5986, 16
        %v6124 = vrot.slane %v6122, 4
        %v6125 = vor.u32 %v6124, %v6120
        %v6126 = vrot.slane %v6125, 4
        %v6128 = vshrl.u32 %v5937, 16
        %v6130 = vrot.slane %v6128, 4
        %v6131 = vrot.slane %v6130, 4
        %v6133 = vshll.u32 %v5938, 16
        %v6135 = vrot.slane %v6133, 5
        %v6136 = vsel %vm1245, %v6131, %v6135
        %v6137 = vshrl.u32 %v5938, 16
        %v6139 = vrot.slane %v6137, 4
        %v6140 = vor.u32 %v6139, %v6135
        %v6141 = vrot.slane %v6140, 4
        %v6143 = vshll.u32 %v5987, 16
        %v6145 = vrot.slane %v6143, 5
        %v6146 = vsel %vm1245, %v6141, %v6145
        %v6147 = vshrl.u32 %v5987, 16
        %v6149 = vrot.slane %v6147, 4
        %v6150 = vor.u32 %v6149, %v6145
        %v6151 = vrot.slane %v6150, 4
        %v6153 = vshrl.u32 %v5940, 16
        %v6155 = vrot.slane %v6153, 4
        %v6156 = vrot.slane %v6155, 4
        %v6158 = vshll.u32 %v5941, 16
        %v6160 = vrot.slane %v6158, 5
        %v6161 = vsel %vm1245, %v6156, %v6160
        %v6162 = vshrl.u32 %v5941, 16
        %v6164 = vrot.slane %v6162, 4
        %v6165 = vor.u32 %v6164, %v6160
        %v6166 = vrot.slane %v6165, 4
        %v6168 = vshll.u32 %v5988, 16
        %v6170 = vrot.slane %v6168, 5
        %v6171 = vsel %vm1245, %v6166, %v6170
        %v6172 = vshrl.u32 %v5988, 16
        %v6174 = vrot.slane %v6172, 4
        %v6175 = vor.u32 %v6174, %v6170
        %v6176 = vrot.slane %v6175, 4
        %v6178 = vshrl.u32 %v5943, 16
        %v6180 = vrot.slane %v6178, 4
        %v6181 = vrot.slane %v6180, 4
        %v6183 = vshll.u32 %v5944, 16
        %v6185 = vrot.slane %v6183, 5
        %v6186 = vsel %vm1245, %v6181, %v6185
        %v6187 = vshrl.u32 %v5944, 16
        %v6189 = vrot.slane %v6187, 4
        %v6190 = vor.u32 %v6189, %v6185
        %v6191 = vrot.slane %v6190, 4
        %v6193 = vshll.u32 %v5989, 16
        %v6195 = vrot.slane %v6193, 5
        %v6196 = vsel %vm1245, %v6191, %v6195
        %v6197 = vshrl.u32 %v5989, 16
        %v6199 = vrot.slane %v6197, 4
        %v6200 = vor.u32 %v6199, %v6195
        %v6201 = vrot.slane %v6200, 4
        %v6203 = vshrl.u32 %v5946, 16
        %v6205 = vrot.slane %v6203, 4
        %v6206 = vrot.slane %v6205, 4
        %v6208 = vshll.u32 %v5947, 16
        %v6210 = vrot.slane %v6208, 5
        %v6211 = vsel %vm1245, %v6206, %v6210
        %v6212 = vshrl.u32 %v5947, 16
        %v6214 = vrot.slane %v6212, 4
        %v6215 = vor.u32 %v6214, %v6210
        %v6216 = vrot.slane %v6215, 4
        %v6218 = vshll.u32 %v5990, 16
        %v6220 = vrot.slane %v6218, 5
        %v6221 = vsel %vm1245, %v6216, %v6220
        %v6222 = vshrl.u32 %v5990, 16
        %v6224 = vrot.slane %v6222, 4
        %v6225 = vor.u32 %v6224, %v6220
        %v6226 = vrot.slane %v6225, 4
        %v6228 = vshrl.u32 %v5949, 16
        %v6230 = vrot.slane %v6228, 4
        %v6231 = vrot.slane %v6230, 4
        %v6233 = vshll.u32 %v5950, 16
        %v6235 = vrot.slane %v6233, 5
        %v6236 = vsel %vm1245, %v6231, %v6235
        %v6237 = vshrl.u32 %v5950, 16
        %v6239 = vrot.slane %v6237, 4
        %v6240 = vor.u32 %v6239, %v6235
        %v6241 = vrot.slane %v6240, 4
        %v6243 = vshll.u32 %v5991, 16
        %v6245 = vrot.slane %v6243, 5
        %v6246 = vsel %vm1245, %v6241, %v6245
        %v6247 = vshrl.u32 %v5991, 16
        %v6249 = vrot.slane %v6247, 4
        %v6250 = vor.u32 %v6249, %v6245
        %v6251 = vrot.slane %v6250, 4
        %v6253 = vshrl.u32 %v5952, 16
        %v6255 = vrot.slane %v6253, 4
        %v6256 = vrot.slane %v6255, 4
        %v6258 = vshll.u32 %v5953, 16
        %v6260 = vrot.slane %v6258, 5
        %v6261 = vsel %vm1245, %v6256, %v6260
        %v6262 = vshrl.u32 %v5953, 16
        %v6264 = vrot.slane %v6262, 4
        %v6265 = vor.u32 %v6264, %v6260
        %v6266 = vrot.slane %v6265, 4
        %v6268 = vshll.u32 %v5992, 16
        %v6270 = vrot.slane %v6268, 5
        %v6271 = vsel %vm1245, %v6266, %v6270
        %v6272 = vshrl.u32 %v5992, 16
        %v6274 = vrot.slane %v6272, 4
        %v6275 = vor.u32 %v6274, %v6270
        %v6276 = vrot.slane %v6275, 4
        %v6278 = vshrl.u32 %v5955, 16
        %v6280 = vrot.slane %v6278, 4
        %v6281 = vrot.slane %v6280, 4
        %v6283 = vshll.u32 %v5956, 16
        %v6285 = vrot.slane %v6283, 5
        %v6286 = vsel %vm1245, %v6281, %v6285
        %v6287 = vshrl.u32 %v5956, 16
        %v6289 = vrot.slane %v6287, 4
        %v6290 = vor.u32 %v6289, %v6285
        %v6291 = vrot.slane %v6290, 4
        %v6293 = vshll.u32 %v5993, 16
        %v6295 = vrot.slane %v6293, 5
        %v6296 = vsel %vm1245, %v6291, %v6295
        %v6297 = vshrl.u32 %v5993, 16
        %v6299 = vrot.slane %v6297, 4
        %v6300 = vor.u32 %v6299, %v6295
        %v6301 = vrot.slane %v6300, 4
        %v6303 = vshrl.u32 %v5958, 16
        %v6305 = vrot.slane %v6303, 4
        %v6306 = vrot.slane %v6305, 4
        %v6308 = vshll.u32 %v5959, 16
        %v6310 = vrot.slane %v6308, 5
        %v6311 = vsel %vm1245, %v6306, %v6310
        %v6312 = vshrl.u32 %v5959, 16
        %v6314 = vrot.slane %v6312, 4
        %v6315 = vor.u32 %v6314, %v6310
        %v6316 = vrot.slane %v6315, 4
        %v6318 = vshll.u32 %v5994, 16
        %v6320 = vrot.slane %v6318, 5
        %v6321 = vsel %vm1245, %v6316, %v6320
        %v6322 = vshrl.u32 %v5994, 16
        %v6324 = vrot.slane %v6322, 4
        %v6325 = vor.u32 %v6324, %v6320
        %v6326 = vrot.slane %v6325, 4
        %v6328 = vshrl.u32 %v5961, 16
        %v6330 = vrot.slane %v6328, 4
        %v6331 = vrot.slane %v6330, 4
        %v6333 = vshll.u32 %v5962, 16
        %v6335 = vrot.slane %v6333, 5
        %v6336 = vsel %vm1245, %v6331, %v6335
        %v6337 = vshrl.u32 %v5962, 16
        %v6339 = vrot.slane %v6337, 4
        %v6340 = vor.u32 %v6339, %v6335
        %v6341 = vrot.slane %v6340, 4
        %v6343 = vshll.u32 %v5995, 16
        %v6345 = vrot.slane %v6343, 5
        %v6346 = vsel %vm1245, %v6341, %v6345
        %v6347 = vshrl.u32 %v5995, 16
        %v6349 = vrot.slane %v6347, 4
        %v6350 = vor.u32 %v6349, %v6345
        %v6351 = vrot.slane %v6350, 4
        %v6353 = vshrl.u32 %v5964, 16
        %v6355 = vrot.slane %v6353, 4
        %v6356 = vrot.slane %v6355, 4
        %v6358 = vshll.u32 %v5965, 16
        %v6360 = vrot.slane %v6358, 5
        %v6361 = vsel %vm1245, %v6356, %v6360
        %v6362 = vshrl.u32 %v5965, 16
        %v6364 = vrot.slane %v6362, 4
        %v6365 = vor.u32 %v6364, %v6360
        %v6366 = vrot.slane %v6365, 4
        %v6368 = vshll.u32 %v5996, 16
        %v6370 = vrot.slane %v6368, 5
        %v6371 = vsel %vm1245, %v6366, %v6370
        %v6372 = vshrl.u32 %v5996, 16
        %v6374 = vrot.slane %v6372, 4
        %v6375 = vor.u32 %v6374, %v6370
        %v6376 = vrot.slane %v6375, 4
        %v6378 = vshrl.u32 %v5967, 16
        %v6380 = vrot.slane %v6378, 4
        %v6381 = vrot.slane %v6380, 4
        %v6383 = vshll.u32 %v5968, 16
        %v6385 = vrot.slane %v6383, 5
        %v6386 = vsel %vm1245, %v6381, %v6385
        %v6387 = vshrl.u32 %v5968, 16
        %v6389 = vrot.slane %v6387, 4
        %v6390 = vor.u32 %v6389, %v6385
        %v6391 = vrot.slane %v6390, 4
        %v6393 = vshll.u32 %v5997, 16
        %v6395 = vrot.slane %v6393, 5
        %v6396 = vsel %vm1245, %v6391, %v6395
        %v6397 = vshrl.u32 %v5997, 16
        %v6399 = vrot.slane %v6397, 4
        %v6400 = vor.u32 %v6399, %v6395
        %v6401 = vrot.slane %v6400, 4
        %v6403 = vshrl.u32 %v5970, 16
        %v6405 = vrot.slane %v6403, 4
        %v6406 = vrot.slane %v6405, 4
        %v6408 = vshll.u32 %v5971, 16
        %v6410 = vrot.slane %v6408, 5
        %v6411 = vsel %vm1245, %v6406, %v6410
        %v6412 = vshrl.u32 %v5971, 16
        %v6414 = vrot.slane %v6412, 4
        %v6415 = vor.u32 %v6414, %v6410
        %v6416 = vrot.slane %v6415, 4
        %v6418 = vshll.u32 %v5998, 16
        %v6420 = vrot.slane %v6418, 5
        %v6421 = vsel %vm1245, %v6416, %v6420
        %v6422 = vshrl.u32 %v5998, 16
        %v6424 = vrot.slane %v6422, 4
        %v6425 = vor.u32 %v6424, %v6420
        %v6426 = vrot.slane %v6425, 4
        %v6428 = vshrl.u32 %v5973, 16
        %v6430 = vrot.slane %v6428, 4
        %v6431 = vrot.slane %v6430, 4
        %v6433 = vshll.u32 %v5974, 16
        %v6435 = vrot.slane %v6433, 5
        %v6436 = vsel %vm1245, %v6431, %v6435
        %v6437 = vshrl.u32 %v5974, 16
        %v6439 = vrot.slane %v6437, 4
        %v6440 = vor.u32 %v6439, %v6435
        %v6441 = vrot.slane %v6440, 4
        %v6443 = vshll.u32 %v5999, 16
        %v6445 = vrot.slane %v6443, 5
        %v6446 = vsel %vm1245, %v6441, %v6445
        %v6447 = vshrl.u32 %v5999, 16
        %v6449 = vrot.slane %v6447, 4
        %v6450 = vor.u32 %v6449, %v6445
        %v6451 = vrot.slane %v6450, 4
        %v6453 = vshrl.u32 %v5976, 16
        %v6455 = vrot.slane %v6453, 4
        %v6456 = vrot.slane %v6455, 4
        %v6458 = vshll.u32 %v5977, 16
        %v6460 = vrot.slane %v6458, 5
        %v6461 = vsel %vm1245, %v6456, %v6460
        %v6462 = vshrl.u32 %v5977, 16
        %v6464 = vrot.slane %v6462, 4
        %v6465 = vor.u32 %v6464, %v6460
        %v6466 = vrot.slane %v6465, 4
        %v6468 = vshll.u32 %v6000, 16
        %v6470 = vrot.slane %v6468, 5
        %v6471 = vsel %vm1245, %v6466, %v6470
        %v6472 = vshrl.u32 %v6000, 16
        %v6474 = vrot.slane %v6472, 4
        %v6475 = vor.u32 %v6474, %v6470
        %v6476 = vrot.slane %v6475, 4
        %v6478 = vshrl.u32 %v5979, 16
        %v6480 = vrot.slane %v6478, 4
        %v6481 = vrot.slane %v6480, 4
        %v6483 = vshll.u32 %v5980, 16
        %v6485 = vrot.slane %v6483, 5
        %v6486 = vsel %vm1245, %v6481, %v6485
        %v6487 = vshrl.u32 %v5980, 16
        %v6489 = vrot.slane %v6487, 4
        %v6490 = vor.u32 %v6489, %v6485
        %v6491 = vrot.slane %v6490, 4
        %v6493 = vshll.u32 %v6001, 16
        %v6495 = vrot.slane %v6493, 5
        %v6496 = vsel %vm1245, %v6491, %v6495
        %v6497 = vshrl.u32 %v6001, 16
        %v6499 = vrot.slane %v6497, 4
        %v6500 = vor.u32 %v6499, %v6495
        %v6501 = vrot.slane %v6500, 4
        %v6562 = vmax.bf16 %v5922, %v6011
        %v6563 = vmax.bf16 %v5923, %v6021
        %v6564 = vmax.bf16 %v5924, %v6026
        %v6565 = vmax.bf16 %v5925, %v6036
        %v6566 = vmax.bf16 %v5926, %v6046
        %v6567 = vmax.bf16 %v5927, %v6051
        %v6568 = vmax.bf16 %v5928, %v6061
        %v6569 = vmax.bf16 %v5929, %v6071
        %v6570 = vmax.bf16 %v5930, %v6076
        %v6571 = vmax.bf16 %v5931, %v6086
        %v6572 = vmax.bf16 %v5932, %v6096
        %v6573 = vmax.bf16 %v5933, %v6101
        %v6574 = vmax.bf16 %v5934, %v6111
        %v6575 = vmax.bf16 %v5935, %v6121
        %v6576 = vmax.bf16 %v5936, %v6126
        %v6577 = vmax.bf16 %v5937, %v6136
        %v6578 = vmax.bf16 %v5938, %v6146
        %v6579 = vmax.bf16 %v5939, %v6151
        %v6580 = vmax.bf16 %v5940, %v6161
        %v6581 = vmax.bf16 %v5941, %v6171
        %v6582 = vmax.bf16 %v5942, %v6176
        %v6583 = vmax.bf16 %v5943, %v6186
        %v6584 = vmax.bf16 %v5944, %v6196
        %v6585 = vmax.bf16 %v5945, %v6201
        %v6586 = vmax.bf16 %v5946, %v6211
        %v6587 = vmax.bf16 %v5947, %v6221
        %v6588 = vmax.bf16 %v5948, %v6226
        %v6589 = vmax.bf16 %v5949, %v6236
        %v6590 = vmax.bf16 %v5950, %v6246
        %v6591 = vmax.bf16 %v5951, %v6251
        %v6592 = vmax.bf16 %v5952, %v6261
        %v6593 = vmax.bf16 %v5953, %v6271
        %v6594 = vmax.bf16 %v5954, %v6276
        %v6595 = vmax.bf16 %v5955, %v6286
        %v6596 = vmax.bf16 %v5956, %v6296
        %v6597 = vmax.bf16 %v5957, %v6301
        %v6598 = vmax.bf16 %v5958, %v6311
        %v6599 = vmax.bf16 %v5959, %v6321
        %v6600 = vmax.bf16 %v5960, %v6326
        %v6601 = vmax.bf16 %v5961, %v6336
        %v6602 = vmax.bf16 %v5962, %v6346
        %v6603 = vmax.bf16 %v5963, %v6351
        %v6604 = vmax.bf16 %v5964, %v6361
        %v6605 = vmax.bf16 %v5965, %v6371
        %v6606 = vmax.bf16 %v5966, %v6376
        %v6607 = vmax.bf16 %v5967, %v6386
        %v6608 = vmax.bf16 %v5968, %v6396
        %v6609 = vmax.bf16 %v5969, %v6401
        %v6610 = vmax.bf16 %v5970, %v6411
        %v6611 = vmax.bf16 %v5971, %v6421
        %v6612 = vmax.bf16 %v5972, %v6426
        %v6613 = vmax.bf16 %v5973, %v6436
        %v6614 = vmax.bf16 %v5974, %v6446
        %v6615 = vmax.bf16 %v5975, %v6451
        %v6616 = vmax.bf16 %v5976, %v6461
        %v6617 = vmax.bf16 %v5977, %v6471
        %v6618 = vmax.bf16 %v5978, %v6476
        %v6619 = vmax.bf16 %v5979, %v6486
        %v6620 = vmax.bf16 %v5980, %v6496
        %v6621 = vmax.bf16 %v5981, %v6501
        %v6662 = vrot.slane %v5923, 5
        %v6663 = vrot.slane %v6662, 4
        %v6664 = vrot.slane %v5982, 5
        %v6665 = vsel %vm1908, %v6663, %v6664
        %v6666 = vrot.slane %v6664, 4
        %v6667 = vrot.slane %v5926, 5
        %v6668 = vrot.slane %v6667, 4
        %v6669 = vrot.slane %v5983, 5
        %v6670 = vsel %vm1908, %v6668, %v6669
        %v6671 = vrot.slane %v6669, 4
        %v6672 = vrot.slane %v5929, 5
        %v6673 = vrot.slane %v6672, 4
        %v6674 = vrot.slane %v5984, 5
        %v6675 = vsel %vm1908, %v6673, %v6674
        %v6676 = vrot.slane %v6674, 4
        %v6677 = vrot.slane %v5932, 5
        %v6678 = vrot.slane %v6677, 4
        %v6679 = vrot.slane %v5985, 5
        %v6680 = vsel %vm1908, %v6678, %v6679
        %v6681 = vrot.slane %v6679, 4
        %v6682 = vrot.slane %v5935, 5
        %v6683 = vrot.slane %v6682, 4
        %v6684 = vrot.slane %v5986, 5
        %v6685 = vsel %vm1908, %v6683, %v6684
        %v6686 = vrot.slane %v6684, 4
        %v6687 = vrot.slane %v5938, 5
        %v6688 = vrot.slane %v6687, 4
        %v6689 = vrot.slane %v5987, 5
        %v6690 = vsel %vm1908, %v6688, %v6689
        %v6691 = vrot.slane %v6689, 4
        %v6692 = vrot.slane %v5941, 5
        %v6693 = vrot.slane %v6692, 4
        %v6694 = vrot.slane %v5988, 5
        %v6695 = vsel %vm1908, %v6693, %v6694
        %v6696 = vrot.slane %v6694, 4
        %v6697 = vrot.slane %v5944, 5
        %v6698 = vrot.slane %v6697, 4
        %v6699 = vrot.slane %v5989, 5
        %v6700 = vsel %vm1908, %v6698, %v6699
        %v6701 = vrot.slane %v6699, 4
        %v6702 = vrot.slane %v5947, 5
        %v6703 = vrot.slane %v6702, 4
        %v6704 = vrot.slane %v5990, 5
        %v6705 = vsel %vm1908, %v6703, %v6704
        %v6706 = vrot.slane %v6704, 4
        %v6707 = vrot.slane %v5950, 5
        %v6708 = vrot.slane %v6707, 4
        %v6709 = vrot.slane %v5991, 5
        %v6710 = vsel %vm1908, %v6708, %v6709
        %v6711 = vrot.slane %v6709, 4
        %v6712 = vrot.slane %v5953, 5
        %v6713 = vrot.slane %v6712, 4
        %v6714 = vrot.slane %v5992, 5
        %v6715 = vsel %vm1908, %v6713, %v6714
        %v6716 = vrot.slane %v6714, 4
        %v6717 = vrot.slane %v5956, 5
        %v6718 = vrot.slane %v6717, 4
        %v6719 = vrot.slane %v5993, 5
        %v6720 = vsel %vm1908, %v6718, %v6719
        %v6721 = vrot.slane %v6719, 4
        %v6722 = vrot.slane %v5959, 5
        %v6723 = vrot.slane %v6722, 4
        %v6724 = vrot.slane %v5994, 5
        %v6725 = vsel %vm1908, %v6723, %v6724
        %v6726 = vrot.slane %v6724, 4
        %v6727 = vrot.slane %v5962, 5
        %v6728 = vrot.slane %v6727, 4
        %v6729 = vrot.slane %v5995, 5
        %v6730 = vsel %vm1908, %v6728, %v6729
        %v6731 = vrot.slane %v6729, 4
        %v6732 = vrot.slane %v5965, 5
        %v6733 = vrot.slane %v6732, 4
        %v6734 = vrot.slane %v5996, 5
        %v6735 = vsel %vm1908, %v6733, %v6734
        %v6736 = vrot.slane %v6734, 4
        %v6737 = vrot.slane %v5968, 5
        %v6738 = vrot.slane %v6737, 4
        %v6739 = vrot.slane %v5997, 5
        %v6740 = vsel %vm1908, %v6738, %v6739
        %v6741 = vrot.slane %v6739, 4
        %v6742 = vrot.slane %v5971, 5
        %v6743 = vrot.slane %v6742, 4
        %v6744 = vrot.slane %v5998, 5
        %v6745 = vsel %vm1908, %v6743, %v6744
        %v6746 = vrot.slane %v6744, 4
        %v6747 = vrot.slane %v5974, 5
        %v6748 = vrot.slane %v6747, 4
        %v6749 = vrot.slane %v5999, 5
        %v6750 = vsel %vm1908, %v6748, %v6749
        %v6751 = vrot.slane %v6749, 4
        %v6752 = vrot.slane %v5977, 5
        %v6753 = vrot.slane %v6752, 4
        %v6754 = vrot.slane %v6000, 5
        %v6755 = vsel %vm1908, %v6753, %v6754
        %v6756 = vrot.slane %v6754, 4
        %v6757 = vrot.slane %v5980, 5
        %v6758 = vrot.slane %v6757, 4
        %v6759 = vrot.slane %v6001, 5
        %v6760 = vsel %vm1908, %v6758, %v6759
        %v6761 = vrot.slane %v6759, 4
        %v6822 = vmax.bf16 %v6562, %v6662
        %v6823 = vmax.bf16 %v6563, %v6665
        %v6824 = vmax.bf16 %v6564, %v6666
        %v6825 = vmax.bf16 %v6565, %v6667
        %v6826 = vmax.bf16 %v6566, %v6670
        %v6827 = vmax.bf16 %v6567, %v6671
        %v6828 = vmax.bf16 %v6568, %v6672
        %v6829 = vmax.bf16 %v6569, %v6675
        %v6830 = vmax.bf16 %v6570, %v6676
        %v6831 = vmax.bf16 %v6571, %v6677
        %v6832 = vmax.bf16 %v6572, %v6680
        %v6833 = vmax.bf16 %v6573, %v6681
        %v6834 = vmax.bf16 %v6574, %v6682
        %v6835 = vmax.bf16 %v6575, %v6685
        %v6836 = vmax.bf16 %v6576, %v6686
        %v6837 = vmax.bf16 %v6577, %v6687
        %v6838 = vmax.bf16 %v6578, %v6690
        %v6839 = vmax.bf16 %v6579, %v6691
        %v6840 = vmax.bf16 %v6580, %v6692
        %v6841 = vmax.bf16 %v6581, %v6695
        %v6842 = vmax.bf16 %v6582, %v6696
        %v6843 = vmax.bf16 %v6583, %v6697
        %v6844 = vmax.bf16 %v6584, %v6700
        %v6845 = vmax.bf16 %v6585, %v6701
        %v6846 = vmax.bf16 %v6586, %v6702
        %v6847 = vmax.bf16 %v6587, %v6705
        %v6848 = vmax.bf16 %v6588, %v6706
        %v6849 = vmax.bf16 %v6589, %v6707
        %v6850 = vmax.bf16 %v6590, %v6710
        %v6851 = vmax.bf16 %v6591, %v6711
        %v6852 = vmax.bf16 %v6592, %v6712
        %v6853 = vmax.bf16 %v6593, %v6715
        %v6854 = vmax.bf16 %v6594, %v6716
        %v6855 = vmax.bf16 %v6595, %v6717
        %v6856 = vmax.bf16 %v6596, %v6720
        %v6857 = vmax.bf16 %v6597, %v6721
        %v6858 = vmax.bf16 %v6598, %v6722
        %v6859 = vmax.bf16 %v6599, %v6725
        %v6860 = vmax.bf16 %v6600, %v6726
        %v6861 = vmax.bf16 %v6601, %v6727
        %v6862 = vmax.bf16 %v6602, %v6730
        %v6863 = vmax.bf16 %v6603, %v6731
        %v6864 = vmax.bf16 %v6604, %v6732
        %v6865 = vmax.bf16 %v6605, %v6735
        %v6866 = vmax.bf16 %v6606, %v6736
        %v6867 = vmax.bf16 %v6607, %v6737
        %v6868 = vmax.bf16 %v6608, %v6740
        %v6869 = vmax.bf16 %v6609, %v6741
        %v6870 = vmax.bf16 %v6610, %v6742
        %v6871 = vmax.bf16 %v6611, %v6745
        %v6872 = vmax.bf16 %v6612, %v6746
        %v6873 = vmax.bf16 %v6613, %v6747
        %v6874 = vmax.bf16 %v6614, %v6750
        %v6875 = vmax.bf16 %v6615, %v6751
        %v6876 = vmax.bf16 %v6616, %v6752
        %v6877 = vmax.bf16 %v6617, %v6755
        %v6878 = vmax.bf16 %v6618, %v6756
        %v6879 = vmax.bf16 %v6619, %v6757
        %v6880 = vmax.bf16 %v6620, %v6760
        %v6881 = vmax.bf16 %v6621, %v6761
        %v6882 = vld [vmem:[#allocation2 + $0x4] sm:$0xf]
        %v6883 = vld [vmem:[#allocation2 + $0x8] sm:$0xf]
        %v6884 = vld [vmem:[#allocation2 + $0xc] sm:$0x1]
        %v6885 = vld [vmem:[#allocation2 + $0x14] sm:$0xf]
        %v6886 = vld [vmem:[#allocation2 + $0x18] sm:$0xf]
        %v6887 = vld [vmem:[#allocation2 + $0x1c] sm:$0x1]
        %v6888 = vld [vmem:[#allocation2 + $0x24] sm:$0xf]
        %v6889 = vld [vmem:[#allocation2 + $0x28] sm:$0xf]
        %v6890 = vld [vmem:[#allocation2 + $0x2c] sm:$0x1]
        %v6891 = vld [vmem:[#allocation2 + $0x34] sm:$0xf]
        %v6892 = vld [vmem:[#allocation2 + $0x38] sm:$0xf]
        %v6893 = vld [vmem:[#allocation2 + $0x3c] sm:$0x1]
        %v6894 = vld [vmem:[#allocation2 + $0x44] sm:$0xf]
        %v6895 = vld [vmem:[#allocation2 + $0x48] sm:$0xf]
        %v6896 = vld [vmem:[#allocation2 + $0x4c] sm:$0x1]
        %v6897 = vld [vmem:[#allocation2 + $0x54] sm:$0xf]
        %v6898 = vld [vmem:[#allocation2 + $0x58] sm:$0xf]
        %v6899 = vld [vmem:[#allocation2 + $0x5c] sm:$0x1]
        %v6900 = vld [vmem:[#allocation2 + $0x64] sm:$0xf]
        %v6901 = vld [vmem:[#allocation2 + $0x68] sm:$0xf]
        %v6902 = vld [vmem:[#allocation2 + $0x6c] sm:$0x1]
        %v6903 = vld [vmem:[#allocation2 + $0x74] sm:$0xf]
        %v6904 = vld [vmem:[#allocation2 + $0x78] sm:$0xf]
        %v6905 = vld [vmem:[#allocation2 + $0x7c] sm:$0x1]
        %v6906 = vld [vmem:[#allocation2 + $0x84] sm:$0xf]
        %v6907 = vld [vmem:[#allocation2 + $0x88] sm:$0xf]
        %v6908 = vld [vmem:[#allocation2 + $0x8c] sm:$0x1]
        %v6909 = vld [vmem:[#allocation2 + $0x94] sm:$0xf]
        %v6910 = vld [vmem:[#allocation2 + $0x98] sm:$0xf]
        %v6911 = vld [vmem:[#allocation2 + $0x9c] sm:$0x1]
        %v6912 = vld [vmem:[#allocation2 + $0xa4] sm:$0xf]
        %v6913 = vld [vmem:[#allocation2 + $0xa8] sm:$0xf]
        %v6914 = vld [vmem:[#allocation2 + $0xac] sm:$0x1]
        %v6915 = vld [vmem:[#allocation2 + $0xb4] sm:$0xf]
        %v6916 = vld [vmem:[#allocation2 + $0xb8] sm:$0xf]
        %v6917 = vld [vmem:[#allocation2 + $0xbc] sm:$0x1]
        %v6918 = vld [vmem:[#allocation2 + $0xc4] sm:$0xf]
        %v6919 = vld [vmem:[#allocation2 + $0xc8] sm:$0xf]
        %v6920 = vld [vmem:[#allocation2 + $0xcc] sm:$0x1]
        %v6921 = vld [vmem:[#allocation2 + $0xd4] sm:$0xf]
        %v6922 = vld [vmem:[#allocation2 + $0xd8] sm:$0xf]
        %v6923 = vld [vmem:[#allocation2 + $0xdc] sm:$0x1]
        %v6924 = vld [vmem:[#allocation2 + $0xe4] sm:$0xf]
        %v6925 = vld [vmem:[#allocation2 + $0xe8] sm:$0xf]
        %v6926 = vld [vmem:[#allocation2 + $0xec] sm:$0x1]
        %v6927 = vld [vmem:[#allocation2 + $0xf4] sm:$0xf]
        %v6928 = vld [vmem:[#allocation2 + $0xf8] sm:$0xf]
        %v6929 = vld [vmem:[#allocation2 + $0xfc] sm:$0x1]
        %v6930 = vld [vmem:[#allocation2 + $0x104] sm:$0xf]
        %v6931 = vld [vmem:[#allocation2 + $0x108] sm:$0xf]
        %v6932 = vld [vmem:[#allocation2 + $0x10c] sm:$0x1]
        %v6933 = vld [vmem:[#allocation2 + $0x114] sm:$0xf]
        %v6934 = vld [vmem:[#allocation2 + $0x118] sm:$0xf]
        %v6935 = vld [vmem:[#allocation2 + $0x11c] sm:$0x1]
        %v6936 = vld [vmem:[#allocation2 + $0x124] sm:$0xf]
        %v6937 = vld [vmem:[#allocation2 + $0x128] sm:$0xf]
        %v6938 = vld [vmem:[#allocation2 + $0x12c] sm:$0x1]
        %v6939 = vld [vmem:[#allocation2 + $0x134] sm:$0xf]
        %v6940 = vld [vmem:[#allocation2 + $0x138] sm:$0xf]
        %v6941 = vld [vmem:[#allocation2 + $0x13c] sm:$0x1]
        %v6943 = vshrl.u32 %v6882, 16
        %v6945 = vrot.slane %v6943, 5
        %v6946 = vshll.u32 %v6882, 16
        %v6948 = vrot.slane %v6946, 6
        %v6949 = vor.u32 %v6945, %v6948
        %v6950 = vrot.slane %v6949, 4
        %v6952 = vshrl.u32 %v6883, 16
        %v6954 = vrot.slane %v6952, 5
        %v6955 = vshll.u32 %v6883, 16
        %v6957 = vrot.slane %v6955, 6
        %v6958 = vor.u32 %v6954, %v6957
        %v6959 = vsel %vm2191, %v6950, %v6958
        %v6960 = vrot.slane %v6958, 4
        %v6962 = vshll.u32 %v6884, 16
        %v6964 = vrot.slane %v6962, 6
        %v6965 = vsel %vm2191, %v6960, %v6964
        %v6967 = vshrl.u32 %v6885, 16
        %v6969 = vrot.slane %v6967, 5
        %v6970 = vshll.u32 %v6885, 16
        %v6972 = vrot.slane %v6970, 6
        %v6973 = vor.u32 %v6969, %v6972
        %v6974 = vrot.slane %v6973, 4
        %v6976 = vshrl.u32 %v6886, 16
        %v6978 = vrot.slane %v6976, 5
        %v6979 = vshll.u32 %v6886, 16
        %v6981 = vrot.slane %v6979, 6
        %v6982 = vor.u32 %v6978, %v6981
        %v6983 = vsel %vm2191, %v6974, %v6982
        %v6984 = vrot.slane %v6982, 4
        %v6986 = vshll.u32 %v6887, 16
        %v6988 = vrot.slane %v6986, 6
        %v6989 = vsel %vm2191, %v6984, %v6988
        %v6991 = vshrl.u32 %v6888, 16
        %v6993 = vrot.slane %v6991, 5
        %v6994 = vshll.u32 %v6888, 16
        %v6996 = vrot.slane %v6994, 6
        %v6997 = vor.u32 %v6993, %v6996
        %v6998 = vrot.slane %v6997, 4
        %v7000 = vshrl.u32 %v6889, 16
        %v7002 = vrot.slane %v7000, 5
        %v7003 = vshll.u32 %v6889, 16
        %v7005 = vrot.slane %v7003, 6
        %v7006 = vor.u32 %v7002, %v7005
        %v7007 = vsel %vm2191, %v6998, %v7006
        %v7008 = vrot.slane %v7006, 4
        %v7010 = vshll.u32 %v6890, 16
        %v7012 = vrot.slane %v7010, 6
        %v7013 = vsel %vm2191, %v7008, %v7012
        %v7015 = vshrl.u32 %v6891, 16
        %v7017 = vrot.slane %v7015, 5
        %v7018 = vshll.u32 %v6891, 16
        %v7020 = vrot.slane %v7018, 6
        %v7021 = vor.u32 %v7017, %v7020
        %v7022 = vrot.slane %v7021, 4
        %v7024 = vshrl.u32 %v6892, 16
        %v7026 = vrot.slane %v7024, 5
        %v7027 = vshll.u32 %v6892, 16
        %v7029 = vrot.slane %v7027, 6
        %v7030 = vor.u32 %v7026, %v7029
        %v7031 = vsel %vm2191, %v7022, %v7030
        %v7032 = vrot.slane %v7030, 4
        %v7034 = vshll.u32 %v6893, 16
        %v7036 = vrot.slane %v7034, 6
        %v7037 = vsel %vm2191, %v7032, %v7036
        %v7039 = vshrl.u32 %v6894, 16
        %v7041 = vrot.slane %v7039, 5
        %v7042 = vshll.u32 %v6894, 16
        %v7044 = vrot.slane %v7042, 6
        %v7045 = vor.u32 %v7041, %v7044
        %v7046 = vrot.slane %v7045, 4
        %v7048 = vshrl.u32 %v6895, 16
        %v7050 = vrot.slane %v7048, 5
        %v7051 = vshll.u32 %v6895, 16
        %v7053 = vrot.slane %v7051, 6
        %v7054 = vor.u32 %v7050, %v7053
        %v7055 = vsel %vm2191, %v7046, %v7054
        %v7056 = vrot.slane %v7054, 4
        %v7058 = vshll.u32 %v6896, 16
        %v7060 = vrot.slane %v7058, 6
        %v7061 = vsel %vm2191, %v7056, %v7060
        %v7063 = vshrl.u32 %v6897, 16
        %v7065 = vrot.slane %v7063, 5
        %v7066 = vshll.u32 %v6897, 16
        %v7068 = vrot.slane %v7066, 6
        %v7069 = vor.u32 %v7065, %v7068
        %v7070 = vrot.slane %v7069, 4
        %v7072 = vshrl.u32 %v6898, 16
        %v7074 = vrot.slane %v7072, 5
        %v7075 = vshll.u32 %v6898, 16
        %v7077 = vrot.slane %v7075, 6
        %v7078 = vor.u32 %v7074, %v7077
        %v7079 = vsel %vm2191, %v7070, %v7078
        %v7080 = vrot.slane %v7078, 4
        %v7082 = vshll.u32 %v6899, 16
        %v7084 = vrot.slane %v7082, 6
        %v7085 = vsel %vm2191, %v7080, %v7084
        %v7087 = vshrl.u32 %v6900, 16
        %v7089 = vrot.slane %v7087, 5
        %v7090 = vshll.u32 %v6900, 16
        %v7092 = vrot.slane %v7090, 6
        %v7093 = vor.u32 %v7089, %v7092
        %v7094 = vrot.slane %v7093, 4
        %v7096 = vshrl.u32 %v6901, 16
        %v7098 = vrot.slane %v7096, 5
        %v7099 = vshll.u32 %v6901, 16
        %v7101 = vrot.slane %v7099, 6
        %v7102 = vor.u32 %v7098, %v7101
        %v7103 = vsel %vm2191, %v7094, %v7102
        %v7104 = vrot.slane %v7102, 4
        %v7106 = vshll.u32 %v6902, 16
        %v7108 = vrot.slane %v7106, 6
        %v7109 = vsel %vm2191, %v7104, %v7108
        %v7111 = vshrl.u32 %v6903, 16
        %v7113 = vrot.slane %v7111, 5
        %v7114 = vshll.u32 %v6903, 16
        %v7116 = vrot.slane %v7114, 6
        %v7117 = vor.u32 %v7113, %v7116
        %v7118 = vrot.slane %v7117, 4
        %v7120 = vshrl.u32 %v6904, 16
        %v7122 = vrot.slane %v7120, 5
        %v7123 = vshll.u32 %v6904, 16
        %v7125 = vrot.slane %v7123, 6
        %v7126 = vor.u32 %v7122, %v7125
        %v7127 = vsel %vm2191, %v7118, %v7126
        %v7128 = vrot.slane %v7126, 4
        %v7130 = vshll.u32 %v6905, 16
        %v7132 = vrot.slane %v7130, 6
        %v7133 = vsel %vm2191, %v7128, %v7132
        %v7135 = vshrl.u32 %v6906, 16
        %v7137 = vrot.slane %v7135, 5
        %v7138 = vshll.u32 %v6906, 16
        %v7140 = vrot.slane %v7138, 6
        %v7141 = vor.u32 %v7137, %v7140
        %v7142 = vrot.slane %v7141, 4
        %v7144 = vshrl.u32 %v6907, 16
        %v7146 = vrot.slane %v7144, 5
        %v7147 = vshll.u32 %v6907, 16
        %v7149 = vrot.slane %v7147, 6
        %v7150 = vor.u32 %v7146, %v7149
        %v7151 = vsel %vm2191, %v7142, %v7150
        %v7152 = vrot.slane %v7150, 4
        %v7154 = vshll.u32 %v6908, 16
        %v7156 = vrot.slane %v7154, 6
        %v7157 = vsel %vm2191, %v7152, %v7156
        %v7159 = vshrl.u32 %v6909, 16
        %v7161 = vrot.slane %v7159, 5
        %v7162 = vshll.u32 %v6909, 16
        %v7164 = vrot.slane %v7162, 6
        %v7165 = vor.u32 %v7161, %v7164
        %v7166 = vrot.slane %v7165, 4
        %v7168 = vshrl.u32 %v6910, 16
        %v7170 = vrot.slane %v7168, 5
        %v7171 = vshll.u32 %v6910, 16
        %v7173 = vrot.slane %v7171, 6
        %v7174 = vor.u32 %v7170, %v7173
        %v7175 = vsel %vm2191, %v7166, %v7174
        %v7176 = vrot.slane %v7174, 4
        %v7178 = vshll.u32 %v6911, 16
        %v7180 = vrot.slane %v7178, 6
        %v7181 = vsel %vm2191, %v7176, %v7180
        %v7183 = vshrl.u32 %v6912, 16
        %v7185 = vrot.slane %v7183, 5
        %v7186 = vshll.u32 %v6912, 16
        %v7188 = vrot.slane %v7186, 6
        %v7189 = vor.u32 %v7185, %v7188
        %v7190 = vrot.slane %v7189, 4
        %v7192 = vshrl.u32 %v6913, 16
        %v7194 = vrot.slane %v7192, 5
        %v7195 = vshll.u32 %v6913, 16
        %v7197 = vrot.slane %v7195, 6
        %v7198 = vor.u32 %v7194, %v7197
        %v7199 = vsel %vm2191, %v7190, %v7198
        %v7200 = vrot.slane %v7198, 4
        %v7202 = vshll.u32 %v6914, 16
        %v7204 = vrot.slane %v7202, 6
        %v7205 = vsel %vm2191, %v7200, %v7204
        %v7207 = vshrl.u32 %v6915, 16
        %v7209 = vrot.slane %v7207, 5
        %v7210 = vshll.u32 %v6915, 16
        %v7212 = vrot.slane %v7210, 6
        %v7213 = vor.u32 %v7209, %v7212
        %v7214 = vrot.slane %v7213, 4
        %v7216 = vshrl.u32 %v6916, 16
        %v7218 = vrot.slane %v7216, 5
        %v7219 = vshll.u32 %v6916, 16
        %v7221 = vrot.slane %v7219, 6
        %v7222 = vor.u32 %v7218, %v7221
        %v7223 = vsel %vm2191, %v7214, %v7222
        %v7224 = vrot.slane %v7222, 4
        %v7226 = vshll.u32 %v6917, 16
        %v7228 = vrot.slane %v7226, 6
        %v7229 = vsel %vm2191, %v7224, %v7228
        %v7231 = vshrl.u32 %v6918, 16
        %v7233 = vrot.slane %v7231, 5
        %v7234 = vshll.u32 %v6918, 16
        %v7236 = vrot.slane %v7234, 6
        %v7237 = vor.u32 %v7233, %v7236
        %v7238 = vrot.slane %v7237, 4
        %v7240 = vshrl.u32 %v6919, 16
        %v7242 = vrot.slane %v7240, 5
        %v7243 = vshll.u32 %v6919, 16
        %v7245 = vrot.slane %v7243, 6
        %v7246 = vor.u32 %v7242, %v7245
        %v7247 = vsel %vm2191, %v7238, %v7246
        %v7248 = vrot.slane %v7246, 4
        %v7250 = vshll.u32 %v6920, 16
        %v7252 = vrot.slane %v7250, 6
        %v7253 = vsel %vm2191, %v7248, %v7252
        %v7255 = vshrl.u32 %v6921, 16
        %v7257 = vrot.slane %v7255, 5
        %v7258 = vshll.u32 %v6921, 16
        %v7260 = vrot.slane %v7258, 6
        %v7261 = vor.u32 %v7257, %v7260
        %v7262 = vrot.slane %v7261, 4
        %v7264 = vshrl.u32 %v6922, 16
        %v7266 = vrot.slane %v7264, 5
        %v7267 = vshll.u32 %v6922, 16
        %v7269 = vrot.slane %v7267, 6
        %v7270 = vor.u32 %v7266, %v7269
        %v7271 = vsel %vm2191, %v7262, %v7270
        %v7272 = vrot.slane %v7270, 4
        %v7274 = vshll.u32 %v6923, 16
        %v7276 = vrot.slane %v7274, 6
        %v7277 = vsel %vm2191, %v7272, %v7276
        %v7279 = vshrl.u32 %v6924, 16
        %v7281 = vrot.slane %v7279, 5
        %v7282 = vshll.u32 %v6924, 16
        %v7284 = vrot.slane %v7282, 6
        %v7285 = vor.u32 %v7281, %v7284
        %v7286 = vrot.slane %v7285, 4
        %v7288 = vshrl.u32 %v6925, 16
        %v7290 = vrot.slane %v7288, 5
        %v7291 = vshll.u32 %v6925, 16
        %v7293 = vrot.slane %v7291, 6
        %v7294 = vor.u32 %v7290, %v7293
        %v7295 = vsel %vm2191, %v7286, %v7294
        %v7296 = vrot.slane %v7294, 4
        %v7298 = vshll.u32 %v6926, 16
        %v7300 = vrot.slane %v7298, 6
        %v7301 = vsel %vm2191, %v7296, %v7300
        %v7303 = vshrl.u32 %v6927, 16
        %v7305 = vrot.slane %v7303, 5
        %v7306 = vshll.u32 %v6927, 16
        %v7308 = vrot.slane %v7306, 6
        %v7309 = vor.u32 %v7305, %v7308
        %v7310 = vrot.slane %v7309, 4
        %v7312 = vshrl.u32 %v6928, 16
        %v7314 = vrot.slane %v7312, 5
        %v7315 = vshll.u32 %v6928, 16
        %v7317 = vrot.slane %v7315, 6
        %v7318 = vor.u32 %v7314, %v7317
        %v7319 = vsel %vm2191, %v7310, %v7318
        %v7320 = vrot.slane %v7318, 4
        %v7322 = vshll.u32 %v6929, 16
        %v7324 = vrot.slane %v7322, 6
        %v7325 = vsel %vm2191, %v7320, %v7324
        %v7327 = vshrl.u32 %v6930, 16
        %v7329 = vrot.slane %v7327, 5
        %v7330 = vshll.u32 %v6930, 16
        %v7332 = vrot.slane %v7330, 6
        %v7333 = vor.u32 %v7329, %v7332
        %v7334 = vrot.slane %v7333, 4
        %v7336 = vshrl.u32 %v6931, 16
        %v7338 = vrot.slane %v7336, 5
        %v7339 = vshll.u32 %v6931, 16
        %v7341 = vrot.slane %v7339, 6
        %v7342 = vor.u32 %v7338, %v7341
        %v7343 = vsel %vm2191, %v7334, %v7342
        %v7344 = vrot.slane %v7342, 4
        %v7346 = vshll.u32 %v6932, 16
        %v7348 = vrot.slane %v7346, 6
        %v7349 = vsel %vm2191, %v7344, %v7348
        %v7351 = vshrl.u32 %v6933, 16
        %v7353 = vrot.slane %v7351, 5
        %v7354 = vshll.u32 %v6933, 16
        %v7356 = vrot.slane %v7354, 6
        %v7357 = vor.u32 %v7353, %v7356
        %v7358 = vrot.slane %v7357, 4
        %v7360 = vshrl.u32 %v6934, 16
        %v7362 = vrot.slane %v7360, 5
        %v7363 = vshll.u32 %v6934, 16
        %v7365 = vrot.slane %v7363, 6
        %v7366 = vor.u32 %v7362, %v7365
        %v7367 = vsel %vm2191, %v7358, %v7366
        %v7368 = vrot.slane %v7366, 4
        %v7370 = vshll.u32 %v6935, 16
        %v7372 = vrot.slane %v7370, 6
        %v7373 = vsel %vm2191, %v7368, %v7372
        %v7375 = vshrl.u32 %v6936, 16
        %v7377 = vrot.slane %v7375, 5
        %v7378 = vshll.u32 %v6936, 16
        %v7380 = vrot.slane %v7378, 6
        %v7381 = vor.u32 %v7377, %v7380
        %v7382 = vrot.slane %v7381, 4
        %v7384 = vshrl.u32 %v6937, 16
        %v7386 = vrot.slane %v7384, 5
        %v7387 = vshll.u32 %v6937, 16
        %v7389 = vrot.slane %v7387, 6
        %v7390 = vor.u32 %v7386, %v7389
        %v7391 = vsel %vm2191, %v7382, %v7390
        %v7392 = vrot.slane %v7390, 4
        %v7394 = vshll.u32 %v6938, 16
        %v7396 = vrot.slane %v7394, 6
        %v7397 = vsel %vm2191, %v7392, %v7396
        %v7399 = vshrl.u32 %v6939, 16
        %v7401 = vrot.slane %v7399, 5
        %v7402 = vshll.u32 %v6939, 16
        %v7404 = vrot.slane %v7402, 6
        %v7405 = vor.u32 %v7401, %v7404
        %v7406 = vrot.slane %v7405, 4
        %v7408 = vshrl.u32 %v6940, 16
        %v7410 = vrot.slane %v7408, 5
        %v7411 = vshll.u32 %v6940, 16
        %v7413 = vrot.slane %v7411, 6
        %v7414 = vor.u32 %v7410, %v7413
        %v7415 = vsel %vm2191, %v7406, %v7414
        %v7416 = vrot.slane %v7414, 4
        %v7418 = vshll.u32 %v6941, 16
        %v7420 = vrot.slane %v7418, 6
        %v7421 = vsel %vm2191, %v7416, %v7420
        %v7482 = vmax.bf16 %v6822, %v6949
        %v7483 = vmax.bf16 %v6823, %v6959
        %v7484 = vmax.bf16 %v6824, %v6965
        %v7485 = vmax.bf16 %v6825, %v6973
        %v7486 = vmax.bf16 %v6826, %v6983
        %v7487 = vmax.bf16 %v6827, %v6989
        %v7488 = vmax.bf16 %v6828, %v6997
        %v7489 = vmax.bf16 %v6829, %v7007
        %v7490 = vmax.bf16 %v6830, %v7013
        %v7491 = vmax.bf16 %v6831, %v7021
        %v7492 = vmax.bf16 %v6832, %v7031
        %v7493 = vmax.bf16 %v6833, %v7037
        %v7494 = vmax.bf16 %v6834, %v7045
        %v7495 = vmax.bf16 %v6835, %v7055
        %v7496 = vmax.bf16 %v6836, %v7061
        %v7497 = vmax.bf16 %v6837, %v7069
        %v7498 = vmax.bf16 %v6838, %v7079
        %v7499 = vmax.bf16 %v6839, %v7085
        %v7500 = vmax.bf16 %v6840, %v7093
        %v7501 = vmax.bf16 %v6841, %v7103
        %v7502 = vmax.bf16 %v6842, %v7109
        %v7503 = vmax.bf16 %v6843, %v7117
        %v7504 = vmax.bf16 %v6844, %v7127
        %v7505 = vmax.bf16 %v6845, %v7133
        %v7506 = vmax.bf16 %v6846, %v7141
        %v7507 = vmax.bf16 %v6847, %v7151
        %v7508 = vmax.bf16 %v6848, %v7157
        %v7509 = vmax.bf16 %v6849, %v7165
        %v7510 = vmax.bf16 %v6850, %v7175
        %v7511 = vmax.bf16 %v6851, %v7181
        %v7512 = vmax.bf16 %v6852, %v7189
        %v7513 = vmax.bf16 %v6853, %v7199
        %v7514 = vmax.bf16 %v6854, %v7205
        %v7515 = vmax.bf16 %v6855, %v7213
        %v7516 = vmax.bf16 %v6856, %v7223
        %v7517 = vmax.bf16 %v6857, %v7229
        %v7518 = vmax.bf16 %v6858, %v7237
        %v7519 = vmax.bf16 %v6859, %v7247
        %v7520 = vmax.bf16 %v6860, %v7253
        %v7521 = vmax.bf16 %v6861, %v7261
        %v7522 = vmax.bf16 %v6862, %v7271
        %v7523 = vmax.bf16 %v6863, %v7277
        %v7524 = vmax.bf16 %v6864, %v7285
        %v7525 = vmax.bf16 %v6865, %v7295
        %v7526 = vmax.bf16 %v6866, %v7301
        %v7527 = vmax.bf16 %v6867, %v7309
        %v7528 = vmax.bf16 %v6868, %v7319
        %v7529 = vmax.bf16 %v6869, %v7325
        %v7530 = vmax.bf16 %v6870, %v7333
        %v7531 = vmax.bf16 %v6871, %v7343
        %v7532 = vmax.bf16 %v6872, %v7349
        %v7533 = vmax.bf16 %v6873, %v7357
        %v7534 = vmax.bf16 %v6874, %v7367
        %v7535 = vmax.bf16 %v6875, %v7373
        %v7536 = vmax.bf16 %v6876, %v7381
        %v7537 = vmax.bf16 %v6877, %v7391
        %v7538 = vmax.bf16 %v6878, %v7397
        %v7539 = vmax.bf16 %v6879, %v7405
        %v7540 = vmax.bf16 %v6880, %v7415
        %v7541 = vmax.bf16 %v6881, %v7421
        %v7542 = vld [vmem:[#allocation2 + $0x4] sm:$0xe]
        %v7543 = vld [vmem:[#allocation2 + $0x14] sm:$0xe]
        %v7544 = vld [vmem:[#allocation2 + $0x24] sm:$0xe]
        %v7545 = vld [vmem:[#allocation2 + $0x34] sm:$0xe]
        %v7546 = vld [vmem:[#allocation2 + $0x44] sm:$0xe]
        %v7547 = vld [vmem:[#allocation2 + $0x54] sm:$0xe]
        %v7548 = vld [vmem:[#allocation2 + $0x64] sm:$0xe]
        %v7549 = vld [vmem:[#allocation2 + $0x74] sm:$0xe]
        %v7550 = vld [vmem:[#allocation2 + $0x84] sm:$0xe]
        %v7551 = vld [vmem:[#allocation2 + $0x94] sm:$0xe]
        %v7552 = vld [vmem:[#allocation2 + $0xa4] sm:$0xe]
        %v7553 = vld [vmem:[#allocation2 + $0xb4] sm:$0xe]
        %v7554 = vld [vmem:[#allocation2 + $0xc4] sm:$0xe]
        %v7555 = vld [vmem:[#allocation2 + $0xd4] sm:$0xe]
        %v7556 = vld [vmem:[#allocation2 + $0xe4] sm:$0xe]
        %v7557 = vld [vmem:[#allocation2 + $0xf4] sm:$0xe]
        %v7558 = vld [vmem:[#allocation2 + $0x104] sm:$0xe]
        %v7559 = vld [vmem:[#allocation2 + $0x114] sm:$0xe]
        %v7560 = vld [vmem:[#allocation2 + $0x124] sm:$0xe]
        %v7561 = vld [vmem:[#allocation2 + $0x134] sm:$0xe]
        %v7622 = vrot.slane %v7542, 6
        %v7623 = vrot.slane %v7622, 4
        %v7624 = vrot.slane %v6883, 6
        %v7625 = vsel %vm2874, %v7623, %v7624
        %v7626 = vrot.slane %v7624, 4
        %v7627 = vrot.slane %v6884, 6
        %v7628 = vsel %vm2874, %v7626, %v7627
        %v7629 = vrot.slane %v7543, 6
        %v7630 = vrot.slane %v7629, 4
        %v7631 = vrot.slane %v6886, 6
        %v7632 = vsel %vm2874, %v7630, %v7631
        %v7633 = vrot.slane %v7631, 4
        %v7634 = vrot.slane %v6887, 6
        %v7635 = vsel %vm2874, %v7633, %v7634
        %v7636 = vrot.slane %v7544, 6
        %v7637 = vrot.slane %v7636, 4
        %v7638 = vrot.slane %v6889, 6
        %v7639 = vsel %vm2874, %v7637, %v7638
        %v7640 = vrot.slane %v7638, 4
        %v7641 = vrot.slane %v6890, 6
        %v7642 = vsel %vm2874, %v7640, %v7641
        %v7643 = vrot.slane %v7545, 6
        %v7644 = vrot.slane %v7643, 4
        %v7645 = vrot.slane %v6892, 6
        %v7646 = vsel %vm2874, %v7644, %v7645
        %v7647 = vrot.slane %v7645, 4
        %v7648 = vrot.slane %v6893, 6
        %v7649 = vsel %vm2874, %v7647, %v7648
        %v7650 = vrot.slane %v7546, 6
        %v7651 = vrot.slane %v7650, 4
        %v7652 = vrot.slane %v6895, 6
        %v7653 = vsel %vm2874, %v7651, %v7652
        %v7654 = vrot.slane %v7652, 4
        %v7655 = vrot.slane %v6896, 6
        %v7656 = vsel %vm2874, %v7654, %v7655
        %v7657 = vrot.slane %v7547, 6
        %v7658 = vrot.slane %v7657, 4
        %v7659 = vrot.slane %v6898, 6
        %v7660 = vsel %vm2874, %v7658, %v7659
        %v7661 = vrot.slane %v7659, 4
        %v7662 = vrot.slane %v6899, 6
        %v7663 = vsel %vm2874, %v7661, %v7662
        %v7664 = vrot.slane %v7548, 6
        %v7665 = vrot.slane %v7664, 4
        %v7666 = vrot.slane %v6901, 6
        %v7667 = vsel %vm2874, %v7665, %v7666
        %v7668 = vrot.slane %v7666, 4
        %v7669 = vrot.slane %v6902, 6
        %v7670 = vsel %vm2874, %v7668, %v7669
        %v7671 = vrot.slane %v7549, 6
        %v7672 = vrot.slane %v7671, 4
        %v7673 = vrot.slane %v6904, 6
        %v7674 = vsel %vm2874, %v7672, %v7673
        %v7675 = vrot.slane %v7673, 4
        %v7676 = vrot.slane %v6905, 6
        %v7677 = vsel %vm2874, %v7675, %v7676
        %v7678 = vrot.slane %v7550, 6
        %v7679 = vrot.slane %v7678, 4
        %v7680 = vrot.slane %v6907, 6
        %v7681 = vsel %vm2874, %v7679, %v7680
        %v7682 = vrot.slane %v7680, 4
        %v7683 = vrot.slane %v6908, 6
        %v7684 = vsel %vm2874, %v7682, %v7683
        %v7685 = vrot.slane %v7551, 6
        %v7686 = vrot.slane %v7685, 4
        %v7687 = vrot.slane %v6910, 6
        %v7688 = vsel %vm2874, %v7686, %v7687
        %v7689 = vrot.slane %v7687, 4
        %v7690 = vrot.slane %v6911, 6
        %v7691 = vsel %vm2874, %v7689, %v7690
        %v7692 = vrot.slane %v7552, 6
        %v7693 = vrot.slane %v7692, 4
        %v7694 = vrot.slane %v6913, 6
        %v7695 = vsel %vm2874, %v7693, %v7694
        %v7696 = vrot.slane %v7694, 4
        %v7697 = vrot.slane %v6914, 6
        %v7698 = vsel %vm2874, %v7696, %v7697
        %v7699 = vrot.slane %v7553, 6
        %v7700 = vrot.slane %v7699, 4
        %v7701 = vrot.slane %v6916, 6
        %v7702 = vsel %vm2874, %v7700, %v7701
        %v7703 = vrot.slane %v7701, 4
        %v7704 = vrot.slane %v6917, 6
        %v7705 = vsel %vm2874, %v7703, %v7704
        %v7706 = vrot.slane %v7554, 6
        %v7707 = vrot.slane %v7706, 4
        %v7708 = vrot.slane %v6919, 6
        %v7709 = vsel %vm2874, %v7707, %v7708
        %v7710 = vrot.slane %v7708, 4
        %v7711 = vrot.slane %v6920, 6
        %v7712 = vsel %vm2874, %v7710, %v7711
        %v7713 = vrot.slane %v7555, 6
        %v7714 = vrot.slane %v7713, 4
        %v7715 = vrot.slane %v6922, 6
        %v7716 = vsel %vm2874, %v7714, %v7715
        %v7717 = vrot.slane %v7715, 4
        %v7718 = vrot.slane %v6923, 6
        %v7719 = vsel %vm2874, %v7717, %v7718
        %v7720 = vrot.slane %v7556, 6
        %v7721 = vrot.slane %v7720, 4
        %v7722 = vrot.slane %v6925, 6
        %v7723 = vsel %vm2874, %v7721, %v7722
        %v7724 = vrot.slane %v7722, 4
        %v7725 = vrot.slane %v6926, 6
        %v7726 = vsel %vm2874, %v7724, %v7725
        %v7727 = vrot.slane %v7557, 6
        %v7728 = vrot.slane %v7727, 4
        %v7729 = vrot.slane %v6928, 6
        %v7730 = vsel %vm2874, %v7728, %v7729
        %v7731 = vrot.slane %v7729, 4
        %v7732 = vrot.slane %v6929, 6
        %v7733 = vsel %vm2874, %v7731, %v7732
        %v7734 = vrot.slane %v7558, 6
        %v7735 = vrot.slane %v7734, 4
        %v7736 = vrot.slane %v6931, 6
        %v7737 = vsel %vm2874, %v7735, %v7736
        %v7738 = vrot.slane %v7736, 4
        %v7739 = vrot.slane %v6932, 6
        %v7740 = vsel %vm2874, %v7738, %v7739
        %v7741 = vrot.slane %v7559, 6
        %v7742 = vrot.slane %v7741, 4
        %v7743 = vrot.slane %v6934, 6
        %v7744 = vsel %vm2874, %v7742, %v7743
        %v7745 = vrot.slane %v7743, 4
        %v7746 = vrot.slane %v6935, 6
        %v7747 = vsel %vm2874, %v7745, %v7746
        %v7748 = vrot.slane %v7560, 6
        %v7749 = vrot.slane %v7748, 4
        %v7750 = vrot.slane %v6937, 6
        %v7751 = vsel %vm2874, %v7749, %v7750
        %v7752 = vrot.slane %v7750, 4
        %v7753 = vrot.slane %v6938, 6
        %v7754 = vsel %vm2874, %v7752, %v7753
        %v7755 = vrot.slane %v7561, 6
        %v7756 = vrot.slane %v7755, 4
        %v7757 = vrot.slane %v6940, 6
        %v7758 = vsel %vm2874, %v7756, %v7757
        %v7759 = vrot.slane %v7757, 4
        %v7760 = vrot.slane %v6941, 6
        %v7761 = vsel %vm2874, %v7759, %v7760
        %v7822 = vmax.bf16 %v7482, %v7622
        %v7823 = vmax.bf16 %v7483, %v7625
        %v7824 = vmax.bf16 %v7484, %v7628
        %v7825 = vmax.bf16 %v7485, %v7629
        %v7826 = vmax.bf16 %v7486, %v7632
        %v7827 = vmax.bf16 %v7487, %v7635
        %v7828 = vmax.bf16 %v7488, %v7636
        %v7829 = vmax.bf16 %v7489, %v7639
        %v7830 = vmax.bf16 %v7490, %v7642
        %v7831 = vmax.bf16 %v7491, %v7643
        %v7832 = vmax.bf16 %v7492, %v7646
        %v7833 = vmax.bf16 %v7493, %v7649
        %v7834 = vmax.bf16 %v7494, %v7650
        %v7835 = vmax.bf16 %v7495, %v7653
        %v7836 = vmax.bf16 %v7496, %v7656
        %v7837 = vmax.bf16 %v7497, %v7657
        %v7838 = vmax.bf16 %v7498, %v7660
        %v7839 = vmax.bf16 %v7499, %v7663
        %v7840 = vmax.bf16 %v7500, %v7664
        %v7841 = vmax.bf16 %v7501, %v7667
        %v7842 = vmax.bf16 %v7502, %v7670
        %v7843 = vmax.bf16 %v7503, %v7671
        %v7844 = vmax.bf16 %v7504, %v7674
        %v7845 = vmax.bf16 %v7505, %v7677
        %v7846 = vmax.bf16 %v7506, %v7678
        %v7847 = vmax.bf16 %v7507, %v7681
        %v7848 = vmax.bf16 %v7508, %v7684
        %v7849 = vmax.bf16 %v7509, %v7685
        %v7850 = vmax.bf16 %v7510, %v7688
        %v7851 = vmax.bf16 %v7511, %v7691
        %v7852 = vmax.bf16 %v7512, %v7692
        %v7853 = vmax.bf16 %v7513, %v7695
        %v7854 = vmax.bf16 %v7514, %v7698
        %v7855 = vmax.bf16 %v7515, %v7699
        %v7856 = vmax.bf16 %v7516, %v7702
        %v7857 = vmax.bf16 %v7517, %v7705
        %v7858 = vmax.bf16 %v7518, %v7706
        %v7859 = vmax.bf16 %v7519, %v7709
        %v7860 = vmax.bf16 %v7520, %v7712
        %v7861 = vmax.bf16 %v7521, %v7713
        %v7862 = vmax.bf16 %v7522, %v7716
        %v7863 = vmax.bf16 %v7523, %v7719
        %v7864 = vmax.bf16 %v7524, %v7720
        %v7865 = vmax.bf16 %v7525, %v7723
        %v7866 = vmax.bf16 %v7526, %v7726
        %v7867 = vmax.bf16 %v7527, %v7727
        %v7868 = vmax.bf16 %v7528, %v7730
        %v7869 = vmax.bf16 %v7529, %v7733
        %v7870 = vmax.bf16 %v7530, %v7734
        %v7871 = vmax.bf16 %v7531, %v7737
        %v7872 = vmax.bf16 %v7532, %v7740
        %v7873 = vmax.bf16 %v7533, %v7741
        %v7874 = vmax.bf16 %v7534, %v7744
        %v7875 = vmax.bf16 %v7535, %v7747
        %v7876 = vmax.bf16 %v7536, %v7748
        %v7877 = vmax.bf16 %v7537, %v7751
        %v7878 = vmax.bf16 %v7538, %v7754
        %v7879 = vmax.bf16 %v7539, %v7755
        %v7880 = vmax.bf16 %v7540, %v7758
        %v7881 = vmax.bf16 %v7541, %v7761
        %v7882 = vmax.bf16 %v7822, %v7825
        %v7883 = vmax.bf16 %v7823, %v7826
        %v7884 = vmax.bf16 %v7824, %v7827
        %v7885 = vmax.bf16 %v7825, %v7828
        %v7886 = vmax.bf16 %v7826, %v7829
        %v7887 = vmax.bf16 %v7827, %v7830
        %v7888 = vmax.bf16 %v7828, %v7831
        %v7889 = vmax.bf16 %v7829, %v7832
        %v7890 = vmax.bf16 %v7830, %v7833
        %v7891 = vmax.bf16 %v7831, %v7834
        %v7892 = vmax.bf16 %v7832, %v7835
        %v7893 = vmax.bf16 %v7833, %v7836
        %v7894 = vmax.bf16 %v7834, %v7837
        %v7895 = vmax.bf16 %v7835, %v7838
        %v7896 = vmax.bf16 %v7836, %v7839
        %v7897 = vmax.bf16 %v7837, %v7840
        %v7898 = vmax.bf16 %v7838, %v7841
        %v7899 = vmax.bf16 %v7839, %v7842
        %v7900 = vmax.bf16 %v7840, %v7843
        %v7901 = vmax.bf16 %v7841, %v7844
        %v7902 = vmax.bf16 %v7842, %v7845
        %v7903 = vmax.bf16 %v7843, %v7846
        %v7904 = vmax.bf16 %v7844, %v7847
        %v7905 = vmax.bf16 %v7845, %v7848
        %v7906 = vmax.bf16 %v7846, %v7849
        %v7907 = vmax.bf16 %v7847, %v7850
        %v7908 = vmax.bf16 %v7848, %v7851
        %v7909 = vmax.bf16 %v7849, %v7852
        %v7910 = vmax.bf16 %v7850, %v7853
        %v7911 = vmax.bf16 %v7851, %v7854
        %v7912 = vmax.bf16 %v7852, %v7855
        %v7913 = vmax.bf16 %v7853, %v7856
        %v7914 = vmax.bf16 %v7854, %v7857
        %v7915 = vmax.bf16 %v7855, %v7858
        %v7916 = vmax.bf16 %v7856, %v7859
        %v7917 = vmax.bf16 %v7857, %v7860
        %v7918 = vmax.bf16 %v7858, %v7861
        %v7919 = vmax.bf16 %v7859, %v7862
        %v7920 = vmax.bf16 %v7860, %v7863
        %v7921 = vmax.bf16 %v7861, %v7864
        %v7922 = vmax.bf16 %v7862, %v7865
        %v7923 = vmax.bf16 %v7863, %v7866
        %v7924 = vmax.bf16 %v7864, %v7867
        %v7925 = vmax.bf16 %v7865, %v7868
        %v7926 = vmax.bf16 %v7866, %v7869
        %v7927 = vmax.bf16 %v7867, %v7870
        %v7928 = vmax.bf16 %v7868, %v7871
        %v7929 = vmax.bf16 %v7869, %v7872
        %v7930 = vmax.bf16 %v7870, %v7873
        %v7931 = vmax.bf16 %v7871, %v7874
        %v7932 = vmax.bf16 %v7872, %v7875
        %v7933 = vmax.bf16 %v7873, %v7876
        %v7934 = vmax.bf16 %v7874, %v7877
        %v7935 = vmax.bf16 %v7875, %v7878
        %v7936 = vmax.bf16 %v7882, %v7828
        %v7937 = vmax.bf16 %v7883, %v7829
        %v7938 = vmax.bf16 %v7884, %v7830
        %v7939 = vmax.bf16 %v7885, %v7831
        %v7940 = vmax.bf16 %v7886, %v7832
        %v7941 = vmax.bf16 %v7887, %v7833
        %v7942 = vmax.bf16 %v7888, %v7834
        %v7943 = vmax.bf16 %v7889, %v7835
        %v7944 = vmax.bf16 %v7890, %v7836
        %v7945 = vmax.bf16 %v7891, %v7837
        %v7946 = vmax.bf16 %v7892, %v7838
        %v7947 = vmax.bf16 %v7893, %v7839
        %v7948 = vmax.bf16 %v7894, %v7840
        %v7949 = vmax.bf16 %v7895, %v7841
        %v7950 = vmax.bf16 %v7896, %v7842
        %v7951 = vmax.bf16 %v7897, %v7843
        %v7952 = vmax.bf16 %v7898, %v7844
        %v7953 = vmax.bf16 %v7899, %v7845
        %v7954 = vmax.bf16 %v7900, %v7846
        %v7955 = vmax.bf16 %v7901, %v7847
        %v7956 = vmax.bf16 %v7902, %v7848
        %v7957 = vmax.bf16 %v7903, %v7849
        %v7958 = vmax.bf16 %v7904, %v7850
        %v7959 = vmax.bf16 %v7905, %v7851
        %v7960 = vmax.bf16 %v7906, %v7852
        %v7961 = vmax.bf16 %v7907, %v7853
        %v7962 = vmax.bf16 %v7908, %v7854
        %v7963 = vmax.bf16 %v7909, %v7855
        %v7964 = vmax.bf16 %v7910, %v7856
        %v7965 = vmax.bf16 %v7911, %v7857
        %v7966 = vmax.bf16 %v7912, %v7858
        %v7967 = vmax.bf16 %v7913, %v7859
        %v7968 = vmax.bf16 %v7914, %v7860
        %v7969 = vmax.bf16 %v7915, %v7861
        %v7970 = vmax.bf16 %v7916, %v7862
        %v7971 = vmax.bf16 %v7917, %v7863
        %v7972 = vmax.bf16 %v7918, %v7864
        %v7973 = vmax.bf16 %v7919, %v7865
        %v7974 = vmax.bf16 %v7920, %v7866
        %v7975 = vmax.bf16 %v7921, %v7867
        %v7976 = vmax.bf16 %v7922, %v7868
        %v7977 = vmax.bf16 %v7923, %v7869
        %v7978 = vmax.bf16 %v7924, %v7870
        %v7979 = vmax.bf16 %v7925, %v7871
        %v7980 = vmax.bf16 %v7926, %v7872
        %v7981 = vmax.bf16 %v7927, %v7873
        %v7982 = vmax.bf16 %v7928, %v7874
        %v7983 = vmax.bf16 %v7929, %v7875
        %v7984 = vmax.bf16 %v7930, %v7876
        %v7985 = vmax.bf16 %v7931, %v7877
        %v7986 = vmax.bf16 %v7932, %v7878
        %v7987 = vmax.bf16 %v7933, %v7879
        %v7988 = vmax.bf16 %v7934, %v7880
        %v7989 = vmax.bf16 %v7935, %v7881
        %v7990 = vmax.bf16 %v7936, %v7942
        %v7991 = vmax.bf16 %v7937, %v7943
        %v7992 = vmax.bf16 %v7938, %v7944
        %v7993 = vmax.bf16 %v7939, %v7945
        %v7994 = vmax.bf16 %v7940, %v7946
        %v7995 = vmax.bf16 %v7941, %v7947
        %v7996 = vmax.bf16 %v7942, %v7948
        %v7997 = vmax.bf16 %v7943, %v7949
        %v7998 = vmax.bf16 %v7944, %v7950
        %v7999 = vmax.bf16 %v7945, %v7951
        %v8000 = vmax.bf16 %v7946, %v7952
        %v8001 = vmax.bf16 %v7947, %v7953
        %v8002 = vmax.bf16 %v7948, %v7954
        %v8003 = vmax.bf16 %v7949, %v7955
        %v8004 = vmax.bf16 %v7950, %v7956
        %v8005 = vmax.bf16 %v7951, %v7957
        %v8006 = vmax.bf16 %v7952, %v7958
        %v8007 = vmax.bf16 %v7953, %v7959
        %v8008 = vmax.bf16 %v7954, %v7960
        %v8009 = vmax.bf16 %v7955, %v7961
        %v8010 = vmax.bf16 %v7956, %v7962
        %v8011 = vmax.bf16 %v7957, %v7963
        %v8012 = vmax.bf16 %v7958, %v7964
        %v8013 = vmax.bf16 %v7959, %v7965
        %v8014 = vmax.bf16 %v7960, %v7966
        %v8015 = vmax.bf16 %v7961, %v7967
        %v8016 = vmax.bf16 %v7962, %v7968
        %v8017 = vmax.bf16 %v7963, %v7969
        %v8018 = vmax.bf16 %v7964, %v7970
        %v8019 = vmax.bf16 %v7965, %v7971
        %v8020 = vmax.bf16 %v7966, %v7972
        %v8021 = vmax.bf16 %v7967, %v7973
        %v8022 = vmax.bf16 %v7968, %v7974
        %v8023 = vmax.bf16 %v7969, %v7975
        %v8024 = vmax.bf16 %v7970, %v7976
        %v8025 = vmax.bf16 %v7971, %v7977
        %v8026 = vmax.bf16 %v7972, %v7978
        %v8027 = vmax.bf16 %v7973, %v7979
        %v8028 = vmax.bf16 %v7974, %v7980
        %v8029 = vmax.bf16 %v7975, %v7981
        %v8030 = vmax.bf16 %v7976, %v7982
        %v8031 = vmax.bf16 %v7977, %v7983
        %v8032 = vmax.bf16 %v7978, %v7984
        %v8033 = vmax.bf16 %v7979, %v7985
        %v8034 = vmax.bf16 %v7980, %v7986
        %v8035 = vmax.bf16 %v7981, %v7987
        %v8036 = vmax.bf16 %v7982, %v7988
        %v8037 = vmax.bf16 %v7983, %v7989
        %v8086 = vrot.slane %v7990, 7
        %v8087 = vrot.slane %v8086, 4
        %v8088 = vrot.slane %v7991, 7
        %v8089 = vsel %vm3341, %v8087, %v8088
        %v8090 = vrot.slane %v8088, 4
        %v8091 = vrot.slane %v7992, 7
        %v8092 = vsel %vm3341, %v8090, %v8091
        %v8093 = vrot.slane %v7993, 7
        %v8094 = vrot.slane %v8093, 4
        %v8095 = vrot.slane %v7994, 7
        %v8096 = vsel %vm3341, %v8094, %v8095
        %v8097 = vrot.slane %v8095, 4
        %v8098 = vrot.slane %v7995, 7
        %v8099 = vsel %vm3341, %v8097, %v8098
        %v8100 = vrot.slane %v7996, 7
        %v8101 = vrot.slane %v8100, 4
        %v8102 = vrot.slane %v7997, 7
        %v8103 = vsel %vm3341, %v8101, %v8102
        %v8104 = vrot.slane %v8102, 4
        %v8105 = vrot.slane %v7998, 7
        %v8106 = vsel %vm3341, %v8104, %v8105
        %v8107 = vrot.slane %v7999, 7
        %v8108 = vrot.slane %v8107, 4
        %v8109 = vrot.slane %v8000, 7
        %v8110 = vsel %vm3341, %v8108, %v8109
        %v8111 = vrot.slane %v8109, 4
        %v8112 = vrot.slane %v8001, 7
        %v8113 = vsel %vm3341, %v8111, %v8112
        %v8114 = vrot.slane %v8002, 7
        %v8115 = vrot.slane %v8114, 4
        %v8116 = vrot.slane %v8003, 7
        %v8117 = vsel %vm3341, %v8115, %v8116
        %v8118 = vrot.slane %v8116, 4
        %v8119 = vrot.slane %v8004, 7
        %v8120 = vsel %vm3341, %v8118, %v8119
        %v8121 = vrot.slane %v8005, 7
        %v8122 = vrot.slane %v8121, 4
        %v8123 = vrot.slane %v8006, 7
        %v8124 = vsel %vm3341, %v8122, %v8123
        %v8125 = vrot.slane %v8123, 4
        %v8126 = vrot.slane %v8007, 7
        %v8127 = vsel %vm3341, %v8125, %v8126
        %v8128 = vrot.slane %v8008, 7
        %v8129 = vrot.slane %v8128, 4
        %v8130 = vrot.slane %v8009, 7
        %v8131 = vsel %vm3341, %v8129, %v8130
        %v8132 = vrot.slane %v8130, 4
        %v8133 = vrot.slane %v8010, 7
        %v8134 = vsel %vm3341, %v8132, %v8133
        %v8135 = vrot.slane %v8011, 7
        %v8136 = vrot.slane %v8135, 4
        %v8137 = vrot.slane %v8012, 7
        %v8138 = vsel %vm3341, %v8136, %v8137
        %v8139 = vrot.slane %v8137, 4
        %v8140 = vrot.slane %v8013, 7
        %v8141 = vsel %vm3341, %v8139, %v8140
        %v8142 = vrot.slane %v8014, 7
        %v8143 = vrot.slane %v8142, 4
        %v8144 = vrot.slane %v8015, 7
        %v8145 = vsel %vm3341, %v8143, %v8144
        %v8146 = vrot.slane %v8144, 4
        %v8147 = vrot.slane %v8016, 7
        %v8148 = vsel %vm3341, %v8146, %v8147
        %v8149 = vrot.slane %v8017, 7
        %v8150 = vrot.slane %v8149, 4
        %v8151 = vrot.slane %v8018, 7
        %v8152 = vsel %vm3341, %v8150, %v8151
        %v8153 = vrot.slane %v8151, 4
        %v8154 = vrot.slane %v8019, 7
        %v8155 = vsel %vm3341, %v8153, %v8154
        %v8156 = vrot.slane %v8020, 7
        %v8157 = vrot.slane %v8156, 4
        %v8158 = vrot.slane %v8021, 7
        %v8159 = vsel %vm3341, %v8157, %v8158
        %v8160 = vrot.slane %v8158, 4
        %v8161 = vrot.slane %v8022, 7
        %v8162 = vsel %vm3341, %v8160, %v8161
        %v8163 = vrot.slane %v8023, 7
        %v8164 = vrot.slane %v8163, 4
        %v8165 = vrot.slane %v8024, 7
        %v8166 = vsel %vm3341, %v8164, %v8165
        %v8167 = vrot.slane %v8165, 4
        %v8168 = vrot.slane %v8025, 7
        %v8169 = vsel %vm3341, %v8167, %v8168
        %v8170 = vrot.slane %v8026, 7
        %v8171 = vrot.slane %v8170, 4
        %v8172 = vrot.slane %v8027, 7
        %v8173 = vsel %vm3341, %v8171, %v8172
        %v8174 = vrot.slane %v8172, 4
        %v8175 = vrot.slane %v8028, 7
        %v8176 = vsel %vm3341, %v8174, %v8175
        %v8177 = vrot.slane %v8029, 7
        %v8178 = vrot.slane %v8177, 4
        %v8179 = vrot.slane %v8030, 7
        %v8180 = vsel %vm3341, %v8178, %v8179
        %v8181 = vrot.slane %v8179, 4
        %v8182 = vrot.slane %v8031, 7
        %v8183 = vsel %vm3341, %v8181, %v8182
        %v8184 = vrot.slane %v8032, 7
        %v8185 = vrot.slane %v8184, 4
        %v8186 = vrot.slane %v8033, 7
        %v8187 = vsel %vm3341, %v8185, %v8186
        %v8188 = vrot.slane %v8186, 4
        %v8189 = vrot.slane %v8034, 7
        %v8190 = vsel %vm3341, %v8188, %v8189
        %v8191 = vrot.slane %v8035, 7
        %v8192 = vrot.slane %v8191, 4
        %v8193 = vrot.slane %v8036, 7
        %v8194 = vsel %vm3341, %v8192, %v8193
        %v8195 = vrot.slane %v8193, 4
        %v8196 = vrot.slane %v8037, 7
        %v8197 = vsel %vm3341, %v8195, %v8196
        %8230 = vst [vmem:[#allocation3 + $0xc] sm:$0xf] %v8089
        %8231 = vst [vmem:[#allocation3 + $0x1c] sm:$0xf] %v8092
        %8232 = vst [vmem:[#allocation3 + $0x2c] sm:$0xf] %v8096
        %8233 = vst [vmem:[#allocation3 + $0x3c] sm:$0xf] %v8099
        %8234 = vst [vmem:[#allocation3 + $0x4c] sm:$0xf] %v8103
        %8235 = vst [vmem:[#allocation3 + $0x5c] sm:$0xf] %v8106
        %8236 = vst [vmem:[#allocation3 + $0x6c] sm:$0xf] %v8110
        %8237 = vst [vmem:[#allocation3 + $0x7c] sm:$0xf] %v8113
        %8238 = vst [vmem:[#allocation3 + $0x8c] sm:$0xf] %v8117
        %8239 = vst [vmem:[#allocation3 + $0x9c] sm:$0xf] %v8120
        %8240 = vst [vmem:[#allocation3 + $0xac] sm:$0xf] %v8124
        %8241 = vst [vmem:[#allocation3 + $0xbc] sm:$0xf] %v8127
        %8242 = vst [vmem:[#allocation3 + $0xcc] sm:$0xf] %v8131
        %8243 = vst [vmem:[#allocation3 + $0xdc] sm:$0xf] %v8134
        %8244 = vst [vmem:[#allocation3 + $0xec] sm:$0xf] %v8138
        %8245 = vst [vmem:[#allocation3 + $0xfc] sm:$0xf] %v8141
        %8246 = vst [vmem:[#allocation3 + $0x10c] sm:$0xf] %v8145
        %8247 = vst [vmem:[#allocation3 + $0x11c] sm:$0xf] %v8148
        %8248 = vst [vmem:[#allocation3 + $0x12c] sm:$0xf] %v8152
        %8249 = vst [vmem:[#allocation3 + $0x13c] sm:$0xf] %v8155
        %8250 = vst [vmem:[#allocation3 + $0x14c] sm:$0xf] %v8159
        %8251 = vst [vmem:[#allocation3 + $0x15c] sm:$0xf] %v8162
        %8252 = vst [vmem:[#allocation3 + $0x16c] sm:$0xf] %v8166
        %8253 = vst [vmem:[#allocation3 + $0x17c] sm:$0xf] %v8169
        %8254 = vst [vmem:[#allocation3 + $0x18c] sm:$0xf] %v8173
        %8255 = vst [vmem:[#allocation3 + $0x19c] sm:$0xf] %v8176
        %8256 = vst [vmem:[#allocation3 + $0x1ac] sm:$0xf] %v8180
        %8257 = vst [vmem:[#allocation3 + $0x1bc] sm:$0xf] %v8183
        %8258 = vst [vmem:[#allocation3 + $0x1cc] sm:$0xf] %v8187
        %8259 = vst [vmem:[#allocation3 + $0x1dc] sm:$0xf] %v8190
        %8260 = vst [vmem:[#allocation3 + $0x1ec] sm:$0xf] %v8194
        %8261 = vst [vmem:[#allocation3 + $0x1fc] sm:$0xf] %v8197
        %v8262 = vld [vmem:[#allocation3] sm:$0xff]
        %v8263 = vld [vmem:[#allocation3 + $0x8] sm:$0xff]
        %v8264 = vld [vmem:[#allocation3 + $0x10] sm:$0xff]
        %v8265 = vld [vmem:[#allocation3 + $0x18] sm:$0xff]
        %v8266 = vld [vmem:[#allocation3 + $0x20] sm:$0xff]
        %v8267 = vld [vmem:[#allocation3 + $0x28] sm:$0xff]
        %v8268 = vld [vmem:[#allocation3 + $0x30] sm:$0xff]
        %v8269 = vld [vmem:[#allocation3 + $0x38] sm:$0xff]
        %v8270 = vld [vmem:[#allocation3 + $0x40] sm:$0xff]
        %v8271 = vld [vmem:[#allocation3 + $0x48] sm:$0xff]
        %v8272 = vld [vmem:[#allocation3 + $0x50] sm:$0xff]
        %v8273 = vld [vmem:[#allocation3 + $0x58] sm:$0xff]
        %v8274 = vld [vmem:[#allocation3 + $0x60] sm:$0xff]
        %v8275 = vld [vmem:[#allocation3 + $0x68] sm:$0xff]
        %v8276 = vld [vmem:[#allocation3 + $0x70] sm:$0xff]
        %v8277 = vld [vmem:[#allocation3 + $0x78] sm:$0xff]
        %v8278 = vld [vmem:[#allocation3 + $0x80] sm:$0xff]
        %v8279 = vld [vmem:[#allocation3 + $0x88] sm:$0xff]
        %v8280 = vld [vmem:[#allocation3 + $0x90] sm:$0xff]
        %v8281 = vld [vmem:[#allocation3 + $0x98] sm:$0xff]
        %v8282 = vld [vmem:[#allocation3 + $0xa0] sm:$0xff]
        %v8283 = vld [vmem:[#allocation3 + $0xa8] sm:$0xff]
        %v8284 = vld [vmem:[#allocation3 + $0xb0] sm:$0xff]
        %v8285 = vld [vmem:[#allocation3 + $0xb8] sm:$0xff]
        %v8286 = vld [vmem:[#allocation3 + $0xc0] sm:$0xff]
        %v8287 = vld [vmem:[#allocation3 + $0xc8] sm:$0xff]
        %v8288 = vld [vmem:[#allocation3 + $0xd0] sm:$0xff]
        %v8289 = vld [vmem:[#allocation3 + $0xd8] sm:$0xff]
        %v8290 = vld [vmem:[#allocation3 + $0xe0] sm:$0xff]
        %v8291 = vld [vmem:[#allocation3 + $0xe8] sm:$0xff]
        %v8292 = vld [vmem:[#allocation3 + $0xf0] sm:$0xff]
        %v8293 = vld [vmem:[#allocation3 + $0xf8] sm:$0xff]
        %v8294 = vld [vmem:[#allocation3 + $0x100] sm:$0xff]
        %v8295 = vld [vmem:[#allocation3 + $0x108] sm:$0xff]
        %v8296 = vld [vmem:[#allocation3 + $0x110] sm:$0xff]
        %v8297 = vld [vmem:[#allocation3 + $0x118] sm:$0xff]
        %v8298 = vld [vmem:[#allocation3 + $0x120] sm:$0xff]
        %v8299 = vld [vmem:[#allocation3 + $0x128] sm:$0xff]
        %v8300 = vld [vmem:[#allocation3 + $0x130] sm:$0xff]
        %v8301 = vld [vmem:[#allocation3 + $0x138] sm:$0xff]
        %v8302 = vld [vmem:[#allocation3 + $0x140] sm:$0xff]
        %v8303 = vld [vmem:[#allocation3 + $0x148] sm:$0xff]
        %v8304 = vld [vmem:[#allocation3 + $0x150] sm:$0xff]
        %v8305 = vld [vmem:[#allocation3 + $0x158] sm:$0xff]
        %v8306 = vld [vmem:[#allocation3 + $0x160] sm:$0xff]
        %v8307 = vld [vmem:[#allocation3 + $0x168] sm:$0xff]
        %v8308 = vld [vmem:[#allocation3 + $0x170] sm:$0xff]
        %v8309 = vld [vmem:[#allocation3 + $0x178] sm:$0xff]
        %v8310 = vld [vmem:[#allocation3 + $0x180] sm:$0xff]
        %v8311 = vld [vmem:[#allocation3 + $0x188] sm:$0xff]
        %v8312 = vld [vmem:[#allocation3 + $0x190] sm:$0xff]
        %v8313 = vld [vmem:[#allocation3 + $0x198] sm:$0xff]
        %v8314 = vld [vmem:[#allocation3 + $0x1a0] sm:$0xff]
        %v8315 = vld [vmem:[#allocation3 + $0x1a8] sm:$0xff]
        %v8316 = vld [vmem:[#allocation3 + $0x1b0] sm:$0xff]
        %v8317 = vld [vmem:[#allocation3 + $0x1b8] sm:$0xff]
        %v8318 = vld [vmem:[#allocation3 + $0x1c0] sm:$0xff]
        %v8319 = vld [vmem:[#allocation3 + $0x1c8] sm:$0xff]
        %v8320 = vld [vmem:[#allocation3 + $0x1d0] sm:$0xff]
        %v8321 = vld [vmem:[#allocation3 + $0x1d8] sm:$0xff]
        %v8322 = vld [vmem:[#allocation3 + $0x1e0] sm:$0xff]
        %v8323 = vld [vmem:[#allocation3 + $0x1e8] sm:$0xff]
        %v8324 = vld [vmem:[#allocation3 + $0x1f0] sm:$0xff]
        %v8325 = vld [vmem:[#allocation3 + $0x1f8] sm:$0xff]
        %v8326 = vld [vmem:[#allocation9] sm:$0xff]
        %v8327 = vld [vmem:[#allocation9 + $0x8] sm:$0xff]
        %v8328 = vld [vmem:[#allocation9 + $0x10] sm:$0xff]
        %v8329 = vld [vmem:[#allocation9 + $0x18] sm:$0xff]
        %v8330 = vld [vmem:[#allocation9 + $0x20] sm:$0xff]
        %v8331 = vld [vmem:[#allocation9 + $0x28] sm:$0xff]
        %v8332 = vld [vmem:[#allocation9 + $0x30] sm:$0xff]
        %v8333 = vld [vmem:[#allocation9 + $0x38] sm:$0xff]
        %v8334 = vld [vmem:[#allocation9 + $0x40] sm:$0xff]
        %v8335 = vld [vmem:[#allocation9 + $0x48] sm:$0xff]
        %v8336 = vld [vmem:[#allocation9 + $0x50] sm:$0xff]
        %v8337 = vld [vmem:[#allocation9 + $0x58] sm:$0xff]
        %v8338 = vld [vmem:[#allocation9 + $0x60] sm:$0xff]
        %v8339 = vld [vmem:[#allocation9 + $0x68] sm:$0xff]
        %v8340 = vld [vmem:[#allocation9 + $0x70] sm:$0xff]
        %v8341 = vld [vmem:[#allocation9 + $0x78] sm:$0xff]
        %v8342 = vld [vmem:[#allocation9 + $0x80] sm:$0xff]
        %v8343 = vld [vmem:[#allocation9 + $0x88] sm:$0xff]
        %v8344 = vld [vmem:[#allocation9 + $0x90] sm:$0xff]
        %v8345 = vld [vmem:[#allocation9 + $0x98] sm:$0xff]
        %v8346 = vld [vmem:[#allocation9 + $0xa0] sm:$0xff]
        %v8347 = vld [vmem:[#allocation9 + $0xa8] sm:$0xff]
        %v8348 = vld [vmem:[#allocation9 + $0xb0] sm:$0xff]
        %v8349 = vld [vmem:[#allocation9 + $0xb8] sm:$0xff]
        %v8350 = vld [vmem:[#allocation9 + $0xc0] sm:$0xff]
        %v8351 = vld [vmem:[#allocation9 + $0xc8] sm:$0xff]
        %v8352 = vld [vmem:[#allocation9 + $0xd0] sm:$0xff]
        %v8353 = vld [vmem:[#allocation9 + $0xd8] sm:$0xff]
        %v8354 = vld [vmem:[#allocation9 + $0xe0] sm:$0xff]
        %v8355 = vld [vmem:[#allocation9 + $0xe8] sm:$0xff]
        %v8356 = vld [vmem:[#allocation9 + $0xf0] sm:$0xff]
        %v8357 = vld [vmem:[#allocation9 + $0xf8] sm:$0xff]
        %v8358 = vld [vmem:[#allocation9 + $0x100] sm:$0xff]
        %v8359 = vld [vmem:[#allocation9 + $0x108] sm:$0xff]
        %v8360 = vld [vmem:[#allocation9 + $0x110] sm:$0xff]
        %v8361 = vld [vmem:[#allocation9 + $0x118] sm:$0xff]
        %v8362 = vld [vmem:[#allocation9 + $0x120] sm:$0xff]
        %v8363 = vld [vmem:[#allocation9 + $0x128] sm:$0xff]
        %v8364 = vld [vmem:[#allocation9 + $0x130] sm:$0xff]
        %v8365 = vld [vmem:[#allocation9 + $0x138] sm:$0xff]
        %v8366 = vld [vmem:[#allocation9 + $0x140] sm:$0xff]
        %v8367 = vld [vmem:[#allocation9 + $0x148] sm:$0xff]
        %v8368 = vld [vmem:[#allocation9 + $0x150] sm:$0xff]
        %v8369 = vld [vmem:[#allocation9 + $0x158] sm:$0xff]
        %v8370 = vld [vmem:[#allocation9 + $0x160] sm:$0xff]
        %v8371 = vld [vmem:[#allocation9 + $0x168] sm:$0xff]
        %v8372 = vld [vmem:[#allocation9 + $0x170] sm:$0xff]
        %v8373 = vld [vmem:[#allocation9 + $0x178] sm:$0xff]
        %v8374 = vld [vmem:[#allocation9 + $0x180] sm:$0xff]
        %v8375 = vld [vmem:[#allocation9 + $0x188] sm:$0xff]
        %v8376 = vld [vmem:[#allocation9 + $0x190] sm:$0xff]
        %v8377 = vld [vmem:[#allocation9 + $0x198] sm:$0xff]
        %v8378 = vld [vmem:[#allocation9 + $0x1a0] sm:$0xff]
        %v8379 = vld [vmem:[#allocation9 + $0x1a8] sm:$0xff]
        %v8380 = vld [vmem:[#allocation9 + $0x1b0] sm:$0xff]
        %v8381 = vld [vmem:[#allocation9 + $0x1b8] sm:$0xff]
        %v8382 = vld [vmem:[#allocation9 + $0x1c0] sm:$0xff]
        %v8383 = vld [vmem:[#allocation9 + $0x1c8] sm:$0xff]
        %v8384 = vld [vmem:[#allocation9 + $0x1d0] sm:$0xff]
        %v8385 = vld [vmem:[#allocation9 + $0x1d8] sm:$0xff]
        %v8386 = vld [vmem:[#allocation9 + $0x1e0] sm:$0xff]
        %v8387 = vld [vmem:[#allocation9 + $0x1e8] sm:$0xff]
        %v8388 = vld [vmem:[#allocation9 + $0x1f0] sm:$0xff]
        %v8389 = vld [vmem:[#allocation9 + $0x1f8] sm:$0xff]
        %v8390 = vld [vmem:[%s4] sm:$0x3]
        %v8392 = vlaneseq
        %v8393 = vshrl.u32 %v8392, 7
        %v8394 = vsub.s32 0, %v8393
        %v8395 = vrot.slane %v8390, %v8394
        %v8396 = vlaneseq
        %v8397 = vshrl.u32 %v8396, 7
        %v8398 = vsub.s32 1, %v8397
        %v8399 = vrot.slane %v8390, %v8398
        %v8466 = vunpack.c.l.b16 %v8262
        %v8467 = vunpack.c.h.b16 %v8262
        %v8468 = vunpack.c.l.b16 %v8263
        %v8469 = vunpack.c.h.b16 %v8263
        %v8470 = vunpack.c.l.b16 %v8264
        %v8471 = vunpack.c.h.b16 %v8264
        %v8472 = vunpack.c.l.b16 %v8265
        %v8473 = vunpack.c.h.b16 %v8265
        %v8474 = vunpack.c.l.b16 %v8266
        %v8475 = vunpack.c.h.b16 %v8266
        %v8476 = vunpack.c.l.b16 %v8267
        %v8477 = vunpack.c.h.b16 %v8267
        %v8478 = vunpack.c.l.b16 %v8268
        %v8479 = vunpack.c.h.b16 %v8268
        %v8480 = vunpack.c.l.b16 %v8269
        %v8481 = vunpack.c.h.b16 %v8269
        %v8482 = vunpack.c.l.b16 %v8270
        %v8483 = vunpack.c.h.b16 %v8270
        %v8484 = vunpack.c.l.b16 %v8271
        %v8485 = vunpack.c.h.b16 %v8271
        %v8486 = vunpack.c.l.b16 %v8272
        %v8487 = vunpack.c.h.b16 %v8272
        %v8488 = vunpack.c.l.b16 %v8273
        %v8489 = vunpack.c.h.b16 %v8273
        %v8490 = vunpack.c.l.b16 %v8274
        %v8491 = vunpack.c.h.b16 %v8274
        %v8492 = vunpack.c.l.b16 %v8275
        %v8493 = vunpack.c.h.b16 %v8275
        %v8494 = vunpack.c.l.b16 %v8276
        %v8495 = vunpack.c.h.b16 %v8276
        %v8496 = vunpack.c.l.b16 %v8277
        %v8497 = vunpack.c.h.b16 %v8277
        %v8498 = vunpack.c.l.b16 %v8278
        %v8499 = vunpack.c.h.b16 %v8278
        %v8500 = vunpack.c.l.b16 %v8279
        %v8501 = vunpack.c.h.b16 %v8279
        %v8502 = vunpack.c.l.b16 %v8280
        %v8503 = vunpack.c.h.b16 %v8280
        %v8504 = vunpack.c.l.b16 %v8281
        %v8505 = vunpack.c.h.b16 %v8281
        %v8506 = vunpack.c.l.b16 %v8282
        %v8507 = vunpack.c.h.b16 %v8282
        %v8508 = vunpack.c.l.b16 %v8283
        %v8509 = vunpack.c.h.b16 %v8283
        %v8510 = vunpack.c.l.b16 %v8284
        %v8511 = vunpack.c.h.b16 %v8284
        %v8512 = vunpack.c.l.b16 %v8285
        %v8513 = vunpack.c.h.b16 %v8285
        %v8514 = vunpack.c.l.b16 %v8286
        %v8515 = vunpack.c.h.b16 %v8286
        %v8516 = vunpack.c.l.b16 %v8287
        %v8517 = vunpack.c.h.b16 %v8287
        %v8518 = vunpack.c.l.b16 %v8288
        %v8519 = vunpack.c.h.b16 %v8288
        %v8520 = vunpack.c.l.b16 %v8289
        %v8521 = vunpack.c.h.b16 %v8289
        %v8522 = vunpack.c.l.b16 %v8290
        %v8523 = vunpack.c.h.b16 %v8290
        %v8524 = vunpack.c.l.b16 %v8291
        %v8525 = vunpack.c.h.b16 %v8291
        %v8526 = vunpack.c.l.b16 %v8292
        %v8527 = vunpack.c.h.b16 %v8292
        %v8528 = vunpack.c.l.b16 %v8293
        %v8529 = vunpack.c.h.b16 %v8293
        %v8530 = vunpack.c.l.b16 %v8294
        %v8531 = vunpack.c.h.b16 %v8294
        %v8532 = vunpack.c.l.b16 %v8295
        %v8533 = vunpack.c.h.b16 %v8295
        %v8534 = vunpack.c.l.b16 %v8296
        %v8535 = vunpack.c.h.b16 %v8296
        %v8536 = vunpack.c.l.b16 %v8297
        %v8537 = vunpack.c.h.b16 %v8297
        %v8538 = vunpack.c.l.b16 %v8298
        %v8539 = vunpack.c.h.b16 %v8298
        %v8540 = vunpack.c.l.b16 %v8299
        %v8541 = vunpack.c.h.b16 %v8299
        %v8542 = vunpack.c.l.b16 %v8300
        %v8543 = vunpack.c.h.b16 %v8300
        %v8544 = vunpack.c.l.b16 %v8301
        %v8545 = vunpack.c.h.b16 %v8301
        %v8546 = vunpack.c.l.b16 %v8302
        %v8547 = vunpack.c.h.b16 %v8302
        %v8548 = vunpack.c.l.b16 %v8303
        %v8549 = vunpack.c.h.b16 %v8303
        %v8550 = vunpack.c.l.b16 %v8304
        %v8551 = vunpack.c.h.b16 %v8304
        %v8552 = vunpack.c.l.b16 %v8305
        %v8553 = vunpack.c.h.b16 %v8305
        %v8554 = vunpack.c.l.b16 %v8306
        %v8555 = vunpack.c.h.b16 %v8306
        %v8556 = vunpack.c.l.b16 %v8307
        %v8557 = vunpack.c.h.b16 %v8307
        %v8558 = vunpack.c.l.b16 %v8308
        %v8559 = vunpack.c.h.b16 %v8308
        %v8560 = vunpack.c.l.b16 %v8309
        %v8561 = vunpack.c.h.b16 %v8309
        %v8562 = vunpack.c.l.b16 %v8310
        %v8563 = vunpack.c.h.b16 %v8310
        %v8564 = vunpack.c.l.b16 %v8311
        %v8565 = vunpack.c.h.b16 %v8311
        %v8566 = vunpack.c.l.b16 %v8312
        %v8567 = vunpack.c.h.b16 %v8312
        %v8568 = vunpack.c.l.b16 %v8313
        %v8569 = vunpack.c.h.b16 %v8313
        %v8570 = vunpack.c.l.b16 %v8314
        %v8571 = vunpack.c.h.b16 %v8314
        %v8572 = vunpack.c.l.b16 %v8315
        %v8573 = vunpack.c.h.b16 %v8315
        %v8574 = vunpack.c.l.b16 %v8316
        %v8575 = vunpack.c.h.b16 %v8316
        %v8576 = vunpack.c.l.b16 %v8317
        %v8577 = vunpack.c.h.b16 %v8317
        %v8578 = vunpack.c.l.b16 %v8318
        %v8579 = vunpack.c.h.b16 %v8318
        %v8580 = vunpack.c.l.b16 %v8319
        %v8581 = vunpack.c.h.b16 %v8319
        %v8582 = vunpack.c.l.b16 %v8320
        %v8583 = vunpack.c.h.b16 %v8320
        %v8584 = vunpack.c.l.b16 %v8321
        %v8585 = vunpack.c.h.b16 %v8321
        %v8586 = vunpack.c.l.b16 %v8322
        %v8587 = vunpack.c.h.b16 %v8322
        %v8588 = vunpack.c.l.b16 %v8323
        %v8589 = vunpack.c.h.b16 %v8323
        %v8590 = vunpack.c.l.b16 %v8324
        %v8591 = vunpack.c.h.b16 %v8324
        %v8592 = vunpack.c.l.b16 %v8325
        %v8593 = vunpack.c.h.b16 %v8325
        %v8594 = vpack.c.b16 %v8470, %v8466
        %v8595 = vpack.c.b16 %v8471, %v8467
        %v8596 = vpack.c.b16 %v8472, %v8468
        %v8597 = vpack.c.b16 %v8473, %v8469
        %v8598 = vpack.c.b16 %v8478, %v8474
        %v8599 = vpack.c.b16 %v8479, %v8475
        %v8600 = vpack.c.b16 %v8480, %v8476
        %v8601 = vpack.c.b16 %v8481, %v8477
        %v8602 = vpack.c.b16 %v8486, %v8482
        %v8603 = vpack.c.b16 %v8487, %v8483
        %v8604 = vpack.c.b16 %v8488, %v8484
        %v8605 = vpack.c.b16 %v8489, %v8485
        %v8606 = vpack.c.b16 %v8494, %v8490
        %v8607 = vpack.c.b16 %v8495, %v8491
        %v8608 = vpack.c.b16 %v8496, %v8492
        %v8609 = vpack.c.b16 %v8497, %v8493
        %v8610 = vpack.c.b16 %v8502, %v8498
        %v8611 = vpack.c.b16 %v8503, %v8499
        %v8612 = vpack.c.b16 %v8504, %v8500
        %v8613 = vpack.c.b16 %v8505, %v8501
        %v8614 = vpack.c.b16 %v8510, %v8506
        %v8615 = vpack.c.b16 %v8511, %v8507
        %v8616 = vpack.c.b16 %v8512, %v8508
        %v8617 = vpack.c.b16 %v8513, %v8509
        %v8618 = vpack.c.b16 %v8518, %v8514
        %v8619 = vpack.c.b16 %v8519, %v8515
        %v8620 = vpack.c.b16 %v8520, %v8516
        %v8621 = vpack.c.b16 %v8521, %v8517
        %v8622 = vpack.c.b16 %v8526, %v8522
        %v8623 = vpack.c.b16 %v8527, %v8523
        %v8624 = vpack.c.b16 %v8528, %v8524
        %v8625 = vpack.c.b16 %v8529, %v8525
        %v8626 = vpack.c.b16 %v8534, %v8530
        %v8627 = vpack.c.b16 %v8535, %v8531
        %v8628 = vpack.c.b16 %v8536, %v8532
        %v8629 = vpack.c.b16 %v8537, %v8533
        %v8630 = vpack.c.b16 %v8542, %v8538
        %v8631 = vpack.c.b16 %v8543, %v8539
        %v8632 = vpack.c.b16 %v8544, %v8540
        %v8633 = vpack.c.b16 %v8545, %v8541
        %v8634 = vpack.c.b16 %v8550, %v8546
        %v8635 = vpack.c.b16 %v8551, %v8547
        %v8636 = vpack.c.b16 %v8552, %v8548
        %v8637 = vpack.c.b16 %v8553, %v8549
        %v8638 = vpack.c.b16 %v8558, %v8554
        %v8639 = vpack.c.b16 %v8559, %v8555
        %v8640 = vpack.c.b16 %v8560, %v8556
        %v8641 = vpack.c.b16 %v8561, %v8557
        %v8642 = vpack.c.b16 %v8566, %v8562
        %v8643 = vpack.c.b16 %v8567, %v8563
        %v8644 = vpack.c.b16 %v8568, %v8564
        %v8645 = vpack.c.b16 %v8569, %v8565
        %v8646 = vpack.c.b16 %v8574, %v8570
        %v8647 = vpack.c.b16 %v8575, %v8571
        %v8648 = vpack.c.b16 %v8576, %v8572
        %v8649 = vpack.c.b16 %v8577, %v8573
        %v8650 = vpack.c.b16 %v8582, %v8578
        %v8651 = vpack.c.b16 %v8583, %v8579
        %v8652 = vpack.c.b16 %v8584, %v8580
        %v8653 = vpack.c.b16 %v8585, %v8581
        %v8654 = vpack.c.b16 %v8590, %v8586
        %v8655 = vpack.c.b16 %v8591, %v8587
        %v8656 = vpack.c.b16 %v8592, %v8588
        %v8657 = vpack.c.b16 %v8593, %v8589
        %v8786 = vunpack.c.l.b16 %v8326
        %v8787 = vunpack.c.h.b16 %v8326
        %v8788 = vunpack.c.l.b16 %v8327
        %v8789 = vunpack.c.h.b16 %v8327
        %v8790 = vunpack.c.l.b16 %v8328
        %v8791 = vunpack.c.h.b16 %v8328
        %v8792 = vunpack.c.l.b16 %v8329
        %v8793 = vunpack.c.h.b16 %v8329
        %v8794 = vunpack.c.l.b16 %v8330
        %v8795 = vunpack.c.h.b16 %v8330
        %v8796 = vunpack.c.l.b16 %v8331
        %v8797 = vunpack.c.h.b16 %v8331
        %v8798 = vunpack.c.l.b16 %v8332
        %v8799 = vunpack.c.h.b16 %v8332
        %v8800 = vunpack.c.l.b16 %v8333
        %v8801 = vunpack.c.h.b16 %v8333
        %v8802 = vunpack.c.l.b16 %v8334
        %v8803 = vunpack.c.h.b16 %v8334
        %v8804 = vunpack.c.l.b16 %v8335
        %v8805 = vunpack.c.h.b16 %v8335
        %v8806 = vunpack.c.l.b16 %v8336
        %v8807 = vunpack.c.h.b16 %v8336
        %v8808 = vunpack.c.l.b16 %v8337
        %v8809 = vunpack.c.h.b16 %v8337
        %v8810 = vunpack.c.l.b16 %v8338
        %v8811 = vunpack.c.h.b16 %v8338
        %v8812 = vunpack.c.l.b16 %v8339
        %v8813 = vunpack.c.h.b16 %v8339
        %v8814 = vunpack.c.l.b16 %v8340
        %v8815 = vunpack.c.h.b16 %v8340
        %v8816 = vunpack.c.l.b16 %v8341
        %v8817 = vunpack.c.h.b16 %v8341
        %v8818 = vunpack.c.l.b16 %v8342
        %v8819 = vunpack.c.h.b16 %v8342
        %v8820 = vunpack.c.l.b16 %v8343
        %v8821 = vunpack.c.h.b16 %v8343
        %v8822 = vunpack.c.l.b16 %v8344
        %v8823 = vunpack.c.h.b16 %v8344
        %v8824 = vunpack.c.l.b16 %v8345
        %v8825 = vunpack.c.h.b16 %v8345
        %v8826 = vunpack.c.l.b16 %v8346
        %v8827 = vunpack.c.h.b16 %v8346
        %v8828 = vunpack.c.l.b16 %v8347
        %v8829 = vunpack.c.h.b16 %v8347
        %v8830 = vunpack.c.l.b16 %v8348
        %v8831 = vunpack.c.h.b16 %v8348
        %v8832 = vunpack.c.l.b16 %v8349
        %v8833 = vunpack.c.h.b16 %v8349
        %v8834 = vunpack.c.l.b16 %v8350
        %v8835 = vunpack.c.h.b16 %v8350
        %v8836 = vunpack.c.l.b16 %v8351
        %v8837 = vunpack.c.h.b16 %v8351
        %v8838 = vunpack.c.l.b16 %v8352
        %v8839 = vunpack.c.h.b16 %v8352
        %v8840 = vunpack.c.l.b16 %v8353
        %v8841 = vunpack.c.h.b16 %v8353
        %v8842 = vunpack.c.l.b16 %v8354
        %v8843 = vunpack.c.h.b16 %v8354
        %v8844 = vunpack.c.l.b16 %v8355
        %v8845 = vunpack.c.h.b16 %v8355
        %v8846 = vunpack.c.l.b16 %v8356
        %v8847 = vunpack.c.h.b16 %v8356
        %v8848 = vunpack.c.l.b16 %v8357
        %v8849 = vunpack.c.h.b16 %v8357
        %v8850 = vunpack.c.l.b16 %v8358
        %v8851 = vunpack.c.h.b16 %v8358
        %v8852 = vunpack.c.l.b16 %v8359
        %v8853 = vunpack.c.h.b16 %v8359
        %v8854 = vunpack.c.l.b16 %v8360
        %v8855 = vunpack.c.h.b16 %v8360
        %v8856 = vunpack.c.l.b16 %v8361
        %v8857 = vunpack.c.h.b16 %v8361
        %v8858 = vunpack.c.l.b16 %v8362
        %v8859 = vunpack.c.h.b16 %v8362
        %v8860 = vunpack.c.l.b16 %v8363
        %v8861 = vunpack.c.h.b16 %v8363
        %v8862 = vunpack.c.l.b16 %v8364
        %v8863 = vunpack.c.h.b16 %v8364
        %v8864 = vunpack.c.l.b16 %v8365
        %v8865 = vunpack.c.h.b16 %v8365
        %v8866 = vunpack.c.l.b16 %v8366
        %v8867 = vunpack.c.h.b16 %v8366
        %v8868 = vunpack.c.l.b16 %v8367
        %v8869 = vunpack.c.h.b16 %v8367
        %v8870 = vunpack.c.l.b16 %v8368
        %v8871 = vunpack.c.h.b16 %v8368
        %v8872 = vunpack.c.l.b16 %v8369
        %v8873 = vunpack.c.h.b16 %v8369
        %v8874 = vunpack.c.l.b16 %v8370
        %v8875 = vunpack.c.h.b16 %v8370
        %v8876 = vunpack.c.l.b16 %v8371
        %v8877 = vunpack.c.h.b16 %v8371
        %v8878 = vunpack.c.l.b16 %v8372
        %v8879 = vunpack.c.h.b16 %v8372
        %v8880 = vunpack.c.l.b16 %v8373
        %v8881 = vunpack.c.h.b16 %v8373
        %v8882 = vunpack.c.l.b16 %v8374
        %v8883 = vunpack.c.h.b16 %v8374
        %v8884 = vunpack.c.l.b16 %v8375
        %v8885 = vunpack.c.h.b16 %v8375
        %v8886 = vunpack.c.l.b16 %v8376
        %v8887 = vunpack.c.h.b16 %v8376
        %v8888 = vunpack.c.l.b16 %v8377
        %v8889 = vunpack.c.h.b16 %v8377
        %v8890 = vunpack.c.l.b16 %v8378
        %v8891 = vunpack.c.h.b16 %v8378
        %v8892 = vunpack.c.l.b16 %v8379
        %v8893 = vunpack.c.h.b16 %v8379
        %v8894 = vunpack.c.l.b16 %v8380
        %v8895 = vunpack.c.h.b16 %v8380
        %v8896 = vunpack.c.l.b16 %v8381
        %v8897 = vunpack.c.h.b16 %v8381
        %v8898 = vunpack.c.l.b16 %v8382
        %v8899 = vunpack.c.h.b16 %v8382
        %v8900 = vunpack.c.l.b16 %v8383
        %v8901 = vunpack.c.h.b16 %v8383
        %v8902 = vunpack.c.l.b16 %v8384
        %v8903 = vunpack.c.h.b16 %v8384
        %v8904 = vunpack.c.l.b16 %v8385
        %v8905 = vunpack.c.h.b16 %v8385
        %v8906 = vunpack.c.l.b16 %v8386
        %v8907 = vunpack.c.h.b16 %v8386
        %v8908 = vunpack.c.l.b16 %v8387
        %v8909 = vunpack.c.h.b16 %v8387
        %v8910 = vunpack.c.l.b16 %v8388
        %v8911 = vunpack.c.h.b16 %v8388
        %v8912 = vunpack.c.l.b16 %v8389
        %v8913 = vunpack.c.h.b16 %v8389
        %v8914 = vpack.c.b16 %v8788, %v8786
        %v8915 = vpack.c.b16 %v8789, %v8787
        %v8916 = vpack.c.b16 %v8792, %v8790
        %v8917 = vpack.c.b16 %v8793, %v8791
        %v8918 = vpack.c.b16 %v8796, %v8794
        %v8919 = vpack.c.b16 %v8797, %v8795
        %v8920 = vpack.c.b16 %v8800, %v8798
        %v8921 = vpack.c.b16 %v8801, %v8799
        %v8922 = vpack.c.b16 %v8804, %v8802
        %v8923 = vpack.c.b16 %v8805, %v8803
        %v8924 = vpack.c.b16 %v8808, %v8806
        %v8925 = vpack.c.b16 %v8809, %v8807
        %v8926 = vpack.c.b16 %v8812, %v8810
        %v8927 = vpack.c.b16 %v8813, %v8811
        %v8928 = vpack.c.b16 %v8816, %v8814
        %v8929 = vpack.c.b16 %v8817, %v8815
        %v8930 = vpack.c.b16 %v8820, %v8818
        %v8931 = vpack.c.b16 %v8821, %v8819
        %v8932 = vpack.c.b16 %v8824, %v8822
        %v8933 = vpack.c.b16 %v8825, %v8823
        %v8934 = vpack.c.b16 %v8828, %v8826
        %v8935 = vpack.c.b16 %v8829, %v8827
        %v8936 = vpack.c.b16 %v8832, %v8830
        %v8937 = vpack.c.b16 %v8833, %v8831
        %v8938 = vpack.c.b16 %v8836, %v8834
        %v8939 = vpack.c.b16 %v8837, %v8835
        %v8940 = vpack.c.b16 %v8840, %v8838
        %v8941 = vpack.c.b16 %v8841, %v8839
        %v8942 = vpack.c.b16 %v8844, %v8842
        %v8943 = vpack.c.b16 %v8845, %v8843
        %v8944 = vpack.c.b16 %v8848, %v8846
        %v8945 = vpack.c.b16 %v8849, %v8847
        %v8946 = vpack.c.b16 %v8852, %v8850
        %v8947 = vpack.c.b16 %v8853, %v8851
        %v8948 = vpack.c.b16 %v8856, %v8854
        %v8949 = vpack.c.b16 %v8857, %v8855
        %v8950 = vpack.c.b16 %v8860, %v8858
        %v8951 = vpack.c.b16 %v8861, %v8859
        %v8952 = vpack.c.b16 %v8864, %v8862
        %v8953 = vpack.c.b16 %v8865, %v8863
        %v8954 = vpack.c.b16 %v8868, %v8866
        %v8955 = vpack.c.b16 %v8869, %v8867
        %v8956 = vpack.c.b16 %v8872, %v8870
        %v8957 = vpack.c.b16 %v8873, %v8871
        %v8958 = vpack.c.b16 %v8876, %v8874
        %v8959 = vpack.c.b16 %v8877, %v8875
        %v8960 = vpack.c.b16 %v8880, %v8878
        %v8961 = vpack.c.b16 %v8881, %v8879
        %v8962 = vpack.c.b16 %v8884, %v8882
        %v8963 = vpack.c.b16 %v8885, %v8883
        %v8964 = vpack.c.b16 %v8888, %v8886
        %v8965 = vpack.c.b16 %v8889, %v8887
        %v8966 = vpack.c.b16 %v8892, %v8890
        %v8967 = vpack.c.b16 %v8893, %v8891
        %v8968 = vpack.c.b16 %v8896, %v8894
        %v8969 = vpack.c.b16 %v8897, %v8895
        %v8970 = vpack.c.b16 %v8900, %v8898
        %v8971 = vpack.c.b16 %v8901, %v8899
        %v8972 = vpack.c.b16 %v8904, %v8902
        %v8973 = vpack.c.b16 %v8905, %v8903
        %v8974 = vpack.c.b16 %v8908, %v8906
        %v8975 = vpack.c.b16 %v8909, %v8907
        %v8976 = vpack.c.b16 %v8912, %v8910
        %v8977 = vpack.c.b16 %v8913, %v8911
        %9042 = vmatprep.subr.bf16.mxu0 %v8929
        %9043 = vmatpush1.bf16.msra.mxu0 %v8928
        %9044 = vmatprep.subr.bf16.mxu0 %v8927
        %9045 = vmatpush1.bf16.msra.mxu0 %v8926
        %9046 = vmatprep.subr.bf16.mxu0 %v8925
        %9047 = vmatpush1.bf16.msra.mxu0 %v8924
        %9048 = vmatprep.subr.bf16.mxu0 %v8923
        %9049 = vmatpush1.bf16.msra.mxu0 %v8922
        %9050 = vmatprep.subr.bf16.mxu0 %v8921
        %9051 = vmatpush1.bf16.msra.mxu0 %v8920
        %9052 = vmatprep.subr.bf16.mxu0 %v8919
        %9053 = vmatpush1.bf16.msra.mxu0 %v8918
        %9054 = vmatprep.subr.bf16.mxu0 %v8917
        %9055 = vmatpush1.bf16.msra.mxu0 %v8916
        %9056 = vmatprep.subr.bf16.mxu0 %v8915
        %9057 = vmatpush1.bf16.msra.mxu0 %v8914
        %9058 = vmatprep.subr.bf16.mxu0 %v8945
        %9059 = vmatpush2.bf16.msra.mxu0 %v8944
        %9060 = vmatprep.subr.bf16.mxu0 %v8943
        %9061 = vmatpush2.bf16.msra.mxu0 %v8942
        %9062 = vmatprep.subr.bf16.mxu0 %v8941
        %9063 = vmatpush2.bf16.msra.mxu0 %v8940
        %9064 = vmatprep.subr.bf16.mxu0 %v8939
        %9065 = vmatpush2.bf16.msra.mxu0 %v8938
        %9066 = vmatprep.subr.bf16.mxu0 %v8937
        %9067 = vmatpush2.bf16.msra.mxu0 %v8936
        %9068 = vmatprep.subr.bf16.mxu0 %v8935
        %9069 = vmatpush2.bf16.msra.mxu0 %v8934
        %9070 = vmatprep.subr.bf16.mxu0 %v8933
        %9071 = vmatpush2.bf16.msra.mxu0 %v8932
        %9072 = vmatprep.subr.bf16.mxu0 %v8931
        %9073 = vmatpush2.bf16.msra.mxu0 %v8930
        %9074 = vmatprep.mubr.bf16.mxu0 %v8595
        %9075 = vmatmul.mubr.bf16.gmra.mxu0 %v8594
        %v9076 = vpop.f32.mrf.mxu0
        %v9077 = vadd.f32 %v8395, %v9076
        %v9078 = vpop.f32.mrf.mxu0
        %v9079 = vadd.f32 %v8399, %v9078
        %v9080 = vpop.f32.mrf.mxu0
        %v9081 = vadd.f32 %v8395, %v9080
        %v9082 = vpop.f32.mrf.mxu0
        %v9083 = vadd.f32 %v8399, %v9082
        %9084 = vmatprep.mubr.bf16.mxu0 %v8599
        %9085 = vmatmul.mubr.bf16.gmra.mxu0 %v8598
        %v9086 = vpop.f32.mrf.mxu0
        %v9087 = vadd.f32 %v8395, %v9086
        %v9088 = vpop.f32.mrf.mxu0
        %v9089 = vadd.f32 %v8399, %v9088
        %v9090 = vpop.f32.mrf.mxu0
        %v9091 = vadd.f32 %v8395, %v9090
        %v9092 = vpop.f32.mrf.mxu0
        %v9093 = vadd.f32 %v8399, %v9092
        %9094 = vmatprep.mubr.bf16.mxu0 %v8603
        %9095 = vmatmul.mubr.bf16.gmra.mxu0 %v8602
        %v9096 = vpop.f32.mrf.mxu0
        %v9097 = vadd.f32 %v8395, %v9096
        %v9098 = vpop.f32.mrf.mxu0
        %v9099 = vadd.f32 %v8399, %v9098
        %v9100 = vpop.f32.mrf.mxu0
        %v9101 = vadd.f32 %v8395, %v9100
        %v9102 = vpop.f32.mrf.mxu0
        %v9103 = vadd.f32 %v8399, %v9102
        %9104 = vmatprep.mubr.bf16.mxu0 %v8607
        %9105 = vmatmul.mubr.bf16.gmra.mxu0 %v8606
        %v9106 = vpop.f32.mrf.mxu0
        %v9107 = vadd.f32 %v8395, %v9106
        %v9108 = vpop.f32.mrf.mxu0
        %v9109 = vadd.f32 %v8399, %v9108
        %v9110 = vpop.f32.mrf.mxu0
        %v9111 = vadd.f32 %v8395, %v9110
        %v9112 = vpop.f32.mrf.mxu0
        %v9113 = vadd.f32 %v8399, %v9112
        %9114 = vmatprep.mubr.bf16.mxu0 %v8611
        %9115 = vmatmul.mubr.bf16.gmra.mxu0 %v8610
        %v9116 = vpop.f32.mrf.mxu0
        %v9117 = vadd.f32 %v8395, %v9116
        %v9118 = vpop.f32.mrf.mxu0
        %v9119 = vadd.f32 %v8399, %v9118
        %v9120 = vpop.f32.mrf.mxu0
        %v9121 = vadd.f32 %v8395, %v9120
        %v9122 = vpop.f32.mrf.mxu0
        %v9123 = vadd.f32 %v8399, %v9122
        %9124 = vmatprep.mubr.bf16.mxu0 %v8615
        %9125 = vmatmul.mubr.bf16.gmra.mxu0 %v8614
        %v9126 = vpop.f32.mrf.mxu0
        %v9127 = vadd.f32 %v8395, %v9126
        %v9128 = vpop.f32.mrf.mxu0
        %v9129 = vadd.f32 %v8399, %v9128
        %v9130 = vpop.f32.mrf.mxu0
        %v9131 = vadd.f32 %v8395, %v9130
        %v9132 = vpop.f32.mrf.mxu0
        %v9133 = vadd.f32 %v8399, %v9132
        %9134 = vmatprep.mubr.bf16.mxu0 %v8619
        %9135 = vmatmul.mubr.bf16.gmra.mxu0 %v8618
        %v9136 = vpop.f32.mrf.mxu0
        %v9137 = vadd.f32 %v8395, %v9136
        %v9138 = vpop.f32.mrf.mxu0
        %v9139 = vadd.f32 %v8399, %v9138
        %v9140 = vpop.f32.mrf.mxu0
        %v9141 = vadd.f32 %v8395, %v9140
        %v9142 = vpop.f32.mrf.mxu0
        %v9143 = vadd.f32 %v8399, %v9142
        %9144 = vmatprep.mubr.bf16.mxu0 %v8623
        %9145 = vmatmul.mubr.bf16.gmra.mxu0 %v8622
        %v9146 = vpop.f32.mrf.mxu0
        %v9147 = vadd.f32 %v8395, %v9146
        %v9148 = vpop.f32.mrf.mxu0
        %v9149 = vadd.f32 %v8399, %v9148
        %v9150 = vpop.f32.mrf.mxu0
        %v9151 = vadd.f32 %v8395, %v9150
        %v9152 = vpop.f32.mrf.mxu0
        %v9153 = vadd.f32 %v8399, %v9152
        %9154 = vmatprep.mubr.bf16.mxu0 %v8627
        %9155 = vmatmul.mubr.bf16.gmra.mxu0 %v8626
        %v9156 = vpop.f32.mrf.mxu0
        %v9157 = vadd.f32 %v8395, %v9156
        %v9158 = vpop.f32.mrf.mxu0
        %v9159 = vadd.f32 %v8399, %v9158
        %v9160 = vpop.f32.mrf.mxu0
        %v9161 = vadd.f32 %v8395, %v9160
        %v9162 = vpop.f32.mrf.mxu0
        %v9163 = vadd.f32 %v8399, %v9162
        %9164 = vmatprep.mubr.bf16.mxu0 %v8631
        %9165 = vmatmul.mubr.bf16.gmra.mxu0 %v8630
        %v9166 = vpop.f32.mrf.mxu0
        %v9167 = vadd.f32 %v8395, %v9166
        %v9168 = vpop.f32.mrf.mxu0
        %v9169 = vadd.f32 %v8399, %v9168
        %v9170 = vpop.f32.mrf.mxu0
        %v9171 = vadd.f32 %v8395, %v9170
        %v9172 = vpop.f32.mrf.mxu0
        %v9173 = vadd.f32 %v8399, %v9172
        %9174 = vmatprep.mubr.bf16.mxu0 %v8635
        %9175 = vmatmul.mubr.bf16.gmra.mxu0 %v8634
        %v9176 = vpop.f32.mrf.mxu0
        %v9177 = vadd.f32 %v8395, %v9176
        %v9178 = vpop.f32.mrf.mxu0
        %v9179 = vadd.f32 %v8399, %v9178
        %v9180 = vpop.f32.mrf.mxu0
        %v9181 = vadd.f32 %v8395, %v9180
        %v9182 = vpop.f32.mrf.mxu0
        %v9183 = vadd.f32 %v8399, %v9182
        %9184 = vmatprep.mubr.bf16.mxu0 %v8639
        %9185 = vmatmul.mubr.bf16.gmra.mxu0 %v8638
        %v9186 = vpop.f32.mrf.mxu0
        %v9187 = vadd.f32 %v8395, %v9186
        %v9188 = vpop.f32.mrf.mxu0
        %v9189 = vadd.f32 %v8399, %v9188
        %v9190 = vpop.f32.mrf.mxu0
        %v9191 = vadd.f32 %v8395, %v9190
        %v9192 = vpop.f32.mrf.mxu0
        %v9193 = vadd.f32 %v8399, %v9192
        %9194 = vmatprep.mubr.bf16.mxu0 %v8643
        %9195 = vmatmul.mubr.bf16.gmra.mxu0 %v8642
        %v9196 = vpop.f32.mrf.mxu0
        %v9197 = vadd.f32 %v8395, %v9196
        %v9198 = vpop.f32.mrf.mxu0
        %v9199 = vadd.f32 %v8399, %v9198
        %v9200 = vpop.f32.mrf.mxu0
        %v9201 = vadd.f32 %v8395, %v9200
        %v9202 = vpop.f32.mrf.mxu0
        %v9203 = vadd.f32 %v8399, %v9202
        %9204 = vmatprep.mubr.bf16.mxu0 %v8647
        %9205 = vmatmul.mubr.bf16.gmra.mxu0 %v8646
        %v9206 = vpop.f32.mrf.mxu0
        %v9207 = vadd.f32 %v8395, %v9206
        %v9208 = vpop.f32.mrf.mxu0
        %v9209 = vadd.f32 %v8399, %v9208
        %v9210 = vpop.f32.mrf.mxu0
        %v9211 = vadd.f32 %v8395, %v9210
        %v9212 = vpop.f32.mrf.mxu0
        %v9213 = vadd.f32 %v8399, %v9212
        %9214 = vmatprep.mubr.bf16.mxu0 %v8651
        %9215 = vmatmul.mubr.bf16.gmra.mxu0 %v8650
        %v9216 = vpop.f32.mrf.mxu0
        %v9217 = vadd.f32 %v8395, %v9216
        %v9218 = vpop.f32.mrf.mxu0
        %v9219 = vadd.f32 %v8399, %v9218
        %v9220 = vpop.f32.mrf.mxu0
        %v9221 = vadd.f32 %v8395, %v9220
        %v9222 = vpop.f32.mrf.mxu0
        %v9223 = vadd.f32 %v8399, %v9222
        %9224 = vmatprep.mubr.bf16.mxu0 %v8655
        %9225 = vmatmul.mubr.bf16.gmra.mxu0 %v8654
        %v9226 = vpop.f32.mrf.mxu0
        %v9227 = vadd.f32 %v8395, %v9226
        %v9228 = vpop.f32.mrf.mxu0
        %v9229 = vadd.f32 %v8399, %v9228
        %v9230 = vpop.f32.mrf.mxu0
        %v9231 = vadd.f32 %v8395, %v9230
        %v9232 = vpop.f32.mrf.mxu0
        %v9233 = vadd.f32 %v8399, %v9232
        %9234 = vdwg.mxu0
        %9235 = vmatprep.subr.bf16.mxu0 %v8961
        %9236 = vmatpush1.bf16.msra.mxu0 %v8960
        %9237 = vmatprep.subr.bf16.mxu0 %v8959
        %9238 = vmatpush1.bf16.msra.mxu0 %v8958
        %9239 = vmatprep.subr.bf16.mxu0 %v8957
        %9240 = vmatpush1.bf16.msra.mxu0 %v8956
        %9241 = vmatprep.subr.bf16.mxu0 %v8955
        %9242 = vmatpush1.bf16.msra.mxu0 %v8954
        %9243 = vmatprep.subr.bf16.mxu0 %v8953
        %9244 = vmatpush1.bf16.msra.mxu0 %v8952
        %9245 = vmatprep.subr.bf16.mxu0 %v8951
        %9246 = vmatpush1.bf16.msra.mxu0 %v8950
        %9247 = vmatprep.subr.bf16.mxu0 %v8949
        %9248 = vmatpush1.bf16.msra.mxu0 %v8948
        %9249 = vmatprep.subr.bf16.mxu0 %v8947
        %9250 = vmatpush1.bf16.msra.mxu0 %v8946
        %9251 = vmatprep.subr.bf16.mxu0 %v8977
        %9252 = vmatpush2.bf16.msra.mxu0 %v8976
        %9253 = vmatprep.subr.bf16.mxu0 %v8975
        %9254 = vmatpush2.bf16.msra.mxu0 %v8974
        %9255 = vmatprep.subr.bf16.mxu0 %v8973
        %9256 = vmatpush2.bf16.msra.mxu0 %v8972
        %9257 = vmatprep.subr.bf16.mxu0 %v8971
        %9258 = vmatpush2.bf16.msra.mxu0 %v8970
        %9259 = vmatprep.subr.bf16.mxu0 %v8969
        %9260 = vmatpush2.bf16.msra.mxu0 %v8968
        %9261 = vmatprep.subr.bf16.mxu0 %v8967
        %9262 = vmatpush2.bf16.msra.mxu0 %v8966
        %9263 = vmatprep.subr.bf16.mxu0 %v8965
        %9264 = vmatpush2.bf16.msra.mxu0 %v8964
        %9265 = vmatprep.subr.bf16.mxu0 %v8963
        %9266 = vmatpush2.bf16.msra.mxu0 %v8962
        %9267 = vmatprep.mubr.bf16.mxu0 %v8597
        %9268 = vmatmul.mubr.bf16.gmra.mxu0 %v8596
        %v9269 = vpop.f32.mrf.mxu0
        %v9270 = vadd.f32 %v9077, %v9269
        %v9271 = vpop.f32.mrf.mxu0
        %v9272 = vadd.f32 %v9079, %v9271
        %v9273 = vpop.f32.mrf.mxu0
        %v9274 = vadd.f32 %v9081, %v9273
        %v9275 = vpop.f32.mrf.mxu0
        %v9276 = vadd.f32 %v9083, %v9275
        %9277 = vmatprep.mubr.bf16.mxu0 %v8601
        %9278 = vmatmul.mubr.bf16.gmra.mxu0 %v8600
        %v9279 = vpop.f32.mrf.mxu0
        %v9280 = vadd.f32 %v9087, %v9279
        %v9281 = vpop.f32.mrf.mxu0
        %v9282 = vadd.f32 %v9089, %v9281
        %v9283 = vpop.f32.mrf.mxu0
        %v9284 = vadd.f32 %v9091, %v9283
        %v9285 = vpop.f32.mrf.mxu0
        %v9286 = vadd.f32 %v9093, %v9285
        %9287 = vmatprep.mubr.bf16.mxu0 %v8605
        %9288 = vmatmul.mubr.bf16.gmra.mxu0 %v8604
        %v9289 = vpop.f32.mrf.mxu0
        %v9290 = vadd.f32 %v9097, %v9289
        %v9291 = vpop.f32.mrf.mxu0
        %v9292 = vadd.f32 %v9099, %v9291
        %v9293 = vpop.f32.mrf.mxu0
        %v9294 = vadd.f32 %v9101, %v9293
        %v9295 = vpop.f32.mrf.mxu0
        %v9296 = vadd.f32 %v9103, %v9295
        %9297 = vmatprep.mubr.bf16.mxu0 %v8609
        %9298 = vmatmul.mubr.bf16.gmra.mxu0 %v8608
        %v9299 = vpop.f32.mrf.mxu0
        %v9300 = vadd.f32 %v9107, %v9299
        %v9301 = vpop.f32.mrf.mxu0
        %v9302 = vadd.f32 %v9109, %v9301
        %v9303 = vpop.f32.mrf.mxu0
        %v9304 = vadd.f32 %v9111, %v9303
        %v9305 = vpop.f32.mrf.mxu0
        %v9306 = vadd.f32 %v9113, %v9305
        %9307 = vmatprep.mubr.bf16.mxu0 %v8613
        %9308 = vmatmul.mubr.bf16.gmra.mxu0 %v8612
        %v9309 = vpop.f32.mrf.mxu0
        %v9310 = vadd.f32 %v9117, %v9309
        %v9311 = vpop.f32.mrf.mxu0
        %v9312 = vadd.f32 %v9119, %v9311
        %v9313 = vpop.f32.mrf.mxu0
        %v9314 = vadd.f32 %v9121, %v9313
        %v9315 = vpop.f32.mrf.mxu0
        %v9316 = vadd.f32 %v9123, %v9315
        %9317 = vmatprep.mubr.bf16.mxu0 %v8617
        %9318 = vmatmul.mubr.bf16.gmra.mxu0 %v8616
        %v9319 = vpop.f32.mrf.mxu0
        %v9320 = vadd.f32 %v9127, %v9319
        %v9321 = vpop.f32.mrf.mxu0
        %v9322 = vadd.f32 %v9129, %v9321
        %v9323 = vpop.f32.mrf.mxu0
        %v9324 = vadd.f32 %v9131, %v9323
        %v9325 = vpop.f32.mrf.mxu0
        %v9326 = vadd.f32 %v9133, %v9325
        %9327 = vmatprep.mubr.bf16.mxu0 %v8621
        %9328 = vmatmul.mubr.bf16.gmra.mxu0 %v8620
        %v9329 = vpop.f32.mrf.mxu0
        %v9330 = vadd.f32 %v9137, %v9329
        %v9331 = vpop.f32.mrf.mxu0
        %v9332 = vadd.f32 %v9139, %v9331
        %v9333 = vpop.f32.mrf.mxu0
        %v9334 = vadd.f32 %v9141, %v9333
        %v9335 = vpop.f32.mrf.mxu0
        %v9336 = vadd.f32 %v9143, %v9335
        %9337 = vmatprep.mubr.bf16.mxu0 %v8625
        %9338 = vmatmul.mubr.bf16.gmra.mxu0 %v8624
        %v9339 = vpop.f32.mrf.mxu0
        %v9340 = vadd.f32 %v9147, %v9339
        %v9341 = vpop.f32.mrf.mxu0
        %v9342 = vadd.f32 %v9149, %v9341
        %v9343 = vpop.f32.mrf.mxu0
        %v9344 = vadd.f32 %v9151, %v9343
        %v9345 = vpop.f32.mrf.mxu0
        %v9346 = vadd.f32 %v9153, %v9345
        %9347 = vmatprep.mubr.bf16.mxu0 %v8629
        %9348 = vmatmul.mubr.bf16.gmra.mxu0 %v8628
        %v9349 = vpop.f32.mrf.mxu0
        %v9350 = vadd.f32 %v9157, %v9349
        %v9351 = vpop.f32.mrf.mxu0
        %v9352 = vadd.f32 %v9159, %v9351
        %v9353 = vpop.f32.mrf.mxu0
        %v9354 = vadd.f32 %v9161, %v9353
        %v9355 = vpop.f32.mrf.mxu0
        %v9356 = vadd.f32 %v9163, %v9355
        %9357 = vmatprep.mubr.bf16.mxu0 %v8633
        %9358 = vmatmul.mubr.bf16.gmra.mxu0 %v8632
        %v9359 = vpop.f32.mrf.mxu0
        %v9360 = vadd.f32 %v9167, %v9359
        %v9361 = vpop.f32.mrf.mxu0
        %v9362 = vadd.f32 %v9169, %v9361
        %v9363 = vpop.f32.mrf.mxu0
        %v9364 = vadd.f32 %v9171, %v9363
        %v9365 = vpop.f32.mrf.mxu0
        %v9366 = vadd.f32 %v9173, %v9365
        %9367 = vmatprep.mubr.bf16.mxu0 %v8637
        %9368 = vmatmul.mubr.bf16.gmra.mxu0 %v8636
        %v9369 = vpop.f32.mrf.mxu0
        %v9370 = vadd.f32 %v9177, %v9369
        %v9371 = vpop.f32.mrf.mxu0
        %v9372 = vadd.f32 %v9179, %v9371
        %v9373 = vpop.f32.mrf.mxu0
        %v9374 = vadd.f32 %v9181, %v9373
        %v9375 = vpop.f32.mrf.mxu0
        %v9376 = vadd.f32 %v9183, %v9375
        %9377 = vmatprep.mubr.bf16.mxu0 %v8641
        %9378 = vmatmul.mubr.bf16.gmra.mxu0 %v8640
        %v9379 = vpop.f32.mrf.mxu0
        %v9380 = vadd.f32 %v9187, %v9379
        %v9381 = vpop.f32.mrf.mxu0
        %v9382 = vadd.f32 %v9189, %v9381
        %v9383 = vpop.f32.mrf.mxu0
        %v9384 = vadd.f32 %v9191, %v9383
        %v9385 = vpop.f32.mrf.mxu0
        %v9386 = vadd.f32 %v9193, %v9385
        %9387 = vmatprep.mubr.bf16.mxu0 %v8645
        %9388 = vmatmul.mubr.bf16.gmra.mxu0 %v8644
        %v9389 = vpop.f32.mrf.mxu0
        %v9390 = vadd.f32 %v9197, %v9389
        %v9391 = vpop.f32.mrf.mxu0
        %v9392 = vadd.f32 %v9199, %v9391
        %v9393 = vpop.f32.mrf.mxu0
        %v9394 = vadd.f32 %v9201, %v9393
        %v9395 = vpop.f32.mrf.mxu0
        %v9396 = vadd.f32 %v9203, %v9395
        %9397 = vmatprep.mubr.bf16.mxu0 %v8649
        %9398 = vmatmul.mubr.bf16.gmra.mxu0 %v8648
        %v9399 = vpop.f32.mrf.mxu0
        %v9400 = vadd.f32 %v9207, %v9399
        %v9401 = vpop.f32.mrf.mxu0
        %v9402 = vadd.f32 %v9209, %v9401
        %v9403 = vpop.f32.mrf.mxu0
        %v9404 = vadd.f32 %v9211, %v9403
        %v9405 = vpop.f32.mrf.mxu0
        %v9406 = vadd.f32 %v9213, %v9405
        %9407 = vmatprep.mubr.bf16.mxu0 %v8653
        %9408 = vmatmul.mubr.bf16.gmra.mxu0 %v8652
        %v9409 = vpop.f32.mrf.mxu0
        %v9410 = vadd.f32 %v9217, %v9409
        %v9411 = vpop.f32.mrf.mxu0
        %v9412 = vadd.f32 %v9219, %v9411
        %v9413 = vpop.f32.mrf.mxu0
        %v9414 = vadd.f32 %v9221, %v9413
        %v9415 = vpop.f32.mrf.mxu0
        %v9416 = vadd.f32 %v9223, %v9415
        %9417 = vmatprep.mubr.bf16.mxu0 %v8657
        %9418 = vmatmul.mubr.bf16.gmra.mxu0 %v8656
        %v9419 = vpop.f32.mrf.mxu0
        %v9420 = vadd.f32 %v9227, %v9419
        %v9421 = vpop.f32.mrf.mxu0
        %v9422 = vadd.f32 %v9229, %v9421
        %v9423 = vpop.f32.mrf.mxu0
        %v9424 = vadd.f32 %v9231, %v9423
        %v9425 = vpop.f32.mrf.mxu0
        %v9426 = vadd.f32 %v9233, %v9425
        %9427 = vdwg.mxu0
        %v9428 = vxor.u32 %v9270, 2147483648
        %v9429 = vxor.u32 %v9272, 2147483648
        %v9430 = vxor.u32 %v9274, 2147483648
        %v9431 = vxor.u32 %v9276, 2147483648
        %v9432 = vxor.u32 %v9280, 2147483648
        %v9433 = vxor.u32 %v9282, 2147483648
        %v9434 = vxor.u32 %v9284, 2147483648
        %v9435 = vxor.u32 %v9286, 2147483648
        %v9436 = vxor.u32 %v9290, 2147483648
        %v9437 = vxor.u32 %v9292, 2147483648
        %v9438 = vxor.u32 %v9294, 2147483648
        %v9439 = vxor.u32 %v9296, 2147483648
        %v9440 = vxor.u32 %v9300, 2147483648
        %v9441 = vxor.u32 %v9302, 2147483648
        %v9442 = vxor.u32 %v9304, 2147483648
        %v9443 = vxor.u32 %v9306, 2147483648
        %v9444 = vxor.u32 %v9310, 2147483648
        %v9445 = vxor.u32 %v9312, 2147483648
        %v9446 = vxor.u32 %v9314, 2147483648
        %v9447 = vxor.u32 %v9316, 2147483648
        %v9448 = vxor.u32 %v9320, 2147483648
        %v9449 = vxor.u32 %v9322, 2147483648
        %v9450 = vxor.u32 %v9324, 2147483648
        %v9451 = vxor.u32 %v9326, 2147483648
        %v9452 = vxor.u32 %v9330, 2147483648
        %v9453 = vxor.u32 %v9332, 2147483648
        %v9454 = vxor.u32 %v9334, 2147483648
        %v9455 = vxor.u32 %v9336, 2147483648
        %v9456 = vxor.u32 %v9340, 2147483648
        %v9457 = vxor.u32 %v9342, 2147483648
        %v9458 = vxor.u32 %v9344, 2147483648
        %v9459 = vxor.u32 %v9346, 2147483648
        %v9460 = vxor.u32 %v9350, 2147483648
        %v9461 = vxor.u32 %v9352, 2147483648
        %v9462 = vxor.u32 %v9354, 2147483648
        %v9463 = vxor.u32 %v9356, 2147483648
        %v9464 = vxor.u32 %v9360, 2147483648
        %v9465 = vxor.u32 %v9362, 2147483648
        %v9466 = vxor.u32 %v9364, 2147483648
        %v9467 = vxor.u32 %v9366, 2147483648
        %v9468 = vxor.u32 %v9370, 2147483648
        %v9469 = vxor.u32 %v9372, 2147483648
        %v9470 = vxor.u32 %v9374, 2147483648
        %v9471 = vxor.u32 %v9376, 2147483648
        %v9472 = vxor.u32 %v9380, 2147483648
        %v9473 = vxor.u32 %v9382, 2147483648
        %v9474 = vxor.u32 %v9384, 2147483648
        %v9475 = vxor.u32 %v9386, 2147483648
        %v9476 = vxor.u32 %v9390, 2147483648
        %v9477 = vxor.u32 %v9392, 2147483648
        %v9478 = vxor.u32 %v9394, 2147483648
        %v9479 = vxor.u32 %v9396, 2147483648
        %v9480 = vxor.u32 %v9400, 2147483648
        %v9481 = vxor.u32 %v9402, 2147483648
        %v9482 = vxor.u32 %v9404, 2147483648
        %v9483 = vxor.u32 %v9406, 2147483648
        %v9484 = vxor.u32 %v9410, 2147483648
        %v9485 = vxor.u32 %v9412, 2147483648
        %v9486 = vxor.u32 %v9414, 2147483648
        %v9487 = vxor.u32 %v9416, 2147483648
        %v9488 = vxor.u32 %v9420, 2147483648
        %v9489 = vxor.u32 %v9422, 2147483648
        %v9490 = vxor.u32 %v9424, 2147483648
        %v9491 = vxor.u32 %v9426, 2147483648
        %v9492 = vmul.f32 %v9428, 1.442695
        %v9493 = vpow.pop %v9492
        %v9494 = vmul.f32 %v9429, 1.442695
        %v9495 = vpow.pop %v9494
        %v9496 = vmul.f32 %v9430, 1.442695
        %v9497 = vpow.pop %v9496
        %v9498 = vmul.f32 %v9431, 1.442695
        %v9499 = vpow.pop %v9498
        %v9500 = vmul.f32 %v9432, 1.442695
        %v9501 = vpow.pop %v9500
        %v9502 = vmul.f32 %v9433, 1.442695
        %v9503 = vpow.pop %v9502
        %v9504 = vmul.f32 %v9434, 1.442695
        %v9505 = vpow.pop %v9504
        %v9506 = vmul.f32 %v9435, 1.442695
        %v9507 = vpow.pop %v9506
        %v9508 = vmul.f32 %v9436, 1.442695
        %v9509 = vpow.pop %v9508
        %v9510 = vmul.f32 %v9437, 1.442695
        %v9511 = vpow.pop %v9510
        %v9512 = vmul.f32 %v9438, 1.442695
        %v9513 = vpow.pop %v9512
        %v9514 = vmul.f32 %v9439, 1.442695
        %v9515 = vpow.pop %v9514
        %v9516 = vmul.f32 %v9440, 1.442695
        %v9517 = vpow.pop %v9516
        %v9518 = vmul.f32 %v9441, 1.442695
        %v9519 = vpow.pop %v9518
        %v9520 = vmul.f32 %v9442, 1.442695
        %v9521 = vpow.pop %v9520
        %v9522 = vmul.f32 %v9443, 1.442695
        %v9523 = vpow.pop %v9522
        %v9524 = vmul.f32 %v9444, 1.442695
        %v9525 = vpow.pop %v9524
        %v9526 = vmul.f32 %v9445, 1.442695
        %v9527 = vpow.pop %v9526
        %v9528 = vmul.f32 %v9446, 1.442695
        %v9529 = vpow.pop %v9528
        %v9530 = vmul.f32 %v9447, 1.442695
        %v9531 = vpow.pop %v9530
        %v9532 = vmul.f32 %v9448, 1.442695
        %v9533 = vpow.pop %v9532
        %v9534 = vmul.f32 %v9449, 1.442695
        %v9535 = vpow.pop %v9534
        %v9536 = vmul.f32 %v9450, 1.442695
        %v9537 = vpow.pop %v9536
        %v9538 = vmul.f32 %v9451, 1.442695
        %v9539 = vpow.pop %v9538
        %v9540 = vmul.f32 %v9452, 1.442695
        %v9541 = vpow.pop %v9540
        %v9542 = vmul.f32 %v9453, 1.442695
        %v9543 = vpow.pop %v9542
        %v9544 = vmul.f32 %v9454, 1.442695
        %v9545 = vpow.pop %v9544
        %v9546 = vmul.f32 %v9455, 1.442695
        %v9547 = vpow.pop %v9546
        %v9548 = vmul.f32 %v9456, 1.442695
        %v9549 = vpow.pop %v9548
        %v9550 = vmul.f32 %v9457, 1.442695
        %v9551 = vpow.pop %v9550
        %v9552 = vmul.f32 %v9458, 1.442695
        %v9553 = vpow.pop %v9552
        %v9554 = vmul.f32 %v9459, 1.442695
        %v9555 = vpow.pop %v9554
        %v9556 = vmul.f32 %v9460, 1.442695
        %v9557 = vpow.pop %v9556
        %v9558 = vmul.f32 %v9461, 1.442695
        %v9559 = vpow.pop %v9558
        %v9560 = vmul.f32 %v9462, 1.442695
        %v9561 = vpow.pop %v9560
        %v9562 = vmul.f32 %v9463, 1.442695
        %v9563 = vpow.pop %v9562
        %v9564 = vmul.f32 %v9464, 1.442695
        %v9565 = vpow.pop %v9564
        %v9566 = vmul.f32 %v9465, 1.442695
        %v9567 = vpow.pop %v9566
        %v9568 = vmul.f32 %v9466, 1.442695
        %v9569 = vpow.pop %v9568
        %v9570 = vmul.f32 %v9467, 1.442695
        %v9571 = vpow.pop %v9570
        %v9572 = vmul.f32 %v9468, 1.442695
        %v9573 = vpow.pop %v9572
        %v9574 = vmul.f32 %v9469, 1.442695
        %v9575 = vpow.pop %v9574
        %v9576 = vmul.f32 %v9470, 1.442695
        %v9577 = vpow.pop %v9576
        %v9578 = vmul.f32 %v9471, 1.442695
        %v9579 = vpow.pop %v9578
        %v9580 = vmul.f32 %v9472, 1.442695
        %v9581 = vpow.pop %v9580
        %v9582 = vmul.f32 %v9473, 1.442695
        %v9583 = vpow.pop %v9582
        %v9584 = vmul.f32 %v9474, 1.442695
        %v9585 = vpow.pop %v9584
        %v9586 = vmul.f32 %v9475, 1.442695
        %v9587 = vpow.pop %v9586
        %v9588 = vmul.f32 %v9476, 1.442695
        %v9589 = vpow.pop %v9588
        %v9590 = vmul.f32 %v9477, 1.442695
        %v9591 = vpow.pop %v9590
        %v9592 = vmul.f32 %v9478, 1.442695
        %v9593 = vpow.pop %v9592
        %v9594 = vmul.f32 %v9479, 1.442695
        %v9595 = vpow.pop %v9594
        %v9596 = vmul.f32 %v9480, 1.442695
        %v9597 = vpow.pop %v9596
        %v9598 = vmul.f32 %v9481, 1.442695
        %v9599 = vpow.pop %v9598
        %v9600 = vmul.f32 %v9482, 1.442695
        %v9601 = vpow.pop %v9600
        %v9602 = vmul.f32 %v9483, 1.442695
        %v9603 = vpow.pop %v9602
        %v9604 = vmul.f32 %v9484, 1.442695
        %v9605 = vpow.pop %v9604
        %v9606 = vmul.f32 %v9485, 1.442695
        %v9607 = vpow.pop %v9606
        %v9608 = vmul.f32 %v9486, 1.442695
        %v9609 = vpow.pop %v9608
        %v9610 = vmul.f32 %v9487, 1.442695
        %v9611 = vpow.pop %v9610
        %v9612 = vmul.f32 %v9488, 1.442695
        %v9613 = vpow.pop %v9612
        %v9614 = vmul.f32 %v9489, 1.442695
        %v9615 = vpow.pop %v9614
        %v9616 = vmul.f32 %v9490, 1.442695
        %v9617 = vpow.pop %v9616
        %v9618 = vmul.f32 %v9491, 1.442695
        %v9619 = vpow.pop %v9618
        %v9620 = vadd.f32 %v9493, 1.0
        %v9621 = vadd.f32 %v9495, 1.0
        %v9622 = vadd.f32 %v9497, 1.0
        %v9623 = vadd.f32 %v9499, 1.0
        %v9624 = vadd.f32 %v9501, 1.0
        %v9625 = vadd.f32 %v9503, 1.0
        %v9626 = vadd.f32 %v9505, 1.0
        %v9627 = vadd.f32 %v9507, 1.0
        %v9628 = vadd.f32 %v9509, 1.0
        %v9629 = vadd.f32 %v9511, 1.0
        %v9630 = vadd.f32 %v9513, 1.0
        %v9631 = vadd.f32 %v9515, 1.0
        %v9632 = vadd.f32 %v9517, 1.0
        %v9633 = vadd.f32 %v9519, 1.0
        %v9634 = vadd.f32 %v9521, 1.0
        %v9635 = vadd.f32 %v9523, 1.0
        %v9636 = vadd.f32 %v9525, 1.0
        %v9637 = vadd.f32 %v9527, 1.0
        %v9638 = vadd.f32 %v9529, 1.0
        %v9639 = vadd.f32 %v9531, 1.0
        %v9640 = vadd.f32 %v9533, 1.0
        %v9641 = vadd.f32 %v9535, 1.0
        %v9642 = vadd.f32 %v9537, 1.0
        %v9643 = vadd.f32 %v9539, 1.0
        %v9644 = vadd.f32 %v9541, 1.0
        %v9645 = vadd.f32 %v9543, 1.0
        %v9646 = vadd.f32 %v9545, 1.0
        %v9647 = vadd.f32 %v9547, 1.0
        %v9648 = vadd.f32 %v9549, 1.0
        %v9649 = vadd.f32 %v9551, 1.0
        %v9650 = vadd.f32 %v9553, 1.0
        %v9651 = vadd.f32 %v9555, 1.0
        %v9652 = vadd.f32 %v9557, 1.0
        %v9653 = vadd.f32 %v9559, 1.0
        %v9654 = vadd.f32 %v9561, 1.0
        %v9655 = vadd.f32 %v9563, 1.0
        %v9656 = vadd.f32 %v9565, 1.0
        %v9657 = vadd.f32 %v9567, 1.0
        %v9658 = vadd.f32 %v9569, 1.0
        %v9659 = vadd.f32 %v9571, 1.0
        %v9660 = vadd.f32 %v9573, 1.0
        %v9661 = vadd.f32 %v9575, 1.0
        %v9662 = vadd.f32 %v9577, 1.0
        %v9663 = vadd.f32 %v9579, 1.0
        %v9664 = vadd.f32 %v9581, 1.0
        %v9665 = vadd.f32 %v9583, 1.0
        %v9666 = vadd.f32 %v9585, 1.0
        %v9667 = vadd.f32 %v9587, 1.0
        %v9668 = vadd.f32 %v9589, 1.0
        %v9669 = vadd.f32 %v9591, 1.0
        %v9670 = vadd.f32 %v9593, 1.0
        %v9671 = vadd.f32 %v9595, 1.0
        %v9672 = vadd.f32 %v9597, 1.0
        %v9673 = vadd.f32 %v9599, 1.0
        %v9674 = vadd.f32 %v9601, 1.0
        %v9675 = vadd.f32 %v9603, 1.0
        %v9676 = vadd.f32 %v9605, 1.0
        %v9677 = vadd.f32 %v9607, 1.0
        %v9678 = vadd.f32 %v9609, 1.0
        %v9679 = vadd.f32 %v9611, 1.0
        %v9680 = vadd.f32 %v9613, 1.0
        %v9681 = vadd.f32 %v9615, 1.0
        %v9682 = vadd.f32 %v9617, 1.0
        %v9683 = vadd.f32 %v9619, 1.0
        %v9684 = vrcp.pop %v9620
        %v9685 = vmul.f32 1.0, %v9684
        %v9686 = vrcp.pop %v9621
        %v9687 = vmul.f32 1.0, %v9686
        %v9688 = vrcp.pop %v9622
        %v9689 = vmul.f32 1.0, %v9688
        %v9690 = vrcp.pop %v9623
        %v9691 = vmul.f32 1.0, %v9690
        %v9692 = vrcp.pop %v9624
        %v9693 = vmul.f32 1.0, %v9692
        %v9694 = vrcp.pop %v9625
        %v9695 = vmul.f32 1.0, %v9694
        %v9696 = vrcp.pop %v9626
        %v9697 = vmul.f32 1.0, %v9696
        %v9698 = vrcp.pop %v9627
        %v9699 = vmul.f32 1.0, %v9698
        %v9700 = vrcp.pop %v9628
        %v9701 = vmul.f32 1.0, %v9700
        %v9702 = vrcp.pop %v9629
        %v9703 = vmul.f32 1.0, %v9702
        %v9704 = vrcp.pop %v9630
        %v9705 = vmul.f32 1.0, %v9704
        %v9706 = vrcp.pop %v9631
        %v9707 = vmul.f32 1.0, %v9706
        %v9708 = vrcp.pop %v9632
        %v9709 = vmul.f32 1.0, %v9708
        %v9710 = vrcp.pop %v9633
        %v9711 = vmul.f32 1.0, %v9710
        %v9712 = vrcp.pop %v9634
        %v9713 = vmul.f32 1.0, %v9712
        %v9714 = vrcp.pop %v9635
        %v9715 = vmul.f32 1.0, %v9714
        %v9716 = vrcp.pop %v9636
        %v9717 = vmul.f32 1.0, %v9716
        %v9718 = vrcp.pop %v9637
        %v9719 = vmul.f32 1.0, %v9718
        %v9720 = vrcp.pop %v9638
        %v9721 = vmul.f32 1.0, %v9720
        %v9722 = vrcp.pop %v9639
        %v9723 = vmul.f32 1.0, %v9722
        %v9724 = vrcp.pop %v9640
        %v9725 = vmul.f32 1.0, %v9724
        %v9726 = vrcp.pop %v9641
        %v9727 = vmul.f32 1.0, %v9726
        %v9728 = vrcp.pop %v9642
        %v9729 = vmul.f32 1.0, %v9728
        %v9730 = vrcp.pop %v9643
        %v9731 = vmul.f32 1.0, %v9730
        %v9732 = vrcp.pop %v9644
        %v9733 = vmul.f32 1.0, %v9732
        %v9734 = vrcp.pop %v9645
        %v9735 = vmul.f32 1.0, %v9734
        %v9736 = vrcp.pop %v9646
        %v9737 = vmul.f32 1.0, %v9736
        %v9738 = vrcp.pop %v9647
        %v9739 = vmul.f32 1.0, %v9738
        %v9740 = vrcp.pop %v9648
        %v9741 = vmul.f32 1.0, %v9740
        %v9742 = vrcp.pop %v9649
        %v9743 = vmul.f32 1.0, %v9742
        %v9744 = vrcp.pop %v9650
        %v9745 = vmul.f32 1.0, %v9744
        %v9746 = vrcp.pop %v9651
        %v9747 = vmul.f32 1.0, %v9746
        %v9748 = vrcp.pop %v9652
        %v9749 = vmul.f32 1.0, %v9748
        %v9750 = vrcp.pop %v9653
        %v9751 = vmul.f32 1.0, %v9750
        %v9752 = vrcp.pop %v9654
        %v9753 = vmul.f32 1.0, %v9752
        %v9754 = vrcp.pop %v9655
        %v9755 = vmul.f32 1.0, %v9754
        %v9756 = vrcp.pop %v9656
        %v9757 = vmul.f32 1.0, %v9756
        %v9758 = vrcp.pop %v9657
        %v9759 = vmul.f32 1.0, %v9758
        %v9760 = vrcp.pop %v9658
        %v9761 = vmul.f32 1.0, %v9760
        %v9762 = vrcp.pop %v9659
        %v9763 = vmul.f32 1.0, %v9762
        %v9764 = vrcp.pop %v9660
        %v9765 = vmul.f32 1.0, %v9764
        %v9766 = vrcp.pop %v9661
        %v9767 = vmul.f32 1.0, %v9766
        %v9768 = vrcp.pop %v9662
        %v9769 = vmul.f32 1.0, %v9768
        %v9770 = vrcp.pop %v9663
        %v9771 = vmul.f32 1.0, %v9770
        %v9772 = vrcp.pop %v9664
        %v9773 = vmul.f32 1.0, %v9772
        %v9774 = vrcp.pop %v9665
        %v9775 = vmul.f32 1.0, %v9774
        %v9776 = vrcp.pop %v9666
        %v9777 = vmul.f32 1.0, %v9776
        %v9778 = vrcp.pop %v9667
        %v9779 = vmul.f32 1.0, %v9778
        %v9780 = vrcp.pop %v9668
        %v9781 = vmul.f32 1.0, %v9780
        %v9782 = vrcp.pop %v9669
        %v9783 = vmul.f32 1.0, %v9782
        %v9784 = vrcp.pop %v9670
        %v9785 = vmul.f32 1.0, %v9784
        %v9786 = vrcp.pop %v9671
        %v9787 = vmul.f32 1.0, %v9786
        %v9788 = vrcp.pop %v9672
        %v9789 = vmul.f32 1.0, %v9788
        %v9790 = vrcp.pop %v9673
        %v9791 = vmul.f32 1.0, %v9790
        %v9792 = vrcp.pop %v9674
        %v9793 = vmul.f32 1.0, %v9792
        %v9794 = vrcp.pop %v9675
        %v9795 = vmul.f32 1.0, %v9794
        %v9796 = vrcp.pop %v9676
        %v9797 = vmul.f32 1.0, %v9796
        %v9798 = vrcp.pop %v9677
        %v9799 = vmul.f32 1.0, %v9798
        %v9800 = vrcp.pop %v9678
        %v9801 = vmul.f32 1.0, %v9800
        %v9802 = vrcp.pop %v9679
        %v9803 = vmul.f32 1.0, %v9802
        %v9804 = vrcp.pop %v9680
        %v9805 = vmul.f32 1.0, %v9804
        %v9806 = vrcp.pop %v9681
        %v9807 = vmul.f32 1.0, %v9806
        %v9808 = vrcp.pop %v9682
        %v9809 = vmul.f32 1.0, %v9808
        %v9810 = vrcp.pop %v9683
        %v9811 = vmul.f32 1.0, %v9810
        %v9812 = vmul.f32 %v9270, %v9685
        %v9813 = vmul.f32 %v9272, %v9687
        %v9814 = vmul.f32 %v9274, %v9689
        %v9815 = vmul.f32 %v9276, %v9691
        %v9816 = vmul.f32 %v9280, %v9693
        %v9817 = vmul.f32 %v9282, %v9695
        %v9818 = vmul.f32 %v9284, %v9697
        %v9819 = vmul.f32 %v9286, %v9699
        %v9820 = vmul.f32 %v9290, %v9701
        %v9821 = vmul.f32 %v9292, %v9703
        %v9822 = vmul.f32 %v9294, %v9705
        %v9823 = vmul.f32 %v9296, %v9707
        %v9824 = vmul.f32 %v9300, %v9709
        %v9825 = vmul.f32 %v9302, %v9711
        %v9826 = vmul.f32 %v9304, %v9713
        %v9827 = vmul.f32 %v9306, %v9715
        %v9828 = vmul.f32 %v9310, %v9717
        %v9829 = vmul.f32 %v9312, %v9719
        %v9830 = vmul.f32 %v9314, %v9721
        %v9831 = vmul.f32 %v9316, %v9723
        %v9832 = vmul.f32 %v9320, %v9725
        %v9833 = vmul.f32 %v9322, %v9727
        %v9834 = vmul.f32 %v9324, %v9729
        %v9835 = vmul.f32 %v9326, %v9731
        %v9836 = vmul.f32 %v9330, %v9733
        %v9837 = vmul.f32 %v9332, %v9735
        %v9838 = vmul.f32 %v9334, %v9737
        %v9839 = vmul.f32 %v9336, %v9739
        %v9840 = vmul.f32 %v9340, %v9741
        %v9841 = vmul.f32 %v9342, %v9743
        %v9842 = vmul.f32 %v9344, %v9745
        %v9843 = vmul.f32 %v9346, %v9747
        %v9844 = vmul.f32 %v9350, %v9749
        %v9845 = vmul.f32 %v9352, %v9751
        %v9846 = vmul.f32 %v9354, %v9753
        %v9847 = vmul.f32 %v9356, %v9755
        %v9848 = vmul.f32 %v9360, %v9757
        %v9849 = vmul.f32 %v9362, %v9759
        %v9850 = vmul.f32 %v9364, %v9761
        %v9851 = vmul.f32 %v9366, %v9763
        %v9852 = vmul.f32 %v9370, %v9765
        %v9853 = vmul.f32 %v9372, %v9767
        %v9854 = vmul.f32 %v9374, %v9769
        %v9855 = vmul.f32 %v9376, %v9771
        %v9856 = vmul.f32 %v9380, %v9773
        %v9857 = vmul.f32 %v9382, %v9775
        %v9858 = vmul.f32 %v9384, %v9777
        %v9859 = vmul.f32 %v9386, %v9779
        %v9860 = vmul.f32 %v9390, %v9781
        %v9861 = vmul.f32 %v9392, %v9783
        %v9862 = vmul.f32 %v9394, %v9785
        %v9863 = vmul.f32 %v9396, %v9787
        %v9864 = vmul.f32 %v9400, %v9789
        %v9865 = vmul.f32 %v9402, %v9791
        %v9866 = vmul.f32 %v9404, %v9793
        %v9867 = vmul.f32 %v9406, %v9795
        %v9868 = vmul.f32 %v9410, %v9797
        %v9869 = vmul.f32 %v9412, %v9799
        %v9870 = vmul.f32 %v9414, %v9801
        %v9871 = vmul.f32 %v9416, %v9803
        %v9872 = vmul.f32 %v9420, %v9805
        %v9873 = vmul.f32 %v9422, %v9807
        %v9874 = vmul.f32 %v9424, %v9809
        %v9875 = vmul.f32 %v9426, %v9811
        %9876 = vst [vmem:[%s271] sm:$0xff] %v9812
        %9877 = vst [vmem:[%s271 + $0x8] sm:$0xff] %v9813
        %9878 = vst [vmem:[%s271 + $0x10] sm:$0xff] %v9814
        %9879 = vst [vmem:[%s271 + $0x18] sm:$0xff] %v9815
        %9880 = vst [vmem:[%s271 + $0x20] sm:$0xff] %v9816
        %9881 = vst [vmem:[%s271 + $0x28] sm:$0xff] %v9817
        %9882 = vst [vmem:[%s271 + $0x30] sm:$0xff] %v9818
        %9883 = vst [vmem:[%s271 + $0x38] sm:$0xff] %v9819
        %9884 = vst [vmem:[%s271 + $0x40] sm:$0xff] %v9820
        %9885 = vst [vmem:[%s271 + $0x48] sm:$0xff] %v9821
        %9886 = vst [vmem:[%s271 + $0x50] sm:$0xff] %v9822
        %9887 = vst [vmem:[%s271 + $0x58] sm:$0xff] %v9823
        %9888 = vst [vmem:[%s271 + $0x60] sm:$0xff] %v9824
        %9889 = vst [vmem:[%s271 + $0x68] sm:$0xff] %v9825
        %9890 = vst [vmem:[%s271 + $0x70] sm:$0xff] %v9826
        %9891 = vst [vmem:[%s271 + $0x78] sm:$0xff] %v9827
        %9892 = vst [vmem:[%s271 + $0x80] sm:$0xff] %v9828
        %9893 = vst [vmem:[%s271 + $0x88] sm:$0xff] %v9829
        %9894 = vst [vmem:[%s271 + $0x90] sm:$0xff] %v9830
        %9895 = vst [vmem:[%s271 + $0x98] sm:$0xff] %v9831
        %9896 = vst [vmem:[%s271 + $0xa0] sm:$0xff] %v9832
        %9897 = vst [vmem:[%s271 + $0xa8] sm:$0xff] %v9833
        %9898 = vst [vmem:[%s271 + $0xb0] sm:$0xff] %v9834
        %9899 = vst [vmem:[%s271 + $0xb8] sm:$0xff] %v9835
        %9900 = vst [vmem:[%s271 + $0xc0] sm:$0xff] %v9836
        %9901 = vst [vmem:[%s271 + $0xc8] sm:$0xff] %v9837
        %9902 = vst [vmem:[%s271 + $0xd0] sm:$0xff] %v9838
        %9903 = vst [vmem:[%s271 + $0xd8] sm:$0xff] %v9839
        %9904 = vst [vmem:[%s271 + $0xe0] sm:$0xff] %v9840
        %9905 = vst [vmem:[%s271 + $0xe8] sm:$0xff] %v9841
        %9906 = vst [vmem:[%s271 + $0xf0] sm:$0xff] %v9842
        %9907 = vst [vmem:[%s271 + $0xf8] sm:$0xff] %v9843
        %9908 = vst [vmem:[%s271 + $0x100] sm:$0xff] %v9844
        %9909 = vst [vmem:[%s271 + $0x108] sm:$0xff] %v9845
        %9910 = vst [vmem:[%s271 + $0x110] sm:$0xff] %v9846
        %9911 = vst [vmem:[%s271 + $0x118] sm:$0xff] %v9847
        %9912 = vst [vmem:[%s271 + $0x120] sm:$0xff] %v9848
        %9913 = vst [vmem:[%s271 + $0x128] sm:$0xff] %v9849
        %9914 = vst [vmem:[%s271 + $0x130] sm:$0xff] %v9850
        %9915 = vst [vmem:[%s271 + $0x138] sm:$0xff] %v9851
        %9916 = vst [vmem:[%s271 + $0x140] sm:$0xff] %v9852
        %9917 = vst [vmem:[%s271 + $0x148] sm:$0xff] %v9853
        %9918 = vst [vmem:[%s271 + $0x150] sm:$0xff] %v9854
        %9919 = vst [vmem:[%s271 + $0x158] sm:$0xff] %v9855
        %9920 = vst [vmem:[%s271 + $0x160] sm:$0xff] %v9856
        %9921 = vst [vmem:[%s271 + $0x168] sm:$0xff] %v9857
        %9922 = vst [vmem:[%s271 + $0x170] sm:$0xff] %v9858
        %9923 = vst [vmem:[%s271 + $0x178] sm:$0xff] %v9859
        %9924 = vst [vmem:[%s271 + $0x180] sm:$0xff] %v9860
        %9925 = vst [vmem:[%s271 + $0x188] sm:$0xff] %v9861
        %9926 = vst [vmem:[%s271 + $0x190] sm:$0xff] %v9862
        %9927 = vst [vmem:[%s271 + $0x198] sm:$0xff] %v9863
        %9928 = vst [vmem:[%s271 + $0x1a0] sm:$0xff] %v9864
        %9929 = vst [vmem:[%s271 + $0x1a8] sm:$0xff] %v9865
        %9930 = vst [vmem:[%s271 + $0x1b0] sm:$0xff] %v9866
        %9931 = vst [vmem:[%s271 + $0x1b8] sm:$0xff] %v9867
        %9932 = vst [vmem:[%s271 + $0x1c0] sm:$0xff] %v9868
        %9933 = vst [vmem:[%s271 + $0x1c8] sm:$0xff] %v9869
        %9934 = vst [vmem:[%s271 + $0x1d0] sm:$0xff] %v9870
        %9935 = vst [vmem:[%s271 + $0x1d8] sm:$0xff] %v9871
        %9936 = vst [vmem:[%s271 + $0x1e0] sm:$0xff] %v9872
        %9937 = vst [vmem:[%s271 + $0x1e8] sm:$0xff] %v9873
        %9938 = vst [vmem:[%s271 + $0x1f0] sm:$0xff] %v9874
        %9939 = vst [vmem:[%s271 + $0x1f8] sm:$0xff] %v9875
        %s9940 = sand.u32 %s141, 1
        %s9941 = scalar_lea.sflag [#allocation6], %s9940
        %s9942 = sand.u32 %s141, 1
        %s9943 = smul.addr %s9942, 512
        %s9944 = scalar_lea.vmem [#allocation10], %s9943
        // Predicated region
        $region53: #{tpu_custom_call.1} parent=39 // pred_check
          %p9945 = pneg %p151
        $region54: #{tpu_custom_call.1} parent=39 // pred_check_branch
          %9947 = sbr.rel (%p9945) target = $region56
        $region55: #{tpu_custom_call.1} parent=39 // pred_region
          %s9949 = ssub.s32 8192, 8192
          %9950 = vsyncadd %s9941, %s9949
          %s9951 = smul.addr %s23, 64
          %s9952 = smul.addr %s9951, 128
          %s9953 = scalar_lea.hbm %s5, %s9952
          %s9954 = sshll.u32 %s9944, 4
          %s9955 = int_to_ptr.vmem [resolvable:$true] %s9954
          %9960 = dma.vmem_to_hbm [thread:$0]  %s9955, 8192, %s9953, %s9941, 256, 256, 16
        $region56: #{tpu_custom_call.1} parent=39 // pred_fallthru
          _
      $region40: #{tpu_custom_call.1} parent=5 // pred_fallthru
        _
      %p9961 = scmp.le.s32.totalorder 2, %s18
      // Predicated region
      $region57: #{tpu_custom_call.1} parent=5 // pred_check
        %p9962 = pneg %p9961
      $region58: #{tpu_custom_call.1} parent=5 // pred_check_branch
        %9964 = sbr.rel (%p9962) target = $region60
      $region59: #{tpu_custom_call.1} parent=5 // pred_region
        %s9965 = ssub.s32 %s18, 2
        // Predicated region
        $region61: #{tpu_custom_call.1} parent=59 // pred_check
          %p9966 = pneg %p157
        $region62: #{tpu_custom_call.1} parent=59 // pred_check_branch
          %9968 = sbr.rel (%p9966) target = $region64
        $region63: #{tpu_custom_call.1} parent=59 // pred_region
          %s9969 = sand.u32 %s142, 1
          %s9970 = scalar_lea.sflag [#allocation6], %s9969
          %s9971 = sand.u32 %s142, 1
          %s9972 = smul.addr %s9971, 512
          %s9973 = scalar_lea.vmem [#allocation10], %s9972
          %9974 = dma.done %s9970, 8192
        $region64: #{tpu_custom_call.1} parent=59 // pred_fallthru
          _
      $region60: #{tpu_custom_call.1} parent=5 // pred_fallthru
        _
    $region6: #{tpu_custom_call.1} parent=1 // loop_footer
      %s22 = sadd.s32 1, %s18
    $region7: #{tpu_custom_call.1} parent=1 // loop_footer_branch
      %17 = sbr.rel target = $region3
    $region8: #{tpu_custom_call.1} parent=1 // loop_exit
      _
    %9975 = vsyncpa [#allocation5], 1
    %s9976 = scalar_lea.sflag [#allocation5], 1
    %9977 = vsyncpa %s9976, 1
    %9978 = vsyncpa [#allocation8], 1
    %9979 = vsyncpa [#allocation6], 1
    %s9980 = scalar_lea.sflag [#allocation6], 1
    %9981 = vsyncpa %s9980, 1

</llo_original>
